<compile_context>
chip_gen: v7x
topology: tpu7x:2x2x1
jax: 0.10.0
libtpu: 0.0.40
codegen_flags: <defaults>
</compile_context>

<pallas_src>
import math
import functools

import jax
import jax.numpy as jnp
from jax.experimental import pallas as pl
from jax.experimental.pallas import tpu as pltpu

F32 = jnp.float32
BF16 = jnp.bfloat16
_VMEM = pl.BlockSpec(memory_space=pltpu.MemorySpace.VMEM)

_RATIO = 0.9  # TopKPooling ratio (static)


def _round_up(v, m):
    return (v + m - 1) // m * m


# ----------------------------- fused Pallas kernel -----------------------------

def _net_kernel(adj_ref, member_ref, x_ref, wslab_ref, bslab_ref, o_ref):
    """Whole Net forward; everything stays resident in VMEM / vregs."""
    n = adj_ref.shape[0]
    cp = x_ref.shape[1]
    neg = jnp.float32(-1e30)

    adj = adj_ref[...]                                   # bf16 [n,n]; adj[i,j]=1 iff edge j->i
    member = member_ref[...]                             # f32 [n,bp], one-hot original membership
    member_bf = member.astype(BF16)
    bp = member.shape[1]

    def bf(v):
        return v.astype(BF16)                            # MXU operands only; VPU math stays f32

    # weight-slab blocks: conv1 weight occupies the first cp rows, then 11 blocks of 128 rows:
    #   0:W2 1:W3 2:W4 3:P1 4:P2 5:P3 6:L1 7:L2 8:L3 9:L4 10:L5   (all bf16, zero padded)
    def wblk(i):
        return wslab_ref[pl.ds(cp + i * 128, 128), :]

    def brow(i):                                         # [1,128] f32 bias row
        return bslab_ref[pl.ds(i, 1), :]

    # node validity (1.0 = node alive); padded rows of member are all-zero
    valid = jnp.sum(member, axis=1, keepdims=True)       # [n,1]

    # tie-break mask (j < i), hoisted out of the three pools
    row_i = jax.lax.broadcasted_iota(jnp.int32, (n, n), 0)
    col_j = jax.lax.broadcasted_iota(jnp.int32, (n, n), 1)
    tri = col_j < row_i                                  # bool [n,n]

    def gcn_relu(x, w, b, valid):
        # PyG GCNConv (source->target flow):  D^-1/2 (A + I) D^-1/2 X W + b
        # adj is never filtered after pooling: removed nodes have zero feature rows, are
        # excluded from the degree via `valid`, and their output rows are re-masked below.
        mv = bf(member * valid)                                          # [n,bp], 0/1
        deg = jnp.sum(jnp.dot(adj, mv, preferred_element_type=jnp.float32),
                      axis=1, keepdims=True) + 1.0                       # valid in-degree + self loop
        dinv = jax.lax.rsqrt(deg)
        xs = dinv * x
        ax = jnp.dot(adj, bf(xs), preferred_element_type=jnp.float32)    # neighbor aggregation
        hx = dinv * ax + (dinv * dinv) * x                               # analytic self loop
        h = jnp.dot(bf(hx), w, preferred_element_type=jnp.float32) + b
        return jnp.maximum(h, 0.0) * valid

    def topk_pool(x, valid, pblk):
        # score = tanh(x . p / ||p||);  p pre-normalized, stored in column 0 of pblk (bf16)
        score = jnp.tanh(jnp.dot(bf(x), pblk,
                                 preferred_element_type=jnp.float32)[:, 0:1])   # [n,1]
        score_m = jnp.where(valid > 0.0, score, neg)
        s_col = jnp.broadcast_to(score_m, (n, n))                        # [i,j] = score_m[i]
        s_row = s_col.T                                                  # [i,j] = score_m[j]
        higher = ((s_row > s_col) | ((s_row == s_col) & tri)).astype(jnp.float32)
        # per-graph descending rank via the idle MXU ([n,n]x[n,bp]) instead of an [n,n]
        # resident same-graph mask; per-graph valid-node counts via tiny [n,bp] reductions.
        rank = jnp.sum(member * jnp.dot(bf(higher), member_bf,
                                        preferred_element_type=jnp.float32),
                       axis=1, keepdims=True)                            # [n,1]
        counts = jnp.sum(member * valid, axis=0, keepdims=True)          # [1,bp]
        n_per = jnp.sum(member * counts, axis=1, keepdims=True)          # [n,1]
        # keep iff rank < ceil(ratio * n_per); for integer rank that is (rank < ratio*n_per)
        # OR (rank < 1) -- avoids an explicit ceil.
        keep = ((valid > 0.0) &
                ((rank < _RATIO * n_per) | (rank < 1.0))).astype(jnp.float32)
        return x * score * keep, keep                                    # x[perm]*tanh(score)[perm]

    x = x_ref[...]
    w1 = wslab_ref[pl.ds(0, cp), :]

    x = gcn_relu(x, w1, brow(0), valid)
    x, valid = topk_pool(x, valid, wblk(3))
    x = gcn_relu(x, wblk(0), brow(1), valid)
    x, valid = topk_pool(x, valid, wblk(4))
    x = gcn_relu(x, wblk(1), brow(2), valid)
    x, valid = topk_pool(x, valid, wblk(5))
    x = gcn_relu(x, wblk(2), brow(3), valid)                             # [n,128], >= 0 post-ReLU

    # global max pool per graph (B tiny & static), assembled fully in registers.
    # x >= 0 post-ReLU, so masked-multiply max == (-inf masking followed by clamp-at-0); empty /
    # padded graph slots yield 0 and are sliced off outside.
    gidx = jax.lax.broadcasted_iota(jnp.int32, (bp, 1), 0)               # [bp,1]
    pooled = jnp.zeros((bp, 128), jnp.float32)
    for g in range(bp):
        mg = member[:, g:g + 1] * valid                                  # [n,1]
        row = jnp.max(x * mg, axis=0, keepdims=True)                     # [1,128]
        pooled = jnp.where(gidx == g, row, pooled)                       # place into row g

    def lin_relu(h, w, b):
        # Linear with eval-mode BatchNorm1d pre-folded into (w, b); bf16 MXU, f32 accumulate.
        y = jnp.dot(bf(h), w, preferred_element_type=jnp.float32) + b
        return jnp.maximum(y, 0.0)

    h = lin_relu(pooled, wblk(6), brow(4))
    h = lin_relu(h, wblk(7), brow(5))
    h = lin_relu(h, wblk(8), brow(6))
    h = lin_relu(h, wblk(9), brow(7))
    # line5 weight lane-padded to 128 output columns (real logit in column 0) so the final
    # store is an unmasked, lane-dense [Bp,128] write.
    o_ref[...] = jnp.dot(bf(h), wblk(10), preferred_element_type=jnp.float32) + brow(8)


# ----------------------------- wrapper -----------------------------

def _fold_bn(params, i):
    """Fold eval-mode BatchNorm1d into the preceding Linear's (w, b)."""
    eps = 1e-5
    scale = params[f'bn{i}_gamma'] / jnp.sqrt(params[f'bn{i}_var'] + eps)
    shift = params[f'bn{i}_beta'] - params[f'bn{i}_mean'] * scale
    w = params[f'line{i}_w'] * scale[None, :]
    b = params[f'line{i}_b'] * scale + shift
    return w, b


@functools.partial(jax.jit, static_argnums=(4,))
def net_forward(x, edge_index, batch, params, num_graphs):
    n, c_in = x.shape
    n_pad = _round_up(n, 128)                 # lane-dense adjacency, tile-aligned transposes
    c_pad = _round_up(max(c_in, 8), 8)
    b_pad = _round_up(num_graphs, 8)

    # A[i,j] = 1 iff edge j -> i : aggregation at target from sources, in-degree normalization
    # (matches PyG GCNConv's default source_to_target flow for directed edge_index too).
    adj = jnp.zeros((n_pad, n_pad), BF16).at[edge_index[1], edge_index[0]].set(1.0)
    member = jnp.zeros((n_pad, b_pad), F32).at[:n, :num_graphs].set(
        (batch[:, None] == jnp.arange(num_graphs)[None, :]).astype(F32))
    x_pad = jnp.zeros((n_pad, c_pad), F32).at[:n, :c_in].set(x)

    # ---- pack all weights into one bf16 slab (zero-padded to 128 lanes / multiples of 8 rows)
    l1w, l1b = _fold_bn(params, 1)
    l2w, l2b = _fold_bn(params, 2)
    l3w, l3b = _fold_bn(params, 3)
    l4w, l4b = _fold_bn(params, 4)

    def normed(name):
        p = params[name]
        return p / jnp.linalg.norm(p)         # fold TopKPooling's 1/||p|| into the score vector

    blk = lambda i: c_pad + i * 128
    wslab = jnp.zeros((c_pad + 11 * 128, 128), F32)
    wslab = wslab.at[0:c_in, 0:32].set(params['conv1_w'])
    wslab = wslab.at[blk(0):blk(0) + 32, 0:64].set(params['conv2_w'])
    wslab = wslab.at[blk(1):blk(1) + 64, 0:128].set(params['conv3_w'])
    wslab = wslab.at[blk(2):blk(2) + 128, 0:128].set(params['conv4_w'])
    wslab = wslab.at[blk(3):blk(3) + 32, 0].set(normed('pool1_p'))
    wslab = wslab.at[blk(4):blk(4) + 64, 0].set(normed('pool2_p'))
    wslab = wslab.at[blk(5):blk(5) + 128, 0].set(normed('pool3_p'))
    wslab = wslab.at[blk(6):blk(6) + 128, 0:64].set(l1w)
    wslab = wslab.at[blk(7):blk(7) + 64, 0:64].set(l2w)
    wslab = wslab.at[blk(8):blk(8) + 64, 0:32].set(l3w)
    wslab = wslab.at[blk(9):blk(9) + 32, 0:16].set(l4w)
    wslab = wslab.at[blk(10):blk(10) + 16, 0:1].set(params['line5_w'])
    wslab = wslab.astype(BF16)

    bslab = jnp.zeros((16, 128), F32)
    bslab = bslab.at[0, 0:32].set(params['conv1_b'])
    bslab = bslab.at[1, 0:64].set(params['conv2_b'])
    bslab = bslab.at[2, 0:128].set(params['conv3_b'])
    bslab = bslab.at[3, 0:128].set(params['conv4_b'])
    bslab = bslab.at[4, 0:64].set(l1b)
    bslab = bslab.at[5, 0:64].set(l2b)
    bslab = bslab.at[6, 0:32].set(l3b)
    bslab = bslab.at[7, 0:16].set(l4b)
    bslab = bslab.at[8, 0:1].set(params['line5_b'])

    # ---- explicit VMEM budget + cost estimate (sized from actual residency)
    bytes_in = (adj.size * 2 + member.size * 4 + x_pad.size * 4 +
                wslab.size * 2 + bslab.size * 4 + b_pad * 128 * 4)
    vmem_limit = int(min(60 * 2 ** 20, max(32 * 2 ** 20, 4 * bytes_in + 16 * 2 ** 20)))
    flops = int(4 * 2 * n_pad * n_pad * (128 + b_pad)      # A@X aggregation + degree matvecs
                + 4 * 2 * n_pad * 128 * 128                 # (A_hat X) @ W
                + 3 * 2 * n_pad * 128 * 128                 # pool score matvecs
                + 3 * 2 * n_pad * n_pad * b_pad             # rank matmuls
                + 5 * 2 * b_pad * 128 * 128)                # MLP head
    cost = pl.CostEstimate(flops=flops, transcendentals=int(7 * n_pad),
                           bytes_accessed=int(bytes_in))

    out = pl.pallas_call(
        _net_kernel,
        out_shape=jax.ShapeDtypeStruct((b_pad, 128), F32),
        in_specs=[_VMEM] * 5,
        out_specs=_VMEM,
        compiler_params=pltpu.CompilerParams(vmem_limit_bytes=vmem_limit),
        cost_estimate=cost,
    )(adj, member, x_pad, wslab, bslab)
    return out[:num_graphs, :1]


# ----------------------------- params / demo -----------------------------

def init_params(key, in_channels):
    keys = iter(jax.random.split(key, 32))

    def dense(k, fin, fout):
        return jax.random.normal(k, (fin, fout), F32) * (1.0 / math.sqrt(fin))

    p = {}
    p['conv1_w'] = dense(next(keys), in_channels, 32); p['conv1_b'] = jnp.zeros((32,), F32)
    p['pool1_p'] = jax.random.normal(next(keys), (32,), F32)
    p['conv2_w'] = dense(next(keys), 32, 64);  p['conv2_b'] = jnp.zeros((64,), F32)
    p['pool2_p'] = jax.random.normal(next(keys), (64,), F32)
    p['conv3_w'] = dense(next(keys), 64, 128); p['conv3_b'] = jnp.zeros((128,), F32)
    p['pool3_p'] = jax.random.normal(next(keys), (128,), F32)
    p['conv4_w'] = dense(next(keys), 128, 128); p['conv4_b'] = jnp.zeros((128,), F32)
    for i, (fin, fout) in enumerate([(128, 64), (64, 64), (64, 32), (32, 16), (16, 1)], start=1):
        p[f'line{i}_w'] = dense(next(keys), fin, fout)
        p[f'line{i}_b'] = jax.random.normal(next(keys), (fout,), F32) * 0.01
    for i, f in enumerate([64, 64, 32, 16], start=1):
        p[f'bn{i}_gamma'] = jnp.ones((f,), F32)
        p[f'bn{i}_beta'] = jnp.zeros((f,), F32)
        p[f'bn{i}_mean'] = jnp.zeros((f,), F32)   # BatchNorm1d in eval mode (running stats)
        p[f'bn{i}_var'] = jnp.ones((f,), F32)
    return p


if __name__ == "__main__":
    key = jax.random.PRNGKey(0)
    kx, kp = jax.random.split(key)

    num_graphs = 2
    nodes_per_graph = 20
    in_channels = 4
    n = num_graphs * nodes_per_graph

    x = jax.random.normal(kx, (n, in_channels), F32)

    # deterministic ring graph (undirected) inside each graph
    srcs, dsts = [], []
    for g in range(num_graphs):
        off = g * nodes_per_graph
        for i in range(nodes_per_graph):
            a, b = off + i, off + (i + 1) % nodes_per_graph
            srcs += [a, b]
            dsts += [b, a]
    edge_index = jnp.array([srcs, dsts], dtype=jnp.int32)                         # [2, 80]
    batch = jnp.repeat(jnp.arange(num_graphs, dtype=jnp.int32), nodes_per_graph)  # [40]

    params = init_params(kp, in_channels)

    out = net_forward(x, edge_index, batch, params, num_graphs)
    out = jax.block_until_ready(out)
    assert out.shape == (num_graphs, 1) and out.dtype == F32
    assert bool(jnp.all(jnp.isfinite(out)))
    print("KERNEL_OK")
</pallas_src>

<mosaic_0001>
module attributes {stable_mosaic.version = 11 : i64} {
  func.func @_net_kernel(%arg0: memref<128x128xbf16, #tpu.memory_space<vmem>>, %arg1: memref<128x8xf32, #tpu.memory_space<vmem>>, %arg2: memref<128x8xf32, #tpu.memory_space<vmem>>, %arg3: memref<1416x128xbf16, #tpu.memory_space<vmem>>, %arg4: memref<16x128xf32, #tpu.memory_space<vmem>>, %arg5: memref<8x128xf32, #tpu.memory_space<vmem>>) attributes {dimension_semantics = [], scalar_prefetch = 0 : i64, scratch_operands = 0 : i64, tpu.core_type = #tpu.core_type<tc>} {
    %c0 = arith.constant 0 : index
    %c0_0 = arith.constant 0 : index
    %0 = vector.load %arg0[%c0, %c0_0] : memref<128x128xbf16, #tpu.memory_space<vmem>>, vector<128x128xbf16>
    %c0_1 = arith.constant 0 : index
    %c0_2 = arith.constant 0 : index
    %1 = vector.load %arg1[%c0_1, %c0_2] : memref<128x8xf32, #tpu.memory_space<vmem>>, vector<128x8xf32>
    %2 = arith.truncf %1 : vector<128x8xf32> to vector<128x8xbf16>
    %cst = arith.constant dense<0.000000e+00> : vector<128xf32>
    %3 = vector.multi_reduction <add>, %1, %cst [1] : vector<128x8xf32> to vector<128xf32>
    %4 = vector.shape_cast %3 : vector<128xf32> to vector<128x1xf32>
    %5 = tpu.iota {dimensions = array<i32: 0>} : vector<128x128xi32>
    %6 = tpu.iota {dimensions = array<i32: 1>} : vector<128x128xi32>
    %7 = arith.cmpi slt, %6, %5 : vector<128x128xi32>
    %c0_3 = arith.constant 0 : index
    %c0_4 = arith.constant 0 : index
    %8 = vector.load %arg2[%c0_3, %c0_4] : memref<128x8xf32, #tpu.memory_space<vmem>>, vector<128x8xf32>
    %c0_5 = arith.constant 0 : index
    %c0_6 = arith.constant 0 : index
    %9 = vector.load %arg3[%c0_5, %c0_6] : memref<1416x128xbf16, #tpu.memory_space<vmem>>, vector<8x128xbf16>
    %c0_7 = arith.constant 0 : index
    %c0_8 = arith.constant 0 : index
    %10 = vector.load %arg4[%c0_7, %c0_8] : memref<16x128xf32, #tpu.memory_space<vmem>>, vector<1x128xf32>
    %11 = vector.broadcast %4 : vector<128x1xf32> to vector<128x8xf32>
    %12 = arith.mulf %1, %11 : vector<128x8xf32>
    %13 = arith.truncf %12 : vector<128x8xf32> to vector<128x8xbf16>
    %cst_9 = arith.constant dense<0.000000e+00> : vector<128x8xf32>
    %14 = tpu.matmul %0, %13, %cst_9 {dimension_numbers = #tpu.dot_dimension_numbers<[1], [0], [0], [1], [0, 0, 1, 1], [], []>} : vector<128x128xbf16>, vector<128x8xbf16>, vector<128x8xf32> -> vector<128x8xf32>
    %cst_10 = arith.constant dense<0.000000e+00> : vector<128xf32>
    %15 = vector.multi_reduction <add>, %14, %cst_10 [1] : vector<128x8xf32> to vector<128xf32>
    %16 = vector.shape_cast %15 : vector<128xf32> to vector<128x1xf32>
    %cst_11 = arith.constant 1.000000e+00 : f32
    %17 = vector.broadcast %cst_11 : f32 to vector<128x1xf32>
    %18 = arith.addf %16, %17 : vector<128x1xf32>
    %19 = math.rsqrt %18 : vector<128x1xf32>
    %20 = vector.broadcast %19 : vector<128x1xf32> to vector<128x8xf32>
    %21 = arith.mulf %20, %8 : vector<128x8xf32>
    %22 = arith.truncf %21 : vector<128x8xf32> to vector<128x8xbf16>
    %cst_12 = arith.constant dense<0.000000e+00> : vector<128x8xf32>
    %23 = tpu.matmul %0, %22, %cst_12 {dimension_numbers = #tpu.dot_dimension_numbers<[1], [0], [0], [1], [0, 0, 1, 1], [], []>} : vector<128x128xbf16>, vector<128x8xbf16>, vector<128x8xf32> -> vector<128x8xf32>
    %24 = vector.broadcast %19 : vector<128x1xf32> to vector<128x8xf32>
    %25 = arith.mulf %24, %23 : vector<128x8xf32>
    %26 = arith.mulf %19, %19 : vector<128x1xf32>
    %27 = vector.broadcast %26 : vector<128x1xf32> to vector<128x8xf32>
    %28 = arith.mulf %27, %8 : vector<128x8xf32>
    %29 = arith.addf %25, %28 : vector<128x8xf32>
    %30 = arith.truncf %29 : vector<128x8xf32> to vector<128x8xbf16>
    %cst_13 = arith.constant dense<0.000000e+00> : vector<128x128xf32>
    %31 = tpu.matmul %30, %9, %cst_13 {dimension_numbers = #tpu.dot_dimension_numbers<[1], [0], [0], [1], [0, 0, 1, 1], [], []>} : vector<128x8xbf16>, vector<8x128xbf16>, vector<128x128xf32> -> vector<128x128xf32>
    %32 = vector.broadcast %10 : vector<1x128xf32> to vector<128x128xf32>
    %33 = arith.addf %31, %32 : vector<128x128xf32>
    %cst_14 = arith.constant 0.000000e+00 : f32
    %34 = vector.broadcast %cst_14 : f32 to vector<128x128xf32>
    %35 = arith.maximumf %33, %34 : vector<128x128xf32>
    %36 = vector.broadcast %4 : vector<128x1xf32> to vector<128x128xf32>
    %37 = arith.mulf %35, %36 : vector<128x128xf32>
    %c392 = arith.constant 392 : index
    %c0_15 = arith.constant 0 : index
    %38 = vector.load %arg3[%c392, %c0_15] : memref<1416x128xbf16, #tpu.memory_space<vmem>>, vector<128x128xbf16>
    %39 = arith.truncf %37 : vector<128x128xf32> to vector<128x128xbf16>
    %cst_16 = arith.constant dense<0.000000e+00> : vector<128x128xf32>
    %40 = tpu.matmul %39, %38, %cst_16 {dimension_numbers = #tpu.dot_dimension_numbers<[1], [0], [0], [1], [0, 0, 1, 1], [], []>} : vector<128x128xbf16>, vector<128x128xbf16>, vector<128x128xf32> -> vector<128x128xf32>
    %41 = vector.extract_strided_slice %40 {offsets = [0, 0], sizes = [128, 1], strides = [1, 1]} : vector<128x128xf32> to vector<128x1xf32>
    %42 = math.tanh %41 : vector<128x1xf32>
    %cst_17 = arith.constant 0.000000e+00 : f32
    %43 = vector.broadcast %cst_17 : f32 to vector<128x1xf32>
    %44 = arith.cmpf ogt, %4, %43 : vector<128x1xf32>
    %cst_18 = arith.constant -1.000000e+30 : f32
    %45 = vector.broadcast %cst_18 : f32 to vector<128x1xf32>
    %46 = arith.select %44, %42, %45 : vector<128x1xi1>, vector<128x1xf32>
    %47 = vector.shape_cast %46 : vector<128x1xf32> to vector<128x1xf32>
    %48 = vector.broadcast %47 : vector<128x1xf32> to vector<128x128xf32>
    %49 = tpu.transpose %48, [1, 0] : vector<128x128xf32> -> vector<128x128xf32>
    %50 = arith.cmpf ogt, %49, %48 : vector<128x128xf32>
    %51 = arith.cmpf oeq, %49, %48 : vector<128x128xf32>
    %52 = arith.andi %51, %7 : vector<128x128xi1>
    %53 = arith.ori %50, %52 : vector<128x128xi1>
    %54 = arith.extui %53 : vector<128x128xi1> to vector<128x128xi32>
    %55 = arith.sitofp %54 : vector<128x128xi32> to vector<128x128xf32>
    %56 = arith.truncf %55 : vector<128x128xf32> to vector<128x128xbf16>
    %cst_19 = arith.constant dense<0.000000e+00> : vector<128x8xf32>
    %57 = tpu.matmul %56, %2, %cst_19 {dimension_numbers = #tpu.dot_dimension_numbers<[1], [0], [0], [1], [0, 0, 1, 1], [], []>} : vector<128x128xbf16>, vector<128x8xbf16>, vector<128x8xf32> -> vector<128x8xf32>
    %58 = arith.mulf %1, %57 : vector<128x8xf32>
    %cst_20 = arith.constant dense<0.000000e+00> : vector<128xf32>
    %59 = vector.multi_reduction <add>, %58, %cst_20 [1] : vector<128x8xf32> to vector<128xf32>
    %60 = vector.shape_cast %59 : vector<128xf32> to vector<128x1xf32>
    %61 = vector.broadcast %4 : vector<128x1xf32> to vector<128x8xf32>
    %62 = arith.mulf %1, %61 : vector<128x8xf32>
    %cst_21 = arith.constant dense<0.000000e+00> : vector<8xf32>
    %63 = vector.multi_reduction <add>, %62, %cst_21 [0] : vector<128x8xf32> to vector<8xf32>
    %64 = vector.shape_cast %63 : vector<8xf32> to vector<1x8xf32>
    %65 = vector.broadcast %64 : vector<1x8xf32> to vector<128x8xf32>
    %66 = arith.mulf %1, %65 : vector<128x8xf32>
    %cst_22 = arith.constant dense<0.000000e+00> : vector<128xf32>
    %67 = vector.multi_reduction <add>, %66, %cst_22 [1] : vector<128x8xf32> to vector<128xf32>
    %68 = vector.shape_cast %67 : vector<128xf32> to vector<128x1xf32>
    %cst_23 = arith.constant 0.000000e+00 : f32
    %69 = vector.broadcast %cst_23 : f32 to vector<128x1xf32>
    %70 = arith.cmpf ogt, %4, %69 : vector<128x1xf32>
    %cst_24 = arith.constant 0.899999976 : f32
    %71 = vector.broadcast %cst_24 : f32 to vector<128x1xf32>
    %72 = arith.mulf %71, %68 : vector<128x1xf32>
    %73 = arith.cmpf olt, %60, %72 : vector<128x1xf32>
    %cst_25 = arith.constant 1.000000e+00 : f32
    %74 = vector.broadcast %cst_25 : f32 to vector<128x1xf32>
    %75 = arith.cmpf olt, %60, %74 : vector<128x1xf32>
    %76 = arith.ori %73, %75 : vector<128x1xi1>
    %77 = arith.andi %70, %76 : vector<128x1xi1>
    %78 = arith.extui %77 : vector<128x1xi1> to vector<128x1xi32>
    %79 = arith.sitofp %78 : vector<128x1xi32> to vector<128x1xf32>
    %80 = vector.broadcast %42 : vector<128x1xf32> to vector<128x128xf32>
    %81 = arith.mulf %37, %80 : vector<128x128xf32>
    %82 = vector.broadcast %79 : vector<128x1xf32> to vector<128x128xf32>
    %83 = arith.mulf %81, %82 : vector<128x128xf32>
    %c8 = arith.constant 8 : index
    %c0_26 = arith.constant 0 : index
    %84 = vector.load %arg3[%c8, %c0_26] : memref<1416x128xbf16, #tpu.memory_space<vmem>>, vector<128x128xbf16>
    %c1 = arith.constant 1 : index
    %c0_27 = arith.constant 0 : index
    %85 = vector.load %arg4[%c1, %c0_27] : memref<16x128xf32, #tpu.memory_space<vmem>>, vector<1x128xf32>
    %86 = vector.broadcast %79 : vector<128x1xf32> to vector<128x8xf32>
    %87 = arith.mulf %1, %86 : vector<128x8xf32>
    %88 = arith.truncf %87 : vector<128x8xf32> to vector<128x8xbf16>
    %cst_28 = arith.constant dense<0.000000e+00> : vector<128x8xf32>
    %89 = tpu.matmul %0, %88, %cst_28 {dimension_numbers = #tpu.dot_dimension_numbers<[1], [0], [0], [1], [0, 0, 1, 1], [], []>} : vector<128x128xbf16>, vector<128x8xbf16>, vector<128x8xf32> -> vector<128x8xf32>
    %cst_29 = arith.constant dense<0.000000e+00> : vector<128xf32>
    %90 = vector.multi_reduction <add>, %89, %cst_29 [1] : vector<128x8xf32> to vector<128xf32>
    %91 = vector.shape_cast %90 : vector<128xf32> to vector<128x1xf32>
    %cst_30 = arith.constant 1.000000e+00 : f32
    %92 = vector.broadcast %cst_30 : f32 to vector<128x1xf32>
    %93 = arith.addf %91, %92 : vector<128x1xf32>
    %94 = math.rsqrt %93 : vector<128x1xf32>
    %95 = vector.broadcast %94 : vector<128x1xf32> to vector<128x128xf32>
    %96 = arith.mulf %95, %83 : vector<128x128xf32>
    %97 = arith.truncf %96 : vector<128x128xf32> to vector<128x128xbf16>
    %cst_31 = arith.constant dense<0.000000e+00> : vector<128x128xf32>
    %98 = tpu.matmul %0, %97, %cst_31 {dimension_numbers = #tpu.dot_dimension_numbers<[1], [0], [0], [1], [0, 0, 1, 1], [], []>} : vector<128x128xbf16>, vector<128x128xbf16>, vector<128x128xf32> -> vector<128x128xf32>
    %99 = vector.broadcast %94 : vector<128x1xf32> to vector<128x128xf32>
    %100 = arith.mulf %99, %98 : vector<128x128xf32>
    %101 = arith.mulf %94, %94 : vector<128x1xf32>
    %102 = vector.broadcast %101 : vector<128x1xf32> to vector<128x128xf32>
    %103 = arith.mulf %102, %83 : vector<128x128xf32>
    %104 = arith.addf %100, %103 : vector<128x128xf32>
    %105 = arith.truncf %104 : vector<128x128xf32> to vector<128x128xbf16>
    %cst_32 = arith.constant dense<0.000000e+00> : vector<128x128xf32>
    %106 = tpu.matmul %105, %84, %cst_32 {dimension_numbers = #tpu.dot_dimension_numbers<[1], [0], [0], [1], [0, 0, 1, 1], [], []>} : vector<128x128xbf16>, vector<128x128xbf16>, vector<128x128xf32> -> vector<128x128xf32>
    %107 = vector.broadcast %85 : vector<1x128xf32> to vector<128x128xf32>
    %108 = arith.addf %106, %107 : vector<128x128xf32>
    %cst_33 = arith.constant 0.000000e+00 : f32
    %109 = vector.broadcast %cst_33 : f32 to vector<128x128xf32>
    %110 = arith.maximumf %108, %109 : vector<128x128xf32>
    %111 = vector.broadcast %79 : vector<128x1xf32> to vector<128x128xf32>
    %112 = arith.mulf %110, %111 : vector<128x128xf32>
    %c520 = arith.constant 520 : index
    %c0_34 = arith.constant 0 : index
    %113 = vector.load %arg3[%c520, %c0_34] : memref<1416x128xbf16, #tpu.memory_space<vmem>>, vector<128x128xbf16>
    %114 = arith.truncf %112 : vector<128x128xf32> to vector<128x128xbf16>
    %cst_35 = arith.constant dense<0.000000e+00> : vector<128x128xf32>
    %115 = tpu.matmul %114, %113, %cst_35 {dimension_numbers = #tpu.dot_dimension_numbers<[1], [0], [0], [1], [0, 0, 1, 1], [], []>} : vector<128x128xbf16>, vector<128x128xbf16>, vector<128x128xf32> -> vector<128x128xf32>
    %116 = vector.extract_strided_slice %115 {offsets = [0, 0], sizes = [128, 1], strides = [1, 1]} : vector<128x128xf32> to vector<128x1xf32>
    %117 = math.tanh %116 : vector<128x1xf32>
    %cst_36 = arith.constant 0.000000e+00 : f32
    %118 = vector.broadcast %cst_36 : f32 to vector<128x1xf32>
    %119 = arith.cmpf ogt, %79, %118 : vector<128x1xf32>
    %cst_37 = arith.constant -1.000000e+30 : f32
    %120 = vector.broadcast %cst_37 : f32 to vector<128x1xf32>
    %121 = arith.select %119, %117, %120 : vector<128x1xi1>, vector<128x1xf32>
    %122 = vector.shape_cast %121 : vector<128x1xf32> to vector<128x1xf32>
    %123 = vector.broadcast %122 : vector<128x1xf32> to vector<128x128xf32>
    %124 = tpu.transpose %123, [1, 0] : vector<128x128xf32> -> vector<128x128xf32>
    %125 = arith.cmpf ogt, %124, %123 : vector<128x128xf32>
    %126 = arith.cmpf oeq, %124, %123 : vector<128x128xf32>
    %127 = arith.andi %126, %7 : vector<128x128xi1>
    %128 = arith.ori %125, %127 : vector<128x128xi1>
    %129 = arith.extui %128 : vector<128x128xi1> to vector<128x128xi32>
    %130 = arith.sitofp %129 : vector<128x128xi32> to vector<128x128xf32>
    %131 = arith.truncf %130 : vector<128x128xf32> to vector<128x128xbf16>
    %cst_38 = arith.constant dense<0.000000e+00> : vector<128x8xf32>
    %132 = tpu.matmul %131, %2, %cst_38 {dimension_numbers = #tpu.dot_dimension_numbers<[1], [0], [0], [1], [0, 0, 1, 1], [], []>} : vector<128x128xbf16>, vector<128x8xbf16>, vector<128x8xf32> -> vector<128x8xf32>
    %133 = arith.mulf %1, %132 : vector<128x8xf32>
    %cst_39 = arith.constant dense<0.000000e+00> : vector<128xf32>
    %134 = vector.multi_reduction <add>, %133, %cst_39 [1] : vector<128x8xf32> to vector<128xf32>
    %135 = vector.shape_cast %134 : vector<128xf32> to vector<128x1xf32>
    %136 = vector.broadcast %79 : vector<128x1xf32> to vector<128x8xf32>
    %137 = arith.mulf %1, %136 : vector<128x8xf32>
    %cst_40 = arith.constant dense<0.000000e+00> : vector<8xf32>
    %138 = vector.multi_reduction <add>, %137, %cst_40 [0] : vector<128x8xf32> to vector<8xf32>
    %139 = vector.shape_cast %138 : vector<8xf32> to vector<1x8xf32>
    %140 = vector.broadcast %139 : vector<1x8xf32> to vector<128x8xf32>
    %141 = arith.mulf %1, %140 : vector<128x8xf32>
    %cst_41 = arith.constant dense<0.000000e+00> : vector<128xf32>
    %142 = vector.multi_reduction <add>, %141, %cst_41 [1] : vector<128x8xf32> to vector<128xf32>
    %143 = vector.shape_cast %142 : vector<128xf32> to vector<128x1xf32>
    %cst_42 = arith.constant 0.000000e+00 : f32
    %144 = vector.broadcast %cst_42 : f32 to vector<128x1xf32>
    %145 = arith.cmpf ogt, %79, %144 : vector<128x1xf32>
    %cst_43 = arith.constant 0.899999976 : f32
    %146 = vector.broadcast %cst_43 : f32 to vector<128x1xf32>
    %147 = arith.mulf %146, %143 : vector<128x1xf32>
    %148 = arith.cmpf olt, %135, %147 : vector<128x1xf32>
    %cst_44 = arith.constant 1.000000e+00 : f32
    %149 = vector.broadcast %cst_44 : f32 to vector<128x1xf32>
    %150 = arith.cmpf olt, %135, %149 : vector<128x1xf32>
    %151 = arith.ori %148, %150 : vector<128x1xi1>
    %152 = arith.andi %145, %151 : vector<128x1xi1>
    %153 = arith.extui %152 : vector<128x1xi1> to vector<128x1xi32>
    %154 = arith.sitofp %153 : vector<128x1xi32> to vector<128x1xf32>
    %155 = vector.broadcast %117 : vector<128x1xf32> to vector<128x128xf32>
    %156 = arith.mulf %112, %155 : vector<128x128xf32>
    %157 = vector.broadcast %154 : vector<128x1xf32> to vector<128x128xf32>
    %158 = arith.mulf %156, %157 : vector<128x128xf32>
    %c136 = arith.constant 136 : index
    %c0_45 = arith.constant 0 : index
    %159 = vector.load %arg3[%c136, %c0_45] : memref<1416x128xbf16, #tpu.memory_space<vmem>>, vector<128x128xbf16>
    %c2 = arith.constant 2 : index
    %c0_46 = arith.constant 0 : index
    %160 = vector.load %arg4[%c2, %c0_46] : memref<16x128xf32, #tpu.memory_space<vmem>>, vector<1x128xf32>
    %161 = vector.broadcast %154 : vector<128x1xf32> to vector<128x8xf32>
    %162 = arith.mulf %1, %161 : vector<128x8xf32>
    %163 = arith.truncf %162 : vector<128x8xf32> to vector<128x8xbf16>
    %cst_47 = arith.constant dense<0.000000e+00> : vector<128x8xf32>
    %164 = tpu.matmul %0, %163, %cst_47 {dimension_numbers = #tpu.dot_dimension_numbers<[1], [0], [0], [1], [0, 0, 1, 1], [], []>} : vector<128x128xbf16>, vector<128x8xbf16>, vector<128x8xf32> -> vector<128x8xf32>
    %cst_48 = arith.constant dense<0.000000e+00> : vector<128xf32>
    %165 = vector.multi_reduction <add>, %164, %cst_48 [1] : vector<128x8xf32> to vector<128xf32>
    %166 = vector.shape_cast %165 : vector<128xf32> to vector<128x1xf32>
    %cst_49 = arith.constant 1.000000e+00 : f32
    %167 = vector.broadcast %cst_49 : f32 to vector<128x1xf32>
    %168 = arith.addf %166, %167 : vector<128x1xf32>
    %169 = math.rsqrt %168 : vector<128x1xf32>
    %170 = vector.broadcast %169 : vector<128x1xf32> to vector<128x128xf32>
    %171 = arith.mulf %170, %158 : vector<128x128xf32>
    %172 = arith.truncf %171 : vector<128x128xf32> to vector<128x128xbf16>
    %cst_50 = arith.constant dense<0.000000e+00> : vector<128x128xf32>
    %173 = tpu.matmul %0, %172, %cst_50 {dimension_numbers = #tpu.dot_dimension_numbers<[1], [0], [0], [1], [0, 0, 1, 1], [], []>} : vector<128x128xbf16>, vector<128x128xbf16>, vector<128x128xf32> -> vector<128x128xf32>
    %174 = vector.broadcast %169 : vector<128x1xf32> to vector<128x128xf32>
    %175 = arith.mulf %174, %173 : vector<128x128xf32>
    %176 = arith.mulf %169, %169 : vector<128x1xf32>
    %177 = vector.broadcast %176 : vector<128x1xf32> to vector<128x128xf32>
    %178 = arith.mulf %177, %158 : vector<128x128xf32>
    %179 = arith.addf %175, %178 : vector<128x128xf32>
    %180 = arith.truncf %179 : vector<128x128xf32> to vector<128x128xbf16>
    %cst_51 = arith.constant dense<0.000000e+00> : vector<128x128xf32>
    %181 = tpu.matmul %180, %159, %cst_51 {dimension_numbers = #tpu.dot_dimension_numbers<[1], [0], [0], [1], [0, 0, 1, 1], [], []>} : vector<128x128xbf16>, vector<128x128xbf16>, vector<128x128xf32> -> vector<128x128xf32>
    %182 = vector.broadcast %160 : vector<1x128xf32> to vector<128x128xf32>
    %183 = arith.addf %181, %182 : vector<128x128xf32>
    %cst_52 = arith.constant 0.000000e+00 : f32
    %184 = vector.broadcast %cst_52 : f32 to vector<128x128xf32>
    %185 = arith.maximumf %183, %184 : vector<128x128xf32>
    %186 = vector.broadcast %154 : vector<128x1xf32> to vector<128x128xf32>
    %187 = arith.mulf %185, %186 : vector<128x128xf32>
    %c648 = arith.constant 648 : index
    %c0_53 = arith.constant 0 : index
    %188 = vector.load %arg3[%c648, %c0_53] : memref<1416x128xbf16, #tpu.memory_space<vmem>>, vector<128x128xbf16>
    %189 = arith.truncf %187 : vector<128x128xf32> to vector<128x128xbf16>
    %cst_54 = arith.constant dense<0.000000e+00> : vector<128x128xf32>
    %190 = tpu.matmul %189, %188, %cst_54 {dimension_numbers = #tpu.dot_dimension_numbers<[1], [0], [0], [1], [0, 0, 1, 1], [], []>} : vector<128x128xbf16>, vector<128x128xbf16>, vector<128x128xf32> -> vector<128x128xf32>
    %191 = vector.extract_strided_slice %190 {offsets = [0, 0], sizes = [128, 1], strides = [1, 1]} : vector<128x128xf32> to vector<128x1xf32>
    %192 = math.tanh %191 : vector<128x1xf32>
    %cst_55 = arith.constant 0.000000e+00 : f32
    %193 = vector.broadcast %cst_55 : f32 to vector<128x1xf32>
    %194 = arith.cmpf ogt, %154, %193 : vector<128x1xf32>
    %cst_56 = arith.constant -1.000000e+30 : f32
    %195 = vector.broadcast %cst_56 : f32 to vector<128x1xf32>
    %196 = arith.select %194, %192, %195 : vector<128x1xi1>, vector<128x1xf32>
    %197 = vector.shape_cast %196 : vector<128x1xf32> to vector<128x1xf32>
    %198 = vector.broadcast %197 : vector<128x1xf32> to vector<128x128xf32>
    %199 = tpu.transpose %198, [1, 0] : vector<128x128xf32> -> vector<128x128xf32>
    %200 = arith.cmpf ogt, %199, %198 : vector<128x128xf32>
    %201 = arith.cmpf oeq, %199, %198 : vector<128x128xf32>
    %202 = arith.andi %201, %7 : vector<128x128xi1>
    %203 = arith.ori %200, %202 : vector<128x128xi1>
    %204 = arith.extui %203 : vector<128x128xi1> to vector<128x128xi32>
    %205 = arith.sitofp %204 : vector<128x128xi32> to vector<128x128xf32>
    %206 = arith.truncf %205 : vector<128x128xf32> to vector<128x128xbf16>
    %cst_57 = arith.constant dense<0.000000e+00> : vector<128x8xf32>
    %207 = tpu.matmul %206, %2, %cst_57 {dimension_numbers = #tpu.dot_dimension_numbers<[1], [0], [0], [1], [0, 0, 1, 1], [], []>} : vector<128x128xbf16>, vector<128x8xbf16>, vector<128x8xf32> -> vector<128x8xf32>
    %208 = arith.mulf %1, %207 : vector<128x8xf32>
    %cst_58 = arith.constant dense<0.000000e+00> : vector<128xf32>
    %209 = vector.multi_reduction <add>, %208, %cst_58 [1] : vector<128x8xf32> to vector<128xf32>
    %210 = vector.shape_cast %209 : vector<128xf32> to vector<128x1xf32>
    %211 = vector.broadcast %154 : vector<128x1xf32> to vector<128x8xf32>
    %212 = arith.mulf %1, %211 : vector<128x8xf32>
    %cst_59 = arith.constant dense<0.000000e+00> : vector<8xf32>
    %213 = vector.multi_reduction <add>, %212, %cst_59 [0] : vector<128x8xf32> to vector<8xf32>
    %214 = vector.shape_cast %213 : vector<8xf32> to vector<1x8xf32>
    %215 = vector.broadcast %214 : vector<1x8xf32> to vector<128x8xf32>
    %216 = arith.mulf %1, %215 : vector<128x8xf32>
    %cst_60 = arith.constant dense<0.000000e+00> : vector<128xf32>
    %217 = vector.multi_reduction <add>, %216, %cst_60 [1] : vector<128x8xf32> to vector<128xf32>
    %218 = vector.shape_cast %217 : vector<128xf32> to vector<128x1xf32>
    %cst_61 = arith.constant 0.000000e+00 : f32
    %219 = vector.broadcast %cst_61 : f32 to vector<128x1xf32>
    %220 = arith.cmpf ogt, %154, %219 : vector<128x1xf32>
    %cst_62 = arith.constant 0.899999976 : f32
    %221 = vector.broadcast %cst_62 : f32 to vector<128x1xf32>
    %222 = arith.mulf %221, %218 : vector<128x1xf32>
    %223 = arith.cmpf olt, %210, %222 : vector<128x1xf32>
    %cst_63 = arith.constant 1.000000e+00 : f32
    %224 = vector.broadcast %cst_63 : f32 to vector<128x1xf32>
    %225 = arith.cmpf olt, %210, %224 : vector<128x1xf32>
    %226 = arith.ori %223, %225 : vector<128x1xi1>
    %227 = arith.andi %220, %226 : vector<128x1xi1>
    %228 = arith.extui %227 : vector<128x1xi1> to vector<128x1xi32>
    %229 = arith.sitofp %228 : vector<128x1xi32> to vector<128x1xf32>
    %230 = vector.broadcast %192 : vector<128x1xf32> to vector<128x128xf32>
    %231 = arith.mulf %187, %230 : vector<128x128xf32>
    %232 = vector.broadcast %229 : vector<128x1xf32> to vector<128x128xf32>
    %233 = arith.mulf %231, %232 : vector<128x128xf32>
    %c264 = arith.constant 264 : index
    %c0_64 = arith.constant 0 : index
    %234 = vector.load %arg3[%c264, %c0_64] : memref<1416x128xbf16, #tpu.memory_space<vmem>>, vector<128x128xbf16>
    %c3 = arith.constant 3 : index
    %c0_65 = arith.constant 0 : index
    %235 = vector.load %arg4[%c3, %c0_65] : memref<16x128xf32, #tpu.memory_space<vmem>>, vector<1x128xf32>
    %236 = vector.broadcast %229 : vector<128x1xf32> to vector<128x8xf32>
    %237 = arith.mulf %1, %236 : vector<128x8xf32>
    %238 = arith.truncf %237 : vector<128x8xf32> to vector<128x8xbf16>
    %cst_66 = arith.constant dense<0.000000e+00> : vector<128x8xf32>
    %239 = tpu.matmul %0, %238, %cst_66 {dimension_numbers = #tpu.dot_dimension_numbers<[1], [0], [0], [1], [0, 0, 1, 1], [], []>} : vector<128x128xbf16>, vector<128x8xbf16>, vector<128x8xf32> -> vector<128x8xf32>
    %cst_67 = arith.constant dense<0.000000e+00> : vector<128xf32>
    %240 = vector.multi_reduction <add>, %239, %cst_67 [1] : vector<128x8xf32> to vector<128xf32>
    %241 = vector.shape_cast %240 : vector<128xf32> to vector<128x1xf32>
    %cst_68 = arith.constant 1.000000e+00 : f32
    %242 = vector.broadcast %cst_68 : f32 to vector<128x1xf32>
    %243 = arith.addf %241, %242 : vector<128x1xf32>
    %244 = math.rsqrt %243 : vector<128x1xf32>
    %245 = vector.broadcast %244 : vector<128x1xf32> to vector<128x128xf32>
    %246 = arith.mulf %245, %233 : vector<128x128xf32>
    %247 = arith.truncf %246 : vector<128x128xf32> to vector<128x128xbf16>
    %cst_69 = arith.constant dense<0.000000e+00> : vector<128x128xf32>
    %248 = tpu.matmul %0, %247, %cst_69 {dimension_numbers = #tpu.dot_dimension_numbers<[1], [0], [0], [1], [0, 0, 1, 1], [], []>} : vector<128x128xbf16>, vector<128x128xbf16>, vector<128x128xf32> -> vector<128x128xf32>
    %249 = vector.broadcast %244 : vector<128x1xf32> to vector<128x128xf32>
    %250 = arith.mulf %249, %248 : vector<128x128xf32>
    %251 = arith.mulf %244, %244 : vector<128x1xf32>
    %252 = vector.broadcast %251 : vector<128x1xf32> to vector<128x128xf32>
    %253 = arith.mulf %252, %233 : vector<128x128xf32>
    %254 = arith.addf %250, %253 : vector<128x128xf32>
    %255 = arith.truncf %254 : vector<128x128xf32> to vector<128x128xbf16>
    %cst_70 = arith.constant dense<0.000000e+00> : vector<128x128xf32>
    %256 = tpu.matmul %255, %234, %cst_70 {dimension_numbers = #tpu.dot_dimension_numbers<[1], [0], [0], [1], [0, 0, 1, 1], [], []>} : vector<128x128xbf16>, vector<128x128xbf16>, vector<128x128xf32> -> vector<128x128xf32>
    %257 = vector.broadcast %235 : vector<1x128xf32> to vector<128x128xf32>
    %258 = arith.addf %256, %257 : vector<128x128xf32>
    %cst_71 = arith.constant 0.000000e+00 : f32
    %259 = vector.broadcast %cst_71 : f32 to vector<128x128xf32>
    %260 = arith.maximumf %258, %259 : vector<128x128xf32>
    %261 = vector.broadcast %229 : vector<128x1xf32> to vector<128x128xf32>
    %262 = arith.mulf %260, %261 : vector<128x128xf32>
    %263 = tpu.iota {dimensions = array<i32: 0>} : vector<8x1xi32>
    %cst_72 = arith.constant 0.000000e+00 : f32
    %264 = vector.broadcast %cst_72 : f32 to vector<8x128xf32>
    %265 = vector.extract_strided_slice %1 {offsets = [0, 0], sizes = [128, 1], strides = [1, 1]} : vector<128x8xf32> to vector<128x1xf32>
    %266 = arith.mulf %265, %229 : vector<128x1xf32>
    %267 = vector.broadcast %266 : vector<128x1xf32> to vector<128x128xf32>
    %268 = arith.mulf %262, %267 : vector<128x128xf32>
    %cst_73 = arith.constant dense<0xFF800000> : vector<128xf32>
    %269 = vector.multi_reduction <maximumf>, %268, %cst_73 [0] : vector<128x128xf32> to vector<128xf32>
    %270 = vector.shape_cast %269 : vector<128xf32> to vector<1x128xf32>
    %c0_i32 = arith.constant 0 : i32
    %271 = vector.broadcast %c0_i32 : i32 to vector<8x1xi32>
    %272 = arith.cmpi eq, %263, %271 : vector<8x1xi32>
    %273 = vector.shape_cast %272 : vector<8x1xi1> to vector<8x1xi1>
    %274 = vector.broadcast %273 : vector<8x1xi1> to vector<8x128xi1>
    %275 = vector.shape_cast %270 : vector<1x128xf32> to vector<1x128xf32>
    %276 = vector.broadcast %275 : vector<1x128xf32> to vector<8x128xf32>
    %277 = arith.select %274, %276, %264 : vector<8x128xi1>, vector<8x128xf32>
    %278 = vector.extract_strided_slice %1 {offsets = [0, 1], sizes = [128, 1], strides = [1, 1]} : vector<128x8xf32> to vector<128x1xf32>
    %279 = arith.mulf %278, %229 : vector<128x1xf32>
    %280 = vector.broadcast %279 : vector<128x1xf32> to vector<128x128xf32>
    %281 = arith.mulf %262, %280 : vector<128x128xf32>
    %cst_74 = arith.constant dense<0xFF800000> : vector<128xf32>
    %282 = vector.multi_reduction <maximumf>, %281, %cst_74 [0] : vector<128x128xf32> to vector<128xf32>
    %283 = vector.shape_cast %282 : vector<128xf32> to vector<1x128xf32>
    %c1_i32 = arith.constant 1 : i32
    %284 = vector.broadcast %c1_i32 : i32 to vector<8x1xi32>
    %285 = arith.cmpi eq, %263, %284 : vector<8x1xi32>
    %286 = vector.shape_cast %285 : vector<8x1xi1> to vector<8x1xi1>
    %287 = vector.broadcast %286 : vector<8x1xi1> to vector<8x128xi1>
    %288 = vector.shape_cast %283 : vector<1x128xf32> to vector<1x128xf32>
    %289 = vector.broadcast %288 : vector<1x128xf32> to vector<8x128xf32>
    %290 = arith.select %287, %289, %277 : vector<8x128xi1>, vector<8x128xf32>
    %291 = vector.extract_strided_slice %1 {offsets = [0, 2], sizes = [128, 1], strides = [1, 1]} : vector<128x8xf32> to vector<128x1xf32>
    %292 = arith.mulf %291, %229 : vector<128x1xf32>
    %293 = vector.broadcast %292 : vector<128x1xf32> to vector<128x128xf32>
    %294 = arith.mulf %262, %293 : vector<128x128xf32>
    %cst_75 = arith.constant dense<0xFF800000> : vector<128xf32>
    %295 = vector.multi_reduction <maximumf>, %294, %cst_75 [0] : vector<128x128xf32> to vector<128xf32>
    %296 = vector.shape_cast %295 : vector<128xf32> to vector<1x128xf32>
    %c2_i32 = arith.constant 2 : i32
    %297 = vector.broadcast %c2_i32 : i32 to vector<8x1xi32>
    %298 = arith.cmpi eq, %263, %297 : vector<8x1xi32>
    %299 = vector.shape_cast %298 : vector<8x1xi1> to vector<8x1xi1>
    %300 = vector.broadcast %299 : vector<8x1xi1> to vector<8x128xi1>
    %301 = vector.shape_cast %296 : vector<1x128xf32> to vector<1x128xf32>
    %302 = vector.broadcast %301 : vector<1x128xf32> to vector<8x128xf32>
    %303 = arith.select %300, %302, %290 : vector<8x128xi1>, vector<8x128xf32>
    %304 = vector.extract_strided_slice %1 {offsets = [0, 3], sizes = [128, 1], strides = [1, 1]} : vector<128x8xf32> to vector<128x1xf32>
    %305 = arith.mulf %304, %229 : vector<128x1xf32>
    %306 = vector.broadcast %305 : vector<128x1xf32> to vector<128x128xf32>
    %307 = arith.mulf %262, %306 : vector<128x128xf32>
    %cst_76 = arith.constant dense<0xFF800000> : vector<128xf32>
    %308 = vector.multi_reduction <maximumf>, %307, %cst_76 [0] : vector<128x128xf32> to vector<128xf32>
    %309 = vector.shape_cast %308 : vector<128xf32> to vector<1x128xf32>
    %c3_i32 = arith.constant 3 : i32
    %310 = vector.broadcast %c3_i32 : i32 to vector<8x1xi32>
    %311 = arith.cmpi eq, %263, %310 : vector<8x1xi32>
    %312 = vector.shape_cast %311 : vector<8x1xi1> to vector<8x1xi1>
    %313 = vector.broadcast %312 : vector<8x1xi1> to vector<8x128xi1>
    %314 = vector.shape_cast %309 : vector<1x128xf32> to vector<1x128xf32>
    %315 = vector.broadcast %314 : vector<1x128xf32> to vector<8x128xf32>
    %316 = arith.select %313, %315, %303 : vector<8x128xi1>, vector<8x128xf32>
    %317 = vector.extract_strided_slice %1 {offsets = [0, 4], sizes = [128, 1], strides = [1, 1]} : vector<128x8xf32> to vector<128x1xf32>
    %318 = arith.mulf %317, %229 : vector<128x1xf32>
    %319 = vector.broadcast %318 : vector<128x1xf32> to vector<128x128xf32>
    %320 = arith.mulf %262, %319 : vector<128x128xf32>
    %cst_77 = arith.constant dense<0xFF800000> : vector<128xf32>
    %321 = vector.multi_reduction <maximumf>, %320, %cst_77 [0] : vector<128x128xf32> to vector<128xf32>
    %322 = vector.shape_cast %321 : vector<128xf32> to vector<1x128xf32>
    %c4_i32 = arith.constant 4 : i32
    %323 = vector.broadcast %c4_i32 : i32 to vector<8x1xi32>
    %324 = arith.cmpi eq, %263, %323 : vector<8x1xi32>
    %325 = vector.shape_cast %324 : vector<8x1xi1> to vector<8x1xi1>
    %326 = vector.broadcast %325 : vector<8x1xi1> to vector<8x128xi1>
    %327 = vector.shape_cast %322 : vector<1x128xf32> to vector<1x128xf32>
    %328 = vector.broadcast %327 : vector<1x128xf32> to vector<8x128xf32>
    %329 = arith.select %326, %328, %316 : vector<8x128xi1>, vector<8x128xf32>
    %330 = vector.extract_strided_slice %1 {offsets = [0, 5], sizes = [128, 1], strides = [1, 1]} : vector<128x8xf32> to vector<128x1xf32>
    %331 = arith.mulf %330, %229 : vector<128x1xf32>
    %332 = vector.broadcast %331 : vector<128x1xf32> to vector<128x128xf32>
    %333 = arith.mulf %262, %332 : vector<128x128xf32>
    %cst_78 = arith.constant dense<0xFF800000> : vector<128xf32>
    %334 = vector.multi_reduction <maximumf>, %333, %cst_78 [0] : vector<128x128xf32> to vector<128xf32>
    %335 = vector.shape_cast %334 : vector<128xf32> to vector<1x128xf32>
    %c5_i32 = arith.constant 5 : i32
    %336 = vector.broadcast %c5_i32 : i32 to vector<8x1xi32>
    %337 = arith.cmpi eq, %263, %336 : vector<8x1xi32>
    %338 = vector.shape_cast %337 : vector<8x1xi1> to vector<8x1xi1>
    %339 = vector.broadcast %338 : vector<8x1xi1> to vector<8x128xi1>
    %340 = vector.shape_cast %335 : vector<1x128xf32> to vector<1x128xf32>
    %341 = vector.broadcast %340 : vector<1x128xf32> to vector<8x128xf32>
    %342 = arith.select %339, %341, %329 : vector<8x128xi1>, vector<8x128xf32>
    %343 = vector.extract_strided_slice %1 {offsets = [0, 6], sizes = [128, 1], strides = [1, 1]} : vector<128x8xf32> to vector<128x1xf32>
    %344 = arith.mulf %343, %229 : vector<128x1xf32>
    %345 = vector.broadcast %344 : vector<128x1xf32> to vector<128x128xf32>
    %346 = arith.mulf %262, %345 : vector<128x128xf32>
    %cst_79 = arith.constant dense<0xFF800000> : vector<128xf32>
    %347 = vector.multi_reduction <maximumf>, %346, %cst_79 [0] : vector<128x128xf32> to vector<128xf32>
    %348 = vector.shape_cast %347 : vector<128xf32> to vector<1x128xf32>
    %c6_i32 = arith.constant 6 : i32
    %349 = vector.broadcast %c6_i32 : i32 to vector<8x1xi32>
    %350 = arith.cmpi eq, %263, %349 : vector<8x1xi32>
    %351 = vector.shape_cast %350 : vector<8x1xi1> to vector<8x1xi1>
    %352 = vector.broadcast %351 : vector<8x1xi1> to vector<8x128xi1>
    %353 = vector.shape_cast %348 : vector<1x128xf32> to vector<1x128xf32>
    %354 = vector.broadcast %353 : vector<1x128xf32> to vector<8x128xf32>
    %355 = arith.select %352, %354, %342 : vector<8x128xi1>, vector<8x128xf32>
    %356 = vector.extract_strided_slice %1 {offsets = [0, 7], sizes = [128, 1], strides = [1, 1]} : vector<128x8xf32> to vector<128x1xf32>
    %357 = arith.mulf %356, %229 : vector<128x1xf32>
    %358 = vector.broadcast %357 : vector<128x1xf32> to vector<128x128xf32>
    %359 = arith.mulf %262, %358 : vector<128x128xf32>
    %cst_80 = arith.constant dense<0xFF800000> : vector<128xf32>
    %360 = vector.multi_reduction <maximumf>, %359, %cst_80 [0] : vector<128x128xf32> to vector<128xf32>
    %361 = vector.shape_cast %360 : vector<128xf32> to vector<1x128xf32>
    %c7_i32 = arith.constant 7 : i32
    %362 = vector.broadcast %c7_i32 : i32 to vector<8x1xi32>
    %363 = arith.cmpi eq, %263, %362 : vector<8x1xi32>
    %364 = vector.shape_cast %363 : vector<8x1xi1> to vector<8x1xi1>
    %365 = vector.broadcast %364 : vector<8x1xi1> to vector<8x128xi1>
    %366 = vector.shape_cast %361 : vector<1x128xf32> to vector<1x128xf32>
    %367 = vector.broadcast %366 : vector<1x128xf32> to vector<8x128xf32>
    %368 = arith.select %365, %367, %355 : vector<8x128xi1>, vector<8x128xf32>
    %c776 = arith.constant 776 : index
    %c0_81 = arith.constant 0 : index
    %369 = vector.load %arg3[%c776, %c0_81] : memref<1416x128xbf16, #tpu.memory_space<vmem>>, vector<128x128xbf16>
    %c4 = arith.constant 4 : index
    %c0_82 = arith.constant 0 : index
    %370 = vector.load %arg4[%c4, %c0_82] : memref<16x128xf32, #tpu.memory_space<vmem>>, vector<1x128xf32>
    %371 = arith.truncf %368 : vector<8x128xf32> to vector<8x128xbf16>
    %cst_83 = arith.constant dense<0.000000e+00> : vector<8x128xf32>
    %372 = tpu.matmul %371, %369, %cst_83 {dimension_numbers = #tpu.dot_dimension_numbers<[1], [0], [0], [1], [0, 0, 1, 1], [], []>} : vector<8x128xbf16>, vector<128x128xbf16>, vector<8x128xf32> -> vector<8x128xf32>
    %373 = vector.broadcast %370 : vector<1x128xf32> to vector<8x128xf32>
    %374 = arith.addf %372, %373 : vector<8x128xf32>
    %cst_84 = arith.constant 0.000000e+00 : f32
    %375 = vector.broadcast %cst_84 : f32 to vector<8x128xf32>
    %376 = arith.maximumf %374, %375 : vector<8x128xf32>
    %c904 = arith.constant 904 : index
    %c0_85 = arith.constant 0 : index
    %377 = vector.load %arg3[%c904, %c0_85] : memref<1416x128xbf16, #tpu.memory_space<vmem>>, vector<128x128xbf16>
    %c5 = arith.constant 5 : index
    %c0_86 = arith.constant 0 : index
    %378 = vector.load %arg4[%c5, %c0_86] : memref<16x128xf32, #tpu.memory_space<vmem>>, vector<1x128xf32>
    %379 = arith.truncf %376 : vector<8x128xf32> to vector<8x128xbf16>
    %cst_87 = arith.constant dense<0.000000e+00> : vector<8x128xf32>
    %380 = tpu.matmul %379, %377, %cst_87 {dimension_numbers = #tpu.dot_dimension_numbers<[1], [0], [0], [1], [0, 0, 1, 1], [], []>} : vector<8x128xbf16>, vector<128x128xbf16>, vector<8x128xf32> -> vector<8x128xf32>
    %381 = vector.broadcast %378 : vector<1x128xf32> to vector<8x128xf32>
    %382 = arith.addf %380, %381 : vector<8x128xf32>
    %cst_88 = arith.constant 0.000000e+00 : f32
    %383 = vector.broadcast %cst_88 : f32 to vector<8x128xf32>
    %384 = arith.maximumf %382, %383 : vector<8x128xf32>
    %c1032 = arith.constant 1032 : index
    %c0_89 = arith.constant 0 : index
    %385 = vector.load %arg3[%c1032, %c0_89] : memref<1416x128xbf16, #tpu.memory_space<vmem>>, vector<128x128xbf16>
    %c6 = arith.constant 6 : index
    %c0_90 = arith.constant 0 : index
    %386 = vector.load %arg4[%c6, %c0_90] : memref<16x128xf32, #tpu.memory_space<vmem>>, vector<1x128xf32>
    %387 = arith.truncf %384 : vector<8x128xf32> to vector<8x128xbf16>
    %cst_91 = arith.constant dense<0.000000e+00> : vector<8x128xf32>
    %388 = tpu.matmul %387, %385, %cst_91 {dimension_numbers = #tpu.dot_dimension_numbers<[1], [0], [0], [1], [0, 0, 1, 1], [], []>} : vector<8x128xbf16>, vector<128x128xbf16>, vector<8x128xf32> -> vector<8x128xf32>
    %389 = vector.broadcast %386 : vector<1x128xf32> to vector<8x128xf32>
    %390 = arith.addf %388, %389 : vector<8x128xf32>
    %cst_92 = arith.constant 0.000000e+00 : f32
    %391 = vector.broadcast %cst_92 : f32 to vector<8x128xf32>
    %392 = arith.maximumf %390, %391 : vector<8x128xf32>
    %c1160 = arith.constant 1160 : index
    %c0_93 = arith.constant 0 : index
    %393 = vector.load %arg3[%c1160, %c0_93] : memref<1416x128xbf16, #tpu.memory_space<vmem>>, vector<128x128xbf16>
    %c7 = arith.constant 7 : index
    %c0_94 = arith.constant 0 : index
    %394 = vector.load %arg4[%c7, %c0_94] : memref<16x128xf32, #tpu.memory_space<vmem>>, vector<1x128xf32>
    %395 = arith.truncf %392 : vector<8x128xf32> to vector<8x128xbf16>
    %cst_95 = arith.constant dense<0.000000e+00> : vector<8x128xf32>
    %396 = tpu.matmul %395, %393, %cst_95 {dimension_numbers = #tpu.dot_dimension_numbers<[1], [0], [0], [1], [0, 0, 1, 1], [], []>} : vector<8x128xbf16>, vector<128x128xbf16>, vector<8x128xf32> -> vector<8x128xf32>
    %397 = vector.broadcast %394 : vector<1x128xf32> to vector<8x128xf32>
    %398 = arith.addf %396, %397 : vector<8x128xf32>
    %cst_96 = arith.constant 0.000000e+00 : f32
    %399 = vector.broadcast %cst_96 : f32 to vector<8x128xf32>
    %400 = arith.maximumf %398, %399 : vector<8x128xf32>
    %401 = arith.truncf %400 : vector<8x128xf32> to vector<8x128xbf16>
    %c1288 = arith.constant 1288 : index
    %c0_97 = arith.constant 0 : index
    %402 = vector.load %arg3[%c1288, %c0_97] : memref<1416x128xbf16, #tpu.memory_space<vmem>>, vector<128x128xbf16>
    %cst_98 = arith.constant dense<0.000000e+00> : vector<8x128xf32>
    %403 = tpu.matmul %401, %402, %cst_98 {dimension_numbers = #tpu.dot_dimension_numbers<[1], [0], [0], [1], [0, 0, 1, 1], [], []>} : vector<8x128xbf16>, vector<128x128xbf16>, vector<8x128xf32> -> vector<8x128xf32>
    %c8_99 = arith.constant 8 : index
    %c0_100 = arith.constant 0 : index
    %404 = vector.load %arg4[%c8_99, %c0_100] : memref<16x128xf32, #tpu.memory_space<vmem>>, vector<1x128xf32>
    %405 = vector.broadcast %404 : vector<1x128xf32> to vector<8x128xf32>
    %406 = arith.addf %403, %405 : vector<8x128xf32>
    %c0_101 = arith.constant 0 : index
    %c0_102 = arith.constant 0 : index
    %407 = vector.load %arg5[%c0_101, %c0_102] : memref<8x128xf32, #tpu.memory_space<vmem>>, vector<8x128xf32>
    tpu.vector_store %arg5[%c0_101, %c0_102], %406 {strides = array<i32>} : memref<8x128xf32, #tpu.memory_space<vmem>>, vector<8x128xf32>,
    return
  }
}

</mosaic_0001>

<llo_original>
// kernel: net_forward.1
$region0: #{net_forward.1}
  #allocation0 [shape = 'u32[]', space=smem, size = 0x4, offset = 0x4, fixed_abs, tag = 'smem constant byte address 0x4 - core index']
  #allocation1 [shape = 'u32[144,128]{1,0:T(1,128)}', space=vmem, size = 0x12000, scoped, tag = 'internal scratch']
  %s0 = inlined_call_operand.vmem [shape: bf16[128,128], index: 0, kind: input, shape index: {}]
  %s1 = inlined_call_operand.vmem [shape: f32[128,8], index: 1, kind: input, shape index: {}]
  %s2 = inlined_call_operand.vmem [shape: f32[128,8], index: 2, kind: input, shape index: {}]
  %s3 = inlined_call_operand.vmem [shape: bf16[1416,128], index: 3, kind: input, shape index: {}]
  %s4 = inlined_call_operand.vmem [shape: f32[16,128], index: 4, kind: input, shape index: {}]
  %s5 = inlined_call_operand.vmem [shape: f32[8,128], index: 5, kind: output, shape index: {}]
  %s6 = sld [smem:[#allocation0]]
  $region30: #{net_forward.1} parent=0
    _
  %s8 = ssub.s32 1, %s6
  %s9 = scalar_select 0, %s8, %s6
  // Predicated region
  $region2: #{net_forward.1} parent=0 // pred_check
    _
  $region3: #{net_forward.1} parent=0 // pred_check_branch
    %11 = sbr.rel (0) target = $region5
  $region4: #{net_forward.1} parent=0 // pred_region
    _
  $region5: #{net_forward.1} parent=0 // pred_fallthru
    _
  // Predicated region
  $region6: #{net_forward.1} parent=0 // pred_check
    _
  $region7: #{net_forward.1} parent=0 // pred_check_branch
    %13 = sbr.rel (0) target = $region9
  $region8: #{net_forward.1} parent=0 // pred_region
    _
  $region9: #{net_forward.1} parent=0 // pred_fallthru
    _
  // Predicated region
  $region10: #{net_forward.1} parent=0 // pred_check
    _
  $region11: #{net_forward.1} parent=0 // pred_check_branch
    %15 = sbr.rel (0) target = $region13
  $region12: #{net_forward.1} parent=0 // pred_region
    _
  $region13: #{net_forward.1} parent=0 // pred_fallthru
    _
  // Predicated region
  $region14: #{net_forward.1} parent=0 // pred_check
    _
  $region15: #{net_forward.1} parent=0 // pred_check_branch
    %17 = sbr.rel (0) target = $region17
  $region16: #{net_forward.1} parent=0 // pred_region
    _
  $region17: #{net_forward.1} parent=0 // pred_fallthru
    _
  // Predicated region
  $region18: #{net_forward.1} parent=0 // pred_check
    _
  $region19: #{net_forward.1} parent=0 // pred_check_branch
    %19 = sbr.rel (0) target = $region21
  $region20: #{net_forward.1} parent=0 // pred_region
    _
  $region21: #{net_forward.1} parent=0 // pred_fallthru
    _
  %v21 = vld [vmem:[%s0] sm:$0xf]
  %v22 = vld [vmem:[%s0 + $0x4] sm:$0xf]
  %v23 = vld [vmem:[%s0 + $0x8] sm:$0xf]
  %v24 = vld [vmem:[%s0 + $0xc] sm:$0xf]
  %v25 = vld [vmem:[%s0 + $0x10] sm:$0xf]
  %v26 = vld [vmem:[%s0 + $0x14] sm:$0xf]
  %v27 = vld [vmem:[%s0 + $0x18] sm:$0xf]
  %v28 = vld [vmem:[%s0 + $0x1c] sm:$0xf]
  %v29 = vld [vmem:[%s0 + $0x20] sm:$0xf]
  %v30 = vld [vmem:[%s0 + $0x24] sm:$0xf]
  %v31 = vld [vmem:[%s0 + $0x28] sm:$0xf]
  %v32 = vld [vmem:[%s0 + $0x2c] sm:$0xf]
  %v33 = vld [vmem:[%s0 + $0x30] sm:$0xf]
  %v34 = vld [vmem:[%s0 + $0x34] sm:$0xf]
  %v35 = vld [vmem:[%s0 + $0x38] sm:$0xf]
  %v36 = vld [vmem:[%s0 + $0x3c] sm:$0xf]
  %v37 = vld [vmem:[%s1] sm:$0xff]
  %v38 = vld [vmem:[%s1 + $0x8] sm:$0xff]
  %v39 = vld [vmem:[%s1 + $0x10] sm:$0xff]
  %v40 = vld [vmem:[%s1 + $0x18] sm:$0xff]
  %v41 = vld [vmem:[%s1 + $0x20] sm:$0xff]
  %v42 = vld [vmem:[%s1 + $0x28] sm:$0xff]
  %v43 = vld [vmem:[%s1 + $0x30] sm:$0xff]
  %v44 = vld [vmem:[%s1 + $0x38] sm:$0xff]
  %v45 = vld [vmem:[%s1 + $0x40] sm:$0xff]
  %v46 = vld [vmem:[%s1 + $0x48] sm:$0xff]
  %v47 = vld [vmem:[%s1 + $0x50] sm:$0xff]
  %v48 = vld [vmem:[%s1 + $0x58] sm:$0xff]
  %v49 = vld [vmem:[%s1 + $0x60] sm:$0xff]
  %v50 = vld [vmem:[%s1 + $0x68] sm:$0xff]
  %v51 = vld [vmem:[%s1 + $0x70] sm:$0xff]
  %v52 = vld [vmem:[%s1 + $0x78] sm:$0xff]
  %v53 = vpack.c.bf16 %v38, %v37
  %v54 = vpack.c.bf16 %v40, %v39
  %v55 = vpack.c.bf16 %v42, %v41
  %v56 = vpack.c.bf16 %v44, %v43
  %v57 = vpack.c.bf16 %v46, %v45
  %v58 = vpack.c.bf16 %v48, %v47
  %v59 = vpack.c.bf16 %v50, %v49
  %v60 = vpack.c.bf16 %v52, %v51
  %vm61 = vcmask 64512
  %v62 = vsel %vm61, %v37, 0.0
  %63 = vadd.xlane.f32.xlu0 %v62
  %v64 = vpop.xlane.xlu0 %63
  %v65 = vsel %vm61, %v38, 0.0
  %66 = vadd.xlane.f32.xlu0 %v65
  %v67 = vpop.xlane.xlu0 %66
  %v68 = vsel %vm61, %v39, 0.0
  %69 = vadd.xlane.f32.xlu0 %v68
  %v70 = vpop.xlane.xlu0 %69
  %v71 = vsel %vm61, %v40, 0.0
  %72 = vadd.xlane.f32.xlu0 %v71
  %v73 = vpop.xlane.xlu0 %72
  %v74 = vsel %vm61, %v41, 0.0
  %75 = vadd.xlane.f32.xlu0 %v74
  %v76 = vpop.xlane.xlu0 %75
  %v77 = vsel %vm61, %v42, 0.0
  %78 = vadd.xlane.f32.xlu0 %v77
  %v79 = vpop.xlane.xlu0 %78
  %v80 = vsel %vm61, %v43, 0.0
  %81 = vadd.xlane.f32.xlu0 %v80
  %v82 = vpop.xlane.xlu0 %81
  %v83 = vsel %vm61, %v44, 0.0
  %84 = vadd.xlane.f32.xlu0 %v83
  %v85 = vpop.xlane.xlu0 %84
  %v86 = vsel %vm61, %v45, 0.0
  %87 = vadd.xlane.f32.xlu0 %v86
  %v88 = vpop.xlane.xlu0 %87
  %v89 = vsel %vm61, %v46, 0.0
  %90 = vadd.xlane.f32.xlu0 %v89
  %v91 = vpop.xlane.xlu0 %90
  %v92 = vsel %vm61, %v47, 0.0
  %93 = vadd.xlane.f32.xlu0 %v92
  %v94 = vpop.xlane.xlu0 %93
  %v95 = vsel %vm61, %v48, 0.0
  %96 = vadd.xlane.f32.xlu0 %v95
  %v97 = vpop.xlane.xlu0 %96
  %v98 = vsel %vm61, %v49, 0.0
  %99 = vadd.xlane.f32.xlu0 %v98
  %v100 = vpop.xlane.xlu0 %99
  %v101 = vsel %vm61, %v50, 0.0
  %102 = vadd.xlane.f32.xlu0 %v101
  %v103 = vpop.xlane.xlu0 %102
  %v104 = vsel %vm61, %v51, 0.0
  %105 = vadd.xlane.f32.xlu0 %v104
  %v106 = vpop.xlane.xlu0 %105
  %v107 = vsel %vm61, %v52, 0.0
  %108 = vadd.xlane.f32.xlu0 %v107
  %v109 = vpop.xlane.xlu0 %108
  %v110 = vlaneseq
  %v111 = vshrl.u32 %v110, 7
  %v112 = vadd.s32 %v111, 8
  %v113 = vadd.s32 %v111, 16
  %v114 = vadd.s32 %v111, 24
  %v115 = vadd.s32 %v111, 32
  %v116 = vadd.s32 %v111, 40
  %v117 = vadd.s32 %v111, 48
  %v118 = vadd.s32 %v111, 56
  %v119 = vadd.s32 %v111, 64
  %v120 = vadd.s32 %v111, 72
  %v121 = vadd.s32 %v111, 80
  %v122 = vadd.s32 %v111, 88
  %v123 = vadd.s32 %v111, 96
  %v124 = vadd.s32 %v111, 104
  %v125 = vadd.s32 %v111, 112
  %v126 = vadd.s32 %v111, 120
  %v127 = vlaneseq
  %v128 = vand.u32 %v127, 127
  %vm129 = vcmp.lt.s32.totalorder %v128, %v111
  %vm130 = vcmp.lt.s32.totalorder %v128, %v112
  %vm131 = vcmp.lt.s32.totalorder %v128, %v113
  %vm132 = vcmp.lt.s32.totalorder %v128, %v114
  %vm133 = vcmp.lt.s32.totalorder %v128, %v115
  %vm134 = vcmp.lt.s32.totalorder %v128, %v116
  %vm135 = vcmp.lt.s32.totalorder %v128, %v117
  %vm136 = vcmp.lt.s32.totalorder %v128, %v118
  %vm137 = vcmp.lt.s32.totalorder %v128, %v119
  %vm138 = vcmp.lt.s32.totalorder %v128, %v120
  %vm139 = vcmp.lt.s32.totalorder %v128, %v121
  %vm140 = vcmp.lt.s32.totalorder %v128, %v122
  %vm141 = vcmp.lt.s32.totalorder %v128, %v123
  %vm142 = vcmp.lt.s32.totalorder %v128, %v124
  %vm143 = vcmp.lt.s32.totalorder %v128, %v125
  %vm144 = vcmp.lt.s32.totalorder %v128, %v126
  %v145 = vld [vmem:[%s2] sm:$0xff]
  %v146 = vld [vmem:[%s2 + $0x8] sm:$0xff]
  %v147 = vld [vmem:[%s2 + $0x10] sm:$0xff]
  %v148 = vld [vmem:[%s2 + $0x18] sm:$0xff]
  %v149 = vld [vmem:[%s2 + $0x20] sm:$0xff]
  %v150 = vld [vmem:[%s2 + $0x28] sm:$0xff]
  %v151 = vld [vmem:[%s2 + $0x30] sm:$0xff]
  %v152 = vld [vmem:[%s2 + $0x38] sm:$0xff]
  %v153 = vld [vmem:[%s2 + $0x40] sm:$0xff]
  %v154 = vld [vmem:[%s2 + $0x48] sm:$0xff]
  %v155 = vld [vmem:[%s2 + $0x50] sm:$0xff]
  %v156 = vld [vmem:[%s2 + $0x58] sm:$0xff]
  %v157 = vld [vmem:[%s2 + $0x60] sm:$0xff]
  %v158 = vld [vmem:[%s2 + $0x68] sm:$0xff]
  %v159 = vld [vmem:[%s2 + $0x70] sm:$0xff]
  %v160 = vld [vmem:[%s2 + $0x78] sm:$0xff]
  %v161 = vld [vmem:[%s3] sm:$0xf]
  %v162 = vld [vmem:[%s4] sm:$0x1]
  %v163 = vmul.f32 %v37, %v64
  %v164 = vmul.f32 %v38, %v67
  %v165 = vmul.f32 %v39, %v70
  %v166 = vmul.f32 %v40, %v73
  %v167 = vmul.f32 %v41, %v76
  %v168 = vmul.f32 %v42, %v79
  %v169 = vmul.f32 %v43, %v82
  %v170 = vmul.f32 %v44, %v85
  %v171 = vmul.f32 %v45, %v88
  %v172 = vmul.f32 %v46, %v91
  %v173 = vmul.f32 %v47, %v94
  %v174 = vmul.f32 %v48, %v97
  %v175 = vmul.f32 %v49, %v100
  %v176 = vmul.f32 %v50, %v103
  %v177 = vmul.f32 %v51, %v106
  %v178 = vmul.f32 %v52, %v109
  %v179 = vpack.c.bf16 %v164, %v163
  %v180 = vpack.c.bf16 %v166, %v165
  %v181 = vpack.c.bf16 %v168, %v167
  %v182 = vpack.c.bf16 %v170, %v169
  %v183 = vpack.c.bf16 %v172, %v171
  %v184 = vpack.c.bf16 %v174, %v173
  %v185 = vpack.c.bf16 %v176, %v175
  %v186 = vpack.c.bf16 %v178, %v177
  %v203 = vunpack.c.l.b16 %v21
  %v204 = vunpack.c.l.b16 %v22
  %v205 = vunpack.c.l.b16 %v23
  %v206 = vunpack.c.l.b16 %v24
  %v207 = vunpack.c.l.b16 %v25
  %v208 = vunpack.c.l.b16 %v26
  %v209 = vunpack.c.l.b16 %v27
  %v210 = vunpack.c.l.b16 %v28
  %v211 = vunpack.c.l.b16 %v29
  %v212 = vunpack.c.l.b16 %v30
  %v213 = vunpack.c.l.b16 %v31
  %v214 = vunpack.c.l.b16 %v32
  %v215 = vunpack.c.l.b16 %v33
  %v216 = vunpack.c.l.b16 %v34
  %v217 = vunpack.c.l.b16 %v35
  %v218 = vunpack.c.l.b16 %v36
  %v219 = vpack.c.b16 %v204, %v203
  %v220 = vpack.c.b16 %v206, %v205
  %v221 = vpack.c.b16 %v208, %v207
  %v222 = vpack.c.b16 %v210, %v209
  %v223 = vpack.c.b16 %v212, %v211
  %v224 = vpack.c.b16 %v214, %v213
  %v225 = vpack.c.b16 %v216, %v215
  %v226 = vpack.c.b16 %v218, %v217
  %235 = vmatprep.subr.bf16.mxu0 0
  %236 = vmatpush1.bf16.msra.mxu0 %v179
  %237 = vmatprep.subr.bf16.mxu0 0
  %238 = vmatpush1.bf16.msra.mxu0 %v180
  %239 = vmatprep.subr.bf16.mxu0 0
  %240 = vmatpush1.bf16.msra.mxu0 %v181
  %241 = vmatprep.subr.bf16.mxu0 0
  %242 = vmatpush1.bf16.msra.mxu0 %v182
  %243 = vmatprep.subr.bf16.mxu0 0
  %244 = vmatpush1.bf16.msra.mxu0 %v183
  %245 = vmatprep.subr.bf16.mxu0 0
  %246 = vmatpush1.bf16.msra.mxu0 %v184
  %247 = vmatprep.subr.bf16.mxu0 0
  %248 = vmatpush1.bf16.msra.mxu0 %v185
  %249 = vmatprep.subr.bf16.mxu0 0
  %250 = vmatpush1.bf16.msra.mxu0 %v186
  %251 = vmatprep.subr.bf16.mxu0 0
  %252 = vmatpush1.bf16.msra.mxu0 0
  %253 = vmatprep.subr.bf16.mxu0 0
  %254 = vmatpush1.bf16.msra.mxu0 0
  %255 = vmatprep.subr.bf16.mxu0 0
  %256 = vmatpush1.bf16.msra.mxu0 0
  %257 = vmatprep.subr.bf16.mxu0 0
  %258 = vmatpush1.bf16.msra.mxu0 0
  %259 = vmatprep.subr.bf16.mxu0 0
  %260 = vmatpush1.bf16.msra.mxu0 0
  %261 = vmatprep.subr.bf16.mxu0 0
  %262 = vmatpush1.bf16.msra.mxu0 0
  %263 = vmatprep.subr.bf16.mxu0 0
  %264 = vmatpush1.bf16.msra.mxu0 0
  %265 = vmatprep.subr.bf16.mxu0 0
  %266 = vmatpush1.bf16.msra.mxu0 0
  %267 = vmatprep.mubr.bf16.mxu0 0
  %268 = vmatmul.mubr.bf16.gmra.mrb[0].mxu0 %v219
  %v269 = vpop.f32.mrb[0].mxu0
  %v270 = vadd.f32 0.0, %v269
  %v271 = vpop.f32.mrb[0].mxu0
  %v272 = vpop.f32.mrb[0].mxu0
  %v273 = vadd.f32 0.0, %v272
  %v274 = vpop.f32.mrb[0].mxu0
  %275 = vmatprep.mubr.bf16.mxu0 0
  %276 = vmatmul.mubr.bf16.gmra.mrb[0].mxu0 %v220
  %v277 = vpop.f32.mrb[0].mxu0
  %v278 = vadd.f32 0.0, %v277
  %v279 = vpop.f32.mrb[0].mxu0
  %v280 = vpop.f32.mrb[0].mxu0
  %v281 = vadd.f32 0.0, %v280
  %v282 = vpop.f32.mrb[0].mxu0
  %283 = vmatprep.mubr.bf16.mxu0 0
  %284 = vmatmul.mubr.bf16.gmra.mrb[0].mxu0 %v221
  %v285 = vpop.f32.mrb[0].mxu0
  %v286 = vadd.f32 0.0, %v285
  %v287 = vpop.f32.mrb[0].mxu0
  %v288 = vpop.f32.mrb[0].mxu0
  %v289 = vadd.f32 0.0, %v288
  %v290 = vpop.f32.mrb[0].mxu0
  %291 = vmatprep.mubr.bf16.mxu0 0
  %292 = vmatmul.mubr.bf16.gmra.mrb[0].mxu0 %v222
  %v293 = vpop.f32.mrb[0].mxu0
  %v294 = vadd.f32 0.0, %v293
  %v295 = vpop.f32.mrb[0].mxu0
  %v296 = vpop.f32.mrb[0].mxu0
  %v297 = vadd.f32 0.0, %v296
  %v298 = vpop.f32.mrb[0].mxu0
  %299 = vmatprep.mubr.bf16.mxu0 0
  %300 = vmatmul.mubr.bf16.gmra.mrb[0].mxu0 %v223
  %v301 = vpop.f32.mrb[0].mxu0
  %v302 = vadd.f32 0.0, %v301
  %v303 = vpop.f32.mrb[0].mxu0
  %v304 = vpop.f32.mrb[0].mxu0
  %v305 = vadd.f32 0.0, %v304
  %v306 = vpop.f32.mrb[0].mxu0
  %307 = vmatprep.mubr.bf16.mxu0 0
  %308 = vmatmul.mubr.bf16.gmra.mrb[0].mxu0 %v224
  %v309 = vpop.f32.mrb[0].mxu0
  %v310 = vadd.f32 0.0, %v309
  %v311 = vpop.f32.mrb[0].mxu0
  %v312 = vpop.f32.mrb[0].mxu0
  %v313 = vadd.f32 0.0, %v312
  %v314 = vpop.f32.mrb[0].mxu0
  %315 = vmatprep.mubr.bf16.mxu0 0
  %316 = vmatmul.mubr.bf16.gmra.mrb[0].mxu0 %v225
  %v317 = vpop.f32.mrb[0].mxu0
  %v318 = vadd.f32 0.0, %v317
  %v319 = vpop.f32.mrb[0].mxu0
  %v320 = vpop.f32.mrb[0].mxu0
  %v321 = vadd.f32 0.0, %v320
  %v322 = vpop.f32.mrb[0].mxu0
  %323 = vmatprep.mubr.bf16.mxu0 0
  %324 = vmatmul.mubr.bf16.gmra.mrb[0].mxu0 %v226
  %v325 = vpop.f32.mrb[0].mxu0
  %v326 = vadd.f32 0.0, %v325
  %v327 = vpop.f32.mrb[0].mxu0
  %v328 = vpop.f32.mrb[0].mxu0
  %v329 = vadd.f32 0.0, %v328
  %v330 = vpop.f32.mrb[0].mxu0
  %331 = vdwg.mxu0
  %v332 = vsel %vm61, %v270, 0.0
  %333 = vadd.xlane.f32.xlu0 %v332
  %v334 = vpop.xlane.xlu0 %333
  %v335 = vsel %vm61, %v273, 0.0
  %336 = vadd.xlane.f32.xlu0 %v335
  %v337 = vpop.xlane.xlu0 %336
  %v338 = vsel %vm61, %v278, 0.0
  %339 = vadd.xlane.f32.xlu0 %v338
  %v340 = vpop.xlane.xlu0 %339
  %v341 = vsel %vm61, %v281, 0.0
  %342 = vadd.xlane.f32.xlu0 %v341
  %v343 = vpop.xlane.xlu0 %342
  %v344 = vsel %vm61, %v286, 0.0
  %345 = vadd.xlane.f32.xlu0 %v344
  %v346 = vpop.xlane.xlu0 %345
  %v347 = vsel %vm61, %v289, 0.0
  %348 = vadd.xlane.f32.xlu0 %v347
  %v349 = vpop.xlane.xlu0 %348
  %v350 = vsel %vm61, %v294, 0.0
  %351 = vadd.xlane.f32.xlu0 %v350
  %v352 = vpop.xlane.xlu0 %351
  %v353 = vsel %vm61, %v297, 0.0
  %354 = vadd.xlane.f32.xlu0 %v353
  %v355 = vpop.xlane.xlu0 %354
  %v356 = vsel %vm61, %v302, 0.0
  %357 = vadd.xlane.f32.xlu0 %v356
  %v358 = vpop.xlane.xlu0 %357
  %v359 = vsel %vm61, %v305, 0.0
  %360 = vadd.xlane.f32.xlu0 %v359
  %v361 = vpop.xlane.xlu0 %360
  %v362 = vsel %vm61, %v310, 0.0
  %363 = vadd.xlane.f32.xlu0 %v362
  %v364 = vpop.xlane.xlu0 %363
  %v365 = vsel %vm61, %v313, 0.0
  %366 = vadd.xlane.f32.xlu0 %v365
  %v367 = vpop.xlane.xlu0 %366
  %v368 = vsel %vm61, %v318, 0.0
  %369 = vadd.xlane.f32.xlu0 %v368
  %v370 = vpop.xlane.xlu0 %369
  %v371 = vsel %vm61, %v321, 0.0
  %372 = vadd.xlane.f32.xlu0 %v371
  %v373 = vpop.xlane.xlu0 %372
  %v374 = vsel %vm61, %v326, 0.0
  %375 = vadd.xlane.f32.xlu0 %v374
  %v376 = vpop.xlane.xlu0 %375
  %v377 = vsel %vm61, %v329, 0.0
  %378 = vadd.xlane.f32.xlu0 %v377
  %v379 = vpop.xlane.xlu0 %378
  %v380 = vadd.f32 %v334, 1.0
  %v381 = vadd.f32 %v337, 1.0
  %v382 = vadd.f32 %v340, 1.0
  %v383 = vadd.f32 %v343, 1.0
  %v384 = vadd.f32 %v346, 1.0
  %v385 = vadd.f32 %v349, 1.0
  %v386 = vadd.f32 %v352, 1.0
  %v387 = vadd.f32 %v355, 1.0
  %v388 = vadd.f32 %v358, 1.0
  %v389 = vadd.f32 %v361, 1.0
  %v390 = vadd.f32 %v364, 1.0
  %v391 = vadd.f32 %v367, 1.0
  %v392 = vadd.f32 %v370, 1.0
  %v393 = vadd.f32 %v373, 1.0
  %v394 = vadd.f32 %v376, 1.0
  %v395 = vadd.f32 %v379, 1.0
  %v396 = vrsqrt.pop %v380
  %v397 = vrsqrt.pop %v381
  %v398 = vrsqrt.pop %v382
  %v399 = vrsqrt.pop %v383
  %v400 = vrsqrt.pop %v384
  %v401 = vrsqrt.pop %v385
  %v402 = vrsqrt.pop %v386
  %v403 = vrsqrt.pop %v387
  %v404 = vrsqrt.pop %v388
  %v405 = vrsqrt.pop %v389
  %v406 = vrsqrt.pop %v390
  %v407 = vrsqrt.pop %v391
  %v408 = vrsqrt.pop %v392
  %v409 = vrsqrt.pop %v393
  %v410 = vrsqrt.pop %v394
  %v411 = vrsqrt.pop %v395
  %v412 = vmul.f32 %v396, %v145
  %v413 = vmul.f32 %v397, %v146
  %v414 = vmul.f32 %v398, %v147
  %v415 = vmul.f32 %v399, %v148
  %v416 = vmul.f32 %v400, %v149
  %v417 = vmul.f32 %v401, %v150
  %v418 = vmul.f32 %v402, %v151
  %v419 = vmul.f32 %v403, %v152
  %v420 = vmul.f32 %v404, %v153
  %v421 = vmul.f32 %v405, %v154
  %v422 = vmul.f32 %v406, %v155
  %v423 = vmul.f32 %v407, %v156
  %v424 = vmul.f32 %v408, %v157
  %v425 = vmul.f32 %v409, %v158
  %v426 = vmul.f32 %v410, %v159
  %v427 = vmul.f32 %v411, %v160
  %v428 = vpack.c.bf16 %v413, %v412
  %v429 = vpack.c.bf16 %v415, %v414
  %v430 = vpack.c.bf16 %v417, %v416
  %v431 = vpack.c.bf16 %v419, %v418
  %v432 = vpack.c.bf16 %v421, %v420
  %v433 = vpack.c.bf16 %v423, %v422
  %v434 = vpack.c.bf16 %v425, %v424
  %v435 = vpack.c.bf16 %v427, %v426
  %436 = vmatprep.subr.bf16.mxu0 0
  %437 = vmatpush1.bf16.msra.mxu0 %v428
  %438 = vmatprep.subr.bf16.mxu0 0
  %439 = vmatpush1.bf16.msra.mxu0 %v429
  %440 = vmatprep.subr.bf16.mxu0 0
  %441 = vmatpush1.bf16.msra.mxu0 %v430
  %442 = vmatprep.subr.bf16.mxu0 0
  %443 = vmatpush1.bf16.msra.mxu0 %v431
  %444 = vmatprep.subr.bf16.mxu0 0
  %445 = vmatpush1.bf16.msra.mxu0 %v432
  %446 = vmatprep.subr.bf16.mxu0 0
  %447 = vmatpush1.bf16.msra.mxu0 %v433
  %448 = vmatprep.subr.bf16.mxu0 0
  %449 = vmatpush1.bf16.msra.mxu0 %v434
  %450 = vmatprep.subr.bf16.mxu0 0
  %451 = vmatpush1.bf16.msra.mxu0 %v435
  %452 = vmatprep.subr.bf16.mxu0 0
  %453 = vmatpush1.bf16.msra.mxu0 0
  %454 = vmatprep.subr.bf16.mxu0 0
  %455 = vmatpush1.bf16.msra.mxu0 0
  %456 = vmatprep.subr.bf16.mxu0 0
  %457 = vmatpush1.bf16.msra.mxu0 0
  %458 = vmatprep.subr.bf16.mxu0 0
  %459 = vmatpush1.bf16.msra.mxu0 0
  %460 = vmatprep.subr.bf16.mxu0 0
  %461 = vmatpush1.bf16.msra.mxu0 0
  %462 = vmatprep.subr.bf16.mxu0 0
  %463 = vmatpush1.bf16.msra.mxu0 0
  %464 = vmatprep.subr.bf16.mxu0 0
  %465 = vmatpush1.bf16.msra.mxu0 0
  %466 = vmatprep.subr.bf16.mxu0 0
  %467 = vmatpush1.bf16.msra.mxu0 0
  %468 = vmatprep.mubr.bf16.mxu0 0
  %469 = vmatmul.mubr.bf16.gmra.mrb[0].mxu0 %v219
  %v470 = vpop.f32.mrb[0].mxu0
  %v471 = vadd.f32 0.0, %v470
  %v472 = vpop.f32.mrb[0].mxu0
  %v473 = vpop.f32.mrb[0].mxu0
  %v474 = vadd.f32 0.0, %v473
  %v475 = vpop.f32.mrb[0].mxu0
  %476 = vmatprep.mubr.bf16.mxu0 0
  %477 = vmatmul.mubr.bf16.gmra.mrb[0].mxu0 %v220
  %v478 = vpop.f32.mrb[0].mxu0
  %v479 = vadd.f32 0.0, %v478
  %v480 = vpop.f32.mrb[0].mxu0
  %v481 = vpop.f32.mrb[0].mxu0
  %v482 = vadd.f32 0.0, %v481
  %v483 = vpop.f32.mrb[0].mxu0
  %484 = vmatprep.mubr.bf16.mxu0 0
  %485 = vmatmul.mubr.bf16.gmra.mrb[0].mxu0 %v221
  %v486 = vpop.f32.mrb[0].mxu0
  %v487 = vadd.f32 0.0, %v486
  %v488 = vpop.f32.mrb[0].mxu0
  %v489 = vpop.f32.mrb[0].mxu0
  %v490 = vadd.f32 0.0, %v489
  %v491 = vpop.f32.mrb[0].mxu0
  %492 = vmatprep.mubr.bf16.mxu0 0
  %493 = vmatmul.mubr.bf16.gmra.mrb[0].mxu0 %v222
  %v494 = vpop.f32.mrb[0].mxu0
  %v495 = vadd.f32 0.0, %v494
  %v496 = vpop.f32.mrb[0].mxu0
  %v497 = vpop.f32.mrb[0].mxu0
  %v498 = vadd.f32 0.0, %v497
  %v499 = vpop.f32.mrb[0].mxu0
  %500 = vmatprep.mubr.bf16.mxu0 0
  %501 = vmatmul.mubr.bf16.gmra.mrb[0].mxu0 %v223
  %v502 = vpop.f32.mrb[0].mxu0
  %v503 = vadd.f32 0.0, %v502
  %v504 = vpop.f32.mrb[0].mxu0
  %v505 = vpop.f32.mrb[0].mxu0
  %v506 = vadd.f32 0.0, %v505
  %v507 = vpop.f32.mrb[0].mxu0
  %508 = vmatprep.mubr.bf16.mxu0 0
  %509 = vmatmul.mubr.bf16.gmra.mrb[0].mxu0 %v224
  %v510 = vpop.f32.mrb[0].mxu0
  %v511 = vadd.f32 0.0, %v510
  %v512 = vpop.f32.mrb[0].mxu0
  %v513 = vpop.f32.mrb[0].mxu0
  %v514 = vadd.f32 0.0, %v513
  %v515 = vpop.f32.mrb[0].mxu0
  %516 = vmatprep.mubr.bf16.mxu0 0
  %517 = vmatmul.mubr.bf16.gmra.mrb[0].mxu0 %v225
  %v518 = vpop.f32.mrb[0].mxu0
  %v519 = vadd.f32 0.0, %v518
  %v520 = vpop.f32.mrb[0].mxu0
  %v521 = vpop.f32.mrb[0].mxu0
  %v522 = vadd.f32 0.0, %v521
  %v523 = vpop.f32.mrb[0].mxu0
  %524 = vmatprep.mubr.bf16.mxu0 0
  %525 = vmatmul.mubr.bf16.gmra.mrb[0].mxu0 %v226
  %v526 = vpop.f32.mrb[0].mxu0
  %v527 = vadd.f32 0.0, %v526
  %v528 = vpop.f32.mrb[0].mxu0
  %v529 = vpop.f32.mrb[0].mxu0
  %v530 = vadd.f32 0.0, %v529
  %v531 = vpop.f32.mrb[0].mxu0
  %532 = vdwg.mxu0
  %v533 = vmul.f32 %v396, %v471
  %v534 = vmul.f32 %v397, %v474
  %v535 = vmul.f32 %v398, %v479
  %v536 = vmul.f32 %v399, %v482
  %v537 = vmul.f32 %v400, %v487
  %v538 = vmul.f32 %v401, %v490
  %v539 = vmul.f32 %v402, %v495
  %v540 = vmul.f32 %v403, %v498
  %v541 = vmul.f32 %v404, %v503
  %v542 = vmul.f32 %v405, %v506
  %v543 = vmul.f32 %v406, %v511
  %v544 = vmul.f32 %v407, %v514
  %v545 = vmul.f32 %v408, %v519
  %v546 = vmul.f32 %v409, %v522
  %v547 = vmul.f32 %v410, %v527
  %v548 = vmul.f32 %v411, %v530
  %v549 = vmul.f32 %v396, %v396
  %v550 = vmul.f32 %v397, %v397
  %v551 = vmul.f32 %v398, %v398
  %v552 = vmul.f32 %v399, %v399
  %v553 = vmul.f32 %v400, %v400
  %v554 = vmul.f32 %v401, %v401
  %v555 = vmul.f32 %v402, %v402
  %v556 = vmul.f32 %v403, %v403
  %v557 = vmul.f32 %v404, %v404
  %v558 = vmul.f32 %v405, %v405
  %v559 = vmul.f32 %v406, %v406
  %v560 = vmul.f32 %v407, %v407
  %v561 = vmul.f32 %v408, %v408
  %v562 = vmul.f32 %v409, %v409
  %v563 = vmul.f32 %v410, %v410
  %v564 = vmul.f32 %v411, %v411
  %v565 = vmul.f32 %v549, %v145
  %v566 = vmul.f32 %v550, %v146
  %v567 = vmul.f32 %v551, %v147
  %v568 = vmul.f32 %v552, %v148
  %v569 = vmul.f32 %v553, %v149
  %v570 = vmul.f32 %v554, %v150
  %v571 = vmul.f32 %v555, %v151
  %v572 = vmul.f32 %v556, %v152
  %v573 = vmul.f32 %v557, %v153
  %v574 = vmul.f32 %v558, %v154
  %v575 = vmul.f32 %v559, %v155
  %v576 = vmul.f32 %v560, %v156
  %v577 = vmul.f32 %v561, %v157
  %v578 = vmul.f32 %v562, %v158
  %v579 = vmul.f32 %v563, %v159
  %v580 = vmul.f32 %v564, %v160
  %v581 = vadd.f32 %v533, %v565
  %v582 = vadd.f32 %v534, %v566
  %v583 = vadd.f32 %v535, %v567
  %v584 = vadd.f32 %v536, %v568
  %v585 = vadd.f32 %v537, %v569
  %v586 = vadd.f32 %v538, %v570
  %v587 = vadd.f32 %v539, %v571
  %v588 = vadd.f32 %v540, %v572
  %v589 = vadd.f32 %v541, %v573
  %v590 = vadd.f32 %v542, %v574
  %v591 = vadd.f32 %v543, %v575
  %v592 = vadd.f32 %v544, %v576
  %v593 = vadd.f32 %v545, %v577
  %v594 = vadd.f32 %v546, %v578
  %v595 = vadd.f32 %v547, %v579
  %v596 = vadd.f32 %v548, %v580
  %v597 = vpack.c.bf16 %v582, %v581
  %v598 = vpack.c.bf16 %v584, %v583
  %v599 = vpack.c.bf16 %v586, %v585
  %v600 = vpack.c.bf16 %v588, %v587
  %v601 = vpack.c.bf16 %v590, %v589
  %v602 = vpack.c.bf16 %v592, %v591
  %v603 = vpack.c.bf16 %v594, %v593
  %v604 = vpack.c.bf16 %v596, %v595
  %v605 = vlaneseq
  %v606 = vshrl.u32 %v605, 7
  %v607 = vsub.s32 0, %v606
  %v608 = vrot.slane %v162, %v607
  %v610 = vsel %vm61, %v597, 0
  %v613 = vsel %vm61, %v598, 0
  %v616 = vsel %vm61, %v599, 0
  %v619 = vsel %vm61, %v600, 0
  %v622 = vsel %vm61, %v601, 0
  %v625 = vsel %vm61, %v602, 0
  %v628 = vsel %vm61, %v603, 0
  %v631 = vsel %vm61, %v604, 0
  %vm633 = vcmask 1043456
  %v635 = vsel %vm633, %v161, 0
  %637 = vmatprep.subr.bf16.mxu0 0
  %638 = vmatpush1.bf16.msra.mxu0 %v635
  %639 = vmatprep.subr.bf16.mxu0 0
  %640 = vmatpush1.bf16.msra.mxu0 0
  %641 = vmatprep.subr.bf16.mxu0 0
  %642 = vmatpush1.bf16.msra.mxu0 0
  %643 = vmatprep.subr.bf16.mxu0 0
  %644 = vmatpush1.bf16.msra.mxu0 0
  %645 = vmatprep.subr.bf16.mxu0 0
  %646 = vmatpush1.bf16.msra.mxu0 0
  %647 = vmatprep.subr.bf16.mxu0 0
  %648 = vmatpush1.bf16.msra.mxu0 0
  %649 = vmatprep.subr.bf16.mxu0 0
  %650 = vmatpush1.bf16.msra.mxu0 0
  %651 = vmatprep.subr.bf16.mxu0 0
  %652 = vmatpush1.bf16.msra.mxu0 0
  %653 = vmatprep.subr.bf16.mxu0 0
  %654 = vmatpush1.bf16.msra.mxu0 0
  %655 = vmatprep.subr.bf16.mxu0 0
  %656 = vmatpush1.bf16.msra.mxu0 0
  %657 = vmatprep.subr.bf16.mxu0 0
  %658 = vmatpush1.bf16.msra.mxu0 0
  %659 = vmatprep.subr.bf16.mxu0 0
  %660 = vmatpush1.bf16.msra.mxu0 0
  %661 = vmatprep.subr.bf16.mxu0 0
  %662 = vmatpush1.bf16.msra.mxu0 0
  %663 = vmatprep.subr.bf16.mxu0 0
  %664 = vmatpush1.bf16.msra.mxu0 0
  %665 = vmatprep.subr.bf16.mxu0 0
  %666 = vmatpush1.bf16.msra.mxu0 0
  %667 = vmatprep.subr.bf16.mxu0 0
  %668 = vmatpush1.bf16.msra.mxu0 0
  %669 = vmatprep.mubr.bf16.mxu0 0
  %670 = vmatmul.mubr.bf16.gmra.mrb[0].mxu0 %v610
  %v671 = vpop.f32.mrb[0].mxu0
  %v672 = vadd.f32 %v608, %v671
  %v673 = vpop.f32.mrb[0].mxu0
  %v674 = vpop.f32.mrb[0].mxu0
  %v675 = vadd.f32 %v608, %v674
  %v676 = vpop.f32.mrb[0].mxu0
  %677 = vmatprep.mubr.bf16.mxu0 0
  %678 = vmatmul.mubr.bf16.gmra.mrb[0].mxu0 %v613
  %v679 = vpop.f32.mrb[0].mxu0
  %v680 = vadd.f32 %v608, %v679
  %v681 = vpop.f32.mrb[0].mxu0
  %v682 = vpop.f32.mrb[0].mxu0
  %v683 = vadd.f32 %v608, %v682
  %v684 = vpop.f32.mrb[0].mxu0
  %685 = vmatprep.mubr.bf16.mxu0 0
  %686 = vmatmul.mubr.bf16.gmra.mrb[0].mxu0 %v616
  %v687 = vpop.f32.mrb[0].mxu0
  %v688 = vadd.f32 %v608, %v687
  %v689 = vpop.f32.mrb[0].mxu0
  %v690 = vpop.f32.mrb[0].mxu0
  %v691 = vadd.f32 %v608, %v690
  %v692 = vpop.f32.mrb[0].mxu0
  %693 = vmatprep.mubr.bf16.mxu0 0
  %694 = vmatmul.mubr.bf16.gmra.mrb[0].mxu0 %v619
  %v695 = vpop.f32.mrb[0].mxu0
  %v696 = vadd.f32 %v608, %v695
  %v697 = vpop.f32.mrb[0].mxu0
  %v698 = vpop.f32.mrb[0].mxu0
  %v699 = vadd.f32 %v608, %v698
  %v700 = vpop.f32.mrb[0].mxu0
  %701 = vmatprep.mubr.bf16.mxu0 0
  %702 = vmatmul.mubr.bf16.gmra.mrb[0].mxu0 %v622
  %v703 = vpop.f32.mrb[0].mxu0
  %v704 = vadd.f32 %v608, %v703
  %v705 = vpop.f32.mrb[0].mxu0
  %v706 = vpop.f32.mrb[0].mxu0
  %v707 = vadd.f32 %v608, %v706
  %v708 = vpop.f32.mrb[0].mxu0
  %709 = vmatprep.mubr.bf16.mxu0 0
  %710 = vmatmul.mubr.bf16.gmra.mrb[0].mxu0 %v625
  %v711 = vpop.f32.mrb[0].mxu0
  %v712 = vadd.f32 %v608, %v711
  %v713 = vpop.f32.mrb[0].mxu0
  %v714 = vpop.f32.mrb[0].mxu0
  %v715 = vadd.f32 %v608, %v714
  %v716 = vpop.f32.mrb[0].mxu0
  %717 = vmatprep.mubr.bf16.mxu0 0
  %718 = vmatmul.mubr.bf16.gmra.mrb[0].mxu0 %v628
  %v719 = vpop.f32.mrb[0].mxu0
  %v720 = vadd.f32 %v608, %v719
  %v721 = vpop.f32.mrb[0].mxu0
  %v722 = vpop.f32.mrb[0].mxu0
  %v723 = vadd.f32 %v608, %v722
  %v724 = vpop.f32.mrb[0].mxu0
  %725 = vmatprep.mubr.bf16.mxu0 0
  %726 = vmatmul.mubr.bf16.gmra.mrb[0].mxu0 %v631
  %v727 = vpop.f32.mrb[0].mxu0
  %v728 = vadd.f32 %v608, %v727
  %v729 = vpop.f32.mrb[0].mxu0
  %v730 = vpop.f32.mrb[0].mxu0
  %v731 = vadd.f32 %v608, %v730
  %v732 = vpop.f32.mrb[0].mxu0
  %733 = vdwg.mxu0
  %v734 = vmax.f32 %v672, 0.0
  %v735 = vmax.f32 %v675, 0.0
  %v736 = vmax.f32 %v680, 0.0
  %v737 = vmax.f32 %v683, 0.0
  %v738 = vmax.f32 %v688, 0.0
  %v739 = vmax.f32 %v691, 0.0
  %v740 = vmax.f32 %v696, 0.0
  %v741 = vmax.f32 %v699, 0.0
  %v742 = vmax.f32 %v704, 0.0
  %v743 = vmax.f32 %v707, 0.0
  %v744 = vmax.f32 %v712, 0.0
  %v745 = vmax.f32 %v715, 0.0
  %v746 = vmax.f32 %v720, 0.0
  %v747 = vmax.f32 %v723, 0.0
  %v748 = vmax.f32 %v728, 0.0
  %v749 = vmax.f32 %v731, 0.0
  %v750 = vmul.f32 %v734, %v64
  %v751 = vmul.f32 %v735, %v67
  %v752 = vmul.f32 %v736, %v70
  %v753 = vmul.f32 %v737, %v73
  %v754 = vmul.f32 %v738, %v76
  %v755 = vmul.f32 %v739, %v79
  %v756 = vmul.f32 %v740, %v82
  %v757 = vmul.f32 %v741, %v85
  %v758 = vmul.f32 %v742, %v88
  %v759 = vmul.f32 %v743, %v91
  %v760 = vmul.f32 %v744, %v94
  %v761 = vmul.f32 %v745, %v97
  %v762 = vmul.f32 %v746, %v100
  %v763 = vmul.f32 %v747, %v103
  %v764 = vmul.f32 %v748, %v106
  %v765 = vmul.f32 %v749, %v109
  %v766 = vld [vmem:[%s3 + $0xc4] sm:$0xf]
  %v767 = vld [vmem:[%s3 + $0xc8] sm:$0xf]
  %v768 = vld [vmem:[%s3 + $0xcc] sm:$0xf]
  %v769 = vld [vmem:[%s3 + $0xd0] sm:$0xf]
  %v770 = vld [vmem:[%s3 + $0xd4] sm:$0xf]
  %v771 = vld [vmem:[%s3 + $0xd8] sm:$0xf]
  %v772 = vld [vmem:[%s3 + $0xdc] sm:$0xf]
  %v773 = vld [vmem:[%s3 + $0xe0] sm:$0xf]
  %v774 = vld [vmem:[%s3 + $0xe4] sm:$0xf]
  %v775 = vld [vmem:[%s3 + $0xe8] sm:$0xf]
  %v776 = vld [vmem:[%s3 + $0xec] sm:$0xf]
  %v777 = vld [vmem:[%s3 + $0xf0] sm:$0xf]
  %v778 = vld [vmem:[%s3 + $0xf4] sm:$0xf]
  %v779 = vld [vmem:[%s3 + $0xf8] sm:$0xf]
  %v780 = vld [vmem:[%s3 + $0xfc] sm:$0xf]
  %v781 = vld [vmem:[%s3 + $0x100] sm:$0xf]
  %v782 = vpack.c.bf16 %v751, %v750
  %v783 = vpack.c.bf16 %v753, %v752
  %v784 = vpack.c.bf16 %v755, %v754
  %v785 = vpack.c.bf16 %v757, %v756
  %v786 = vpack.c.bf16 %v759, %v758
  %v787 = vpack.c.bf16 %v761, %v760
  %v788 = vpack.c.bf16 %v763, %v762
  %v789 = vpack.c.bf16 %v765, %v764
  %v806 = vunpack.c.l.b16 %v766
  %v807 = vunpack.c.l.b16 %v767
  %v808 = vunpack.c.l.b16 %v768
  %v809 = vunpack.c.l.b16 %v769
  %v810 = vunpack.c.l.b16 %v770
  %v811 = vunpack.c.l.b16 %v771
  %v812 = vunpack.c.l.b16 %v772
  %v813 = vunpack.c.l.b16 %v773
  %v814 = vunpack.c.l.b16 %v774
  %v815 = vunpack.c.l.b16 %v775
  %v816 = vunpack.c.l.b16 %v776
  %v817 = vunpack.c.l.b16 %v777
  %v818 = vunpack.c.l.b16 %v778
  %v819 = vunpack.c.l.b16 %v779
  %v820 = vunpack.c.l.b16 %v780
  %v821 = vunpack.c.l.b16 %v781
  %v822 = vpack.c.b16 %v807, %v806
  %v823 = vpack.c.b16 %v809, %v808
  %v824 = vpack.c.b16 %v811, %v810
  %v825 = vpack.c.b16 %v813, %v812
  %v826 = vpack.c.b16 %v815, %v814
  %v827 = vpack.c.b16 %v817, %v816
  %v828 = vpack.c.b16 %v819, %v818
  %v829 = vpack.c.b16 %v821, %v820
  %838 = vmatprep.subr.bf16.mxu0 0
  %839 = vmatpush1.bf16.msra.mxu0 %v822
  %840 = vmatprep.subr.bf16.mxu0 0
  %841 = vmatpush1.bf16.msra.mxu0 %v823
  %842 = vmatprep.subr.bf16.mxu0 0
  %843 = vmatpush1.bf16.msra.mxu0 %v824
  %844 = vmatprep.subr.bf16.mxu0 0
  %845 = vmatpush1.bf16.msra.mxu0 %v825
  %846 = vmatprep.subr.bf16.mxu0 0
  %847 = vmatpush1.bf16.msra.mxu0 %v826
  %848 = vmatprep.subr.bf16.mxu0 0
  %849 = vmatpush1.bf16.msra.mxu0 %v827
  %850 = vmatprep.subr.bf16.mxu0 0
  %851 = vmatpush1.bf16.msra.mxu0 %v828
  %852 = vmatprep.subr.bf16.mxu0 0
  %853 = vmatpush1.bf16.msra.mxu0 %v829
  %854 = vmatprep.subr.bf16.mxu0 0
  %855 = vmatpush1.bf16.msra.mxu0 0
  %856 = vmatprep.subr.bf16.mxu0 0
  %857 = vmatpush1.bf16.msra.mxu0 0
  %858 = vmatprep.subr.bf16.mxu0 0
  %859 = vmatpush1.bf16.msra.mxu0 0
  %860 = vmatprep.subr.bf16.mxu0 0
  %861 = vmatpush1.bf16.msra.mxu0 0
  %862 = vmatprep.subr.bf16.mxu0 0
  %863 = vmatpush1.bf16.msra.mxu0 0
  %864 = vmatprep.subr.bf16.mxu0 0
  %865 = vmatpush1.bf16.msra.mxu0 0
  %866 = vmatprep.subr.bf16.mxu0 0
  %867 = vmatpush1.bf16.msra.mxu0 0
  %868 = vmatprep.subr.bf16.mxu0 0
  %869 = vmatpush1.bf16.msra.mxu0 0
  %870 = vmatprep.mubr.bf16.mxu0 0
  %871 = vmatmul.mubr.bf16.gmra.mrb[0].mxu0 %v782
  %v872 = vpop.f32.mrb[0].mxu0
  %v873 = vadd.f32 0.0, %v872
  %v874 = vpop.f32.mrb[0].mxu0
  %v875 = vpop.f32.mrb[0].mxu0
  %v876 = vadd.f32 0.0, %v875
  %v877 = vpop.f32.mrb[0].mxu0
  %878 = vmatprep.mubr.bf16.mxu0 0
  %879 = vmatmul.mubr.bf16.gmra.mrb[0].mxu0 %v783
  %v880 = vpop.f32.mrb[0].mxu0
  %v881 = vadd.f32 0.0, %v880
  %v882 = vpop.f32.mrb[0].mxu0
  %v883 = vpop.f32.mrb[0].mxu0
  %v884 = vadd.f32 0.0, %v883
  %v885 = vpop.f32.mrb[0].mxu0
  %886 = vmatprep.mubr.bf16.mxu0 0
  %887 = vmatmul.mubr.bf16.gmra.mrb[0].mxu0 %v784
  %v888 = vpop.f32.mrb[0].mxu0
  %v889 = vadd.f32 0.0, %v888
  %v890 = vpop.f32.mrb[0].mxu0
  %v891 = vpop.f32.mrb[0].mxu0
  %v892 = vadd.f32 0.0, %v891
  %v893 = vpop.f32.mrb[0].mxu0
  %894 = vmatprep.mubr.bf16.mxu0 0
  %895 = vmatmul.mubr.bf16.gmra.mrb[0].mxu0 %v785
  %v896 = vpop.f32.mrb[0].mxu0
  %v897 = vadd.f32 0.0, %v896
  %v898 = vpop.f32.mrb[0].mxu0
  %v899 = vpop.f32.mrb[0].mxu0
  %v900 = vadd.f32 0.0, %v899
  %v901 = vpop.f32.mrb[0].mxu0
  %902 = vmatprep.mubr.bf16.mxu0 0
  %903 = vmatmul.mubr.bf16.gmra.mrb[0].mxu0 %v786
  %v904 = vpop.f32.mrb[0].mxu0
  %v905 = vadd.f32 0.0, %v904
  %v906 = vpop.f32.mrb[0].mxu0
  %v907 = vpop.f32.mrb[0].mxu0
  %v908 = vadd.f32 0.0, %v907
  %v909 = vpop.f32.mrb[0].mxu0
  %910 = vmatprep.mubr.bf16.mxu0 0
  %911 = vmatmul.mubr.bf16.gmra.mrb[0].mxu0 %v787
  %v912 = vpop.f32.mrb[0].mxu0
  %v913 = vadd.f32 0.0, %v912
  %v914 = vpop.f32.mrb[0].mxu0
  %v915 = vpop.f32.mrb[0].mxu0
  %v916 = vadd.f32 0.0, %v915
  %v917 = vpop.f32.mrb[0].mxu0
  %918 = vmatprep.mubr.bf16.mxu0 0
  %919 = vmatmul.mubr.bf16.gmra.mrb[0].mxu0 %v788
  %v920 = vpop.f32.mrb[0].mxu0
  %v921 = vadd.f32 0.0, %v920
  %v922 = vpop.f32.mrb[0].mxu0
  %v923 = vpop.f32.mrb[0].mxu0
  %v924 = vadd.f32 0.0, %v923
  %v925 = vpop.f32.mrb[0].mxu0
  %926 = vmatprep.mubr.bf16.mxu0 0
  %927 = vmatmul.mubr.bf16.gmra.mrb[0].mxu0 %v789
  %v928 = vpop.f32.mrb[0].mxu0
  %v929 = vadd.f32 0.0, %v928
  %v930 = vpop.f32.mrb[0].mxu0
  %v931 = vpop.f32.mrb[0].mxu0
  %v932 = vadd.f32 0.0, %v931
  %v933 = vpop.f32.mrb[0].mxu0
  %934 = vdwg.mxu0
  %v935 = vtanh.pop %v873
  %v936 = vtanh.pop %v876
  %v937 = vtanh.pop %v881
  %v938 = vtanh.pop %v884
  %v939 = vtanh.pop %v889
  %v940 = vtanh.pop %v892
  %v941 = vtanh.pop %v897
  %v942 = vtanh.pop %v900
  %v943 = vtanh.pop %v905
  %v944 = vtanh.pop %v908
  %v945 = vtanh.pop %v913
  %v946 = vtanh.pop %v916
  %v947 = vtanh.pop %v921
  %v948 = vtanh.pop %v924
  %v949 = vtanh.pop %v929
  %v950 = vtanh.pop %v932
  %vm951 = vcmp.gt.f32.partialorder %v64, 0.0
  %vm952 = vcmp.gt.f32.partialorder %v67, 0.0
  %vm953 = vcmp.gt.f32.partialorder %v70, 0.0
  %vm954 = vcmp.gt.f32.partialorder %v73, 0.0
  %vm955 = vcmp.gt.f32.partialorder %v76, 0.0
  %vm956 = vcmp.gt.f32.partialorder %v79, 0.0
  %vm957 = vcmp.gt.f32.partialorder %v82, 0.0
  %vm958 = vcmp.gt.f32.partialorder %v85, 0.0
  %vm959 = vcmp.gt.f32.partialorder %v88, 0.0
  %vm960 = vcmp.gt.f32.partialorder %v91, 0.0
  %vm961 = vcmp.gt.f32.partialorder %v94, 0.0
  %vm962 = vcmp.gt.f32.partialorder %v97, 0.0
  %vm963 = vcmp.gt.f32.partialorder %v100, 0.0
  %vm964 = vcmp.gt.f32.partialorder %v103, 0.0
  %vm965 = vcmp.gt.f32.partialorder %v106, 0.0
  %vm966 = vcmp.gt.f32.partialorder %v109, 0.0
  %v967 = vsel %vm951, %v935, -1e+30
  %v968 = vsel %vm952, %v936, -1e+30
  %v969 = vsel %vm953, %v937, -1e+30
  %v970 = vsel %vm954, %v938, -1e+30
  %v971 = vsel %vm955, %v939, -1e+30
  %v972 = vsel %vm956, %v940, -1e+30
  %v973 = vsel %vm957, %v941, -1e+30
  %v974 = vsel %vm958, %v942, -1e+30
  %v975 = vsel %vm959, %v943, -1e+30
  %v976 = vsel %vm960, %v944, -1e+30
  %v977 = vsel %vm961, %v945, -1e+30
  %v978 = vsel %vm962, %v946, -1e+30
  %v979 = vsel %vm963, %v947, -1e+30
  %v980 = vsel %vm964, %v948, -1e+30
  %v981 = vsel %vm965, %v949, -1e+30
  %v982 = vsel %vm966, %v950, -1e+30
  %984 = vset.pattern.permute.xlu0 0
  %985 = vperm.xlu0 %984, %v967
  %v986 = vpop.permute.xlu0 %985
  %989 = vset.pattern.permute.xlu0 0
  %990 = vperm.xlu0 %989, %v968
  %v991 = vpop.permute.xlu0 %990
  %994 = vset.pattern.permute.xlu0 0
  %995 = vperm.xlu0 %994, %v969
  %v996 = vpop.permute.xlu0 %995
  %999 = vset.pattern.permute.xlu0 0
  %1000 = vperm.xlu0 %999, %v970
  %v1001 = vpop.permute.xlu0 %1000
  %1004 = vset.pattern.permute.xlu0 0
  %1005 = vperm.xlu0 %1004, %v971
  %v1006 = vpop.permute.xlu0 %1005
  %1009 = vset.pattern.permute.xlu0 0
  %1010 = vperm.xlu0 %1009, %v972
  %v1011 = vpop.permute.xlu0 %1010
  %1014 = vset.pattern.permute.xlu0 0
  %1015 = vperm.xlu0 %1014, %v973
  %v1016 = vpop.permute.xlu0 %1015
  %1019 = vset.pattern.permute.xlu0 0
  %1020 = vperm.xlu0 %1019, %v974
  %v1021 = vpop.permute.xlu0 %1020
  %1024 = vset.pattern.permute.xlu0 0
  %1025 = vperm.xlu0 %1024, %v975
  %v1026 = vpop.permute.xlu0 %1025
  %1029 = vset.pattern.permute.xlu0 0
  %1030 = vperm.xlu0 %1029, %v976
  %v1031 = vpop.permute.xlu0 %1030
  %1034 = vset.pattern.permute.xlu0 0
  %1035 = vperm.xlu0 %1034, %v977
  %v1036 = vpop.permute.xlu0 %1035
  %1039 = vset.pattern.permute.xlu0 0
  %1040 = vperm.xlu0 %1039, %v978
  %v1041 = vpop.permute.xlu0 %1040
  %1044 = vset.pattern.permute.xlu0 0
  %1045 = vperm.xlu0 %1044, %v979
  %v1046 = vpop.permute.xlu0 %1045
  %1049 = vset.pattern.permute.xlu0 0
  %1050 = vperm.xlu0 %1049, %v980
  %v1051 = vpop.permute.xlu0 %1050
  %1054 = vset.pattern.permute.xlu0 0
  %1055 = vperm.xlu0 %1054, %v981
  %v1056 = vpop.permute.xlu0 %1055
  %1059 = vset.pattern.permute.xlu0 0
  %1060 = vperm.xlu0 %1059, %v982
  %v1061 = vpop.permute.xlu0 %1060
  %1063 = vxpose.xlu0.b32.start [1/16] %v986, 128
  %1064 = vxpose.xlu0.b32.cont [2/16] %v991, 128
  %1065 = vxpose.xlu0.b32.cont [3/16] %v996, 128
  %1066 = vxpose.xlu0.b32.cont [4/16] %v1001, 128
  %1067 = vxpose.xlu0.b32.cont [5/16] %v1006, 128
  %1068 = vxpose.xlu0.b32.cont [6/16] %v1011, 128
  %1069 = vxpose.xlu0.b32.cont [7/16] %v1016, 128
  %1070 = vxpose.xlu0.b32.cont [8/16] %v1021, 128
  %1071 = vxpose.xlu0.b32.cont [9/16] %v1026, 128
  %1072 = vxpose.xlu0.b32.cont [10/16] %v1031, 128
  %1073 = vxpose.xlu0.b32.cont [11/16] %v1036, 128
  %1074 = vxpose.xlu0.b32.cont [12/16] %v1041, 128
  %1075 = vxpose.xlu0.b32.cont [13/16] %v1046, 128
  %1076 = vxpose.xlu0.b32.cont [14/16] %v1051, 128
  %1077 = vxpose.xlu0.b32.cont [15/16] %v1056, 128
  %1078 = vxpose.xlu0.b32.end [16/16] %v1061, 128
  %v1079 = vpop.trf.xlu0
  %v1080 = vpop.trf.xlu0
  %v1081 = vpop.trf.xlu0
  %v1082 = vpop.trf.xlu0
  %v1083 = vpop.trf.xlu0
  %v1084 = vpop.trf.xlu0
  %v1085 = vpop.trf.xlu0
  %v1086 = vpop.trf.xlu0
  %v1087 = vpop.trf.xlu0
  %v1088 = vpop.trf.xlu0
  %v1089 = vpop.trf.xlu0
  %v1090 = vpop.trf.xlu0
  %v1091 = vpop.trf.xlu0
  %v1092 = vpop.trf.xlu0
  %v1093 = vpop.trf.xlu0
  %v1094 = vpop.trf.xlu0
  %vm1095 = vcmp.gt.f32.partialorder %v1079, %v986
  %vm1096 = vcmp.gt.f32.partialorder %v1080, %v991
  %vm1097 = vcmp.gt.f32.partialorder %v1081, %v996
  %vm1098 = vcmp.gt.f32.partialorder %v1082, %v1001
  %vm1099 = vcmp.gt.f32.partialorder %v1083, %v1006
  %vm1100 = vcmp.gt.f32.partialorder %v1084, %v1011
  %vm1101 = vcmp.gt.f32.partialorder %v1085, %v1016
  %vm1102 = vcmp.gt.f32.partialorder %v1086, %v1021
  %vm1103 = vcmp.gt.f32.partialorder %v1087, %v1026
  %vm1104 = vcmp.gt.f32.partialorder %v1088, %v1031
  %vm1105 = vcmp.gt.f32.partialorder %v1089, %v1036
  %vm1106 = vcmp.gt.f32.partialorder %v1090, %v1041
  %vm1107 = vcmp.gt.f32.partialorder %v1091, %v1046
  %vm1108 = vcmp.gt.f32.partialorder %v1092, %v1051
  %vm1109 = vcmp.gt.f32.partialorder %v1093, %v1056
  %vm1110 = vcmp.gt.f32.partialorder %v1094, %v1061
  %vm1111 = vcmp.eq.f32.partialorder %v1079, %v986
  %vm1112 = vcmp.eq.f32.partialorder %v1080, %v991
  %vm1113 = vcmp.eq.f32.partialorder %v1081, %v996
  %vm1114 = vcmp.eq.f32.partialorder %v1082, %v1001
  %vm1115 = vcmp.eq.f32.partialorder %v1083, %v1006
  %vm1116 = vcmp.eq.f32.partialorder %v1084, %v1011
  %vm1117 = vcmp.eq.f32.partialorder %v1085, %v1016
  %vm1118 = vcmp.eq.f32.partialorder %v1086, %v1021
  %vm1119 = vcmp.eq.f32.partialorder %v1087, %v1026
  %vm1120 = vcmp.eq.f32.partialorder %v1088, %v1031
  %vm1121 = vcmp.eq.f32.partialorder %v1089, %v1036
  %vm1122 = vcmp.eq.f32.partialorder %v1090, %v1041
  %vm1123 = vcmp.eq.f32.partialorder %v1091, %v1046
  %vm1124 = vcmp.eq.f32.partialorder %v1092, %v1051
  %vm1125 = vcmp.eq.f32.partialorder %v1093, %v1056
  %vm1126 = vcmp.eq.f32.partialorder %v1094, %v1061
  %vm1127 = vmand %vm1111, %vm129
  %vm1128 = vmand %vm1112, %vm130
  %vm1129 = vmand %vm1113, %vm131
  %vm1130 = vmand %vm1114, %vm132
  %vm1131 = vmand %vm1115, %vm133
  %vm1132 = vmand %vm1116, %vm134
  %vm1133 = vmand %vm1117, %vm135
  %vm1134 = vmand %vm1118, %vm136
  %vm1135 = vmand %vm1119, %vm137
  %vm1136 = vmand %vm1120, %vm138
  %vm1137 = vmand %vm1121, %vm139
  %vm1138 = vmand %vm1122, %vm140
  %vm1139 = vmand %vm1123, %vm141
  %vm1140 = vmand %vm1124, %vm142
  %vm1141 = vmand %vm1125, %vm143
  %vm1142 = vmand %vm1126, %vm144
  %vm1143 = vmor %vm1095, %vm1127
  %vm1144 = vmor %vm1096, %vm1128
  %vm1145 = vmor %vm1097, %vm1129
  %vm1146 = vmor %vm1098, %vm1130
  %vm1147 = vmor %vm1099, %vm1131
  %vm1148 = vmor %vm1100, %vm1132
  %vm1149 = vmor %vm1101, %vm1133
  %vm1150 = vmor %vm1102, %vm1134
  %vm1151 = vmor %vm1103, %vm1135
  %vm1152 = vmor %vm1104, %vm1136
  %vm1153 = vmor %vm1105, %vm1137
  %vm1154 = vmor %vm1106, %vm1138
  %vm1155 = vmor %vm1107, %vm1139
  %vm1156 = vmor %vm1108, %vm1140
  %vm1157 = vmor %vm1109, %vm1141
  %vm1158 = vmor %vm1110, %vm1142
  %v1159 = vsel %vm1143, 1, 0
  %v1160 = vsel %vm1144, 1, 0
  %v1161 = vsel %vm1145, 1, 0
  %v1162 = vsel %vm1146, 1, 0
  %v1163 = vsel %vm1147, 1, 0
  %v1164 = vsel %vm1148, 1, 0
  %v1165 = vsel %vm1149, 1, 0
  %v1166 = vsel %vm1150, 1, 0
  %v1167 = vsel %vm1151, 1, 0
  %v1168 = vsel %vm1152, 1, 0
  %v1169 = vsel %vm1153, 1, 0
  %v1170 = vsel %vm1154, 1, 0
  %v1171 = vsel %vm1155, 1, 0
  %v1172 = vsel %vm1156, 1, 0
  %v1173 = vsel %vm1157, 1, 0
  %v1174 = vsel %vm1158, 1, 0
  %v1175 = vcvt.s32.f32 %v1159
  %v1176 = vcvt.s32.f32 %v1160
  %v1177 = vcvt.s32.f32 %v1161
  %v1178 = vcvt.s32.f32 %v1162
  %v1179 = vcvt.s32.f32 %v1163
  %v1180 = vcvt.s32.f32 %v1164
  %v1181 = vcvt.s32.f32 %v1165
  %v1182 = vcvt.s32.f32 %v1166
  %v1183 = vcvt.s32.f32 %v1167
  %v1184 = vcvt.s32.f32 %v1168
  %v1185 = vcvt.s32.f32 %v1169
  %v1186 = vcvt.s32.f32 %v1170
  %v1187 = vcvt.s32.f32 %v1171
  %v1188 = vcvt.s32.f32 %v1172
  %v1189 = vcvt.s32.f32 %v1173
  %v1190 = vcvt.s32.f32 %v1174
  %v1191 = vpack.c.bf16 %v1176, %v1175
  %v1192 = vpack.c.bf16 %v1178, %v1177
  %v1193 = vpack.c.bf16 %v1180, %v1179
  %v1194 = vpack.c.bf16 %v1182, %v1181
  %v1195 = vpack.c.bf16 %v1184, %v1183
  %v1196 = vpack.c.bf16 %v1186, %v1185
  %v1197 = vpack.c.bf16 %v1188, %v1187
  %v1198 = vpack.c.bf16 %v1190, %v1189
  %1199 = vmatprep.subr.bf16.mxu0 0
  %1200 = vmatpush1.bf16.msra.mxu0 %v53
  %1201 = vmatprep.subr.bf16.mxu0 0
  %1202 = vmatpush1.bf16.msra.mxu0 %v54
  %1203 = vmatprep.subr.bf16.mxu0 0
  %1204 = vmatpush1.bf16.msra.mxu0 %v55
  %1205 = vmatprep.subr.bf16.mxu0 0
  %1206 = vmatpush1.bf16.msra.mxu0 %v56
  %1207 = vmatprep.subr.bf16.mxu0 0
  %1208 = vmatpush1.bf16.msra.mxu0 %v57
  %1209 = vmatprep.subr.bf16.mxu0 0
  %1210 = vmatpush1.bf16.msra.mxu0 %v58
  %1211 = vmatprep.subr.bf16.mxu0 0
  %1212 = vmatpush1.bf16.msra.mxu0 %v59
  %1213 = vmatprep.subr.bf16.mxu0 0
  %1214 = vmatpush1.bf16.msra.mxu0 %v60
  %1215 = vmatprep.subr.bf16.mxu0 0
  %1216 = vmatpush1.bf16.msra.mxu0 0
  %1217 = vmatprep.subr.bf16.mxu0 0
  %1218 = vmatpush1.bf16.msra.mxu0 0
  %1219 = vmatprep.subr.bf16.mxu0 0
  %1220 = vmatpush1.bf16.msra.mxu0 0
  %1221 = vmatprep.subr.bf16.mxu0 0
  %1222 = vmatpush1.bf16.msra.mxu0 0
  %1223 = vmatprep.subr.bf16.mxu0 0
  %1224 = vmatpush1.bf16.msra.mxu0 0
  %1225 = vmatprep.subr.bf16.mxu0 0
  %1226 = vmatpush1.bf16.msra.mxu0 0
  %1227 = vmatprep.subr.bf16.mxu0 0
  %1228 = vmatpush1.bf16.msra.mxu0 0
  %1229 = vmatprep.subr.bf16.mxu0 0
  %1230 = vmatpush1.bf16.msra.mxu0 0
  %1231 = vmatprep.mubr.bf16.mxu0 0
  %1232 = vmatmul.mubr.bf16.gmra.mrb[0].mxu0 %v1191
  %v1233 = vpop.f32.mrb[0].mxu0
  %v1234 = vadd.f32 0.0, %v1233
  %v1235 = vpop.f32.mrb[0].mxu0
  %v1236 = vpop.f32.mrb[0].mxu0
  %v1237 = vadd.f32 0.0, %v1236
  %v1238 = vpop.f32.mrb[0].mxu0
  %1239 = vmatprep.mubr.bf16.mxu0 0
  %1240 = vmatmul.mubr.bf16.gmra.mrb[0].mxu0 %v1192
  %v1241 = vpop.f32.mrb[0].mxu0
  %v1242 = vadd.f32 0.0, %v1241
  %v1243 = vpop.f32.mrb[0].mxu0
  %v1244 = vpop.f32.mrb[0].mxu0
  %v1245 = vadd.f32 0.0, %v1244
  %v1246 = vpop.f32.mrb[0].mxu0
  %1247 = vmatprep.mubr.bf16.mxu0 0
  %1248 = vmatmul.mubr.bf16.gmra.mrb[0].mxu0 %v1193
  %v1249 = vpop.f32.mrb[0].mxu0
  %v1250 = vadd.f32 0.0, %v1249
  %v1251 = vpop.f32.mrb[0].mxu0
  %v1252 = vpop.f32.mrb[0].mxu0
  %v1253 = vadd.f32 0.0, %v1252
  %v1254 = vpop.f32.mrb[0].mxu0
  %1255 = vmatprep.mubr.bf16.mxu0 0
  %1256 = vmatmul.mubr.bf16.gmra.mrb[0].mxu0 %v1194
  %v1257 = vpop.f32.mrb[0].mxu0
  %v1258 = vadd.f32 0.0, %v1257
  %v1259 = vpop.f32.mrb[0].mxu0
  %v1260 = vpop.f32.mrb[0].mxu0
  %v1261 = vadd.f32 0.0, %v1260
  %v1262 = vpop.f32.mrb[0].mxu0
  %1263 = vmatprep.mubr.bf16.mxu0 0
  %1264 = vmatmul.mubr.bf16.gmra.mrb[0].mxu0 %v1195
  %v1265 = vpop.f32.mrb[0].mxu0
  %v1266 = vadd.f32 0.0, %v1265
  %v1267 = vpop.f32.mrb[0].mxu0
  %v1268 = vpop.f32.mrb[0].mxu0
  %v1269 = vadd.f32 0.0, %v1268
  %v1270 = vpop.f32.mrb[0].mxu0
  %1271 = vmatprep.mubr.bf16.mxu0 0
  %1272 = vmatmul.mubr.bf16.gmra.mrb[0].mxu0 %v1196
  %v1273 = vpop.f32.mrb[0].mxu0
  %v1274 = vadd.f32 0.0, %v1273
  %v1275 = vpop.f32.mrb[0].mxu0
  %v1276 = vpop.f32.mrb[0].mxu0
  %v1277 = vadd.f32 0.0, %v1276
  %v1278 = vpop.f32.mrb[0].mxu0
  %1279 = vmatprep.mubr.bf16.mxu0 0
  %1280 = vmatmul.mubr.bf16.gmra.mrb[0].mxu0 %v1197
  %v1281 = vpop.f32.mrb[0].mxu0
  %v1282 = vadd.f32 0.0, %v1281
  %v1283 = vpop.f32.mrb[0].mxu0
  %v1284 = vpop.f32.mrb[0].mxu0
  %v1285 = vadd.f32 0.0, %v1284
  %v1286 = vpop.f32.mrb[0].mxu0
  %1287 = vmatprep.mubr.bf16.mxu0 0
  %1288 = vmatmul.mubr.bf16.gmra.mrb[0].mxu0 %v1198
  %v1289 = vpop.f32.mrb[0].mxu0
  %v1290 = vadd.f32 0.0, %v1289
  %v1291 = vpop.f32.mrb[0].mxu0
  %v1292 = vpop.f32.mrb[0].mxu0
  %v1293 = vadd.f32 0.0, %v1292
  %v1294 = vpop.f32.mrb[0].mxu0
  %1295 = vdwg.mxu0
  %v1296 = vmul.f32 %v37, %v1234
  %v1297 = vmul.f32 %v38, %v1237
  %v1298 = vmul.f32 %v39, %v1242
  %v1299 = vmul.f32 %v40, %v1245
  %v1300 = vmul.f32 %v41, %v1250
  %v1301 = vmul.f32 %v42, %v1253
  %v1302 = vmul.f32 %v43, %v1258
  %v1303 = vmul.f32 %v44, %v1261
  %v1304 = vmul.f32 %v45, %v1266
  %v1305 = vmul.f32 %v46, %v1269
  %v1306 = vmul.f32 %v47, %v1274
  %v1307 = vmul.f32 %v48, %v1277
  %v1308 = vmul.f32 %v49, %v1282
  %v1309 = vmul.f32 %v50, %v1285
  %v1310 = vmul.f32 %v51, %v1290
  %v1311 = vmul.f32 %v52, %v1293
  %v1312 = vsel %vm61, %v1296, 0.0
  %1313 = vadd.xlane.f32.xlu0 %v1312
  %v1314 = vpop.xlane.xlu0 %1313
  %v1315 = vsel %vm61, %v1297, 0.0
  %1316 = vadd.xlane.f32.xlu0 %v1315
  %v1317 = vpop.xlane.xlu0 %1316
  %v1318 = vsel %vm61, %v1298, 0.0
  %1319 = vadd.xlane.f32.xlu0 %v1318
  %v1320 = vpop.xlane.xlu0 %1319
  %v1321 = vsel %vm61, %v1299, 0.0
  %1322 = vadd.xlane.f32.xlu0 %v1321
  %v1323 = vpop.xlane.xlu0 %1322
  %v1324 = vsel %vm61, %v1300, 0.0
  %1325 = vadd.xlane.f32.xlu0 %v1324
  %v1326 = vpop.xlane.xlu0 %1325
  %v1327 = vsel %vm61, %v1301, 0.0
  %1328 = vadd.xlane.f32.xlu0 %v1327
  %v1329 = vpop.xlane.xlu0 %1328
  %v1330 = vsel %vm61, %v1302, 0.0
  %1331 = vadd.xlane.f32.xlu0 %v1330
  %v1332 = vpop.xlane.xlu0 %1331
  %v1333 = vsel %vm61, %v1303, 0.0
  %1334 = vadd.xlane.f32.xlu0 %v1333
  %v1335 = vpop.xlane.xlu0 %1334
  %v1336 = vsel %vm61, %v1304, 0.0
  %1337 = vadd.xlane.f32.xlu0 %v1336
  %v1338 = vpop.xlane.xlu0 %1337
  %v1339 = vsel %vm61, %v1305, 0.0
  %1340 = vadd.xlane.f32.xlu0 %v1339
  %v1341 = vpop.xlane.xlu0 %1340
  %v1342 = vsel %vm61, %v1306, 0.0
  %1343 = vadd.xlane.f32.xlu0 %v1342
  %v1344 = vpop.xlane.xlu0 %1343
  %v1345 = vsel %vm61, %v1307, 0.0
  %1346 = vadd.xlane.f32.xlu0 %v1345
  %v1347 = vpop.xlane.xlu0 %1346
  %v1348 = vsel %vm61, %v1308, 0.0
  %1349 = vadd.xlane.f32.xlu0 %v1348
  %v1350 = vpop.xlane.xlu0 %1349
  %v1351 = vsel %vm61, %v1309, 0.0
  %1352 = vadd.xlane.f32.xlu0 %v1351
  %v1353 = vpop.xlane.xlu0 %1352
  %v1354 = vsel %vm61, %v1310, 0.0
  %1355 = vadd.xlane.f32.xlu0 %v1354
  %v1356 = vpop.xlane.xlu0 %1355
  %v1357 = vsel %vm61, %v1311, 0.0
  %1358 = vadd.xlane.f32.xlu0 %v1357
  %v1359 = vpop.xlane.xlu0 %1358
  %v1360 = vsel %vm61, %v163, 0.0
  %v1361 = vsel %vm61, %v164, 0.0
  %v1362 = vadd.f32 %v1360, %v1361
  %v1363 = vsel %vm61, %v165, 0.0
  %v1364 = vadd.f32 %v1362, %v1363
  %v1365 = vsel %vm61, %v166, 0.0
  %v1366 = vadd.f32 %v1364, %v1365
  %v1367 = vsel %vm61, %v167, 0.0
  %v1368 = vadd.f32 %v1366, %v1367
  %v1369 = vsel %vm61, %v168, 0.0
  %v1370 = vadd.f32 %v1368, %v1369
  %v1371 = vsel %vm61, %v169, 0.0
  %v1372 = vadd.f32 %v1370, %v1371
  %v1373 = vsel %vm61, %v170, 0.0
  %v1374 = vadd.f32 %v1372, %v1373
  %v1375 = vsel %vm61, %v171, 0.0
  %v1376 = vadd.f32 %v1374, %v1375
  %v1377 = vsel %vm61, %v172, 0.0
  %v1378 = vadd.f32 %v1376, %v1377
  %v1379 = vsel %vm61, %v173, 0.0
  %v1380 = vadd.f32 %v1378, %v1379
  %v1381 = vsel %vm61, %v174, 0.0
  %v1382 = vadd.f32 %v1380, %v1381
  %v1383 = vsel %vm61, %v175, 0.0
  %v1384 = vadd.f32 %v1382, %v1383
  %v1385 = vsel %vm61, %v176, 0.0
  %v1386 = vadd.f32 %v1384, %v1385
  %v1387 = vsel %vm61, %v177, 0.0
  %v1388 = vadd.f32 %v1386, %v1387
  %v1389 = vsel %vm61, %v178, 0.0
  %v1390 = vadd.f32 %v1388, %v1389
  %v1391 = vrot.slane %v1390, 4
  %v1392 = vadd.f32 %v1390, %v1391
  %v1393 = vrot.slane %v1392, 2
  %v1394 = vadd.f32 %v1392, %v1393
  %v1395 = vrot.slane %v1394, 1
  %v1396 = vadd.f32 %v1394, %v1395
  %v1397 = vmul.f32 %v37, %v1396
  %v1398 = vmul.f32 %v38, %v1396
  %v1399 = vmul.f32 %v39, %v1396
  %v1400 = vmul.f32 %v40, %v1396
  %v1401 = vmul.f32 %v41, %v1396
  %v1402 = vmul.f32 %v42, %v1396
  %v1403 = vmul.f32 %v43, %v1396
  %v1404 = vmul.f32 %v44, %v1396
  %v1405 = vmul.f32 %v45, %v1396
  %v1406 = vmul.f32 %v46, %v1396
  %v1407 = vmul.f32 %v47, %v1396
  %v1408 = vmul.f32 %v48, %v1396
  %v1409 = vmul.f32 %v49, %v1396
  %v1410 = vmul.f32 %v50, %v1396
  %v1411 = vmul.f32 %v51, %v1396
  %v1412 = vmul.f32 %v52, %v1396
  %v1413 = vsel %vm61, %v1397, 0.0
  %1414 = vadd.xlane.f32.xlu0 %v1413
  %v1415 = vpop.xlane.xlu0 %1414
  %v1416 = vsel %vm61, %v1398, 0.0
  %1417 = vadd.xlane.f32.xlu0 %v1416
  %v1418 = vpop.xlane.xlu0 %1417
  %v1419 = vsel %vm61, %v1399, 0.0
  %1420 = vadd.xlane.f32.xlu0 %v1419
  %v1421 = vpop.xlane.xlu0 %1420
  %v1422 = vsel %vm61, %v1400, 0.0
  %1423 = vadd.xlane.f32.xlu0 %v1422
  %v1424 = vpop.xlane.xlu0 %1423
  %v1425 = vsel %vm61, %v1401, 0.0
  %1426 = vadd.xlane.f32.xlu0 %v1425
  %v1427 = vpop.xlane.xlu0 %1426
  %v1428 = vsel %vm61, %v1402, 0.0
  %1429 = vadd.xlane.f32.xlu0 %v1428
  %v1430 = vpop.xlane.xlu0 %1429
  %v1431 = vsel %vm61, %v1403, 0.0
  %1432 = vadd.xlane.f32.xlu0 %v1431
  %v1433 = vpop.xlane.xlu0 %1432
  %v1434 = vsel %vm61, %v1404, 0.0
  %1435 = vadd.xlane.f32.xlu0 %v1434
  %v1436 = vpop.xlane.xlu0 %1435
  %v1437 = vsel %vm61, %v1405, 0.0
  %1438 = vadd.xlane.f32.xlu0 %v1437
  %v1439 = vpop.xlane.xlu0 %1438
  %v1440 = vsel %vm61, %v1406, 0.0
  %1441 = vadd.xlane.f32.xlu0 %v1440
  %v1442 = vpop.xlane.xlu0 %1441
  %v1443 = vsel %vm61, %v1407, 0.0
  %1444 = vadd.xlane.f32.xlu0 %v1443
  %v1445 = vpop.xlane.xlu0 %1444
  %v1446 = vsel %vm61, %v1408, 0.0
  %1447 = vadd.xlane.f32.xlu0 %v1446
  %v1448 = vpop.xlane.xlu0 %1447
  %v1449 = vsel %vm61, %v1409, 0.0
  %1450 = vadd.xlane.f32.xlu0 %v1449
  %v1451 = vpop.xlane.xlu0 %1450
  %v1452 = vsel %vm61, %v1410, 0.0
  %1453 = vadd.xlane.f32.xlu0 %v1452
  %v1454 = vpop.xlane.xlu0 %1453
  %v1455 = vsel %vm61, %v1411, 0.0
  %1456 = vadd.xlane.f32.xlu0 %v1455
  %v1457 = vpop.xlane.xlu0 %1456
  %v1458 = vsel %vm61, %v1412, 0.0
  %1459 = vadd.xlane.f32.xlu0 %v1458
  %v1460 = vpop.xlane.xlu0 %1459
  %v1461 = vmul.f32 %v1415, 0.9
  %v1462 = vmul.f32 %v1418, 0.9
  %v1463 = vmul.f32 %v1421, 0.9
  %v1464 = vmul.f32 %v1424, 0.9
  %v1465 = vmul.f32 %v1427, 0.9
  %v1466 = vmul.f32 %v1430, 0.9
  %v1467 = vmul.f32 %v1433, 0.9
  %v1468 = vmul.f32 %v1436, 0.9
  %v1469 = vmul.f32 %v1439, 0.9
  %v1470 = vmul.f32 %v1442, 0.9
  %v1471 = vmul.f32 %v1445, 0.9
  %v1472 = vmul.f32 %v1448, 0.9
  %v1473 = vmul.f32 %v1451, 0.9
  %v1474 = vmul.f32 %v1454, 0.9
  %v1475 = vmul.f32 %v1457, 0.9
  %v1476 = vmul.f32 %v1460, 0.9
  %vm1477 = vcmp.lt.f32.partialorder %v1314, %v1461
  %vm1478 = vcmp.lt.f32.partialorder %v1317, %v1462
  %vm1479 = vcmp.lt.f32.partialorder %v1320, %v1463
  %vm1480 = vcmp.lt.f32.partialorder %v1323, %v1464
  %vm1481 = vcmp.lt.f32.partialorder %v1326, %v1465
  %vm1482 = vcmp.lt.f32.partialorder %v1329, %v1466
  %vm1483 = vcmp.lt.f32.partialorder %v1332, %v1467
  %vm1484 = vcmp.lt.f32.partialorder %v1335, %v1468
  %vm1485 = vcmp.lt.f32.partialorder %v1338, %v1469
  %vm1486 = vcmp.lt.f32.partialorder %v1341, %v1470
  %vm1487 = vcmp.lt.f32.partialorder %v1344, %v1471
  %vm1488 = vcmp.lt.f32.partialorder %v1347, %v1472
  %vm1489 = vcmp.lt.f32.partialorder %v1350, %v1473
  %vm1490 = vcmp.lt.f32.partialorder %v1353, %v1474
  %vm1491 = vcmp.lt.f32.partialorder %v1356, %v1475
  %vm1492 = vcmp.lt.f32.partialorder %v1359, %v1476
  %vm1493 = vcmp.lt.f32.partialorder %v1314, 1.0
  %vm1494 = vcmp.lt.f32.partialorder %v1317, 1.0
  %vm1495 = vcmp.lt.f32.partialorder %v1320, 1.0
  %vm1496 = vcmp.lt.f32.partialorder %v1323, 1.0
  %vm1497 = vcmp.lt.f32.partialorder %v1326, 1.0
  %vm1498 = vcmp.lt.f32.partialorder %v1329, 1.0
  %vm1499 = vcmp.lt.f32.partialorder %v1332, 1.0
  %vm1500 = vcmp.lt.f32.partialorder %v1335, 1.0
  %vm1501 = vcmp.lt.f32.partialorder %v1338, 1.0
  %vm1502 = vcmp.lt.f32.partialorder %v1341, 1.0
  %vm1503 = vcmp.lt.f32.partialorder %v1344, 1.0
  %vm1504 = vcmp.lt.f32.partialorder %v1347, 1.0
  %vm1505 = vcmp.lt.f32.partialorder %v1350, 1.0
  %vm1506 = vcmp.lt.f32.partialorder %v1353, 1.0
  %vm1507 = vcmp.lt.f32.partialorder %v1356, 1.0
  %vm1508 = vcmp.lt.f32.partialorder %v1359, 1.0
  %vm1509 = vmor %vm1477, %vm1493
  %vm1510 = vmor %vm1478, %vm1494
  %vm1511 = vmor %vm1479, %vm1495
  %vm1512 = vmor %vm1480, %vm1496
  %vm1513 = vmor %vm1481, %vm1497
  %vm1514 = vmor %vm1482, %vm1498
  %vm1515 = vmor %vm1483, %vm1499
  %vm1516 = vmor %vm1484, %vm1500
  %vm1517 = vmor %vm1485, %vm1501
  %vm1518 = vmor %vm1486, %vm1502
  %vm1519 = vmor %vm1487, %vm1503
  %vm1520 = vmor %vm1488, %vm1504
  %vm1521 = vmor %vm1489, %vm1505
  %vm1522 = vmor %vm1490, %vm1506
  %vm1523 = vmor %vm1491, %vm1507
  %vm1524 = vmor %vm1492, %vm1508
  %vm1525 = vmand %vm951, %vm1509
  %vm1526 = vmand %vm952, %vm1510
  %vm1527 = vmand %vm953, %vm1511
  %vm1528 = vmand %vm954, %vm1512
  %vm1529 = vmand %vm955, %vm1513
  %vm1530 = vmand %vm956, %vm1514
  %vm1531 = vmand %vm957, %vm1515
  %vm1532 = vmand %vm958, %vm1516
  %vm1533 = vmand %vm959, %vm1517
  %vm1534 = vmand %vm960, %vm1518
  %vm1535 = vmand %vm961, %vm1519
  %vm1536 = vmand %vm962, %vm1520
  %vm1537 = vmand %vm963, %vm1521
  %vm1538 = vmand %vm964, %vm1522
  %vm1539 = vmand %vm965, %vm1523
  %vm1540 = vmand %vm966, %vm1524
  %v1541 = vsel %vm1525, 1, 0
  %v1542 = vsel %vm1526, 1, 0
  %v1543 = vsel %vm1527, 1, 0
  %v1544 = vsel %vm1528, 1, 0
  %v1545 = vsel %vm1529, 1, 0
  %v1546 = vsel %vm1530, 1, 0
  %v1547 = vsel %vm1531, 1, 0
  %v1548 = vsel %vm1532, 1, 0
  %v1549 = vsel %vm1533, 1, 0
  %v1550 = vsel %vm1534, 1, 0
  %v1551 = vsel %vm1535, 1, 0
  %v1552 = vsel %vm1536, 1, 0
  %v1553 = vsel %vm1537, 1, 0
  %v1554 = vsel %vm1538, 1, 0
  %v1555 = vsel %vm1539, 1, 0
  %v1556 = vsel %vm1540, 1, 0
  %v1557 = vcvt.s32.f32 %v1541
  %v1558 = vcvt.s32.f32 %v1542
  %v1559 = vcvt.s32.f32 %v1543
  %v1560 = vcvt.s32.f32 %v1544
  %v1561 = vcvt.s32.f32 %v1545
  %v1562 = vcvt.s32.f32 %v1546
  %v1563 = vcvt.s32.f32 %v1547
  %v1564 = vcvt.s32.f32 %v1548
  %v1565 = vcvt.s32.f32 %v1549
  %v1566 = vcvt.s32.f32 %v1550
  %v1567 = vcvt.s32.f32 %v1551
  %v1568 = vcvt.s32.f32 %v1552
  %v1569 = vcvt.s32.f32 %v1553
  %v1570 = vcvt.s32.f32 %v1554
  %v1571 = vcvt.s32.f32 %v1555
  %v1572 = vcvt.s32.f32 %v1556
  %1574 = vset.pattern.permute.xlu0 0
  %1575 = vperm.xlu0 %1574, %v935
  %v1576 = vpop.permute.xlu0 %1575
  %1579 = vset.pattern.permute.xlu0 0
  %1580 = vperm.xlu0 %1579, %v936
  %v1581 = vpop.permute.xlu0 %1580
  %1584 = vset.pattern.permute.xlu0 0
  %1585 = vperm.xlu0 %1584, %v937
  %v1586 = vpop.permute.xlu0 %1585
  %1589 = vset.pattern.permute.xlu0 0
  %1590 = vperm.xlu0 %1589, %v938
  %v1591 = vpop.permute.xlu0 %1590
  %1594 = vset.pattern.permute.xlu0 0
  %1595 = vperm.xlu0 %1594, %v939
  %v1596 = vpop.permute.xlu0 %1595
  %1599 = vset.pattern.permute.xlu0 0
  %1600 = vperm.xlu0 %1599, %v940
  %v1601 = vpop.permute.xlu0 %1600
  %1604 = vset.pattern.permute.xlu0 0
  %1605 = vperm.xlu0 %1604, %v941
  %v1606 = vpop.permute.xlu0 %1605
  %1609 = vset.pattern.permute.xlu0 0
  %1610 = vperm.xlu0 %1609, %v942
  %v1611 = vpop.permute.xlu0 %1610
  %1614 = vset.pattern.permute.xlu0 0
  %1615 = vperm.xlu0 %1614, %v943
  %v1616 = vpop.permute.xlu0 %1615
  %1619 = vset.pattern.permute.xlu0 0
  %1620 = vperm.xlu0 %1619, %v944
  %v1621 = vpop.permute.xlu0 %1620
  %1624 = vset.pattern.permute.xlu0 0
  %1625 = vperm.xlu0 %1624, %v945
  %v1626 = vpop.permute.xlu0 %1625
  %1629 = vset.pattern.permute.xlu0 0
  %1630 = vperm.xlu0 %1629, %v946
  %v1631 = vpop.permute.xlu0 %1630
  %1634 = vset.pattern.permute.xlu0 0
  %1635 = vperm.xlu0 %1634, %v947
  %v1636 = vpop.permute.xlu0 %1635
  %1639 = vset.pattern.permute.xlu0 0
  %1640 = vperm.xlu0 %1639, %v948
  %v1641 = vpop.permute.xlu0 %1640
  %1644 = vset.pattern.permute.xlu0 0
  %1645 = vperm.xlu0 %1644, %v949
  %v1646 = vpop.permute.xlu0 %1645
  %1649 = vset.pattern.permute.xlu0 0
  %1650 = vperm.xlu0 %1649, %v950
  %v1651 = vpop.permute.xlu0 %1650
  %v1653 = vmul.f32 %v750, %v1576
  %v1654 = vmul.f32 %v751, %v1581
  %v1655 = vmul.f32 %v752, %v1586
  %v1656 = vmul.f32 %v753, %v1591
  %v1657 = vmul.f32 %v754, %v1596
  %v1658 = vmul.f32 %v755, %v1601
  %v1659 = vmul.f32 %v756, %v1606
  %v1660 = vmul.f32 %v757, %v1611
  %v1661 = vmul.f32 %v758, %v1616
  %v1662 = vmul.f32 %v759, %v1621
  %v1663 = vmul.f32 %v760, %v1626
  %v1664 = vmul.f32 %v761, %v1631
  %v1665 = vmul.f32 %v762, %v1636
  %v1666 = vmul.f32 %v763, %v1641
  %v1667 = vmul.f32 %v764, %v1646
  %v1668 = vmul.f32 %v765, %v1651
  %v1669 = vmul.f32 %v1653, %v1557
  %v1670 = vmul.f32 %v1654, %v1558
  %v1671 = vmul.f32 %v1655, %v1559
  %v1672 = vmul.f32 %v1656, %v1560
  %v1673 = vmul.f32 %v1657, %v1561
  %v1674 = vmul.f32 %v1658, %v1562
  %v1675 = vmul.f32 %v1659, %v1563
  %v1676 = vmul.f32 %v1660, %v1564
  %v1677 = vmul.f32 %v1661, %v1565
  %v1678 = vmul.f32 %v1662, %v1566
  %v1679 = vmul.f32 %v1663, %v1567
  %v1680 = vmul.f32 %v1664, %v1568
  %v1681 = vmul.f32 %v1665, %v1569
  %v1682 = vmul.f32 %v1666, %v1570
  %v1683 = vmul.f32 %v1667, %v1571
  %v1684 = vmul.f32 %v1668, %v1572
  %v1685 = vld [vmem:[%s3 + $0x4] sm:$0xf]
  %v1686 = vld [vmem:[%s3 + $0x8] sm:$0xf]
  %v1687 = vld [vmem:[%s3 + $0xc] sm:$0xf]
  %v1688 = vld [vmem:[%s3 + $0x10] sm:$0xf]
  %v1689 = vld [vmem:[%s3 + $0x14] sm:$0xf]
  %v1690 = vld [vmem:[%s3 + $0x18] sm:$0xf]
  %v1691 = vld [vmem:[%s3 + $0x1c] sm:$0xf]
  %v1692 = vld [vmem:[%s3 + $0x20] sm:$0xf]
  %v1693 = vld [vmem:[%s3 + $0x24] sm:$0xf]
  %v1694 = vld [vmem:[%s3 + $0x28] sm:$0xf]
  %v1695 = vld [vmem:[%s3 + $0x2c] sm:$0xf]
  %v1696 = vld [vmem:[%s3 + $0x30] sm:$0xf]
  %v1697 = vld [vmem:[%s3 + $0x34] sm:$0xf]
  %v1698 = vld [vmem:[%s3 + $0x38] sm:$0xf]
  %v1699 = vld [vmem:[%s3 + $0x3c] sm:$0xf]
  %v1700 = vld [vmem:[%s3 + $0x40] sm:$0xf]
  %v1701 = vld [vmem:[%s4 + $0x1] sm:$0x1]
  %v1702 = vmul.f32 %v37, %v1557
  %v1703 = vmul.f32 %v38, %v1558
  %v1704 = vmul.f32 %v39, %v1559
  %v1705 = vmul.f32 %v40, %v1560
  %v1706 = vmul.f32 %v41, %v1561
  %v1707 = vmul.f32 %v42, %v1562
  %v1708 = vmul.f32 %v43, %v1563
  %v1709 = vmul.f32 %v44, %v1564
  %v1710 = vmul.f32 %v45, %v1565
  %v1711 = vmul.f32 %v46, %v1566
  %v1712 = vmul.f32 %v47, %v1567
  %v1713 = vmul.f32 %v48, %v1568
  %v1714 = vmul.f32 %v49, %v1569
  %v1715 = vmul.f32 %v50, %v1570
  %v1716 = vmul.f32 %v51, %v1571
  %v1717 = vmul.f32 %v52, %v1572
  %v1718 = vpack.c.bf16 %v1703, %v1702
  %v1719 = vpack.c.bf16 %v1705, %v1704
  %v1720 = vpack.c.bf16 %v1707, %v1706
  %v1721 = vpack.c.bf16 %v1709, %v1708
  %v1722 = vpack.c.bf16 %v1711, %v1710
  %v1723 = vpack.c.bf16 %v1713, %v1712
  %v1724 = vpack.c.bf16 %v1715, %v1714
  %v1725 = vpack.c.bf16 %v1717, %v1716
  %1726 = vmatprep.subr.bf16.mxu0 0
  %1727 = vmatpush1.bf16.msra.mxu0 %v1718
  %1728 = vmatprep.subr.bf16.mxu0 0
  %1729 = vmatpush1.bf16.msra.mxu0 %v1719
  %1730 = vmatprep.subr.bf16.mxu0 0
  %1731 = vmatpush1.bf16.msra.mxu0 %v1720
  %1732 = vmatprep.subr.bf16.mxu0 0
  %1733 = vmatpush1.bf16.msra.mxu0 %v1721
  %1734 = vmatprep.subr.bf16.mxu0 0
  %1735 = vmatpush1.bf16.msra.mxu0 %v1722
  %1736 = vmatprep.subr.bf16.mxu0 0
  %1737 = vmatpush1.bf16.msra.mxu0 %v1723
  %1738 = vmatprep.subr.bf16.mxu0 0
  %1739 = vmatpush1.bf16.msra.mxu0 %v1724
  %1740 = vmatprep.subr.bf16.mxu0 0
  %1741 = vmatpush1.bf16.msra.mxu0 %v1725
  %1742 = vmatprep.subr.bf16.mxu0 0
  %1743 = vmatpush1.bf16.msra.mxu0 0
  %1744 = vmatprep.subr.bf16.mxu0 0
  %1745 = vmatpush1.bf16.msra.mxu0 0
  %1746 = vmatprep.subr.bf16.mxu0 0
  %1747 = vmatpush1.bf16.msra.mxu0 0
  %1748 = vmatprep.subr.bf16.mxu0 0
  %1749 = vmatpush1.bf16.msra.mxu0 0
  %1750 = vmatprep.subr.bf16.mxu0 0
  %1751 = vmatpush1.bf16.msra.mxu0 0
  %1752 = vmatprep.subr.bf16.mxu0 0
  %1753 = vmatpush1.bf16.msra.mxu0 0
  %1754 = vmatprep.subr.bf16.mxu0 0
  %1755 = vmatpush1.bf16.msra.mxu0 0
  %1756 = vmatprep.subr.bf16.mxu0 0
  %1757 = vmatpush1.bf16.msra.mxu0 0
  %1758 = vmatprep.mubr.bf16.mxu0 0
  %1759 = vmatmul.mubr.bf16.gmra.mrb[0].mxu0 %v219
  %v1760 = vpop.f32.mrb[0].mxu0
  %v1761 = vadd.f32 0.0, %v1760
  %v1762 = vpop.f32.mrb[0].mxu0
  %v1763 = vpop.f32.mrb[0].mxu0
  %v1764 = vadd.f32 0.0, %v1763
  %v1765 = vpop.f32.mrb[0].mxu0
  %1766 = vmatprep.mubr.bf16.mxu0 0
  %1767 = vmatmul.mubr.bf16.gmra.mrb[0].mxu0 %v220
  %v1768 = vpop.f32.mrb[0].mxu0
  %v1769 = vadd.f32 0.0, %v1768
  %v1770 = vpop.f32.mrb[0].mxu0
  %v1771 = vpop.f32.mrb[0].mxu0
  %v1772 = vadd.f32 0.0, %v1771
  %v1773 = vpop.f32.mrb[0].mxu0
  %1774 = vmatprep.mubr.bf16.mxu0 0
  %1775 = vmatmul.mubr.bf16.gmra.mrb[0].mxu0 %v221
  %v1776 = vpop.f32.mrb[0].mxu0
  %v1777 = vadd.f32 0.0, %v1776
  %v1778 = vpop.f32.mrb[0].mxu0
  %v1779 = vpop.f32.mrb[0].mxu0
  %v1780 = vadd.f32 0.0, %v1779
  %v1781 = vpop.f32.mrb[0].mxu0
  %1782 = vmatprep.mubr.bf16.mxu0 0
  %1783 = vmatmul.mubr.bf16.gmra.mrb[0].mxu0 %v222
  %v1784 = vpop.f32.mrb[0].mxu0
  %v1785 = vadd.f32 0.0, %v1784
  %v1786 = vpop.f32.mrb[0].mxu0
  %v1787 = vpop.f32.mrb[0].mxu0
  %v1788 = vadd.f32 0.0, %v1787
  %v1789 = vpop.f32.mrb[0].mxu0
  %1790 = vmatprep.mubr.bf16.mxu0 0
  %1791 = vmatmul.mubr.bf16.gmra.mrb[0].mxu0 %v223
  %v1792 = vpop.f32.mrb[0].mxu0
  %v1793 = vadd.f32 0.0, %v1792
  %v1794 = vpop.f32.mrb[0].mxu0
  %v1795 = vpop.f32.mrb[0].mxu0
  %v1796 = vadd.f32 0.0, %v1795
  %v1797 = vpop.f32.mrb[0].mxu0
  %1798 = vmatprep.mubr.bf16.mxu0 0
  %1799 = vmatmul.mubr.bf16.gmra.mrb[0].mxu0 %v224
  %v1800 = vpop.f32.mrb[0].mxu0
  %v1801 = vadd.f32 0.0, %v1800
  %v1802 = vpop.f32.mrb[0].mxu0
  %v1803 = vpop.f32.mrb[0].mxu0
  %v1804 = vadd.f32 0.0, %v1803
  %v1805 = vpop.f32.mrb[0].mxu0
  %1806 = vmatprep.mubr.bf16.mxu0 0
  %1807 = vmatmul.mubr.bf16.gmra.mrb[0].mxu0 %v225
  %v1808 = vpop.f32.mrb[0].mxu0
  %v1809 = vadd.f32 0.0, %v1808
  %v1810 = vpop.f32.mrb[0].mxu0
  %v1811 = vpop.f32.mrb[0].mxu0
  %v1812 = vadd.f32 0.0, %v1811
  %v1813 = vpop.f32.mrb[0].mxu0
  %1814 = vmatprep.mubr.bf16.mxu0 0
  %1815 = vmatmul.mubr.bf16.gmra.mrb[0].mxu0 %v226
  %v1816 = vpop.f32.mrb[0].mxu0
  %v1817 = vadd.f32 0.0, %v1816
  %v1818 = vpop.f32.mrb[0].mxu0
  %v1819 = vpop.f32.mrb[0].mxu0
  %v1820 = vadd.f32 0.0, %v1819
  %v1821 = vpop.f32.mrb[0].mxu0
  %1822 = vdwg.mxu0
  %v1823 = vsel %vm61, %v1761, 0.0
  %1824 = vadd.xlane.f32.xlu0 %v1823
  %v1825 = vpop.xlane.xlu0 %1824
  %v1826 = vsel %vm61, %v1764, 0.0
  %1827 = vadd.xlane.f32.xlu0 %v1826
  %v1828 = vpop.xlane.xlu0 %1827
  %v1829 = vsel %vm61, %v1769, 0.0
  %1830 = vadd.xlane.f32.xlu0 %v1829
  %v1831 = vpop.xlane.xlu0 %1830
  %v1832 = vsel %vm61, %v1772, 0.0
  %1833 = vadd.xlane.f32.xlu0 %v1832
  %v1834 = vpop.xlane.xlu0 %1833
  %v1835 = vsel %vm61, %v1777, 0.0
  %1836 = vadd.xlane.f32.xlu0 %v1835
  %v1837 = vpop.xlane.xlu0 %1836
  %v1838 = vsel %vm61, %v1780, 0.0
  %1839 = vadd.xlane.f32.xlu0 %v1838
  %v1840 = vpop.xlane.xlu0 %1839
  %v1841 = vsel %vm61, %v1785, 0.0
  %1842 = vadd.xlane.f32.xlu0 %v1841
  %v1843 = vpop.xlane.xlu0 %1842
  %v1844 = vsel %vm61, %v1788, 0.0
  %1845 = vadd.xlane.f32.xlu0 %v1844
  %v1846 = vpop.xlane.xlu0 %1845
  %v1847 = vsel %vm61, %v1793, 0.0
  %1848 = vadd.xlane.f32.xlu0 %v1847
  %v1849 = vpop.xlane.xlu0 %1848
  %v1850 = vsel %vm61, %v1796, 0.0
  %1851 = vadd.xlane.f32.xlu0 %v1850
  %v1852 = vpop.xlane.xlu0 %1851
  %v1853 = vsel %vm61, %v1801, 0.0
  %1854 = vadd.xlane.f32.xlu0 %v1853
  %v1855 = vpop.xlane.xlu0 %1854
  %v1856 = vsel %vm61, %v1804, 0.0
  %1857 = vadd.xlane.f32.xlu0 %v1856
  %v1858 = vpop.xlane.xlu0 %1857
  %v1859 = vsel %vm61, %v1809, 0.0
  %1860 = vadd.xlane.f32.xlu0 %v1859
  %v1861 = vpop.xlane.xlu0 %1860
  %v1862 = vsel %vm61, %v1812, 0.0
  %1863 = vadd.xlane.f32.xlu0 %v1862
  %v1864 = vpop.xlane.xlu0 %1863
  %v1865 = vsel %vm61, %v1817, 0.0
  %1866 = vadd.xlane.f32.xlu0 %v1865
  %v1867 = vpop.xlane.xlu0 %1866
  %v1868 = vsel %vm61, %v1820, 0.0
  %1869 = vadd.xlane.f32.xlu0 %v1868
  %v1870 = vpop.xlane.xlu0 %1869
  %v1871 = vadd.f32 %v1825, 1.0
  %v1872 = vadd.f32 %v1828, 1.0
  %v1873 = vadd.f32 %v1831, 1.0
  %v1874 = vadd.f32 %v1834, 1.0
  %v1875 = vadd.f32 %v1837, 1.0
  %v1876 = vadd.f32 %v1840, 1.0
  %v1877 = vadd.f32 %v1843, 1.0
  %v1878 = vadd.f32 %v1846, 1.0
  %v1879 = vadd.f32 %v1849, 1.0
  %v1880 = vadd.f32 %v1852, 1.0
  %v1881 = vadd.f32 %v1855, 1.0
  %v1882 = vadd.f32 %v1858, 1.0
  %v1883 = vadd.f32 %v1861, 1.0
  %v1884 = vadd.f32 %v1864, 1.0
  %v1885 = vadd.f32 %v1867, 1.0
  %v1886 = vadd.f32 %v1870, 1.0
  %v1887 = vrsqrt.pop %v1871
  %v1888 = vrsqrt.pop %v1872
  %v1889 = vrsqrt.pop %v1873
  %v1890 = vrsqrt.pop %v1874
  %v1891 = vrsqrt.pop %v1875
  %v1892 = vrsqrt.pop %v1876
  %v1893 = vrsqrt.pop %v1877
  %v1894 = vrsqrt.pop %v1878
  %v1895 = vrsqrt.pop %v1879
  %v1896 = vrsqrt.pop %v1880
  %v1897 = vrsqrt.pop %v1881
  %v1898 = vrsqrt.pop %v1882
  %v1899 = vrsqrt.pop %v1883
  %v1900 = vrsqrt.pop %v1884
  %v1901 = vrsqrt.pop %v1885
  %v1902 = vrsqrt.pop %v1886
  %v1903 = vmul.f32 %v1887, %v1669
  %v1904 = vmul.f32 %v1888, %v1670
  %v1905 = vmul.f32 %v1889, %v1671
  %v1906 = vmul.f32 %v1890, %v1672
  %v1907 = vmul.f32 %v1891, %v1673
  %v1908 = vmul.f32 %v1892, %v1674
  %v1909 = vmul.f32 %v1893, %v1675
  %v1910 = vmul.f32 %v1894, %v1676
  %v1911 = vmul.f32 %v1895, %v1677
  %v1912 = vmul.f32 %v1896, %v1678
  %v1913 = vmul.f32 %v1897, %v1679
  %v1914 = vmul.f32 %v1898, %v1680
  %v1915 = vmul.f32 %v1899, %v1681
  %v1916 = vmul.f32 %v1900, %v1682
  %v1917 = vmul.f32 %v1901, %v1683
  %v1918 = vmul.f32 %v1902, %v1684
  %v1919 = vpack.c.bf16 %v1904, %v1903
  %v1920 = vpack.c.bf16 %v1906, %v1905
  %v1921 = vpack.c.bf16 %v1908, %v1907
  %v1922 = vpack.c.bf16 %v1910, %v1909
  %v1923 = vpack.c.bf16 %v1912, %v1911
  %v1924 = vpack.c.bf16 %v1914, %v1913
  %v1925 = vpack.c.bf16 %v1916, %v1915
  %v1926 = vpack.c.bf16 %v1918, %v1917
  %1927 = vmatprep.subr.bf16.mxu0 0
  %1928 = vmatpush1.bf16.msra.mxu0 %v1919
  %1929 = vmatprep.subr.bf16.mxu0 0
  %1930 = vmatpush1.bf16.msra.mxu0 %v1920
  %1931 = vmatprep.subr.bf16.mxu0 0
  %1932 = vmatpush1.bf16.msra.mxu0 %v1921
  %1933 = vmatprep.subr.bf16.mxu0 0
  %1934 = vmatpush1.bf16.msra.mxu0 %v1922
  %1935 = vmatprep.subr.bf16.mxu0 0
  %1936 = vmatpush1.bf16.msra.mxu0 %v1923
  %1937 = vmatprep.subr.bf16.mxu0 0
  %1938 = vmatpush1.bf16.msra.mxu0 %v1924
  %1939 = vmatprep.subr.bf16.mxu0 0
  %1940 = vmatpush1.bf16.msra.mxu0 %v1925
  %1941 = vmatprep.subr.bf16.mxu0 0
  %1942 = vmatpush1.bf16.msra.mxu0 %v1926
  %1943 = vmatprep.subr.bf16.mxu0 0
  %1944 = vmatpush1.bf16.msra.mxu0 0
  %1945 = vmatprep.subr.bf16.mxu0 0
  %1946 = vmatpush1.bf16.msra.mxu0 0
  %1947 = vmatprep.subr.bf16.mxu0 0
  %1948 = vmatpush1.bf16.msra.mxu0 0
  %1949 = vmatprep.subr.bf16.mxu0 0
  %1950 = vmatpush1.bf16.msra.mxu0 0
  %1951 = vmatprep.subr.bf16.mxu0 0
  %1952 = vmatpush1.bf16.msra.mxu0 0
  %1953 = vmatprep.subr.bf16.mxu0 0
  %1954 = vmatpush1.bf16.msra.mxu0 0
  %1955 = vmatprep.subr.bf16.mxu0 0
  %1956 = vmatpush1.bf16.msra.mxu0 0
  %1957 = vmatprep.subr.bf16.mxu0 0
  %1958 = vmatpush1.bf16.msra.mxu0 0
  %1959 = vmatprep.mubr.bf16.mxu0 0
  %1960 = vmatmul.mubr.bf16.gmra.mrb[0].mxu0 %v219
  %v1961 = vpop.f32.mrb[0].mxu0
  %v1962 = vadd.f32 0.0, %v1961
  %v1963 = vpop.f32.mrb[0].mxu0
  %v1964 = vpop.f32.mrb[0].mxu0
  %v1965 = vadd.f32 0.0, %v1964
  %v1966 = vpop.f32.mrb[0].mxu0
  %1967 = vmatprep.mubr.bf16.mxu0 0
  %1968 = vmatmul.mubr.bf16.gmra.mrb[0].mxu0 %v220
  %v1969 = vpop.f32.mrb[0].mxu0
  %v1970 = vadd.f32 0.0, %v1969
  %v1971 = vpop.f32.mrb[0].mxu0
  %v1972 = vpop.f32.mrb[0].mxu0
  %v1973 = vadd.f32 0.0, %v1972
  %v1974 = vpop.f32.mrb[0].mxu0
  %1975 = vmatprep.mubr.bf16.mxu0 0
  %1976 = vmatmul.mubr.bf16.gmra.mrb[0].mxu0 %v221
  %v1977 = vpop.f32.mrb[0].mxu0
  %v1978 = vadd.f32 0.0, %v1977
  %v1979 = vpop.f32.mrb[0].mxu0
  %v1980 = vpop.f32.mrb[0].mxu0
  %v1981 = vadd.f32 0.0, %v1980
  %v1982 = vpop.f32.mrb[0].mxu0
  %1983 = vmatprep.mubr.bf16.mxu0 0
  %1984 = vmatmul.mubr.bf16.gmra.mrb[0].mxu0 %v222
  %v1985 = vpop.f32.mrb[0].mxu0
  %v1986 = vadd.f32 0.0, %v1985
  %v1987 = vpop.f32.mrb[0].mxu0
  %v1988 = vpop.f32.mrb[0].mxu0
  %v1989 = vadd.f32 0.0, %v1988
  %v1990 = vpop.f32.mrb[0].mxu0
  %1991 = vmatprep.mubr.bf16.mxu0 0
  %1992 = vmatmul.mubr.bf16.gmra.mrb[0].mxu0 %v223
  %v1993 = vpop.f32.mrb[0].mxu0
  %v1994 = vadd.f32 0.0, %v1993
  %v1995 = vpop.f32.mrb[0].mxu0
  %v1996 = vpop.f32.mrb[0].mxu0
  %v1997 = vadd.f32 0.0, %v1996
  %v1998 = vpop.f32.mrb[0].mxu0
  %1999 = vmatprep.mubr.bf16.mxu0 0
  %2000 = vmatmul.mubr.bf16.gmra.mrb[0].mxu0 %v224
  %v2001 = vpop.f32.mrb[0].mxu0
  %v2002 = vadd.f32 0.0, %v2001
  %v2003 = vpop.f32.mrb[0].mxu0
  %v2004 = vpop.f32.mrb[0].mxu0
  %v2005 = vadd.f32 0.0, %v2004
  %v2006 = vpop.f32.mrb[0].mxu0
  %2007 = vmatprep.mubr.bf16.mxu0 0
  %2008 = vmatmul.mubr.bf16.gmra.mrb[0].mxu0 %v225
  %v2009 = vpop.f32.mrb[0].mxu0
  %v2010 = vadd.f32 0.0, %v2009
  %v2011 = vpop.f32.mrb[0].mxu0
  %v2012 = vpop.f32.mrb[0].mxu0
  %v2013 = vadd.f32 0.0, %v2012
  %v2014 = vpop.f32.mrb[0].mxu0
  %2015 = vmatprep.mubr.bf16.mxu0 0
  %2016 = vmatmul.mubr.bf16.gmra.mrb[0].mxu0 %v226
  %v2017 = vpop.f32.mrb[0].mxu0
  %v2018 = vadd.f32 0.0, %v2017
  %v2019 = vpop.f32.mrb[0].mxu0
  %v2020 = vpop.f32.mrb[0].mxu0
  %v2021 = vadd.f32 0.0, %v2020
  %v2022 = vpop.f32.mrb[0].mxu0
  %2023 = vdwg.mxu0
  %v2024 = vmul.f32 %v1887, %v1962
  %v2025 = vmul.f32 %v1888, %v1965
  %v2026 = vmul.f32 %v1889, %v1970
  %v2027 = vmul.f32 %v1890, %v1973
  %v2028 = vmul.f32 %v1891, %v1978
  %v2029 = vmul.f32 %v1892, %v1981
  %v2030 = vmul.f32 %v1893, %v1986
  %v2031 = vmul.f32 %v1894, %v1989
  %v2032 = vmul.f32 %v1895, %v1994
  %v2033 = vmul.f32 %v1896, %v1997
  %v2034 = vmul.f32 %v1897, %v2002
  %v2035 = vmul.f32 %v1898, %v2005
  %v2036 = vmul.f32 %v1899, %v2010
  %v2037 = vmul.f32 %v1900, %v2013
  %v2038 = vmul.f32 %v1901, %v2018
  %v2039 = vmul.f32 %v1902, %v2021
  %v2040 = vmul.f32 %v1887, %v1887
  %v2041 = vmul.f32 %v1888, %v1888
  %v2042 = vmul.f32 %v1889, %v1889
  %v2043 = vmul.f32 %v1890, %v1890
  %v2044 = vmul.f32 %v1891, %v1891
  %v2045 = vmul.f32 %v1892, %v1892
  %v2046 = vmul.f32 %v1893, %v1893
  %v2047 = vmul.f32 %v1894, %v1894
  %v2048 = vmul.f32 %v1895, %v1895
  %v2049 = vmul.f32 %v1896, %v1896
  %v2050 = vmul.f32 %v1897, %v1897
  %v2051 = vmul.f32 %v1898, %v1898
  %v2052 = vmul.f32 %v1899, %v1899
  %v2053 = vmul.f32 %v1900, %v1900
  %v2054 = vmul.f32 %v1901, %v1901
  %v2055 = vmul.f32 %v1902, %v1902
  %v2056 = vmul.f32 %v2040, %v1669
  %v2057 = vmul.f32 %v2041, %v1670
  %v2058 = vmul.f32 %v2042, %v1671
  %v2059 = vmul.f32 %v2043, %v1672
  %v2060 = vmul.f32 %v2044, %v1673
  %v2061 = vmul.f32 %v2045, %v1674
  %v2062 = vmul.f32 %v2046, %v1675
  %v2063 = vmul.f32 %v2047, %v1676
  %v2064 = vmul.f32 %v2048, %v1677
  %v2065 = vmul.f32 %v2049, %v1678
  %v2066 = vmul.f32 %v2050, %v1679
  %v2067 = vmul.f32 %v2051, %v1680
  %v2068 = vmul.f32 %v2052, %v1681
  %v2069 = vmul.f32 %v2053, %v1682
  %v2070 = vmul.f32 %v2054, %v1683
  %v2071 = vmul.f32 %v2055, %v1684
  %v2072 = vadd.f32 %v2024, %v2056
  %v2073 = vadd.f32 %v2025, %v2057
  %v2074 = vadd.f32 %v2026, %v2058
  %v2075 = vadd.f32 %v2027, %v2059
  %v2076 = vadd.f32 %v2028, %v2060
  %v2077 = vadd.f32 %v2029, %v2061
  %v2078 = vadd.f32 %v2030, %v2062
  %v2079 = vadd.f32 %v2031, %v2063
  %v2080 = vadd.f32 %v2032, %v2064
  %v2081 = vadd.f32 %v2033, %v2065
  %v2082 = vadd.f32 %v2034, %v2066
  %v2083 = vadd.f32 %v2035, %v2067
  %v2084 = vadd.f32 %v2036, %v2068
  %v2085 = vadd.f32 %v2037, %v2069
  %v2086 = vadd.f32 %v2038, %v2070
  %v2087 = vadd.f32 %v2039, %v2071
  %v2088 = vpack.c.bf16 %v2073, %v2072
  %v2089 = vpack.c.bf16 %v2075, %v2074
  %v2090 = vpack.c.bf16 %v2077, %v2076
  %v2091 = vpack.c.bf16 %v2079, %v2078
  %v2092 = vpack.c.bf16 %v2081, %v2080
  %v2093 = vpack.c.bf16 %v2083, %v2082
  %v2094 = vpack.c.bf16 %v2085, %v2084
  %v2095 = vpack.c.bf16 %v2087, %v2086
  %v2096 = vlaneseq
  %v2097 = vshrl.u32 %v2096, 7
  %v2098 = vsub.s32 0, %v2097
  %v2099 = vrot.slane %v1701, %v2098
  %v2116 = vunpack.c.l.b16 %v1685
  %v2117 = vunpack.c.l.b16 %v1686
  %v2118 = vunpack.c.l.b16 %v1687
  %v2119 = vunpack.c.l.b16 %v1688
  %v2120 = vunpack.c.l.b16 %v1689
  %v2121 = vunpack.c.l.b16 %v1690
  %v2122 = vunpack.c.l.b16 %v1691
  %v2123 = vunpack.c.l.b16 %v1692
  %v2124 = vunpack.c.l.b16 %v1693
  %v2125 = vunpack.c.l.b16 %v1694
  %v2126 = vunpack.c.l.b16 %v1695
  %v2127 = vunpack.c.l.b16 %v1696
  %v2128 = vunpack.c.l.b16 %v1697
  %v2129 = vunpack.c.l.b16 %v1698
  %v2130 = vunpack.c.l.b16 %v1699
  %v2131 = vunpack.c.l.b16 %v1700
  %v2132 = vpack.c.b16 %v2117, %v2116
  %v2133 = vpack.c.b16 %v2119, %v2118
  %v2134 = vpack.c.b16 %v2121, %v2120
  %v2135 = vpack.c.b16 %v2123, %v2122
  %v2136 = vpack.c.b16 %v2125, %v2124
  %v2137 = vpack.c.b16 %v2127, %v2126
  %v2138 = vpack.c.b16 %v2129, %v2128
  %v2139 = vpack.c.b16 %v2131, %v2130
  %2148 = vmatprep.subr.bf16.mxu0 0
  %2149 = vmatpush1.bf16.msra.mxu0 %v2132
  %2150 = vmatprep.subr.bf16.mxu0 0
  %2151 = vmatpush1.bf16.msra.mxu0 %v2133
  %2152 = vmatprep.subr.bf16.mxu0 0
  %2153 = vmatpush1.bf16.msra.mxu0 %v2134
  %2154 = vmatprep.subr.bf16.mxu0 0
  %2155 = vmatpush1.bf16.msra.mxu0 %v2135
  %2156 = vmatprep.subr.bf16.mxu0 0
  %2157 = vmatpush1.bf16.msra.mxu0 %v2136
  %2158 = vmatprep.subr.bf16.mxu0 0
  %2159 = vmatpush1.bf16.msra.mxu0 %v2137
  %2160 = vmatprep.subr.bf16.mxu0 0
  %2161 = vmatpush1.bf16.msra.mxu0 %v2138
  %2162 = vmatprep.subr.bf16.mxu0 0
  %2163 = vmatpush1.bf16.msra.mxu0 %v2139
  %2164 = vmatprep.subr.bf16.mxu0 0
  %2165 = vmatpush1.bf16.msra.mxu0 0
  %2166 = vmatprep.subr.bf16.mxu0 0
  %2167 = vmatpush1.bf16.msra.mxu0 0
  %2168 = vmatprep.subr.bf16.mxu0 0
  %2169 = vmatpush1.bf16.msra.mxu0 0
  %2170 = vmatprep.subr.bf16.mxu0 0
  %2171 = vmatpush1.bf16.msra.mxu0 0
  %2172 = vmatprep.subr.bf16.mxu0 0
  %2173 = vmatpush1.bf16.msra.mxu0 0
  %2174 = vmatprep.subr.bf16.mxu0 0
  %2175 = vmatpush1.bf16.msra.mxu0 0
  %2176 = vmatprep.subr.bf16.mxu0 0
  %2177 = vmatpush1.bf16.msra.mxu0 0
  %2178 = vmatprep.subr.bf16.mxu0 0
  %2179 = vmatpush1.bf16.msra.mxu0 0
  %2180 = vmatprep.mubr.bf16.mxu0 0
  %2181 = vmatmul.mubr.bf16.gmra.mrb[0].mxu0 %v2088
  %v2182 = vpop.f32.mrb[0].mxu0
  %v2183 = vadd.f32 %v2099, %v2182
  %v2184 = vpop.f32.mrb[0].mxu0
  %v2185 = vpop.f32.mrb[0].mxu0
  %v2186 = vadd.f32 %v2099, %v2185
  %v2187 = vpop.f32.mrb[0].mxu0
  %2188 = vmatprep.mubr.bf16.mxu0 0
  %2189 = vmatmul.mubr.bf16.gmra.mrb[0].mxu0 %v2089
  %v2190 = vpop.f32.mrb[0].mxu0
  %v2191 = vadd.f32 %v2099, %v2190
  %v2192 = vpop.f32.mrb[0].mxu0
  %v2193 = vpop.f32.mrb[0].mxu0
  %v2194 = vadd.f32 %v2099, %v2193
  %v2195 = vpop.f32.mrb[0].mxu0
  %2196 = vmatprep.mubr.bf16.mxu0 0
  %2197 = vmatmul.mubr.bf16.gmra.mrb[0].mxu0 %v2090
  %v2198 = vpop.f32.mrb[0].mxu0
  %v2199 = vadd.f32 %v2099, %v2198
  %v2200 = vpop.f32.mrb[0].mxu0
  %v2201 = vpop.f32.mrb[0].mxu0
  %v2202 = vadd.f32 %v2099, %v2201
  %v2203 = vpop.f32.mrb[0].mxu0
  %2204 = vmatprep.mubr.bf16.mxu0 0
  %2205 = vmatmul.mubr.bf16.gmra.mrb[0].mxu0 %v2091
  %v2206 = vpop.f32.mrb[0].mxu0
  %v2207 = vadd.f32 %v2099, %v2206
  %v2208 = vpop.f32.mrb[0].mxu0
  %v2209 = vpop.f32.mrb[0].mxu0
  %v2210 = vadd.f32 %v2099, %v2209
  %v2211 = vpop.f32.mrb[0].mxu0
  %2212 = vmatprep.mubr.bf16.mxu0 0
  %2213 = vmatmul.mubr.bf16.gmra.mrb[0].mxu0 %v2092
  %v2214 = vpop.f32.mrb[0].mxu0
  %v2215 = vadd.f32 %v2099, %v2214
  %v2216 = vpop.f32.mrb[0].mxu0
  %v2217 = vpop.f32.mrb[0].mxu0
  %v2218 = vadd.f32 %v2099, %v2217
  %v2219 = vpop.f32.mrb[0].mxu0
  %2220 = vmatprep.mubr.bf16.mxu0 0
  %2221 = vmatmul.mubr.bf16.gmra.mrb[0].mxu0 %v2093
  %v2222 = vpop.f32.mrb[0].mxu0
  %v2223 = vadd.f32 %v2099, %v2222
  %v2224 = vpop.f32.mrb[0].mxu0
  %v2225 = vpop.f32.mrb[0].mxu0
  %v2226 = vadd.f32 %v2099, %v2225
  %v2227 = vpop.f32.mrb[0].mxu0
  %2228 = vmatprep.mubr.bf16.mxu0 0
  %2229 = vmatmul.mubr.bf16.gmra.mrb[0].mxu0 %v2094
  %v2230 = vpop.f32.mrb[0].mxu0
  %v2231 = vadd.f32 %v2099, %v2230
  %v2232 = vpop.f32.mrb[0].mxu0
  %v2233 = vpop.f32.mrb[0].mxu0
  %v2234 = vadd.f32 %v2099, %v2233
  %v2235 = vpop.f32.mrb[0].mxu0
  %2236 = vmatprep.mubr.bf16.mxu0 0
  %2237 = vmatmul.mubr.bf16.gmra.mrb[0].mxu0 %v2095
  %v2238 = vpop.f32.mrb[0].mxu0
  %v2239 = vadd.f32 %v2099, %v2238
  %v2240 = vpop.f32.mrb[0].mxu0
  %v2241 = vpop.f32.mrb[0].mxu0
  %v2242 = vadd.f32 %v2099, %v2241
  %v2243 = vpop.f32.mrb[0].mxu0
  %2244 = vdwg.mxu0
  %v2245 = vmax.f32 %v2183, 0.0
  %v2246 = vmax.f32 %v2186, 0.0
  %v2247 = vmax.f32 %v2191, 0.0
  %v2248 = vmax.f32 %v2194, 0.0
  %v2249 = vmax.f32 %v2199, 0.0
  %v2250 = vmax.f32 %v2202, 0.0
  %v2251 = vmax.f32 %v2207, 0.0
  %v2252 = vmax.f32 %v2210, 0.0
  %v2253 = vmax.f32 %v2215, 0.0
  %v2254 = vmax.f32 %v2218, 0.0
  %v2255 = vmax.f32 %v2223, 0.0
  %v2256 = vmax.f32 %v2226, 0.0
  %v2257 = vmax.f32 %v2231, 0.0
  %v2258 = vmax.f32 %v2234, 0.0
  %v2259 = vmax.f32 %v2239, 0.0
  %v2260 = vmax.f32 %v2242, 0.0
  %v2261 = vmul.f32 %v2245, %v1557
  %v2262 = vmul.f32 %v2246, %v1558
  %v2263 = vmul.f32 %v2247, %v1559
  %v2264 = vmul.f32 %v2248, %v1560
  %v2265 = vmul.f32 %v2249, %v1561
  %v2266 = vmul.f32 %v2250, %v1562
  %v2267 = vmul.f32 %v2251, %v1563
  %v2268 = vmul.f32 %v2252, %v1564
  %v2269 = vmul.f32 %v2253, %v1565
  %v2270 = vmul.f32 %v2254, %v1566
  %v2271 = vmul.f32 %v2255, %v1567
  %v2272 = vmul.f32 %v2256, %v1568
  %v2273 = vmul.f32 %v2257, %v1569
  %v2274 = vmul.f32 %v2258, %v1570
  %v2275 = vmul.f32 %v2259, %v1571
  %v2276 = vmul.f32 %v2260, %v1572
  %v2277 = vld [vmem:[%s3 + $0x104] sm:$0xf]
  %v2278 = vld [vmem:[%s3 + $0x108] sm:$0xf]
  %v2279 = vld [vmem:[%s3 + $0x10c] sm:$0xf]
  %v2280 = vld [vmem:[%s3 + $0x110] sm:$0xf]
  %v2281 = vld [vmem:[%s3 + $0x114] sm:$0xf]
  %v2282 = vld [vmem:[%s3 + $0x118] sm:$0xf]
  %v2283 = vld [vmem:[%s3 + $0x11c] sm:$0xf]
  %v2284 = vld [vmem:[%s3 + $0x120] sm:$0xf]
  %v2285 = vld [vmem:[%s3 + $0x124] sm:$0xf]
  %v2286 = vld [vmem:[%s3 + $0x128] sm:$0xf]
  %v2287 = vld [vmem:[%s3 + $0x12c] sm:$0xf]
  %v2288 = vld [vmem:[%s3 + $0x130] sm:$0xf]
  %v2289 = vld [vmem:[%s3 + $0x134] sm:$0xf]
  %v2290 = vld [vmem:[%s3 + $0x138] sm:$0xf]
  %v2291 = vld [vmem:[%s3 + $0x13c] sm:$0xf]
  %v2292 = vld [vmem:[%s3 + $0x140] sm:$0xf]
  %v2293 = vpack.c.bf16 %v2262, %v2261
  %v2294 = vpack.c.bf16 %v2264, %v2263
  %v2295 = vpack.c.bf16 %v2266, %v2265
  %v2296 = vpack.c.bf16 %v2268, %v2267
  %v2297 = vpack.c.bf16 %v2270, %v2269
  %v2298 = vpack.c.bf16 %v2272, %v2271
  %v2299 = vpack.c.bf16 %v2274, %v2273
  %v2300 = vpack.c.bf16 %v2276, %v2275
  %v2317 = vunpack.c.l.b16 %v2277
  %v2318 = vunpack.c.l.b16 %v2278
  %v2319 = vunpack.c.l.b16 %v2279
  %v2320 = vunpack.c.l.b16 %v2280
  %v2321 = vunpack.c.l.b16 %v2281
  %v2322 = vunpack.c.l.b16 %v2282
  %v2323 = vunpack.c.l.b16 %v2283
  %v2324 = vunpack.c.l.b16 %v2284
  %v2325 = vunpack.c.l.b16 %v2285
  %v2326 = vunpack.c.l.b16 %v2286
  %v2327 = vunpack.c.l.b16 %v2287
  %v2328 = vunpack.c.l.b16 %v2288
  %v2329 = vunpack.c.l.b16 %v2289
  %v2330 = vunpack.c.l.b16 %v2290
  %v2331 = vunpack.c.l.b16 %v2291
  %v2332 = vunpack.c.l.b16 %v2292
  %v2333 = vpack.c.b16 %v2318, %v2317
  %v2334 = vpack.c.b16 %v2320, %v2319
  %v2335 = vpack.c.b16 %v2322, %v2321
  %v2336 = vpack.c.b16 %v2324, %v2323
  %v2337 = vpack.c.b16 %v2326, %v2325
  %v2338 = vpack.c.b16 %v2328, %v2327
  %v2339 = vpack.c.b16 %v2330, %v2329
  %v2340 = vpack.c.b16 %v2332, %v2331
  %2349 = vmatprep.subr.bf16.mxu0 0
  %2350 = vmatpush1.bf16.msra.mxu0 %v2333
  %2351 = vmatprep.subr.bf16.mxu0 0
  %2352 = vmatpush1.bf16.msra.mxu0 %v2334
  %2353 = vmatprep.subr.bf16.mxu0 0
  %2354 = vmatpush1.bf16.msra.mxu0 %v2335
  %2355 = vmatprep.subr.bf16.mxu0 0
  %2356 = vmatpush1.bf16.msra.mxu0 %v2336
  %2357 = vmatprep.subr.bf16.mxu0 0
  %2358 = vmatpush1.bf16.msra.mxu0 %v2337
  %2359 = vmatprep.subr.bf16.mxu0 0
  %2360 = vmatpush1.bf16.msra.mxu0 %v2338
  %2361 = vmatprep.subr.bf16.mxu0 0
  %2362 = vmatpush1.bf16.msra.mxu0 %v2339
  %2363 = vmatprep.subr.bf16.mxu0 0
  %2364 = vmatpush1.bf16.msra.mxu0 %v2340
  %2365 = vmatprep.subr.bf16.mxu0 0
  %2366 = vmatpush1.bf16.msra.mxu0 0
  %2367 = vmatprep.subr.bf16.mxu0 0
  %2368 = vmatpush1.bf16.msra.mxu0 0
  %2369 = vmatprep.subr.bf16.mxu0 0
  %2370 = vmatpush1.bf16.msra.mxu0 0
  %2371 = vmatprep.subr.bf16.mxu0 0
  %2372 = vmatpush1.bf16.msra.mxu0 0
  %2373 = vmatprep.subr.bf16.mxu0 0
  %2374 = vmatpush1.bf16.msra.mxu0 0
  %2375 = vmatprep.subr.bf16.mxu0 0
  %2376 = vmatpush1.bf16.msra.mxu0 0
  %2377 = vmatprep.subr.bf16.mxu0 0
  %2378 = vmatpush1.bf16.msra.mxu0 0
  %2379 = vmatprep.subr.bf16.mxu0 0
  %2380 = vmatpush1.bf16.msra.mxu0 0
  %2381 = vmatprep.mubr.bf16.mxu0 0
  %2382 = vmatmul.mubr.bf16.gmra.mrb[0].mxu0 %v2293
  %v2383 = vpop.f32.mrb[0].mxu0
  %v2384 = vadd.f32 0.0, %v2383
  %v2385 = vpop.f32.mrb[0].mxu0
  %v2386 = vpop.f32.mrb[0].mxu0
  %v2387 = vadd.f32 0.0, %v2386
  %v2388 = vpop.f32.mrb[0].mxu0
  %2389 = vmatprep.mubr.bf16.mxu0 0
  %2390 = vmatmul.mubr.bf16.gmra.mrb[0].mxu0 %v2294
  %v2391 = vpop.f32.mrb[0].mxu0
  %v2392 = vadd.f32 0.0, %v2391
  %v2393 = vpop.f32.mrb[0].mxu0
  %v2394 = vpop.f32.mrb[0].mxu0
  %v2395 = vadd.f32 0.0, %v2394
  %v2396 = vpop.f32.mrb[0].mxu0
  %2397 = vmatprep.mubr.bf16.mxu0 0
  %2398 = vmatmul.mubr.bf16.gmra.mrb[0].mxu0 %v2295
  %v2399 = vpop.f32.mrb[0].mxu0
  %v2400 = vadd.f32 0.0, %v2399
  %v2401 = vpop.f32.mrb[0].mxu0
  %v2402 = vpop.f32.mrb[0].mxu0
  %v2403 = vadd.f32 0.0, %v2402
  %v2404 = vpop.f32.mrb[0].mxu0
  %2405 = vmatprep.mubr.bf16.mxu0 0
  %2406 = vmatmul.mubr.bf16.gmra.mrb[0].mxu0 %v2296
  %v2407 = vpop.f32.mrb[0].mxu0
  %v2408 = vadd.f32 0.0, %v2407
  %v2409 = vpop.f32.mrb[0].mxu0
  %v2410 = vpop.f32.mrb[0].mxu0
  %v2411 = vadd.f32 0.0, %v2410
  %v2412 = vpop.f32.mrb[0].mxu0
  %2413 = vmatprep.mubr.bf16.mxu0 0
  %2414 = vmatmul.mubr.bf16.gmra.mrb[0].mxu0 %v2297
  %v2415 = vpop.f32.mrb[0].mxu0
  %v2416 = vadd.f32 0.0, %v2415
  %v2417 = vpop.f32.mrb[0].mxu0
  %v2418 = vpop.f32.mrb[0].mxu0
  %v2419 = vadd.f32 0.0, %v2418
  %v2420 = vpop.f32.mrb[0].mxu0
  %2421 = vmatprep.mubr.bf16.mxu0 0
  %2422 = vmatmul.mubr.bf16.gmra.mrb[0].mxu0 %v2298
  %v2423 = vpop.f32.mrb[0].mxu0
  %v2424 = vadd.f32 0.0, %v2423
  %v2425 = vpop.f32.mrb[0].mxu0
  %v2426 = vpop.f32.mrb[0].mxu0
  %v2427 = vadd.f32 0.0, %v2426
  %v2428 = vpop.f32.mrb[0].mxu0
  %2429 = vmatprep.mubr.bf16.mxu0 0
  %2430 = vmatmul.mubr.bf16.gmra.mrb[0].mxu0 %v2299
  %v2431 = vpop.f32.mrb[0].mxu0
  %v2432 = vadd.f32 0.0, %v2431
  %v2433 = vpop.f32.mrb[0].mxu0
  %v2434 = vpop.f32.mrb[0].mxu0
  %v2435 = vadd.f32 0.0, %v2434
  %v2436 = vpop.f32.mrb[0].mxu0
  %2437 = vmatprep.mubr.bf16.mxu0 0
  %2438 = vmatmul.mubr.bf16.gmra.mrb[0].mxu0 %v2300
  %v2439 = vpop.f32.mrb[0].mxu0
  %v2440 = vadd.f32 0.0, %v2439
  %v2441 = vpop.f32.mrb[0].mxu0
  %v2442 = vpop.f32.mrb[0].mxu0
  %v2443 = vadd.f32 0.0, %v2442
  %v2444 = vpop.f32.mrb[0].mxu0
  %2445 = vdwg.mxu0
  %v2446 = vtanh.pop %v2384
  %v2447 = vtanh.pop %v2387
  %v2448 = vtanh.pop %v2392
  %v2449 = vtanh.pop %v2395
  %v2450 = vtanh.pop %v2400
  %v2451 = vtanh.pop %v2403
  %v2452 = vtanh.pop %v2408
  %v2453 = vtanh.pop %v2411
  %v2454 = vtanh.pop %v2416
  %v2455 = vtanh.pop %v2419
  %v2456 = vtanh.pop %v2424
  %v2457 = vtanh.pop %v2427
  %v2458 = vtanh.pop %v2432
  %v2459 = vtanh.pop %v2435
  %v2460 = vtanh.pop %v2440
  %v2461 = vtanh.pop %v2443
  %vm2462 = vcmp.gt.f32.partialorder %v1557, 0.0
  %vm2463 = vcmp.gt.f32.partialorder %v1558, 0.0
  %vm2464 = vcmp.gt.f32.partialorder %v1559, 0.0
  %vm2465 = vcmp.gt.f32.partialorder %v1560, 0.0
  %vm2466 = vcmp.gt.f32.partialorder %v1561, 0.0
  %vm2467 = vcmp.gt.f32.partialorder %v1562, 0.0
  %vm2468 = vcmp.gt.f32.partialorder %v1563, 0.0
  %vm2469 = vcmp.gt.f32.partialorder %v1564, 0.0
  %vm2470 = vcmp.gt.f32.partialorder %v1565, 0.0
  %vm2471 = vcmp.gt.f32.partialorder %v1566, 0.0
  %vm2472 = vcmp.gt.f32.partialorder %v1567, 0.0
  %vm2473 = vcmp.gt.f32.partialorder %v1568, 0.0
  %vm2474 = vcmp.gt.f32.partialorder %v1569, 0.0
  %vm2475 = vcmp.gt.f32.partialorder %v1570, 0.0
  %vm2476 = vcmp.gt.f32.partialorder %v1571, 0.0
  %vm2477 = vcmp.gt.f32.partialorder %v1572, 0.0
  %v2478 = vsel %vm2462, %v2446, -1e+30
  %v2479 = vsel %vm2463, %v2447, -1e+30
  %v2480 = vsel %vm2464, %v2448, -1e+30
  %v2481 = vsel %vm2465, %v2449, -1e+30
  %v2482 = vsel %vm2466, %v2450, -1e+30
  %v2483 = vsel %vm2467, %v2451, -1e+30
  %v2484 = vsel %vm2468, %v2452, -1e+30
  %v2485 = vsel %vm2469, %v2453, -1e+30
  %v2486 = vsel %vm2470, %v2454, -1e+30
  %v2487 = vsel %vm2471, %v2455, -1e+30
  %v2488 = vsel %vm2472, %v2456, -1e+30
  %v2489 = vsel %vm2473, %v2457, -1e+30
  %v2490 = vsel %vm2474, %v2458, -1e+30
  %v2491 = vsel %vm2475, %v2459, -1e+30
  %v2492 = vsel %vm2476, %v2460, -1e+30
  %v2493 = vsel %vm2477, %v2461, -1e+30
  %2495 = vset.pattern.permute.xlu0 0
  %2496 = vperm.xlu0 %2495, %v2478
  %v2497 = vpop.permute.xlu0 %2496
  %2500 = vset.pattern.permute.xlu0 0
  %2501 = vperm.xlu0 %2500, %v2479
  %v2502 = vpop.permute.xlu0 %2501
  %2505 = vset.pattern.permute.xlu0 0
  %2506 = vperm.xlu0 %2505, %v2480
  %v2507 = vpop.permute.xlu0 %2506
  %2510 = vset.pattern.permute.xlu0 0
  %2511 = vperm.xlu0 %2510, %v2481
  %v2512 = vpop.permute.xlu0 %2511
  %2515 = vset.pattern.permute.xlu0 0
  %2516 = vperm.xlu0 %2515, %v2482
  %v2517 = vpop.permute.xlu0 %2516
  %2520 = vset.pattern.permute.xlu0 0
  %2521 = vperm.xlu0 %2520, %v2483
  %v2522 = vpop.permute.xlu0 %2521
  %2525 = vset.pattern.permute.xlu0 0
  %2526 = vperm.xlu0 %2525, %v2484
  %v2527 = vpop.permute.xlu0 %2526
  %2530 = vset.pattern.permute.xlu0 0
  %2531 = vperm.xlu0 %2530, %v2485
  %v2532 = vpop.permute.xlu0 %2531
  %2535 = vset.pattern.permute.xlu0 0
  %2536 = vperm.xlu0 %2535, %v2486
  %v2537 = vpop.permute.xlu0 %2536
  %2540 = vset.pattern.permute.xlu0 0
  %2541 = vperm.xlu0 %2540, %v2487
  %v2542 = vpop.permute.xlu0 %2541
  %2545 = vset.pattern.permute.xlu0 0
  %2546 = vperm.xlu0 %2545, %v2488
  %v2547 = vpop.permute.xlu0 %2546
  %2550 = vset.pattern.permute.xlu0 0
  %2551 = vperm.xlu0 %2550, %v2489
  %v2552 = vpop.permute.xlu0 %2551
  %2555 = vset.pattern.permute.xlu0 0
  %2556 = vperm.xlu0 %2555, %v2490
  %v2557 = vpop.permute.xlu0 %2556
  %2560 = vset.pattern.permute.xlu0 0
  %2561 = vperm.xlu0 %2560, %v2491
  %v2562 = vpop.permute.xlu0 %2561
  %2565 = vset.pattern.permute.xlu0 0
  %2566 = vperm.xlu0 %2565, %v2492
  %v2567 = vpop.permute.xlu0 %2566
  %2570 = vset.pattern.permute.xlu0 0
  %2571 = vperm.xlu0 %2570, %v2493
  %v2572 = vpop.permute.xlu0 %2571
  %2574 = vxpose.xlu0.b32.start [1/16] %v2497, 128
  %2575 = vxpose.xlu0.b32.cont [2/16] %v2502, 128
  %2576 = vxpose.xlu0.b32.cont [3/16] %v2507, 128
  %2577 = vxpose.xlu0.b32.cont [4/16] %v2512, 128
  %2578 = vxpose.xlu0.b32.cont [5/16] %v2517, 128
  %2579 = vxpose.xlu0.b32.cont [6/16] %v2522, 128
  %2580 = vxpose.xlu0.b32.cont [7/16] %v2527, 128
  %2581 = vxpose.xlu0.b32.cont [8/16] %v2532, 128
  %2582 = vxpose.xlu0.b32.cont [9/16] %v2537, 128
  %2583 = vxpose.xlu0.b32.cont [10/16] %v2542, 128
  %2584 = vxpose.xlu0.b32.cont [11/16] %v2547, 128
  %2585 = vxpose.xlu0.b32.cont [12/16] %v2552, 128
  %2586 = vxpose.xlu0.b32.cont [13/16] %v2557, 128
  %2587 = vxpose.xlu0.b32.cont [14/16] %v2562, 128
  %2588 = vxpose.xlu0.b32.cont [15/16] %v2567, 128
  %2589 = vxpose.xlu0.b32.end [16/16] %v2572, 128
  %v2590 = vpop.trf.xlu0
  %v2591 = vpop.trf.xlu0
  %v2592 = vpop.trf.xlu0
  %v2593 = vpop.trf.xlu0
  %v2594 = vpop.trf.xlu0
  %v2595 = vpop.trf.xlu0
  %v2596 = vpop.trf.xlu0
  %v2597 = vpop.trf.xlu0
  %v2598 = vpop.trf.xlu0
  %v2599 = vpop.trf.xlu0
  %v2600 = vpop.trf.xlu0
  %v2601 = vpop.trf.xlu0
  %v2602 = vpop.trf.xlu0
  %v2603 = vpop.trf.xlu0
  %v2604 = vpop.trf.xlu0
  %v2605 = vpop.trf.xlu0
  %vm2606 = vcmp.gt.f32.partialorder %v2590, %v2497
  %vm2607 = vcmp.gt.f32.partialorder %v2591, %v2502
  %vm2608 = vcmp.gt.f32.partialorder %v2592, %v2507
  %vm2609 = vcmp.gt.f32.partialorder %v2593, %v2512
  %vm2610 = vcmp.gt.f32.partialorder %v2594, %v2517
  %vm2611 = vcmp.gt.f32.partialorder %v2595, %v2522
  %vm2612 = vcmp.gt.f32.partialorder %v2596, %v2527
  %vm2613 = vcmp.gt.f32.partialorder %v2597, %v2532
  %vm2614 = vcmp.gt.f32.partialorder %v2598, %v2537
  %vm2615 = vcmp.gt.f32.partialorder %v2599, %v2542
  %vm2616 = vcmp.gt.f32.partialorder %v2600, %v2547
  %vm2617 = vcmp.gt.f32.partialorder %v2601, %v2552
  %vm2618 = vcmp.gt.f32.partialorder %v2602, %v2557
  %vm2619 = vcmp.gt.f32.partialorder %v2603, %v2562
  %vm2620 = vcmp.gt.f32.partialorder %v2604, %v2567
  %vm2621 = vcmp.gt.f32.partialorder %v2605, %v2572
  %vm2622 = vcmp.eq.f32.partialorder %v2590, %v2497
  %vm2623 = vcmp.eq.f32.partialorder %v2591, %v2502
  %vm2624 = vcmp.eq.f32.partialorder %v2592, %v2507
  %vm2625 = vcmp.eq.f32.partialorder %v2593, %v2512
  %vm2626 = vcmp.eq.f32.partialorder %v2594, %v2517
  %vm2627 = vcmp.eq.f32.partialorder %v2595, %v2522
  %vm2628 = vcmp.eq.f32.partialorder %v2596, %v2527
  %vm2629 = vcmp.eq.f32.partialorder %v2597, %v2532
  %vm2630 = vcmp.eq.f32.partialorder %v2598, %v2537
  %vm2631 = vcmp.eq.f32.partialorder %v2599, %v2542
  %vm2632 = vcmp.eq.f32.partialorder %v2600, %v2547
  %vm2633 = vcmp.eq.f32.partialorder %v2601, %v2552
  %vm2634 = vcmp.eq.f32.partialorder %v2602, %v2557
  %vm2635 = vcmp.eq.f32.partialorder %v2603, %v2562
  %vm2636 = vcmp.eq.f32.partialorder %v2604, %v2567
  %vm2637 = vcmp.eq.f32.partialorder %v2605, %v2572
  %vm2638 = vmand %vm2622, %vm129
  %vm2639 = vmand %vm2623, %vm130
  %vm2640 = vmand %vm2624, %vm131
  %vm2641 = vmand %vm2625, %vm132
  %vm2642 = vmand %vm2626, %vm133
  %vm2643 = vmand %vm2627, %vm134
  %vm2644 = vmand %vm2628, %vm135
  %vm2645 = vmand %vm2629, %vm136
  %vm2646 = vmand %vm2630, %vm137
  %vm2647 = vmand %vm2631, %vm138
  %vm2648 = vmand %vm2632, %vm139
  %vm2649 = vmand %vm2633, %vm140
  %vm2650 = vmand %vm2634, %vm141
  %vm2651 = vmand %vm2635, %vm142
  %vm2652 = vmand %vm2636, %vm143
  %vm2653 = vmand %vm2637, %vm144
  %vm2654 = vmor %vm2606, %vm2638
  %vm2655 = vmor %vm2607, %vm2639
  %vm2656 = vmor %vm2608, %vm2640
  %vm2657 = vmor %vm2609, %vm2641
  %vm2658 = vmor %vm2610, %vm2642
  %vm2659 = vmor %vm2611, %vm2643
  %vm2660 = vmor %vm2612, %vm2644
  %vm2661 = vmor %vm2613, %vm2645
  %vm2662 = vmor %vm2614, %vm2646
  %vm2663 = vmor %vm2615, %vm2647
  %vm2664 = vmor %vm2616, %vm2648
  %vm2665 = vmor %vm2617, %vm2649
  %vm2666 = vmor %vm2618, %vm2650
  %vm2667 = vmor %vm2619, %vm2651
  %vm2668 = vmor %vm2620, %vm2652
  %vm2669 = vmor %vm2621, %vm2653
  %v2670 = vsel %vm2654, 1, 0
  %v2671 = vsel %vm2655, 1, 0
  %v2672 = vsel %vm2656, 1, 0
  %v2673 = vsel %vm2657, 1, 0
  %v2674 = vsel %vm2658, 1, 0
  %v2675 = vsel %vm2659, 1, 0
  %v2676 = vsel %vm2660, 1, 0
  %v2677 = vsel %vm2661, 1, 0
  %v2678 = vsel %vm2662, 1, 0
  %v2679 = vsel %vm2663, 1, 0
  %v2680 = vsel %vm2664, 1, 0
  %v2681 = vsel %vm2665, 1, 0
  %v2682 = vsel %vm2666, 1, 0
  %v2683 = vsel %vm2667, 1, 0
  %v2684 = vsel %vm2668, 1, 0
  %v2685 = vsel %vm2669, 1, 0
  %v2686 = vcvt.s32.f32 %v2670
  %v2687 = vcvt.s32.f32 %v2671
  %v2688 = vcvt.s32.f32 %v2672
  %v2689 = vcvt.s32.f32 %v2673
  %v2690 = vcvt.s32.f32 %v2674
  %v2691 = vcvt.s32.f32 %v2675
  %v2692 = vcvt.s32.f32 %v2676
  %v2693 = vcvt.s32.f32 %v2677
  %v2694 = vcvt.s32.f32 %v2678
  %v2695 = vcvt.s32.f32 %v2679
  %v2696 = vcvt.s32.f32 %v2680
  %v2697 = vcvt.s32.f32 %v2681
  %v2698 = vcvt.s32.f32 %v2682
  %v2699 = vcvt.s32.f32 %v2683
  %v2700 = vcvt.s32.f32 %v2684
  %v2701 = vcvt.s32.f32 %v2685
  %v2702 = vpack.c.bf16 %v2687, %v2686
  %v2703 = vpack.c.bf16 %v2689, %v2688
  %v2704 = vpack.c.bf16 %v2691, %v2690
  %v2705 = vpack.c.bf16 %v2693, %v2692
  %v2706 = vpack.c.bf16 %v2695, %v2694
  %v2707 = vpack.c.bf16 %v2697, %v2696
  %v2708 = vpack.c.bf16 %v2699, %v2698
  %v2709 = vpack.c.bf16 %v2701, %v2700
  %2710 = vmatprep.subr.bf16.mxu0 0
  %2711 = vmatpush1.bf16.msra.mxu0 %v53
  %2712 = vmatprep.subr.bf16.mxu0 0
  %2713 = vmatpush1.bf16.msra.mxu0 %v54
  %2714 = vmatprep.subr.bf16.mxu0 0
  %2715 = vmatpush1.bf16.msra.mxu0 %v55
  %2716 = vmatprep.subr.bf16.mxu0 0
  %2717 = vmatpush1.bf16.msra.mxu0 %v56
  %2718 = vmatprep.subr.bf16.mxu0 0
  %2719 = vmatpush1.bf16.msra.mxu0 %v57
  %2720 = vmatprep.subr.bf16.mxu0 0
  %2721 = vmatpush1.bf16.msra.mxu0 %v58
  %2722 = vmatprep.subr.bf16.mxu0 0
  %2723 = vmatpush1.bf16.msra.mxu0 %v59
  %2724 = vmatprep.subr.bf16.mxu0 0
  %2725 = vmatpush1.bf16.msra.mxu0 %v60
  %2726 = vmatprep.subr.bf16.mxu0 0
  %2727 = vmatpush1.bf16.msra.mxu0 0
  %2728 = vmatprep.subr.bf16.mxu0 0
  %2729 = vmatpush1.bf16.msra.mxu0 0
  %2730 = vmatprep.subr.bf16.mxu0 0
  %2731 = vmatpush1.bf16.msra.mxu0 0
  %2732 = vmatprep.subr.bf16.mxu0 0
  %2733 = vmatpush1.bf16.msra.mxu0 0
  %2734 = vmatprep.subr.bf16.mxu0 0
  %2735 = vmatpush1.bf16.msra.mxu0 0
  %2736 = vmatprep.subr.bf16.mxu0 0
  %2737 = vmatpush1.bf16.msra.mxu0 0
  %2738 = vmatprep.subr.bf16.mxu0 0
  %2739 = vmatpush1.bf16.msra.mxu0 0
  %2740 = vmatprep.subr.bf16.mxu0 0
  %2741 = vmatpush1.bf16.msra.mxu0 0
  %2742 = vmatprep.mubr.bf16.mxu0 0
  %2743 = vmatmul.mubr.bf16.gmra.mrb[0].mxu0 %v2702
  %v2744 = vpop.f32.mrb[0].mxu0
  %v2745 = vadd.f32 0.0, %v2744
  %v2746 = vpop.f32.mrb[0].mxu0
  %v2747 = vpop.f32.mrb[0].mxu0
  %v2748 = vadd.f32 0.0, %v2747
  %v2749 = vpop.f32.mrb[0].mxu0
  %2750 = vmatprep.mubr.bf16.mxu0 0
  %2751 = vmatmul.mubr.bf16.gmra.mrb[0].mxu0 %v2703
  %v2752 = vpop.f32.mrb[0].mxu0
  %v2753 = vadd.f32 0.0, %v2752
  %v2754 = vpop.f32.mrb[0].mxu0
  %v2755 = vpop.f32.mrb[0].mxu0
  %v2756 = vadd.f32 0.0, %v2755
  %v2757 = vpop.f32.mrb[0].mxu0
  %2758 = vmatprep.mubr.bf16.mxu0 0
  %2759 = vmatmul.mubr.bf16.gmra.mrb[0].mxu0 %v2704
  %v2760 = vpop.f32.mrb[0].mxu0
  %v2761 = vadd.f32 0.0, %v2760
  %v2762 = vpop.f32.mrb[0].mxu0
  %v2763 = vpop.f32.mrb[0].mxu0
  %v2764 = vadd.f32 0.0, %v2763
  %v2765 = vpop.f32.mrb[0].mxu0
  %2766 = vmatprep.mubr.bf16.mxu0 0
  %2767 = vmatmul.mubr.bf16.gmra.mrb[0].mxu0 %v2705
  %v2768 = vpop.f32.mrb[0].mxu0
  %v2769 = vadd.f32 0.0, %v2768
  %v2770 = vpop.f32.mrb[0].mxu0
  %v2771 = vpop.f32.mrb[0].mxu0
  %v2772 = vadd.f32 0.0, %v2771
  %v2773 = vpop.f32.mrb[0].mxu0
  %2774 = vmatprep.mubr.bf16.mxu0 0
  %2775 = vmatmul.mubr.bf16.gmra.mrb[0].mxu0 %v2706
  %v2776 = vpop.f32.mrb[0].mxu0
  %v2777 = vadd.f32 0.0, %v2776
  %v2778 = vpop.f32.mrb[0].mxu0
  %v2779 = vpop.f32.mrb[0].mxu0
  %v2780 = vadd.f32 0.0, %v2779
  %v2781 = vpop.f32.mrb[0].mxu0
  %2782 = vmatprep.mubr.bf16.mxu0 0
  %2783 = vmatmul.mubr.bf16.gmra.mrb[0].mxu0 %v2707
  %v2784 = vpop.f32.mrb[0].mxu0
  %v2785 = vadd.f32 0.0, %v2784
  %v2786 = vpop.f32.mrb[0].mxu0
  %v2787 = vpop.f32.mrb[0].mxu0
  %v2788 = vadd.f32 0.0, %v2787
  %v2789 = vpop.f32.mrb[0].mxu0
  %2790 = vmatprep.mubr.bf16.mxu0 0
  %2791 = vmatmul.mubr.bf16.gmra.mrb[0].mxu0 %v2708
  %v2792 = vpop.f32.mrb[0].mxu0
  %v2793 = vadd.f32 0.0, %v2792
  %v2794 = vpop.f32.mrb[0].mxu0
  %v2795 = vpop.f32.mrb[0].mxu0
  %v2796 = vadd.f32 0.0, %v2795
  %v2797 = vpop.f32.mrb[0].mxu0
  %2798 = vmatprep.mubr.bf16.mxu0 0
  %2799 = vmatmul.mubr.bf16.gmra.mrb[0].mxu0 %v2709
  %v2800 = vpop.f32.mrb[0].mxu0
  %v2801 = vadd.f32 0.0, %v2800
  %v2802 = vpop.f32.mrb[0].mxu0
  %v2803 = vpop.f32.mrb[0].mxu0
  %v2804 = vadd.f32 0.0, %v2803
  %v2805 = vpop.f32.mrb[0].mxu0
  %2806 = vdwg.mxu0
  %v2807 = vmul.f32 %v37, %v2745
  %v2808 = vmul.f32 %v38, %v2748
  %v2809 = vmul.f32 %v39, %v2753
  %v2810 = vmul.f32 %v40, %v2756
  %v2811 = vmul.f32 %v41, %v2761
  %v2812 = vmul.f32 %v42, %v2764
  %v2813 = vmul.f32 %v43, %v2769
  %v2814 = vmul.f32 %v44, %v2772
  %v2815 = vmul.f32 %v45, %v2777
  %v2816 = vmul.f32 %v46, %v2780
  %v2817 = vmul.f32 %v47, %v2785
  %v2818 = vmul.f32 %v48, %v2788
  %v2819 = vmul.f32 %v49, %v2793
  %v2820 = vmul.f32 %v50, %v2796
  %v2821 = vmul.f32 %v51, %v2801
  %v2822 = vmul.f32 %v52, %v2804
  %v2823 = vsel %vm61, %v2807, 0.0
  %2824 = vadd.xlane.f32.xlu0 %v2823
  %v2825 = vpop.xlane.xlu0 %2824
  %v2826 = vsel %vm61, %v2808, 0.0
  %2827 = vadd.xlane.f32.xlu0 %v2826
  %v2828 = vpop.xlane.xlu0 %2827
  %v2829 = vsel %vm61, %v2809, 0.0
  %2830 = vadd.xlane.f32.xlu0 %v2829
  %v2831 = vpop.xlane.xlu0 %2830
  %v2832 = vsel %vm61, %v2810, 0.0
  %2833 = vadd.xlane.f32.xlu0 %v2832
  %v2834 = vpop.xlane.xlu0 %2833
  %v2835 = vsel %vm61, %v2811, 0.0
  %2836 = vadd.xlane.f32.xlu0 %v2835
  %v2837 = vpop.xlane.xlu0 %2836
  %v2838 = vsel %vm61, %v2812, 0.0
  %2839 = vadd.xlane.f32.xlu0 %v2838
  %v2840 = vpop.xlane.xlu0 %2839
  %v2841 = vsel %vm61, %v2813, 0.0
  %2842 = vadd.xlane.f32.xlu0 %v2841
  %v2843 = vpop.xlane.xlu0 %2842
  %v2844 = vsel %vm61, %v2814, 0.0
  %2845 = vadd.xlane.f32.xlu0 %v2844
  %v2846 = vpop.xlane.xlu0 %2845
  %v2847 = vsel %vm61, %v2815, 0.0
  %2848 = vadd.xlane.f32.xlu0 %v2847
  %v2849 = vpop.xlane.xlu0 %2848
  %v2850 = vsel %vm61, %v2816, 0.0
  %2851 = vadd.xlane.f32.xlu0 %v2850
  %v2852 = vpop.xlane.xlu0 %2851
  %v2853 = vsel %vm61, %v2817, 0.0
  %2854 = vadd.xlane.f32.xlu0 %v2853
  %v2855 = vpop.xlane.xlu0 %2854
  %v2856 = vsel %vm61, %v2818, 0.0
  %2857 = vadd.xlane.f32.xlu0 %v2856
  %v2858 = vpop.xlane.xlu0 %2857
  %v2859 = vsel %vm61, %v2819, 0.0
  %2860 = vadd.xlane.f32.xlu0 %v2859
  %v2861 = vpop.xlane.xlu0 %2860
  %v2862 = vsel %vm61, %v2820, 0.0
  %2863 = vadd.xlane.f32.xlu0 %v2862
  %v2864 = vpop.xlane.xlu0 %2863
  %v2865 = vsel %vm61, %v2821, 0.0
  %2866 = vadd.xlane.f32.xlu0 %v2865
  %v2867 = vpop.xlane.xlu0 %2866
  %v2868 = vsel %vm61, %v2822, 0.0
  %2869 = vadd.xlane.f32.xlu0 %v2868
  %v2870 = vpop.xlane.xlu0 %2869
  %v2871 = vsel %vm61, %v1702, 0.0
  %v2872 = vsel %vm61, %v1703, 0.0
  %v2873 = vadd.f32 %v2871, %v2872
  %v2874 = vsel %vm61, %v1704, 0.0
  %v2875 = vadd.f32 %v2873, %v2874
  %v2876 = vsel %vm61, %v1705, 0.0
  %v2877 = vadd.f32 %v2875, %v2876
  %v2878 = vsel %vm61, %v1706, 0.0
  %v2879 = vadd.f32 %v2877, %v2878
  %v2880 = vsel %vm61, %v1707, 0.0
  %v2881 = vadd.f32 %v2879, %v2880
  %v2882 = vsel %vm61, %v1708, 0.0
  %v2883 = vadd.f32 %v2881, %v2882
  %v2884 = vsel %vm61, %v1709, 0.0
  %v2885 = vadd.f32 %v2883, %v2884
  %v2886 = vsel %vm61, %v1710, 0.0
  %v2887 = vadd.f32 %v2885, %v2886
  %v2888 = vsel %vm61, %v1711, 0.0
  %v2889 = vadd.f32 %v2887, %v2888
  %v2890 = vsel %vm61, %v1712, 0.0
  %v2891 = vadd.f32 %v2889, %v2890
  %v2892 = vsel %vm61, %v1713, 0.0
  %v2893 = vadd.f32 %v2891, %v2892
  %v2894 = vsel %vm61, %v1714, 0.0
  %v2895 = vadd.f32 %v2893, %v2894
  %v2896 = vsel %vm61, %v1715, 0.0
  %v2897 = vadd.f32 %v2895, %v2896
  %v2898 = vsel %vm61, %v1716, 0.0
  %v2899 = vadd.f32 %v2897, %v2898
  %v2900 = vsel %vm61, %v1717, 0.0
  %v2901 = vadd.f32 %v2899, %v2900
  %v2902 = vrot.slane %v2901, 4
  %v2903 = vadd.f32 %v2901, %v2902
  %v2904 = vrot.slane %v2903, 2
  %v2905 = vadd.f32 %v2903, %v2904
  %v2906 = vrot.slane %v2905, 1
  %v2907 = vadd.f32 %v2905, %v2906
  %v2908 = vmul.f32 %v37, %v2907
  %v2909 = vmul.f32 %v38, %v2907
  %v2910 = vmul.f32 %v39, %v2907
  %v2911 = vmul.f32 %v40, %v2907
  %v2912 = vmul.f32 %v41, %v2907
  %v2913 = vmul.f32 %v42, %v2907
  %v2914 = vmul.f32 %v43, %v2907
  %v2915 = vmul.f32 %v44, %v2907
  %v2916 = vmul.f32 %v45, %v2907
  %v2917 = vmul.f32 %v46, %v2907
  %v2918 = vmul.f32 %v47, %v2907
  %v2919 = vmul.f32 %v48, %v2907
  %v2920 = vmul.f32 %v49, %v2907
  %v2921 = vmul.f32 %v50, %v2907
  %v2922 = vmul.f32 %v51, %v2907
  %v2923 = vmul.f32 %v52, %v2907
  %v2924 = vsel %vm61, %v2908, 0.0
  %2925 = vadd.xlane.f32.xlu0 %v2924
  %v2926 = vpop.xlane.xlu0 %2925
  %v2927 = vsel %vm61, %v2909, 0.0
  %2928 = vadd.xlane.f32.xlu0 %v2927
  %v2929 = vpop.xlane.xlu0 %2928
  %v2930 = vsel %vm61, %v2910, 0.0
  %2931 = vadd.xlane.f32.xlu0 %v2930
  %v2932 = vpop.xlane.xlu0 %2931
  %v2933 = vsel %vm61, %v2911, 0.0
  %2934 = vadd.xlane.f32.xlu0 %v2933
  %v2935 = vpop.xlane.xlu0 %2934
  %v2936 = vsel %vm61, %v2912, 0.0
  %2937 = vadd.xlane.f32.xlu0 %v2936
  %v2938 = vpop.xlane.xlu0 %2937
  %v2939 = vsel %vm61, %v2913, 0.0
  %2940 = vadd.xlane.f32.xlu0 %v2939
  %v2941 = vpop.xlane.xlu0 %2940
  %v2942 = vsel %vm61, %v2914, 0.0
  %2943 = vadd.xlane.f32.xlu0 %v2942
  %v2944 = vpop.xlane.xlu0 %2943
  %v2945 = vsel %vm61, %v2915, 0.0
  %2946 = vadd.xlane.f32.xlu0 %v2945
  %v2947 = vpop.xlane.xlu0 %2946
  %v2948 = vsel %vm61, %v2916, 0.0
  %2949 = vadd.xlane.f32.xlu0 %v2948
  %v2950 = vpop.xlane.xlu0 %2949
  %v2951 = vsel %vm61, %v2917, 0.0
  %2952 = vadd.xlane.f32.xlu0 %v2951
  %v2953 = vpop.xlane.xlu0 %2952
  %v2954 = vsel %vm61, %v2918, 0.0
  %2955 = vadd.xlane.f32.xlu0 %v2954
  %v2956 = vpop.xlane.xlu0 %2955
  %v2957 = vsel %vm61, %v2919, 0.0
  %2958 = vadd.xlane.f32.xlu0 %v2957
  %v2959 = vpop.xlane.xlu0 %2958
  %v2960 = vsel %vm61, %v2920, 0.0
  %2961 = vadd.xlane.f32.xlu0 %v2960
  %v2962 = vpop.xlane.xlu0 %2961
  %v2963 = vsel %vm61, %v2921, 0.0
  %2964 = vadd.xlane.f32.xlu0 %v2963
  %v2965 = vpop.xlane.xlu0 %2964
  %v2966 = vsel %vm61, %v2922, 0.0
  %2967 = vadd.xlane.f32.xlu0 %v2966
  %v2968 = vpop.xlane.xlu0 %2967
  %v2969 = vsel %vm61, %v2923, 0.0
  %2970 = vadd.xlane.f32.xlu0 %v2969
  %v2971 = vpop.xlane.xlu0 %2970
  %v2972 = vmul.f32 %v2926, 0.9
  %v2973 = vmul.f32 %v2929, 0.9
  %v2974 = vmul.f32 %v2932, 0.9
  %v2975 = vmul.f32 %v2935, 0.9
  %v2976 = vmul.f32 %v2938, 0.9
  %v2977 = vmul.f32 %v2941, 0.9
  %v2978 = vmul.f32 %v2944, 0.9
  %v2979 = vmul.f32 %v2947, 0.9
  %v2980 = vmul.f32 %v2950, 0.9
  %v2981 = vmul.f32 %v2953, 0.9
  %v2982 = vmul.f32 %v2956, 0.9
  %v2983 = vmul.f32 %v2959, 0.9
  %v2984 = vmul.f32 %v2962, 0.9
  %v2985 = vmul.f32 %v2965, 0.9
  %v2986 = vmul.f32 %v2968, 0.9
  %v2987 = vmul.f32 %v2971, 0.9
  %vm2988 = vcmp.lt.f32.partialorder %v2825, %v2972
  %vm2989 = vcmp.lt.f32.partialorder %v2828, %v2973
  %vm2990 = vcmp.lt.f32.partialorder %v2831, %v2974
  %vm2991 = vcmp.lt.f32.partialorder %v2834, %v2975
  %vm2992 = vcmp.lt.f32.partialorder %v2837, %v2976
  %vm2993 = vcmp.lt.f32.partialorder %v2840, %v2977
  %vm2994 = vcmp.lt.f32.partialorder %v2843, %v2978
  %vm2995 = vcmp.lt.f32.partialorder %v2846, %v2979
  %vm2996 = vcmp.lt.f32.partialorder %v2849, %v2980
  %vm2997 = vcmp.lt.f32.partialorder %v2852, %v2981
  %vm2998 = vcmp.lt.f32.partialorder %v2855, %v2982
  %vm2999 = vcmp.lt.f32.partialorder %v2858, %v2983
  %vm3000 = vcmp.lt.f32.partialorder %v2861, %v2984
  %vm3001 = vcmp.lt.f32.partialorder %v2864, %v2985
  %vm3002 = vcmp.lt.f32.partialorder %v2867, %v2986
  %vm3003 = vcmp.lt.f32.partialorder %v2870, %v2987
  %vm3004 = vcmp.lt.f32.partialorder %v2825, 1.0
  %vm3005 = vcmp.lt.f32.partialorder %v2828, 1.0
  %vm3006 = vcmp.lt.f32.partialorder %v2831, 1.0
  %vm3007 = vcmp.lt.f32.partialorder %v2834, 1.0
  %vm3008 = vcmp.lt.f32.partialorder %v2837, 1.0
  %vm3009 = vcmp.lt.f32.partialorder %v2840, 1.0
  %vm3010 = vcmp.lt.f32.partialorder %v2843, 1.0
  %vm3011 = vcmp.lt.f32.partialorder %v2846, 1.0
  %vm3012 = vcmp.lt.f32.partialorder %v2849, 1.0
  %vm3013 = vcmp.lt.f32.partialorder %v2852, 1.0
  %vm3014 = vcmp.lt.f32.partialorder %v2855, 1.0
  %vm3015 = vcmp.lt.f32.partialorder %v2858, 1.0
  %vm3016 = vcmp.lt.f32.partialorder %v2861, 1.0
  %vm3017 = vcmp.lt.f32.partialorder %v2864, 1.0
  %vm3018 = vcmp.lt.f32.partialorder %v2867, 1.0
  %vm3019 = vcmp.lt.f32.partialorder %v2870, 1.0
  %vm3020 = vmor %vm2988, %vm3004
  %vm3021 = vmor %vm2989, %vm3005
  %vm3022 = vmor %vm2990, %vm3006
  %vm3023 = vmor %vm2991, %vm3007
  %vm3024 = vmor %vm2992, %vm3008
  %vm3025 = vmor %vm2993, %vm3009
  %vm3026 = vmor %vm2994, %vm3010
  %vm3027 = vmor %vm2995, %vm3011
  %vm3028 = vmor %vm2996, %vm3012
  %vm3029 = vmor %vm2997, %vm3013
  %vm3030 = vmor %vm2998, %vm3014
  %vm3031 = vmor %vm2999, %vm3015
  %vm3032 = vmor %vm3000, %vm3016
  %vm3033 = vmor %vm3001, %vm3017
  %vm3034 = vmor %vm3002, %vm3018
  %vm3035 = vmor %vm3003, %vm3019
  %vm3036 = vmand %vm2462, %vm3020
  %vm3037 = vmand %vm2463, %vm3021
  %vm3038 = vmand %vm2464, %vm3022
  %vm3039 = vmand %vm2465, %vm3023
  %vm3040 = vmand %vm2466, %vm3024
  %vm3041 = vmand %vm2467, %vm3025
  %vm3042 = vmand %vm2468, %vm3026
  %vm3043 = vmand %vm2469, %vm3027
  %vm3044 = vmand %vm2470, %vm3028
  %vm3045 = vmand %vm2471, %vm3029
  %vm3046 = vmand %vm2472, %vm3030
  %vm3047 = vmand %vm2473, %vm3031
  %vm3048 = vmand %vm2474, %vm3032
  %vm3049 = vmand %vm2475, %vm3033
  %vm3050 = vmand %vm2476, %vm3034
  %vm3051 = vmand %vm2477, %vm3035
  %v3052 = vsel %vm3036, 1, 0
  %v3053 = vsel %vm3037, 1, 0
  %v3054 = vsel %vm3038, 1, 0
  %v3055 = vsel %vm3039, 1, 0
  %v3056 = vsel %vm3040, 1, 0
  %v3057 = vsel %vm3041, 1, 0
  %v3058 = vsel %vm3042, 1, 0
  %v3059 = vsel %vm3043, 1, 0
  %v3060 = vsel %vm3044, 1, 0
  %v3061 = vsel %vm3045, 1, 0
  %v3062 = vsel %vm3046, 1, 0
  %v3063 = vsel %vm3047, 1, 0
  %v3064 = vsel %vm3048, 1, 0
  %v3065 = vsel %vm3049, 1, 0
  %v3066 = vsel %vm3050, 1, 0
  %v3067 = vsel %vm3051, 1, 0
  %v3068 = vcvt.s32.f32 %v3052
  %v3069 = vcvt.s32.f32 %v3053
  %v3070 = vcvt.s32.f32 %v3054
  %v3071 = vcvt.s32.f32 %v3055
  %v3072 = vcvt.s32.f32 %v3056
  %v3073 = vcvt.s32.f32 %v3057
  %v3074 = vcvt.s32.f32 %v3058
  %v3075 = vcvt.s32.f32 %v3059
  %v3076 = vcvt.s32.f32 %v3060
  %v3077 = vcvt.s32.f32 %v3061
  %v3078 = vcvt.s32.f32 %v3062
  %v3079 = vcvt.s32.f32 %v3063
  %v3080 = vcvt.s32.f32 %v3064
  %v3081 = vcvt.s32.f32 %v3065
  %v3082 = vcvt.s32.f32 %v3066
  %v3083 = vcvt.s32.f32 %v3067
  %3085 = vset.pattern.permute.xlu0 0
  %3086 = vperm.xlu0 %3085, %v2446
  %v3087 = vpop.permute.xlu0 %3086
  %3090 = vset.pattern.permute.xlu0 0
  %3091 = vperm.xlu0 %3090, %v2447
  %v3092 = vpop.permute.xlu0 %3091
  %3095 = vset.pattern.permute.xlu0 0
  %3096 = vperm.xlu0 %3095, %v2448
  %v3097 = vpop.permute.xlu0 %3096
  %3100 = vset.pattern.permute.xlu0 0
  %3101 = vperm.xlu0 %3100, %v2449
  %v3102 = vpop.permute.xlu0 %3101
  %3105 = vset.pattern.permute.xlu0 0
  %3106 = vperm.xlu0 %3105, %v2450
  %v3107 = vpop.permute.xlu0 %3106
  %3110 = vset.pattern.permute.xlu0 0
  %3111 = vperm.xlu0 %3110, %v2451
  %v3112 = vpop.permute.xlu0 %3111
  %3115 = vset.pattern.permute.xlu0 0
  %3116 = vperm.xlu0 %3115, %v2452
  %v3117 = vpop.permute.xlu0 %3116
  %3120 = vset.pattern.permute.xlu0 0
  %3121 = vperm.xlu0 %3120, %v2453
  %v3122 = vpop.permute.xlu0 %3121
  %3125 = vset.pattern.permute.xlu0 0
  %3126 = vperm.xlu0 %3125, %v2454
  %v3127 = vpop.permute.xlu0 %3126
  %3130 = vset.pattern.permute.xlu0 0
  %3131 = vperm.xlu0 %3130, %v2455
  %v3132 = vpop.permute.xlu0 %3131
  %3135 = vset.pattern.permute.xlu0 0
  %3136 = vperm.xlu0 %3135, %v2456
  %v3137 = vpop.permute.xlu0 %3136
  %3140 = vset.pattern.permute.xlu0 0
  %3141 = vperm.xlu0 %3140, %v2457
  %v3142 = vpop.permute.xlu0 %3141
  %3145 = vset.pattern.permute.xlu0 0
  %3146 = vperm.xlu0 %3145, %v2458
  %v3147 = vpop.permute.xlu0 %3146
  %3150 = vset.pattern.permute.xlu0 0
  %3151 = vperm.xlu0 %3150, %v2459
  %v3152 = vpop.permute.xlu0 %3151
  %3155 = vset.pattern.permute.xlu0 0
  %3156 = vperm.xlu0 %3155, %v2460
  %v3157 = vpop.permute.xlu0 %3156
  %3160 = vset.pattern.permute.xlu0 0
  %3161 = vperm.xlu0 %3160, %v2461
  %v3162 = vpop.permute.xlu0 %3161
  %v3164 = vmul.f32 %v2261, %v3087
  %v3165 = vmul.f32 %v2262, %v3092
  %v3166 = vmul.f32 %v2263, %v3097
  %v3167 = vmul.f32 %v2264, %v3102
  %v3168 = vmul.f32 %v2265, %v3107
  %v3169 = vmul.f32 %v2266, %v3112
  %v3170 = vmul.f32 %v2267, %v3117
  %v3171 = vmul.f32 %v2268, %v3122
  %v3172 = vmul.f32 %v2269, %v3127
  %v3173 = vmul.f32 %v2270, %v3132
  %v3174 = vmul.f32 %v2271, %v3137
  %v3175 = vmul.f32 %v2272, %v3142
  %v3176 = vmul.f32 %v2273, %v3147
  %v3177 = vmul.f32 %v2274, %v3152
  %v3178 = vmul.f32 %v2275, %v3157
  %v3179 = vmul.f32 %v2276, %v3162
  %v3180 = vmul.f32 %v3164, %v3068
  %v3181 = vmul.f32 %v3165, %v3069
  %v3182 = vmul.f32 %v3166, %v3070
  %v3183 = vmul.f32 %v3167, %v3071
  %v3184 = vmul.f32 %v3168, %v3072
  %v3185 = vmul.f32 %v3169, %v3073
  %v3186 = vmul.f32 %v3170, %v3074
  %v3187 = vmul.f32 %v3171, %v3075
  %v3188 = vmul.f32 %v3172, %v3076
  %v3189 = vmul.f32 %v3173, %v3077
  %v3190 = vmul.f32 %v3174, %v3078
  %v3191 = vmul.f32 %v3175, %v3079
  %v3192 = vmul.f32 %v3176, %v3080
  %v3193 = vmul.f32 %v3177, %v3081
  %v3194 = vmul.f32 %v3178, %v3082
  %v3195 = vmul.f32 %v3179, %v3083
  %v3196 = vld [vmem:[%s3 + $0x44] sm:$0xf]
  %v3197 = vld [vmem:[%s3 + $0x48] sm:$0xf]
  %v3198 = vld [vmem:[%s3 + $0x4c] sm:$0xf]
  %v3199 = vld [vmem:[%s3 + $0x50] sm:$0xf]
  %v3200 = vld [vmem:[%s3 + $0x54] sm:$0xf]
  %v3201 = vld [vmem:[%s3 + $0x58] sm:$0xf]
  %v3202 = vld [vmem:[%s3 + $0x5c] sm:$0xf]
  %v3203 = vld [vmem:[%s3 + $0x60] sm:$0xf]
  %v3204 = vld [vmem:[%s3 + $0x64] sm:$0xf]
  %v3205 = vld [vmem:[%s3 + $0x68] sm:$0xf]
  %v3206 = vld [vmem:[%s3 + $0x6c] sm:$0xf]
  %v3207 = vld [vmem:[%s3 + $0x70] sm:$0xf]
  %v3208 = vld [vmem:[%s3 + $0x74] sm:$0xf]
  %v3209 = vld [vmem:[%s3 + $0x78] sm:$0xf]
  %v3210 = vld [vmem:[%s3 + $0x7c] sm:$0xf]
  %v3211 = vld [vmem:[%s3 + $0x80] sm:$0xf]
  %v3212 = vld [vmem:[%s4 + $0x2] sm:$0x1]
  %v3213 = vmul.f32 %v37, %v3068
  %v3214 = vmul.f32 %v38, %v3069
  %v3215 = vmul.f32 %v39, %v3070
  %v3216 = vmul.f32 %v40, %v3071
  %v3217 = vmul.f32 %v41, %v3072
  %v3218 = vmul.f32 %v42, %v3073
  %v3219 = vmul.f32 %v43, %v3074
  %v3220 = vmul.f32 %v44, %v3075
  %v3221 = vmul.f32 %v45, %v3076
  %v3222 = vmul.f32 %v46, %v3077
  %v3223 = vmul.f32 %v47, %v3078
  %v3224 = vmul.f32 %v48, %v3079
  %v3225 = vmul.f32 %v49, %v3080
  %v3226 = vmul.f32 %v50, %v3081
  %v3227 = vmul.f32 %v51, %v3082
  %v3228 = vmul.f32 %v52, %v3083
  %v3229 = vpack.c.bf16 %v3214, %v3213
  %v3230 = vpack.c.bf16 %v3216, %v3215
  %v3231 = vpack.c.bf16 %v3218, %v3217
  %v3232 = vpack.c.bf16 %v3220, %v3219
  %v3233 = vpack.c.bf16 %v3222, %v3221
  %v3234 = vpack.c.bf16 %v3224, %v3223
  %v3235 = vpack.c.bf16 %v3226, %v3225
  %v3236 = vpack.c.bf16 %v3228, %v3227
  %3237 = vmatprep.subr.bf16.mxu0 0
  %3238 = vmatpush1.bf16.msra.mxu0 %v3229
  %3239 = vmatprep.subr.bf16.mxu0 0
  %3240 = vmatpush1.bf16.msra.mxu0 %v3230
  %3241 = vmatprep.subr.bf16.mxu0 0
  %3242 = vmatpush1.bf16.msra.mxu0 %v3231
  %3243 = vmatprep.subr.bf16.mxu0 0
  %3244 = vmatpush1.bf16.msra.mxu0 %v3232
  %3245 = vmatprep.subr.bf16.mxu0 0
  %3246 = vmatpush1.bf16.msra.mxu0 %v3233
  %3247 = vmatprep.subr.bf16.mxu0 0
  %3248 = vmatpush1.bf16.msra.mxu0 %v3234
  %3249 = vmatprep.subr.bf16.mxu0 0
  %3250 = vmatpush1.bf16.msra.mxu0 %v3235
  %3251 = vmatprep.subr.bf16.mxu0 0
  %3252 = vmatpush1.bf16.msra.mxu0 %v3236
  %3253 = vmatprep.subr.bf16.mxu0 0
  %3254 = vmatpush1.bf16.msra.mxu0 0
  %3255 = vmatprep.subr.bf16.mxu0 0
  %3256 = vmatpush1.bf16.msra.mxu0 0
  %3257 = vmatprep.subr.bf16.mxu0 0
  %3258 = vmatpush1.bf16.msra.mxu0 0
  %3259 = vmatprep.subr.bf16.mxu0 0
  %3260 = vmatpush1.bf16.msra.mxu0 0
  %3261 = vmatprep.subr.bf16.mxu0 0
  %3262 = vmatpush1.bf16.msra.mxu0 0
  %3263 = vmatprep.subr.bf16.mxu0 0
  %3264 = vmatpush1.bf16.msra.mxu0 0
  %3265 = vmatprep.subr.bf16.mxu0 0
  %3266 = vmatpush1.bf16.msra.mxu0 0
  %3267 = vmatprep.subr.bf16.mxu0 0
  %3268 = vmatpush1.bf16.msra.mxu0 0
  %3269 = vmatprep.mubr.bf16.mxu0 0
  %3270 = vmatmul.mubr.bf16.gmra.mrb[0].mxu0 %v219
  %v3271 = vpop.f32.mrb[0].mxu0
  %v3272 = vadd.f32 0.0, %v3271
  %v3273 = vpop.f32.mrb[0].mxu0
  %v3274 = vpop.f32.mrb[0].mxu0
  %v3275 = vadd.f32 0.0, %v3274
  %v3276 = vpop.f32.mrb[0].mxu0
  %3277 = vmatprep.mubr.bf16.mxu0 0
  %3278 = vmatmul.mubr.bf16.gmra.mrb[0].mxu0 %v220
  %v3279 = vpop.f32.mrb[0].mxu0
  %v3280 = vadd.f32 0.0, %v3279
  %v3281 = vpop.f32.mrb[0].mxu0
  %v3282 = vpop.f32.mrb[0].mxu0
  %v3283 = vadd.f32 0.0, %v3282
  %v3284 = vpop.f32.mrb[0].mxu0
  %3285 = vmatprep.mubr.bf16.mxu0 0
  %3286 = vmatmul.mubr.bf16.gmra.mrb[0].mxu0 %v221
  %v3287 = vpop.f32.mrb[0].mxu0
  %v3288 = vadd.f32 0.0, %v3287
  %v3289 = vpop.f32.mrb[0].mxu0
  %v3290 = vpop.f32.mrb[0].mxu0
  %v3291 = vadd.f32 0.0, %v3290
  %v3292 = vpop.f32.mrb[0].mxu0
  %3293 = vmatprep.mubr.bf16.mxu0 0
  %3294 = vmatmul.mubr.bf16.gmra.mrb[0].mxu0 %v222
  %v3295 = vpop.f32.mrb[0].mxu0
  %v3296 = vadd.f32 0.0, %v3295
  %v3297 = vpop.f32.mrb[0].mxu0
  %v3298 = vpop.f32.mrb[0].mxu0
  %v3299 = vadd.f32 0.0, %v3298
  %v3300 = vpop.f32.mrb[0].mxu0
  %3301 = vmatprep.mubr.bf16.mxu0 0
  %3302 = vmatmul.mubr.bf16.gmra.mrb[0].mxu0 %v223
  %v3303 = vpop.f32.mrb[0].mxu0
  %v3304 = vadd.f32 0.0, %v3303
  %v3305 = vpop.f32.mrb[0].mxu0
  %v3306 = vpop.f32.mrb[0].mxu0
  %v3307 = vadd.f32 0.0, %v3306
  %v3308 = vpop.f32.mrb[0].mxu0
  %3309 = vmatprep.mubr.bf16.mxu0 0
  %3310 = vmatmul.mubr.bf16.gmra.mrb[0].mxu0 %v224
  %v3311 = vpop.f32.mrb[0].mxu0
  %v3312 = vadd.f32 0.0, %v3311
  %v3313 = vpop.f32.mrb[0].mxu0
  %v3314 = vpop.f32.mrb[0].mxu0
  %v3315 = vadd.f32 0.0, %v3314
  %v3316 = vpop.f32.mrb[0].mxu0
  %3317 = vmatprep.mubr.bf16.mxu0 0
  %3318 = vmatmul.mubr.bf16.gmra.mrb[0].mxu0 %v225
  %v3319 = vpop.f32.mrb[0].mxu0
  %v3320 = vadd.f32 0.0, %v3319
  %v3321 = vpop.f32.mrb[0].mxu0
  %v3322 = vpop.f32.mrb[0].mxu0
  %v3323 = vadd.f32 0.0, %v3322
  %v3324 = vpop.f32.mrb[0].mxu0
  %3325 = vmatprep.mubr.bf16.mxu0 0
  %3326 = vmatmul.mubr.bf16.gmra.mrb[0].mxu0 %v226
  %v3327 = vpop.f32.mrb[0].mxu0
  %v3328 = vadd.f32 0.0, %v3327
  %v3329 = vpop.f32.mrb[0].mxu0
  %v3330 = vpop.f32.mrb[0].mxu0
  %v3331 = vadd.f32 0.0, %v3330
  %v3332 = vpop.f32.mrb[0].mxu0
  %3333 = vdwg.mxu0
  %v3334 = vsel %vm61, %v3272, 0.0
  %3335 = vadd.xlane.f32.xlu0 %v3334
  %v3336 = vpop.xlane.xlu0 %3335
  %v3337 = vsel %vm61, %v3275, 0.0
  %3338 = vadd.xlane.f32.xlu0 %v3337
  %v3339 = vpop.xlane.xlu0 %3338
  %v3340 = vsel %vm61, %v3280, 0.0
  %3341 = vadd.xlane.f32.xlu0 %v3340
  %v3342 = vpop.xlane.xlu0 %3341
  %v3343 = vsel %vm61, %v3283, 0.0
  %3344 = vadd.xlane.f32.xlu0 %v3343
  %v3345 = vpop.xlane.xlu0 %3344
  %v3346 = vsel %vm61, %v3288, 0.0
  %3347 = vadd.xlane.f32.xlu0 %v3346
  %v3348 = vpop.xlane.xlu0 %3347
  %v3349 = vsel %vm61, %v3291, 0.0
  %3350 = vadd.xlane.f32.xlu0 %v3349
  %v3351 = vpop.xlane.xlu0 %3350
  %v3352 = vsel %vm61, %v3296, 0.0
  %3353 = vadd.xlane.f32.xlu0 %v3352
  %v3354 = vpop.xlane.xlu0 %3353
  %v3355 = vsel %vm61, %v3299, 0.0
  %3356 = vadd.xlane.f32.xlu0 %v3355
  %v3357 = vpop.xlane.xlu0 %3356
  %v3358 = vsel %vm61, %v3304, 0.0
  %3359 = vadd.xlane.f32.xlu0 %v3358
  %v3360 = vpop.xlane.xlu0 %3359
  %v3361 = vsel %vm61, %v3307, 0.0
  %3362 = vadd.xlane.f32.xlu0 %v3361
  %v3363 = vpop.xlane.xlu0 %3362
  %v3364 = vsel %vm61, %v3312, 0.0
  %3365 = vadd.xlane.f32.xlu0 %v3364
  %v3366 = vpop.xlane.xlu0 %3365
  %v3367 = vsel %vm61, %v3315, 0.0
  %3368 = vadd.xlane.f32.xlu0 %v3367
  %v3369 = vpop.xlane.xlu0 %3368
  %v3370 = vsel %vm61, %v3320, 0.0
  %3371 = vadd.xlane.f32.xlu0 %v3370
  %v3372 = vpop.xlane.xlu0 %3371
  %v3373 = vsel %vm61, %v3323, 0.0
  %3374 = vadd.xlane.f32.xlu0 %v3373
  %v3375 = vpop.xlane.xlu0 %3374
  %v3376 = vsel %vm61, %v3328, 0.0
  %3377 = vadd.xlane.f32.xlu0 %v3376
  %v3378 = vpop.xlane.xlu0 %3377
  %v3379 = vsel %vm61, %v3331, 0.0
  %3380 = vadd.xlane.f32.xlu0 %v3379
  %v3381 = vpop.xlane.xlu0 %3380
  %v3382 = vadd.f32 %v3336, 1.0
  %v3383 = vadd.f32 %v3339, 1.0
  %v3384 = vadd.f32 %v3342, 1.0
  %v3385 = vadd.f32 %v3345, 1.0
  %v3386 = vadd.f32 %v3348, 1.0
  %v3387 = vadd.f32 %v3351, 1.0
  %v3388 = vadd.f32 %v3354, 1.0
  %v3389 = vadd.f32 %v3357, 1.0
  %v3390 = vadd.f32 %v3360, 1.0
  %v3391 = vadd.f32 %v3363, 1.0
  %v3392 = vadd.f32 %v3366, 1.0
  %v3393 = vadd.f32 %v3369, 1.0
  %v3394 = vadd.f32 %v3372, 1.0
  %v3395 = vadd.f32 %v3375, 1.0
  %v3396 = vadd.f32 %v3378, 1.0
  %v3397 = vadd.f32 %v3381, 1.0
  %v3398 = vrsqrt.pop %v3382
  %v3399 = vrsqrt.pop %v3383
  %v3400 = vrsqrt.pop %v3384
  %v3401 = vrsqrt.pop %v3385
  %v3402 = vrsqrt.pop %v3386
  %v3403 = vrsqrt.pop %v3387
  %v3404 = vrsqrt.pop %v3388
  %v3405 = vrsqrt.pop %v3389
  %v3406 = vrsqrt.pop %v3390
  %v3407 = vrsqrt.pop %v3391
  %v3408 = vrsqrt.pop %v3392
  %v3409 = vrsqrt.pop %v3393
  %v3410 = vrsqrt.pop %v3394
  %v3411 = vrsqrt.pop %v3395
  %v3412 = vrsqrt.pop %v3396
  %v3413 = vrsqrt.pop %v3397
  %v3414 = vmul.f32 %v3398, %v3180
  %v3415 = vmul.f32 %v3399, %v3181
  %v3416 = vmul.f32 %v3400, %v3182
  %v3417 = vmul.f32 %v3401, %v3183
  %v3418 = vmul.f32 %v3402, %v3184
  %v3419 = vmul.f32 %v3403, %v3185
  %v3420 = vmul.f32 %v3404, %v3186
  %v3421 = vmul.f32 %v3405, %v3187
  %v3422 = vmul.f32 %v3406, %v3188
  %v3423 = vmul.f32 %v3407, %v3189
  %v3424 = vmul.f32 %v3408, %v3190
  %v3425 = vmul.f32 %v3409, %v3191
  %v3426 = vmul.f32 %v3410, %v3192
  %v3427 = vmul.f32 %v3411, %v3193
  %v3428 = vmul.f32 %v3412, %v3194
  %v3429 = vmul.f32 %v3413, %v3195
  %v3430 = vpack.c.bf16 %v3415, %v3414
  %v3431 = vpack.c.bf16 %v3417, %v3416
  %v3432 = vpack.c.bf16 %v3419, %v3418
  %v3433 = vpack.c.bf16 %v3421, %v3420
  %v3434 = vpack.c.bf16 %v3423, %v3422
  %v3435 = vpack.c.bf16 %v3425, %v3424
  %v3436 = vpack.c.bf16 %v3427, %v3426
  %v3437 = vpack.c.bf16 %v3429, %v3428
  %3438 = vmatprep.subr.bf16.mxu0 0
  %3439 = vmatpush1.bf16.msra.mxu0 %v3430
  %3440 = vmatprep.subr.bf16.mxu0 0
  %3441 = vmatpush1.bf16.msra.mxu0 %v3431
  %3442 = vmatprep.subr.bf16.mxu0 0
  %3443 = vmatpush1.bf16.msra.mxu0 %v3432
  %3444 = vmatprep.subr.bf16.mxu0 0
  %3445 = vmatpush1.bf16.msra.mxu0 %v3433
  %3446 = vmatprep.subr.bf16.mxu0 0
  %3447 = vmatpush1.bf16.msra.mxu0 %v3434
  %3448 = vmatprep.subr.bf16.mxu0 0
  %3449 = vmatpush1.bf16.msra.mxu0 %v3435
  %3450 = vmatprep.subr.bf16.mxu0 0
  %3451 = vmatpush1.bf16.msra.mxu0 %v3436
  %3452 = vmatprep.subr.bf16.mxu0 0
  %3453 = vmatpush1.bf16.msra.mxu0 %v3437
  %3454 = vmatprep.subr.bf16.mxu0 0
  %3455 = vmatpush1.bf16.msra.mxu0 0
  %3456 = vmatprep.subr.bf16.mxu0 0
  %3457 = vmatpush1.bf16.msra.mxu0 0
  %3458 = vmatprep.subr.bf16.mxu0 0
  %3459 = vmatpush1.bf16.msra.mxu0 0
  %3460 = vmatprep.subr.bf16.mxu0 0
  %3461 = vmatpush1.bf16.msra.mxu0 0
  %3462 = vmatprep.subr.bf16.mxu0 0
  %3463 = vmatpush1.bf16.msra.mxu0 0
  %3464 = vmatprep.subr.bf16.mxu0 0
  %3465 = vmatpush1.bf16.msra.mxu0 0
  %3466 = vmatprep.subr.bf16.mxu0 0
  %3467 = vmatpush1.bf16.msra.mxu0 0
  %3468 = vmatprep.subr.bf16.mxu0 0
  %3469 = vmatpush1.bf16.msra.mxu0 0
  %3470 = vmatprep.mubr.bf16.mxu0 0
  %3471 = vmatmul.mubr.bf16.gmra.mrb[0].mxu0 %v219
  %v3472 = vpop.f32.mrb[0].mxu0
  %v3473 = vadd.f32 0.0, %v3472
  %v3474 = vpop.f32.mrb[0].mxu0
  %v3475 = vpop.f32.mrb[0].mxu0
  %v3476 = vadd.f32 0.0, %v3475
  %v3477 = vpop.f32.mrb[0].mxu0
  %3478 = vmatprep.mubr.bf16.mxu0 0
  %3479 = vmatmul.mubr.bf16.gmra.mrb[0].mxu0 %v220
  %v3480 = vpop.f32.mrb[0].mxu0
  %v3481 = vadd.f32 0.0, %v3480
  %v3482 = vpop.f32.mrb[0].mxu0
  %v3483 = vpop.f32.mrb[0].mxu0
  %v3484 = vadd.f32 0.0, %v3483
  %v3485 = vpop.f32.mrb[0].mxu0
  %3486 = vmatprep.mubr.bf16.mxu0 0
  %3487 = vmatmul.mubr.bf16.gmra.mrb[0].mxu0 %v221
  %v3488 = vpop.f32.mrb[0].mxu0
  %v3489 = vadd.f32 0.0, %v3488
  %v3490 = vpop.f32.mrb[0].mxu0
  %v3491 = vpop.f32.mrb[0].mxu0
  %v3492 = vadd.f32 0.0, %v3491
  %v3493 = vpop.f32.mrb[0].mxu0
  %3494 = vmatprep.mubr.bf16.mxu0 0
  %3495 = vmatmul.mubr.bf16.gmra.mrb[0].mxu0 %v222
  %v3496 = vpop.f32.mrb[0].mxu0
  %v3497 = vadd.f32 0.0, %v3496
  %v3498 = vpop.f32.mrb[0].mxu0
  %v3499 = vpop.f32.mrb[0].mxu0
  %v3500 = vadd.f32 0.0, %v3499
  %v3501 = vpop.f32.mrb[0].mxu0
  %3502 = vmatprep.mubr.bf16.mxu0 0
  %3503 = vmatmul.mubr.bf16.gmra.mrb[0].mxu0 %v223
  %v3504 = vpop.f32.mrb[0].mxu0
  %v3505 = vadd.f32 0.0, %v3504
  %v3506 = vpop.f32.mrb[0].mxu0
  %v3507 = vpop.f32.mrb[0].mxu0
  %v3508 = vadd.f32 0.0, %v3507
  %v3509 = vpop.f32.mrb[0].mxu0
  %3510 = vmatprep.mubr.bf16.mxu0 0
  %3511 = vmatmul.mubr.bf16.gmra.mrb[0].mxu0 %v224
  %v3512 = vpop.f32.mrb[0].mxu0
  %v3513 = vadd.f32 0.0, %v3512
  %v3514 = vpop.f32.mrb[0].mxu0
  %v3515 = vpop.f32.mrb[0].mxu0
  %v3516 = vadd.f32 0.0, %v3515
  %v3517 = vpop.f32.mrb[0].mxu0
  %3518 = vmatprep.mubr.bf16.mxu0 0
  %3519 = vmatmul.mubr.bf16.gmra.mrb[0].mxu0 %v225
  %v3520 = vpop.f32.mrb[0].mxu0
  %v3521 = vadd.f32 0.0, %v3520
  %v3522 = vpop.f32.mrb[0].mxu0
  %v3523 = vpop.f32.mrb[0].mxu0
  %v3524 = vadd.f32 0.0, %v3523
  %v3525 = vpop.f32.mrb[0].mxu0
  %3526 = vmatprep.mubr.bf16.mxu0 0
  %3527 = vmatmul.mubr.bf16.gmra.mrb[0].mxu0 %v226
  %v3528 = vpop.f32.mrb[0].mxu0
  %v3529 = vadd.f32 0.0, %v3528
  %v3530 = vpop.f32.mrb[0].mxu0
  %v3531 = vpop.f32.mrb[0].mxu0
  %v3532 = vadd.f32 0.0, %v3531
  %v3533 = vpop.f32.mrb[0].mxu0
  %3534 = vdwg.mxu0
  %v3535 = vmul.f32 %v3398, %v3473
  %v3536 = vmul.f32 %v3399, %v3476
  %v3537 = vmul.f32 %v3400, %v3481
  %v3538 = vmul.f32 %v3401, %v3484
  %v3539 = vmul.f32 %v3402, %v3489
  %v3540 = vmul.f32 %v3403, %v3492
  %v3541 = vmul.f32 %v3404, %v3497
  %v3542 = vmul.f32 %v3405, %v3500
  %v3543 = vmul.f32 %v3406, %v3505
  %v3544 = vmul.f32 %v3407, %v3508
  %v3545 = vmul.f32 %v3408, %v3513
  %v3546 = vmul.f32 %v3409, %v3516
  %v3547 = vmul.f32 %v3410, %v3521
  %v3548 = vmul.f32 %v3411, %v3524
  %v3549 = vmul.f32 %v3412, %v3529
  %v3550 = vmul.f32 %v3413, %v3532
  %v3551 = vmul.f32 %v3398, %v3398
  %v3552 = vmul.f32 %v3399, %v3399
  %v3553 = vmul.f32 %v3400, %v3400
  %v3554 = vmul.f32 %v3401, %v3401
  %v3555 = vmul.f32 %v3402, %v3402
  %v3556 = vmul.f32 %v3403, %v3403
  %v3557 = vmul.f32 %v3404, %v3404
  %v3558 = vmul.f32 %v3405, %v3405
  %v3559 = vmul.f32 %v3406, %v3406
  %v3560 = vmul.f32 %v3407, %v3407
  %v3561 = vmul.f32 %v3408, %v3408
  %v3562 = vmul.f32 %v3409, %v3409
  %v3563 = vmul.f32 %v3410, %v3410
  %v3564 = vmul.f32 %v3411, %v3411
  %v3565 = vmul.f32 %v3412, %v3412
  %v3566 = vmul.f32 %v3413, %v3413
  %v3567 = vmul.f32 %v3551, %v3180
  %v3568 = vmul.f32 %v3552, %v3181
  %v3569 = vmul.f32 %v3553, %v3182
  %v3570 = vmul.f32 %v3554, %v3183
  %v3571 = vmul.f32 %v3555, %v3184
  %v3572 = vmul.f32 %v3556, %v3185
  %v3573 = vmul.f32 %v3557, %v3186
  %v3574 = vmul.f32 %v3558, %v3187
  %v3575 = vmul.f32 %v3559, %v3188
  %v3576 = vmul.f32 %v3560, %v3189
  %v3577 = vmul.f32 %v3561, %v3190
  %v3578 = vmul.f32 %v3562, %v3191
  %v3579 = vmul.f32 %v3563, %v3192
  %v3580 = vmul.f32 %v3564, %v3193
  %v3581 = vmul.f32 %v3565, %v3194
  %v3582 = vmul.f32 %v3566, %v3195
  %v3583 = vadd.f32 %v3535, %v3567
  %v3584 = vadd.f32 %v3536, %v3568
  %v3585 = vadd.f32 %v3537, %v3569
  %v3586 = vadd.f32 %v3538, %v3570
  %v3587 = vadd.f32 %v3539, %v3571
  %v3588 = vadd.f32 %v3540, %v3572
  %v3589 = vadd.f32 %v3541, %v3573
  %v3590 = vadd.f32 %v3542, %v3574
  %v3591 = vadd.f32 %v3543, %v3575
  %v3592 = vadd.f32 %v3544, %v3576
  %v3593 = vadd.f32 %v3545, %v3577
  %v3594 = vadd.f32 %v3546, %v3578
  %v3595 = vadd.f32 %v3547, %v3579
  %v3596 = vadd.f32 %v3548, %v3580
  %v3597 = vadd.f32 %v3549, %v3581
  %v3598 = vadd.f32 %v3550, %v3582
  %v3599 = vpack.c.bf16 %v3584, %v3583
  %v3600 = vpack.c.bf16 %v3586, %v3585
  %v3601 = vpack.c.bf16 %v3588, %v3587
  %v3602 = vpack.c.bf16 %v3590, %v3589
  %v3603 = vpack.c.bf16 %v3592, %v3591
  %v3604 = vpack.c.bf16 %v3594, %v3593
  %v3605 = vpack.c.bf16 %v3596, %v3595
  %v3606 = vpack.c.bf16 %v3598, %v3597
  %v3607 = vlaneseq
  %v3608 = vshrl.u32 %v3607, 7
  %v3609 = vsub.s32 0, %v3608
  %v3610 = vrot.slane %v3212, %v3609
  %v3627 = vunpack.c.l.b16 %v3196
  %v3628 = vunpack.c.l.b16 %v3197
  %v3629 = vunpack.c.l.b16 %v3198
  %v3630 = vunpack.c.l.b16 %v3199
  %v3631 = vunpack.c.l.b16 %v3200
  %v3632 = vunpack.c.l.b16 %v3201
  %v3633 = vunpack.c.l.b16 %v3202
  %v3634 = vunpack.c.l.b16 %v3203
  %v3635 = vunpack.c.l.b16 %v3204
  %v3636 = vunpack.c.l.b16 %v3205
  %v3637 = vunpack.c.l.b16 %v3206
  %v3638 = vunpack.c.l.b16 %v3207
  %v3639 = vunpack.c.l.b16 %v3208
  %v3640 = vunpack.c.l.b16 %v3209
  %v3641 = vunpack.c.l.b16 %v3210
  %v3642 = vunpack.c.l.b16 %v3211
  %v3643 = vpack.c.b16 %v3628, %v3627
  %v3644 = vpack.c.b16 %v3630, %v3629
  %v3645 = vpack.c.b16 %v3632, %v3631
  %v3646 = vpack.c.b16 %v3634, %v3633
  %v3647 = vpack.c.b16 %v3636, %v3635
  %v3648 = vpack.c.b16 %v3638, %v3637
  %v3649 = vpack.c.b16 %v3640, %v3639
  %v3650 = vpack.c.b16 %v3642, %v3641
  %3659 = vmatprep.subr.bf16.mxu0 0
  %3660 = vmatpush1.bf16.msra.mxu0 %v3643
  %3661 = vmatprep.subr.bf16.mxu0 0
  %3662 = vmatpush1.bf16.msra.mxu0 %v3644
  %3663 = vmatprep.subr.bf16.mxu0 0
  %3664 = vmatpush1.bf16.msra.mxu0 %v3645
  %3665 = vmatprep.subr.bf16.mxu0 0
  %3666 = vmatpush1.bf16.msra.mxu0 %v3646
  %3667 = vmatprep.subr.bf16.mxu0 0
  %3668 = vmatpush1.bf16.msra.mxu0 %v3647
  %3669 = vmatprep.subr.bf16.mxu0 0
  %3670 = vmatpush1.bf16.msra.mxu0 %v3648
  %3671 = vmatprep.subr.bf16.mxu0 0
  %3672 = vmatpush1.bf16.msra.mxu0 %v3649
  %3673 = vmatprep.subr.bf16.mxu0 0
  %3674 = vmatpush1.bf16.msra.mxu0 %v3650
  %3675 = vmatprep.subr.bf16.mxu0 0
  %3676 = vmatpush1.bf16.msra.mxu0 0
  %3677 = vmatprep.subr.bf16.mxu0 0
  %3678 = vmatpush1.bf16.msra.mxu0 0
  %3679 = vmatprep.subr.bf16.mxu0 0
  %3680 = vmatpush1.bf16.msra.mxu0 0
  %3681 = vmatprep.subr.bf16.mxu0 0
  %3682 = vmatpush1.bf16.msra.mxu0 0
  %3683 = vmatprep.subr.bf16.mxu0 0
  %3684 = vmatpush1.bf16.msra.mxu0 0
  %3685 = vmatprep.subr.bf16.mxu0 0
  %3686 = vmatpush1.bf16.msra.mxu0 0
  %3687 = vmatprep.subr.bf16.mxu0 0
  %3688 = vmatpush1.bf16.msra.mxu0 0
  %3689 = vmatprep.subr.bf16.mxu0 0
  %3690 = vmatpush1.bf16.msra.mxu0 0
  %3691 = vmatprep.mubr.bf16.mxu0 0
  %3692 = vmatmul.mubr.bf16.gmra.mrb[0].mxu0 %v3599
  %v3693 = vpop.f32.mrb[0].mxu0
  %v3694 = vadd.f32 %v3610, %v3693
  %v3695 = vpop.f32.mrb[0].mxu0
  %v3696 = vpop.f32.mrb[0].mxu0
  %v3697 = vadd.f32 %v3610, %v3696
  %v3698 = vpop.f32.mrb[0].mxu0
  %3699 = vmatprep.mubr.bf16.mxu0 0
  %3700 = vmatmul.mubr.bf16.gmra.mrb[0].mxu0 %v3600
  %v3701 = vpop.f32.mrb[0].mxu0
  %v3702 = vadd.f32 %v3610, %v3701
  %v3703 = vpop.f32.mrb[0].mxu0
  %v3704 = vpop.f32.mrb[0].mxu0
  %v3705 = vadd.f32 %v3610, %v3704
  %v3706 = vpop.f32.mrb[0].mxu0
  %3707 = vmatprep.mubr.bf16.mxu0 0
  %3708 = vmatmul.mubr.bf16.gmra.mrb[0].mxu0 %v3601
  %v3709 = vpop.f32.mrb[0].mxu0
  %v3710 = vadd.f32 %v3610, %v3709
  %v3711 = vpop.f32.mrb[0].mxu0
  %v3712 = vpop.f32.mrb[0].mxu0
  %v3713 = vadd.f32 %v3610, %v3712
  %v3714 = vpop.f32.mrb[0].mxu0
  %3715 = vmatprep.mubr.bf16.mxu0 0
  %3716 = vmatmul.mubr.bf16.gmra.mrb[0].mxu0 %v3602
  %v3717 = vpop.f32.mrb[0].mxu0
  %v3718 = vadd.f32 %v3610, %v3717
  %v3719 = vpop.f32.mrb[0].mxu0
  %v3720 = vpop.f32.mrb[0].mxu0
  %v3721 = vadd.f32 %v3610, %v3720
  %v3722 = vpop.f32.mrb[0].mxu0
  %3723 = vmatprep.mubr.bf16.mxu0 0
  %3724 = vmatmul.mubr.bf16.gmra.mrb[0].mxu0 %v3603
  %v3725 = vpop.f32.mrb[0].mxu0
  %v3726 = vadd.f32 %v3610, %v3725
  %v3727 = vpop.f32.mrb[0].mxu0
  %v3728 = vpop.f32.mrb[0].mxu0
  %v3729 = vadd.f32 %v3610, %v3728
  %v3730 = vpop.f32.mrb[0].mxu0
  %3731 = vmatprep.mubr.bf16.mxu0 0
  %3732 = vmatmul.mubr.bf16.gmra.mrb[0].mxu0 %v3604
  %v3733 = vpop.f32.mrb[0].mxu0
  %v3734 = vadd.f32 %v3610, %v3733
  %v3735 = vpop.f32.mrb[0].mxu0
  %v3736 = vpop.f32.mrb[0].mxu0
  %v3737 = vadd.f32 %v3610, %v3736
  %v3738 = vpop.f32.mrb[0].mxu0
  %3739 = vmatprep.mubr.bf16.mxu0 0
  %3740 = vmatmul.mubr.bf16.gmra.mrb[0].mxu0 %v3605
  %v3741 = vpop.f32.mrb[0].mxu0
  %v3742 = vadd.f32 %v3610, %v3741
  %v3743 = vpop.f32.mrb[0].mxu0
  %v3744 = vpop.f32.mrb[0].mxu0
  %v3745 = vadd.f32 %v3610, %v3744
  %v3746 = vpop.f32.mrb[0].mxu0
  %3747 = vmatprep.mubr.bf16.mxu0 0
  %3748 = vmatmul.mubr.bf16.gmra.mrb[0].mxu0 %v3606
  %v3749 = vpop.f32.mrb[0].mxu0
  %v3750 = vadd.f32 %v3610, %v3749
  %v3751 = vpop.f32.mrb[0].mxu0
  %v3752 = vpop.f32.mrb[0].mxu0
  %v3753 = vadd.f32 %v3610, %v3752
  %v3754 = vpop.f32.mrb[0].mxu0
  %3755 = vdwg.mxu0
  %v3756 = vmax.f32 %v3694, 0.0
  %v3757 = vmax.f32 %v3697, 0.0
  %v3758 = vmax.f32 %v3702, 0.0
  %v3759 = vmax.f32 %v3705, 0.0
  %v3760 = vmax.f32 %v3710, 0.0
  %v3761 = vmax.f32 %v3713, 0.0
  %v3762 = vmax.f32 %v3718, 0.0
  %v3763 = vmax.f32 %v3721, 0.0
  %v3764 = vmax.f32 %v3726, 0.0
  %v3765 = vmax.f32 %v3729, 0.0
  %v3766 = vmax.f32 %v3734, 0.0
  %v3767 = vmax.f32 %v3737, 0.0
  %v3768 = vmax.f32 %v3742, 0.0
  %v3769 = vmax.f32 %v3745, 0.0
  %v3770 = vmax.f32 %v3750, 0.0
  %v3771 = vmax.f32 %v3753, 0.0
  %v3772 = vmul.f32 %v3756, %v3068
  %v3773 = vmul.f32 %v3757, %v3069
  %v3774 = vmul.f32 %v3758, %v3070
  %v3775 = vmul.f32 %v3759, %v3071
  %v3776 = vmul.f32 %v3760, %v3072
  %v3777 = vmul.f32 %v3761, %v3073
  %v3778 = vmul.f32 %v3762, %v3074
  %v3779 = vmul.f32 %v3763, %v3075
  %v3780 = vmul.f32 %v3764, %v3076
  %v3781 = vmul.f32 %v3765, %v3077
  %v3782 = vmul.f32 %v3766, %v3078
  %v3783 = vmul.f32 %v3767, %v3079
  %v3784 = vmul.f32 %v3768, %v3080
  %v3785 = vmul.f32 %v3769, %v3081
  %v3786 = vmul.f32 %v3770, %v3082
  %v3787 = vmul.f32 %v3771, %v3083
  %v3788 = vld [vmem:[%s3 + $0x144] sm:$0xf]
  %v3789 = vld [vmem:[%s3 + $0x148] sm:$0xf]
  %v3790 = vld [vmem:[%s3 + $0x14c] sm:$0xf]
  %v3791 = vld [vmem:[%s3 + $0x150] sm:$0xf]
  %v3792 = vld [vmem:[%s3 + $0x154] sm:$0xf]
  %v3793 = vld [vmem:[%s3 + $0x158] sm:$0xf]
  %v3794 = vld [vmem:[%s3 + $0x15c] sm:$0xf]
  %v3795 = vld [vmem:[%s3 + $0x160] sm:$0xf]
  %v3796 = vld [vmem:[%s3 + $0x164] sm:$0xf]
  %v3797 = vld [vmem:[%s3 + $0x168] sm:$0xf]
  %v3798 = vld [vmem:[%s3 + $0x16c] sm:$0xf]
  %v3799 = vld [vmem:[%s3 + $0x170] sm:$0xf]
  %v3800 = vld [vmem:[%s3 + $0x174] sm:$0xf]
  %v3801 = vld [vmem:[%s3 + $0x178] sm:$0xf]
  %v3802 = vld [vmem:[%s3 + $0x17c] sm:$0xf]
  %v3803 = vld [vmem:[%s3 + $0x180] sm:$0xf]
  %v3804 = vpack.c.bf16 %v3773, %v3772
  %v3805 = vpack.c.bf16 %v3775, %v3774
  %v3806 = vpack.c.bf16 %v3777, %v3776
  %v3807 = vpack.c.bf16 %v3779, %v3778
  %v3808 = vpack.c.bf16 %v3781, %v3780
  %v3809 = vpack.c.bf16 %v3783, %v3782
  %v3810 = vpack.c.bf16 %v3785, %v3784
  %v3811 = vpack.c.bf16 %v3787, %v3786
  %v3828 = vunpack.c.l.b16 %v3788
  %v3829 = vunpack.c.l.b16 %v3789
  %v3830 = vunpack.c.l.b16 %v3790
  %v3831 = vunpack.c.l.b16 %v3791
  %v3832 = vunpack.c.l.b16 %v3792
  %v3833 = vunpack.c.l.b16 %v3793
  %v3834 = vunpack.c.l.b16 %v3794
  %v3835 = vunpack.c.l.b16 %v3795
  %v3836 = vunpack.c.l.b16 %v3796
  %v3837 = vunpack.c.l.b16 %v3797
  %v3838 = vunpack.c.l.b16 %v3798
  %v3839 = vunpack.c.l.b16 %v3799
  %v3840 = vunpack.c.l.b16 %v3800
  %v3841 = vunpack.c.l.b16 %v3801
  %v3842 = vunpack.c.l.b16 %v3802
  %v3843 = vunpack.c.l.b16 %v3803
  %v3844 = vpack.c.b16 %v3829, %v3828
  %v3845 = vpack.c.b16 %v3831, %v3830
  %v3846 = vpack.c.b16 %v3833, %v3832
  %v3847 = vpack.c.b16 %v3835, %v3834
  %v3848 = vpack.c.b16 %v3837, %v3836
  %v3849 = vpack.c.b16 %v3839, %v3838
  %v3850 = vpack.c.b16 %v3841, %v3840
  %v3851 = vpack.c.b16 %v3843, %v3842
  %3860 = vmatprep.subr.bf16.mxu0 0
  %3861 = vmatpush1.bf16.msra.mxu0 %v3844
  %3862 = vmatprep.subr.bf16.mxu0 0
  %3863 = vmatpush1.bf16.msra.mxu0 %v3845
  %3864 = vmatprep.subr.bf16.mxu0 0
  %3865 = vmatpush1.bf16.msra.mxu0 %v3846
  %3866 = vmatprep.subr.bf16.mxu0 0
  %3867 = vmatpush1.bf16.msra.mxu0 %v3847
  %3868 = vmatprep.subr.bf16.mxu0 0
  %3869 = vmatpush1.bf16.msra.mxu0 %v3848
  %3870 = vmatprep.subr.bf16.mxu0 0
  %3871 = vmatpush1.bf16.msra.mxu0 %v3849
  %3872 = vmatprep.subr.bf16.mxu0 0
  %3873 = vmatpush1.bf16.msra.mxu0 %v3850
  %3874 = vmatprep.subr.bf16.mxu0 0
  %3875 = vmatpush1.bf16.msra.mxu0 %v3851
  %3876 = vmatprep.subr.bf16.mxu0 0
  %3877 = vmatpush1.bf16.msra.mxu0 0
  %3878 = vmatprep.subr.bf16.mxu0 0
  %3879 = vmatpush1.bf16.msra.mxu0 0
  %3880 = vmatprep.subr.bf16.mxu0 0
  %3881 = vmatpush1.bf16.msra.mxu0 0
  %3882 = vmatprep.subr.bf16.mxu0 0
  %3883 = vmatpush1.bf16.msra.mxu0 0
  %3884 = vmatprep.subr.bf16.mxu0 0
  %3885 = vmatpush1.bf16.msra.mxu0 0
  %3886 = vmatprep.subr.bf16.mxu0 0
  %3887 = vmatpush1.bf16.msra.mxu0 0
  %3888 = vmatprep.subr.bf16.mxu0 0
  %3889 = vmatpush1.bf16.msra.mxu0 0
  %3890 = vmatprep.subr.bf16.mxu0 0
  %3891 = vmatpush1.bf16.msra.mxu0 0
  %3892 = vmatprep.mubr.bf16.mxu0 0
  %3893 = vmatmul.mubr.bf16.gmra.mrb[0].mxu0 %v3804
  %v3894 = vpop.f32.mrb[0].mxu0
  %v3895 = vadd.f32 0.0, %v3894
  %v3896 = vpop.f32.mrb[0].mxu0
  %v3897 = vpop.f32.mrb[0].mxu0
  %v3898 = vadd.f32 0.0, %v3897
  %v3899 = vpop.f32.mrb[0].mxu0
  %3900 = vmatprep.mubr.bf16.mxu0 0
  %3901 = vmatmul.mubr.bf16.gmra.mrb[0].mxu0 %v3805
  %v3902 = vpop.f32.mrb[0].mxu0
  %v3903 = vadd.f32 0.0, %v3902
  %v3904 = vpop.f32.mrb[0].mxu0
  %v3905 = vpop.f32.mrb[0].mxu0
  %v3906 = vadd.f32 0.0, %v3905
  %v3907 = vpop.f32.mrb[0].mxu0
  %3908 = vmatprep.mubr.bf16.mxu0 0
  %3909 = vmatmul.mubr.bf16.gmra.mrb[0].mxu0 %v3806
  %v3910 = vpop.f32.mrb[0].mxu0
  %v3911 = vadd.f32 0.0, %v3910
  %v3912 = vpop.f32.mrb[0].mxu0
  %v3913 = vpop.f32.mrb[0].mxu0
  %v3914 = vadd.f32 0.0, %v3913
  %v3915 = vpop.f32.mrb[0].mxu0
  %3916 = vmatprep.mubr.bf16.mxu0 0
  %3917 = vmatmul.mubr.bf16.gmra.mrb[0].mxu0 %v3807
  %v3918 = vpop.f32.mrb[0].mxu0
  %v3919 = vadd.f32 0.0, %v3918
  %v3920 = vpop.f32.mrb[0].mxu0
  %v3921 = vpop.f32.mrb[0].mxu0
  %v3922 = vadd.f32 0.0, %v3921
  %v3923 = vpop.f32.mrb[0].mxu0
  %3924 = vmatprep.mubr.bf16.mxu0 0
  %3925 = vmatmul.mubr.bf16.gmra.mrb[0].mxu0 %v3808
  %v3926 = vpop.f32.mrb[0].mxu0
  %v3927 = vadd.f32 0.0, %v3926
  %v3928 = vpop.f32.mrb[0].mxu0
  %v3929 = vpop.f32.mrb[0].mxu0
  %v3930 = vadd.f32 0.0, %v3929
  %v3931 = vpop.f32.mrb[0].mxu0
  %3932 = vmatprep.mubr.bf16.mxu0 0
  %3933 = vmatmul.mubr.bf16.gmra.mrb[0].mxu0 %v3809
  %v3934 = vpop.f32.mrb[0].mxu0
  %v3935 = vadd.f32 0.0, %v3934
  %v3936 = vpop.f32.mrb[0].mxu0
  %v3937 = vpop.f32.mrb[0].mxu0
  %v3938 = vadd.f32 0.0, %v3937
  %v3939 = vpop.f32.mrb[0].mxu0
  %3940 = vmatprep.mubr.bf16.mxu0 0
  %3941 = vmatmul.mubr.bf16.gmra.mrb[0].mxu0 %v3810
  %v3942 = vpop.f32.mrb[0].mxu0
  %v3943 = vadd.f32 0.0, %v3942
  %v3944 = vpop.f32.mrb[0].mxu0
  %v3945 = vpop.f32.mrb[0].mxu0
  %v3946 = vadd.f32 0.0, %v3945
  %v3947 = vpop.f32.mrb[0].mxu0
  %3948 = vmatprep.mubr.bf16.mxu0 0
  %3949 = vmatmul.mubr.bf16.gmra.mrb[0].mxu0 %v3811
  %v3950 = vpop.f32.mrb[0].mxu0
  %v3951 = vadd.f32 0.0, %v3950
  %v3952 = vpop.f32.mrb[0].mxu0
  %v3953 = vpop.f32.mrb[0].mxu0
  %v3954 = vadd.f32 0.0, %v3953
  %v3955 = vpop.f32.mrb[0].mxu0
  %3956 = vdwg.mxu0
  %v3957 = vtanh.pop %v3895
  %v3958 = vtanh.pop %v3898
  %v3959 = vtanh.pop %v3903
  %v3960 = vtanh.pop %v3906
  %v3961 = vtanh.pop %v3911
  %v3962 = vtanh.pop %v3914
  %v3963 = vtanh.pop %v3919
  %v3964 = vtanh.pop %v3922
  %v3965 = vtanh.pop %v3927
  %v3966 = vtanh.pop %v3930
  %v3967 = vtanh.pop %v3935
  %v3968 = vtanh.pop %v3938
  %v3969 = vtanh.pop %v3943
  %v3970 = vtanh.pop %v3946
  %v3971 = vtanh.pop %v3951
  %v3972 = vtanh.pop %v3954
  %vm3973 = vcmp.gt.f32.partialorder %v3068, 0.0
  %vm3974 = vcmp.gt.f32.partialorder %v3069, 0.0
  %vm3975 = vcmp.gt.f32.partialorder %v3070, 0.0
  %vm3976 = vcmp.gt.f32.partialorder %v3071, 0.0
  %vm3977 = vcmp.gt.f32.partialorder %v3072, 0.0
  %vm3978 = vcmp.gt.f32.partialorder %v3073, 0.0
  %vm3979 = vcmp.gt.f32.partialorder %v3074, 0.0
  %vm3980 = vcmp.gt.f32.partialorder %v3075, 0.0
  %vm3981 = vcmp.gt.f32.partialorder %v3076, 0.0
  %vm3982 = vcmp.gt.f32.partialorder %v3077, 0.0
  %vm3983 = vcmp.gt.f32.partialorder %v3078, 0.0
  %vm3984 = vcmp.gt.f32.partialorder %v3079, 0.0
  %vm3985 = vcmp.gt.f32.partialorder %v3080, 0.0
  %vm3986 = vcmp.gt.f32.partialorder %v3081, 0.0
  %vm3987 = vcmp.gt.f32.partialorder %v3082, 0.0
  %vm3988 = vcmp.gt.f32.partialorder %v3083, 0.0
  %v3989 = vsel %vm3973, %v3957, -1e+30
  %v3990 = vsel %vm3974, %v3958, -1e+30
  %v3991 = vsel %vm3975, %v3959, -1e+30
  %v3992 = vsel %vm3976, %v3960, -1e+30
  %v3993 = vsel %vm3977, %v3961, -1e+30
  %v3994 = vsel %vm3978, %v3962, -1e+30
  %v3995 = vsel %vm3979, %v3963, -1e+30
  %v3996 = vsel %vm3980, %v3964, -1e+30
  %v3997 = vsel %vm3981, %v3965, -1e+30
  %v3998 = vsel %vm3982, %v3966, -1e+30
  %v3999 = vsel %vm3983, %v3967, -1e+30
  %v4000 = vsel %vm3984, %v3968, -1e+30
  %v4001 = vsel %vm3985, %v3969, -1e+30
  %v4002 = vsel %vm3986, %v3970, -1e+30
  %v4003 = vsel %vm3987, %v3971, -1e+30
  %v4004 = vsel %vm3988, %v3972, -1e+30
  %4006 = vset.pattern.permute.xlu0 0
  %4007 = vperm.xlu0 %4006, %v3989
  %v4008 = vpop.permute.xlu0 %4007
  %4011 = vset.pattern.permute.xlu0 0
  %4012 = vperm.xlu0 %4011, %v3990
  %v4013 = vpop.permute.xlu0 %4012
  %4016 = vset.pattern.permute.xlu0 0
  %4017 = vperm.xlu0 %4016, %v3991
  %v4018 = vpop.permute.xlu0 %4017
  %4021 = vset.pattern.permute.xlu0 0
  %4022 = vperm.xlu0 %4021, %v3992
  %v4023 = vpop.permute.xlu0 %4022
  %4026 = vset.pattern.permute.xlu0 0
  %4027 = vperm.xlu0 %4026, %v3993
  %v4028 = vpop.permute.xlu0 %4027
  %4031 = vset.pattern.permute.xlu0 0
  %4032 = vperm.xlu0 %4031, %v3994
  %v4033 = vpop.permute.xlu0 %4032
  %4036 = vset.pattern.permute.xlu0 0
  %4037 = vperm.xlu0 %4036, %v3995
  %v4038 = vpop.permute.xlu0 %4037
  %4041 = vset.pattern.permute.xlu0 0
  %4042 = vperm.xlu0 %4041, %v3996
  %v4043 = vpop.permute.xlu0 %4042
  %4046 = vset.pattern.permute.xlu0 0
  %4047 = vperm.xlu0 %4046, %v3997
  %v4048 = vpop.permute.xlu0 %4047
  %4051 = vset.pattern.permute.xlu0 0
  %4052 = vperm.xlu0 %4051, %v3998
  %v4053 = vpop.permute.xlu0 %4052
  %4056 = vset.pattern.permute.xlu0 0
  %4057 = vperm.xlu0 %4056, %v3999
  %v4058 = vpop.permute.xlu0 %4057
  %4061 = vset.pattern.permute.xlu0 0
  %4062 = vperm.xlu0 %4061, %v4000
  %v4063 = vpop.permute.xlu0 %4062
  %4066 = vset.pattern.permute.xlu0 0
  %4067 = vperm.xlu0 %4066, %v4001
  %v4068 = vpop.permute.xlu0 %4067
  %4071 = vset.pattern.permute.xlu0 0
  %4072 = vperm.xlu0 %4071, %v4002
  %v4073 = vpop.permute.xlu0 %4072
  %4076 = vset.pattern.permute.xlu0 0
  %4077 = vperm.xlu0 %4076, %v4003
  %v4078 = vpop.permute.xlu0 %4077
  %4081 = vset.pattern.permute.xlu0 0
  %4082 = vperm.xlu0 %4081, %v4004
  %v4083 = vpop.permute.xlu0 %4082
  %4085 = vxpose.xlu0.b32.start [1/16] %v4008, 128
  %4086 = vxpose.xlu0.b32.cont [2/16] %v4013, 128
  %4087 = vxpose.xlu0.b32.cont [3/16] %v4018, 128
  %4088 = vxpose.xlu0.b32.cont [4/16] %v4023, 128
  %4089 = vxpose.xlu0.b32.cont [5/16] %v4028, 128
  %4090 = vxpose.xlu0.b32.cont [6/16] %v4033, 128
  %4091 = vxpose.xlu0.b32.cont [7/16] %v4038, 128
  %4092 = vxpose.xlu0.b32.cont [8/16] %v4043, 128
  %4093 = vxpose.xlu0.b32.cont [9/16] %v4048, 128
  %4094 = vxpose.xlu0.b32.cont [10/16] %v4053, 128
  %4095 = vxpose.xlu0.b32.cont [11/16] %v4058, 128
  %4096 = vxpose.xlu0.b32.cont [12/16] %v4063, 128
  %4097 = vxpose.xlu0.b32.cont [13/16] %v4068, 128
  %4098 = vxpose.xlu0.b32.cont [14/16] %v4073, 128
  %4099 = vxpose.xlu0.b32.cont [15/16] %v4078, 128
  %4100 = vxpose.xlu0.b32.end [16/16] %v4083, 128
  %v4101 = vpop.trf.xlu0
  %v4102 = vpop.trf.xlu0
  %v4103 = vpop.trf.xlu0
  %v4104 = vpop.trf.xlu0
  %v4105 = vpop.trf.xlu0
  %v4106 = vpop.trf.xlu0
  %v4107 = vpop.trf.xlu0
  %v4108 = vpop.trf.xlu0
  %v4109 = vpop.trf.xlu0
  %v4110 = vpop.trf.xlu0
  %v4111 = vpop.trf.xlu0
  %v4112 = vpop.trf.xlu0
  %v4113 = vpop.trf.xlu0
  %v4114 = vpop.trf.xlu0
  %v4115 = vpop.trf.xlu0
  %v4116 = vpop.trf.xlu0
  %vm4117 = vcmp.gt.f32.partialorder %v4101, %v4008
  %vm4118 = vcmp.gt.f32.partialorder %v4102, %v4013
  %vm4119 = vcmp.gt.f32.partialorder %v4103, %v4018
  %vm4120 = vcmp.gt.f32.partialorder %v4104, %v4023
  %vm4121 = vcmp.gt.f32.partialorder %v4105, %v4028
  %vm4122 = vcmp.gt.f32.partialorder %v4106, %v4033
  %vm4123 = vcmp.gt.f32.partialorder %v4107, %v4038
  %vm4124 = vcmp.gt.f32.partialorder %v4108, %v4043
  %vm4125 = vcmp.gt.f32.partialorder %v4109, %v4048
  %vm4126 = vcmp.gt.f32.partialorder %v4110, %v4053
  %vm4127 = vcmp.gt.f32.partialorder %v4111, %v4058
  %vm4128 = vcmp.gt.f32.partialorder %v4112, %v4063
  %vm4129 = vcmp.gt.f32.partialorder %v4113, %v4068
  %vm4130 = vcmp.gt.f32.partialorder %v4114, %v4073
  %vm4131 = vcmp.gt.f32.partialorder %v4115, %v4078
  %vm4132 = vcmp.gt.f32.partialorder %v4116, %v4083
  %vm4133 = vcmp.eq.f32.partialorder %v4101, %v4008
  %vm4134 = vcmp.eq.f32.partialorder %v4102, %v4013
  %vm4135 = vcmp.eq.f32.partialorder %v4103, %v4018
  %vm4136 = vcmp.eq.f32.partialorder %v4104, %v4023
  %vm4137 = vcmp.eq.f32.partialorder %v4105, %v4028
  %vm4138 = vcmp.eq.f32.partialorder %v4106, %v4033
  %vm4139 = vcmp.eq.f32.partialorder %v4107, %v4038
  %vm4140 = vcmp.eq.f32.partialorder %v4108, %v4043
  %vm4141 = vcmp.eq.f32.partialorder %v4109, %v4048
  %vm4142 = vcmp.eq.f32.partialorder %v4110, %v4053
  %vm4143 = vcmp.eq.f32.partialorder %v4111, %v4058
  %vm4144 = vcmp.eq.f32.partialorder %v4112, %v4063
  %vm4145 = vcmp.eq.f32.partialorder %v4113, %v4068
  %vm4146 = vcmp.eq.f32.partialorder %v4114, %v4073
  %vm4147 = vcmp.eq.f32.partialorder %v4115, %v4078
  %vm4148 = vcmp.eq.f32.partialorder %v4116, %v4083
  %vm4149 = vmand %vm4133, %vm129
  %vm4150 = vmand %vm4134, %vm130
  %vm4151 = vmand %vm4135, %vm131
  %vm4152 = vmand %vm4136, %vm132
  %vm4153 = vmand %vm4137, %vm133
  %vm4154 = vmand %vm4138, %vm134
  %vm4155 = vmand %vm4139, %vm135
  %vm4156 = vmand %vm4140, %vm136
  %vm4157 = vmand %vm4141, %vm137
  %vm4158 = vmand %vm4142, %vm138
  %vm4159 = vmand %vm4143, %vm139
  %vm4160 = vmand %vm4144, %vm140
  %vm4161 = vmand %vm4145, %vm141
  %vm4162 = vmand %vm4146, %vm142
  %vm4163 = vmand %vm4147, %vm143
  %vm4164 = vmand %vm4148, %vm144
  %vm4165 = vmor %vm4117, %vm4149
  %vm4166 = vmor %vm4118, %vm4150
  %vm4167 = vmor %vm4119, %vm4151
  %vm4168 = vmor %vm4120, %vm4152
  %vm4169 = vmor %vm4121, %vm4153
  %vm4170 = vmor %vm4122, %vm4154
  %vm4171 = vmor %vm4123, %vm4155
  %vm4172 = vmor %vm4124, %vm4156
  %vm4173 = vmor %vm4125, %vm4157
  %vm4174 = vmor %vm4126, %vm4158
  %vm4175 = vmor %vm4127, %vm4159
  %vm4176 = vmor %vm4128, %vm4160
  %vm4177 = vmor %vm4129, %vm4161
  %vm4178 = vmor %vm4130, %vm4162
  %vm4179 = vmor %vm4131, %vm4163
  %vm4180 = vmor %vm4132, %vm4164
  %v4181 = vsel %vm4165, 1, 0
  %v4182 = vsel %vm4166, 1, 0
  %v4183 = vsel %vm4167, 1, 0
  %v4184 = vsel %vm4168, 1, 0
  %v4185 = vsel %vm4169, 1, 0
  %v4186 = vsel %vm4170, 1, 0
  %v4187 = vsel %vm4171, 1, 0
  %v4188 = vsel %vm4172, 1, 0
  %v4189 = vsel %vm4173, 1, 0
  %v4190 = vsel %vm4174, 1, 0
  %v4191 = vsel %vm4175, 1, 0
  %v4192 = vsel %vm4176, 1, 0
  %v4193 = vsel %vm4177, 1, 0
  %v4194 = vsel %vm4178, 1, 0
  %v4195 = vsel %vm4179, 1, 0
  %v4196 = vsel %vm4180, 1, 0
  %v4197 = vcvt.s32.f32 %v4181
  %v4198 = vcvt.s32.f32 %v4182
  %v4199 = vcvt.s32.f32 %v4183
  %v4200 = vcvt.s32.f32 %v4184
  %v4201 = vcvt.s32.f32 %v4185
  %v4202 = vcvt.s32.f32 %v4186
  %v4203 = vcvt.s32.f32 %v4187
  %v4204 = vcvt.s32.f32 %v4188
  %v4205 = vcvt.s32.f32 %v4189
  %v4206 = vcvt.s32.f32 %v4190
  %v4207 = vcvt.s32.f32 %v4191
  %v4208 = vcvt.s32.f32 %v4192
  %v4209 = vcvt.s32.f32 %v4193
  %v4210 = vcvt.s32.f32 %v4194
  %v4211 = vcvt.s32.f32 %v4195
  %v4212 = vcvt.s32.f32 %v4196
  %v4213 = vpack.c.bf16 %v4198, %v4197
  %v4214 = vpack.c.bf16 %v4200, %v4199
  %v4215 = vpack.c.bf16 %v4202, %v4201
  %v4216 = vpack.c.bf16 %v4204, %v4203
  %v4217 = vpack.c.bf16 %v4206, %v4205
  %v4218 = vpack.c.bf16 %v4208, %v4207
  %v4219 = vpack.c.bf16 %v4210, %v4209
  %v4220 = vpack.c.bf16 %v4212, %v4211
  %4221 = vmatprep.subr.bf16.mxu0 0
  %4222 = vmatpush1.bf16.msra.mxu0 %v53
  %4223 = vmatprep.subr.bf16.mxu0 0
  %4224 = vmatpush1.bf16.msra.mxu0 %v54
  %4225 = vmatprep.subr.bf16.mxu0 0
  %4226 = vmatpush1.bf16.msra.mxu0 %v55
  %4227 = vmatprep.subr.bf16.mxu0 0
  %4228 = vmatpush1.bf16.msra.mxu0 %v56
  %4229 = vmatprep.subr.bf16.mxu0 0
  %4230 = vmatpush1.bf16.msra.mxu0 %v57
  %4231 = vmatprep.subr.bf16.mxu0 0
  %4232 = vmatpush1.bf16.msra.mxu0 %v58
  %4233 = vmatprep.subr.bf16.mxu0 0
  %4234 = vmatpush1.bf16.msra.mxu0 %v59
  %4235 = vmatprep.subr.bf16.mxu0 0
  %4236 = vmatpush1.bf16.msra.mxu0 %v60
  %4237 = vmatprep.subr.bf16.mxu0 0
  %4238 = vmatpush1.bf16.msra.mxu0 0
  %4239 = vmatprep.subr.bf16.mxu0 0
  %4240 = vmatpush1.bf16.msra.mxu0 0
  %4241 = vmatprep.subr.bf16.mxu0 0
  %4242 = vmatpush1.bf16.msra.mxu0 0
  %4243 = vmatprep.subr.bf16.mxu0 0
  %4244 = vmatpush1.bf16.msra.mxu0 0
  %4245 = vmatprep.subr.bf16.mxu0 0
  %4246 = vmatpush1.bf16.msra.mxu0 0
  %4247 = vmatprep.subr.bf16.mxu0 0
  %4248 = vmatpush1.bf16.msra.mxu0 0
  %4249 = vmatprep.subr.bf16.mxu0 0
  %4250 = vmatpush1.bf16.msra.mxu0 0
  %4251 = vmatprep.subr.bf16.mxu0 0
  %4252 = vmatpush1.bf16.msra.mxu0 0
  %4253 = vmatprep.mubr.bf16.mxu0 0
  %4254 = vmatmul.mubr.bf16.gmra.mrb[0].mxu0 %v4213
  %v4255 = vpop.f32.mrb[0].mxu0
  %v4256 = vadd.f32 0.0, %v4255
  %v4257 = vpop.f32.mrb[0].mxu0
  %v4258 = vpop.f32.mrb[0].mxu0
  %v4259 = vadd.f32 0.0, %v4258
  %v4260 = vpop.f32.mrb[0].mxu0
  %4261 = vmatprep.mubr.bf16.mxu0 0
  %4262 = vmatmul.mubr.bf16.gmra.mrb[0].mxu0 %v4214
  %v4263 = vpop.f32.mrb[0].mxu0
  %v4264 = vadd.f32 0.0, %v4263
  %v4265 = vpop.f32.mrb[0].mxu0
  %v4266 = vpop.f32.mrb[0].mxu0
  %v4267 = vadd.f32 0.0, %v4266
  %v4268 = vpop.f32.mrb[0].mxu0
  %4269 = vmatprep.mubr.bf16.mxu0 0
  %4270 = vmatmul.mubr.bf16.gmra.mrb[0].mxu0 %v4215
  %v4271 = vpop.f32.mrb[0].mxu0
  %v4272 = vadd.f32 0.0, %v4271
  %v4273 = vpop.f32.mrb[0].mxu0
  %v4274 = vpop.f32.mrb[0].mxu0
  %v4275 = vadd.f32 0.0, %v4274
  %v4276 = vpop.f32.mrb[0].mxu0
  %4277 = vmatprep.mubr.bf16.mxu0 0
  %4278 = vmatmul.mubr.bf16.gmra.mrb[0].mxu0 %v4216
  %v4279 = vpop.f32.mrb[0].mxu0
  %v4280 = vadd.f32 0.0, %v4279
  %v4281 = vpop.f32.mrb[0].mxu0
  %v4282 = vpop.f32.mrb[0].mxu0
  %v4283 = vadd.f32 0.0, %v4282
  %v4284 = vpop.f32.mrb[0].mxu0
  %4285 = vmatprep.mubr.bf16.mxu0 0
  %4286 = vmatmul.mubr.bf16.gmra.mrb[0].mxu0 %v4217
  %v4287 = vpop.f32.mrb[0].mxu0
  %v4288 = vadd.f32 0.0, %v4287
  %v4289 = vpop.f32.mrb[0].mxu0
  %v4290 = vpop.f32.mrb[0].mxu0
  %v4291 = vadd.f32 0.0, %v4290
  %v4292 = vpop.f32.mrb[0].mxu0
  %4293 = vmatprep.mubr.bf16.mxu0 0
  %4294 = vmatmul.mubr.bf16.gmra.mrb[0].mxu0 %v4218
  %v4295 = vpop.f32.mrb[0].mxu0
  %v4296 = vadd.f32 0.0, %v4295
  %v4297 = vpop.f32.mrb[0].mxu0
  %v4298 = vpop.f32.mrb[0].mxu0
  %v4299 = vadd.f32 0.0, %v4298
  %v4300 = vpop.f32.mrb[0].mxu0
  %4301 = vmatprep.mubr.bf16.mxu0 0
  %4302 = vmatmul.mubr.bf16.gmra.mrb[0].mxu0 %v4219
  %v4303 = vpop.f32.mrb[0].mxu0
  %v4304 = vadd.f32 0.0, %v4303
  %v4305 = vpop.f32.mrb[0].mxu0
  %v4306 = vpop.f32.mrb[0].mxu0
  %v4307 = vadd.f32 0.0, %v4306
  %v4308 = vpop.f32.mrb[0].mxu0
  %4309 = vmatprep.mubr.bf16.mxu0 0
  %4310 = vmatmul.mubr.bf16.gmra.mrb[0].mxu0 %v4220
  %v4311 = vpop.f32.mrb[0].mxu0
  %v4312 = vadd.f32 0.0, %v4311
  %v4313 = vpop.f32.mrb[0].mxu0
  %v4314 = vpop.f32.mrb[0].mxu0
  %v4315 = vadd.f32 0.0, %v4314
  %v4316 = vpop.f32.mrb[0].mxu0
  %4317 = vdwg.mxu0
  %v4318 = vmul.f32 %v37, %v4256
  %v4319 = vmul.f32 %v38, %v4259
  %v4320 = vmul.f32 %v39, %v4264
  %v4321 = vmul.f32 %v40, %v4267
  %v4322 = vmul.f32 %v41, %v4272
  %v4323 = vmul.f32 %v42, %v4275
  %v4324 = vmul.f32 %v43, %v4280
  %v4325 = vmul.f32 %v44, %v4283
  %v4326 = vmul.f32 %v45, %v4288
  %v4327 = vmul.f32 %v46, %v4291
  %v4328 = vmul.f32 %v47, %v4296
  %v4329 = vmul.f32 %v48, %v4299
  %v4330 = vmul.f32 %v49, %v4304
  %v4331 = vmul.f32 %v50, %v4307
  %v4332 = vmul.f32 %v51, %v4312
  %v4333 = vmul.f32 %v52, %v4315
  %v4334 = vsel %vm61, %v4318, 0.0
  %4335 = vadd.xlane.f32.xlu0 %v4334
  %v4336 = vpop.xlane.xlu0 %4335
  %v4337 = vsel %vm61, %v4319, 0.0
  %4338 = vadd.xlane.f32.xlu0 %v4337
  %v4339 = vpop.xlane.xlu0 %4338
  %v4340 = vsel %vm61, %v4320, 0.0
  %4341 = vadd.xlane.f32.xlu0 %v4340
  %v4342 = vpop.xlane.xlu0 %4341
  %v4343 = vsel %vm61, %v4321, 0.0
  %4344 = vadd.xlane.f32.xlu0 %v4343
  %v4345 = vpop.xlane.xlu0 %4344
  %v4346 = vsel %vm61, %v4322, 0.0
  %4347 = vadd.xlane.f32.xlu0 %v4346
  %v4348 = vpop.xlane.xlu0 %4347
  %v4349 = vsel %vm61, %v4323, 0.0
  %4350 = vadd.xlane.f32.xlu0 %v4349
  %v4351 = vpop.xlane.xlu0 %4350
  %v4352 = vsel %vm61, %v4324, 0.0
  %4353 = vadd.xlane.f32.xlu0 %v4352
  %v4354 = vpop.xlane.xlu0 %4353
  %v4355 = vsel %vm61, %v4325, 0.0
  %4356 = vadd.xlane.f32.xlu0 %v4355
  %v4357 = vpop.xlane.xlu0 %4356
  %v4358 = vsel %vm61, %v4326, 0.0
  %4359 = vadd.xlane.f32.xlu0 %v4358
  %v4360 = vpop.xlane.xlu0 %4359
  %v4361 = vsel %vm61, %v4327, 0.0
  %4362 = vadd.xlane.f32.xlu0 %v4361
  %v4363 = vpop.xlane.xlu0 %4362
  %v4364 = vsel %vm61, %v4328, 0.0
  %4365 = vadd.xlane.f32.xlu0 %v4364
  %v4366 = vpop.xlane.xlu0 %4365
  %v4367 = vsel %vm61, %v4329, 0.0
  %4368 = vadd.xlane.f32.xlu0 %v4367
  %v4369 = vpop.xlane.xlu0 %4368
  %v4370 = vsel %vm61, %v4330, 0.0
  %4371 = vadd.xlane.f32.xlu0 %v4370
  %v4372 = vpop.xlane.xlu0 %4371
  %v4373 = vsel %vm61, %v4331, 0.0
  %4374 = vadd.xlane.f32.xlu0 %v4373
  %v4375 = vpop.xlane.xlu0 %4374
  %v4376 = vsel %vm61, %v4332, 0.0
  %4377 = vadd.xlane.f32.xlu0 %v4376
  %v4378 = vpop.xlane.xlu0 %4377
  %v4379 = vsel %vm61, %v4333, 0.0
  %4380 = vadd.xlane.f32.xlu0 %v4379
  %v4381 = vpop.xlane.xlu0 %4380
  %v4382 = vsel %vm61, %v3213, 0.0
  %v4383 = vsel %vm61, %v3214, 0.0
  %v4384 = vadd.f32 %v4382, %v4383
  %v4385 = vsel %vm61, %v3215, 0.0
  %v4386 = vadd.f32 %v4384, %v4385
  %v4387 = vsel %vm61, %v3216, 0.0
  %v4388 = vadd.f32 %v4386, %v4387
  %v4389 = vsel %vm61, %v3217, 0.0
  %v4390 = vadd.f32 %v4388, %v4389
  %v4391 = vsel %vm61, %v3218, 0.0
  %v4392 = vadd.f32 %v4390, %v4391
  %v4393 = vsel %vm61, %v3219, 0.0
  %v4394 = vadd.f32 %v4392, %v4393
  %v4395 = vsel %vm61, %v3220, 0.0
  %v4396 = vadd.f32 %v4394, %v4395
  %v4397 = vsel %vm61, %v3221, 0.0
  %v4398 = vadd.f32 %v4396, %v4397
  %v4399 = vsel %vm61, %v3222, 0.0
  %v4400 = vadd.f32 %v4398, %v4399
  %v4401 = vsel %vm61, %v3223, 0.0
  %v4402 = vadd.f32 %v4400, %v4401
  %v4403 = vsel %vm61, %v3224, 0.0
  %v4404 = vadd.f32 %v4402, %v4403
  %v4405 = vsel %vm61, %v3225, 0.0
  %v4406 = vadd.f32 %v4404, %v4405
  %v4407 = vsel %vm61, %v3226, 0.0
  %v4408 = vadd.f32 %v4406, %v4407
  %v4409 = vsel %vm61, %v3227, 0.0
  %v4410 = vadd.f32 %v4408, %v4409
  %v4411 = vsel %vm61, %v3228, 0.0
  %v4412 = vadd.f32 %v4410, %v4411
  %v4413 = vrot.slane %v4412, 4
  %v4414 = vadd.f32 %v4412, %v4413
  %v4415 = vrot.slane %v4414, 2
  %v4416 = vadd.f32 %v4414, %v4415
  %v4417 = vrot.slane %v4416, 1
  %v4418 = vadd.f32 %v4416, %v4417
  %v4419 = vmul.f32 %v37, %v4418
  %v4420 = vmul.f32 %v38, %v4418
  %v4421 = vmul.f32 %v39, %v4418
  %v4422 = vmul.f32 %v40, %v4418
  %v4423 = vmul.f32 %v41, %v4418
  %v4424 = vmul.f32 %v42, %v4418
  %v4425 = vmul.f32 %v43, %v4418
  %v4426 = vmul.f32 %v44, %v4418
  %v4427 = vmul.f32 %v45, %v4418
  %v4428 = vmul.f32 %v46, %v4418
  %v4429 = vmul.f32 %v47, %v4418
  %v4430 = vmul.f32 %v48, %v4418
  %v4431 = vmul.f32 %v49, %v4418
  %v4432 = vmul.f32 %v50, %v4418
  %v4433 = vmul.f32 %v51, %v4418
  %v4434 = vmul.f32 %v52, %v4418
  %v4435 = vsel %vm61, %v4419, 0.0
  %4436 = vadd.xlane.f32.xlu0 %v4435
  %v4437 = vpop.xlane.xlu0 %4436
  %v4438 = vsel %vm61, %v4420, 0.0
  %4439 = vadd.xlane.f32.xlu0 %v4438
  %v4440 = vpop.xlane.xlu0 %4439
  %v4441 = vsel %vm61, %v4421, 0.0
  %4442 = vadd.xlane.f32.xlu0 %v4441
  %v4443 = vpop.xlane.xlu0 %4442
  %v4444 = vsel %vm61, %v4422, 0.0
  %4445 = vadd.xlane.f32.xlu0 %v4444
  %v4446 = vpop.xlane.xlu0 %4445
  %v4447 = vsel %vm61, %v4423, 0.0
  %4448 = vadd.xlane.f32.xlu0 %v4447
  %v4449 = vpop.xlane.xlu0 %4448
  %v4450 = vsel %vm61, %v4424, 0.0
  %4451 = vadd.xlane.f32.xlu0 %v4450
  %v4452 = vpop.xlane.xlu0 %4451
  %v4453 = vsel %vm61, %v4425, 0.0
  %4454 = vadd.xlane.f32.xlu0 %v4453
  %v4455 = vpop.xlane.xlu0 %4454
  %v4456 = vsel %vm61, %v4426, 0.0
  %4457 = vadd.xlane.f32.xlu0 %v4456
  %v4458 = vpop.xlane.xlu0 %4457
  %v4459 = vsel %vm61, %v4427, 0.0
  %4460 = vadd.xlane.f32.xlu0 %v4459
  %v4461 = vpop.xlane.xlu0 %4460
  %v4462 = vsel %vm61, %v4428, 0.0
  %4463 = vadd.xlane.f32.xlu0 %v4462
  %v4464 = vpop.xlane.xlu0 %4463
  %v4465 = vsel %vm61, %v4429, 0.0
  %4466 = vadd.xlane.f32.xlu0 %v4465
  %v4467 = vpop.xlane.xlu0 %4466
  %v4468 = vsel %vm61, %v4430, 0.0
  %4469 = vadd.xlane.f32.xlu0 %v4468
  %v4470 = vpop.xlane.xlu0 %4469
  %v4471 = vsel %vm61, %v4431, 0.0
  %4472 = vadd.xlane.f32.xlu0 %v4471
  %v4473 = vpop.xlane.xlu0 %4472
  %v4474 = vsel %vm61, %v4432, 0.0
  %4475 = vadd.xlane.f32.xlu0 %v4474
  %v4476 = vpop.xlane.xlu0 %4475
  %v4477 = vsel %vm61, %v4433, 0.0
  %4478 = vadd.xlane.f32.xlu0 %v4477
  %v4479 = vpop.xlane.xlu0 %4478
  %v4480 = vsel %vm61, %v4434, 0.0
  %4481 = vadd.xlane.f32.xlu0 %v4480
  %v4482 = vpop.xlane.xlu0 %4481
  %v4483 = vmul.f32 %v4437, 0.9
  %v4484 = vmul.f32 %v4440, 0.9
  %v4485 = vmul.f32 %v4443, 0.9
  %v4486 = vmul.f32 %v4446, 0.9
  %v4487 = vmul.f32 %v4449, 0.9
  %v4488 = vmul.f32 %v4452, 0.9
  %v4489 = vmul.f32 %v4455, 0.9
  %v4490 = vmul.f32 %v4458, 0.9
  %v4491 = vmul.f32 %v4461, 0.9
  %v4492 = vmul.f32 %v4464, 0.9
  %v4493 = vmul.f32 %v4467, 0.9
  %v4494 = vmul.f32 %v4470, 0.9
  %v4495 = vmul.f32 %v4473, 0.9
  %v4496 = vmul.f32 %v4476, 0.9
  %v4497 = vmul.f32 %v4479, 0.9
  %v4498 = vmul.f32 %v4482, 0.9
  %vm4499 = vcmp.lt.f32.partialorder %v4336, %v4483
  %vm4500 = vcmp.lt.f32.partialorder %v4339, %v4484
  %vm4501 = vcmp.lt.f32.partialorder %v4342, %v4485
  %vm4502 = vcmp.lt.f32.partialorder %v4345, %v4486
  %vm4503 = vcmp.lt.f32.partialorder %v4348, %v4487
  %vm4504 = vcmp.lt.f32.partialorder %v4351, %v4488
  %vm4505 = vcmp.lt.f32.partialorder %v4354, %v4489
  %vm4506 = vcmp.lt.f32.partialorder %v4357, %v4490
  %vm4507 = vcmp.lt.f32.partialorder %v4360, %v4491
  %vm4508 = vcmp.lt.f32.partialorder %v4363, %v4492
  %vm4509 = vcmp.lt.f32.partialorder %v4366, %v4493
  %vm4510 = vcmp.lt.f32.partialorder %v4369, %v4494
  %vm4511 = vcmp.lt.f32.partialorder %v4372, %v4495
  %vm4512 = vcmp.lt.f32.partialorder %v4375, %v4496
  %vm4513 = vcmp.lt.f32.partialorder %v4378, %v4497
  %vm4514 = vcmp.lt.f32.partialorder %v4381, %v4498
  %vm4515 = vcmp.lt.f32.partialorder %v4336, 1.0
  %vm4516 = vcmp.lt.f32.partialorder %v4339, 1.0
  %vm4517 = vcmp.lt.f32.partialorder %v4342, 1.0
  %vm4518 = vcmp.lt.f32.partialorder %v4345, 1.0
  %vm4519 = vcmp.lt.f32.partialorder %v4348, 1.0
  %vm4520 = vcmp.lt.f32.partialorder %v4351, 1.0
  %vm4521 = vcmp.lt.f32.partialorder %v4354, 1.0
  %vm4522 = vcmp.lt.f32.partialorder %v4357, 1.0
  %vm4523 = vcmp.lt.f32.partialorder %v4360, 1.0
  %vm4524 = vcmp.lt.f32.partialorder %v4363, 1.0
  %vm4525 = vcmp.lt.f32.partialorder %v4366, 1.0
  %vm4526 = vcmp.lt.f32.partialorder %v4369, 1.0
  %vm4527 = vcmp.lt.f32.partialorder %v4372, 1.0
  %vm4528 = vcmp.lt.f32.partialorder %v4375, 1.0
  %vm4529 = vcmp.lt.f32.partialorder %v4378, 1.0
  %vm4530 = vcmp.lt.f32.partialorder %v4381, 1.0
  %vm4531 = vmor %vm4499, %vm4515
  %vm4532 = vmor %vm4500, %vm4516
  %vm4533 = vmor %vm4501, %vm4517
  %vm4534 = vmor %vm4502, %vm4518
  %vm4535 = vmor %vm4503, %vm4519
  %vm4536 = vmor %vm4504, %vm4520
  %vm4537 = vmor %vm4505, %vm4521
  %vm4538 = vmor %vm4506, %vm4522
  %vm4539 = vmor %vm4507, %vm4523
  %vm4540 = vmor %vm4508, %vm4524
  %vm4541 = vmor %vm4509, %vm4525
  %vm4542 = vmor %vm4510, %vm4526
  %vm4543 = vmor %vm4511, %vm4527
  %vm4544 = vmor %vm4512, %vm4528
  %vm4545 = vmor %vm4513, %vm4529
  %vm4546 = vmor %vm4514, %vm4530
  %vm4547 = vmand %vm3973, %vm4531
  %vm4548 = vmand %vm3974, %vm4532
  %vm4549 = vmand %vm3975, %vm4533
  %vm4550 = vmand %vm3976, %vm4534
  %vm4551 = vmand %vm3977, %vm4535
  %vm4552 = vmand %vm3978, %vm4536
  %vm4553 = vmand %vm3979, %vm4537
  %vm4554 = vmand %vm3980, %vm4538
  %vm4555 = vmand %vm3981, %vm4539
  %vm4556 = vmand %vm3982, %vm4540
  %vm4557 = vmand %vm3983, %vm4541
  %vm4558 = vmand %vm3984, %vm4542
  %vm4559 = vmand %vm3985, %vm4543
  %vm4560 = vmand %vm3986, %vm4544
  %vm4561 = vmand %vm3987, %vm4545
  %vm4562 = vmand %vm3988, %vm4546
  %v4563 = vsel %vm4547, 1, 0
  %v4564 = vsel %vm4548, 1, 0
  %v4565 = vsel %vm4549, 1, 0
  %v4566 = vsel %vm4550, 1, 0
  %v4567 = vsel %vm4551, 1, 0
  %v4568 = vsel %vm4552, 1, 0
  %v4569 = vsel %vm4553, 1, 0
  %v4570 = vsel %vm4554, 1, 0
  %v4571 = vsel %vm4555, 1, 0
  %v4572 = vsel %vm4556, 1, 0
  %v4573 = vsel %vm4557, 1, 0
  %v4574 = vsel %vm4558, 1, 0
  %v4575 = vsel %vm4559, 1, 0
  %v4576 = vsel %vm4560, 1, 0
  %v4577 = vsel %vm4561, 1, 0
  %v4578 = vsel %vm4562, 1, 0
  %v4579 = vcvt.s32.f32 %v4563
  %v4580 = vcvt.s32.f32 %v4564
  %v4581 = vcvt.s32.f32 %v4565
  %v4582 = vcvt.s32.f32 %v4566
  %v4583 = vcvt.s32.f32 %v4567
  %v4584 = vcvt.s32.f32 %v4568
  %v4585 = vcvt.s32.f32 %v4569
  %v4586 = vcvt.s32.f32 %v4570
  %v4587 = vcvt.s32.f32 %v4571
  %v4588 = vcvt.s32.f32 %v4572
  %v4589 = vcvt.s32.f32 %v4573
  %v4590 = vcvt.s32.f32 %v4574
  %v4591 = vcvt.s32.f32 %v4575
  %v4592 = vcvt.s32.f32 %v4576
  %v4593 = vcvt.s32.f32 %v4577
  %v4594 = vcvt.s32.f32 %v4578
  %4596 = vset.pattern.permute.xlu0 0
  %4597 = vperm.xlu0 %4596, %v3957
  %v4598 = vpop.permute.xlu0 %4597
  %4601 = vset.pattern.permute.xlu0 0
  %4602 = vperm.xlu0 %4601, %v3958
  %v4603 = vpop.permute.xlu0 %4602
  %4606 = vset.pattern.permute.xlu0 0
  %4607 = vperm.xlu0 %4606, %v3959
  %v4608 = vpop.permute.xlu0 %4607
  %4611 = vset.pattern.permute.xlu0 0
  %4612 = vperm.xlu0 %4611, %v3960
  %v4613 = vpop.permute.xlu0 %4612
  %4616 = vset.pattern.permute.xlu0 0
  %4617 = vperm.xlu0 %4616, %v3961
  %v4618 = vpop.permute.xlu0 %4617
  %4621 = vset.pattern.permute.xlu0 0
  %4622 = vperm.xlu0 %4621, %v3962
  %v4623 = vpop.permute.xlu0 %4622
  %4626 = vset.pattern.permute.xlu0 0
  %4627 = vperm.xlu0 %4626, %v3963
  %v4628 = vpop.permute.xlu0 %4627
  %4631 = vset.pattern.permute.xlu0 0
  %4632 = vperm.xlu0 %4631, %v3964
  %v4633 = vpop.permute.xlu0 %4632
  %4636 = vset.pattern.permute.xlu0 0
  %4637 = vperm.xlu0 %4636, %v3965
  %v4638 = vpop.permute.xlu0 %4637
  %4641 = vset.pattern.permute.xlu0 0
  %4642 = vperm.xlu0 %4641, %v3966
  %v4643 = vpop.permute.xlu0 %4642
  %4646 = vset.pattern.permute.xlu0 0
  %4647 = vperm.xlu0 %4646, %v3967
  %v4648 = vpop.permute.xlu0 %4647
  %4651 = vset.pattern.permute.xlu0 0
  %4652 = vperm.xlu0 %4651, %v3968
  %v4653 = vpop.permute.xlu0 %4652
  %4656 = vset.pattern.permute.xlu0 0
  %4657 = vperm.xlu0 %4656, %v3969
  %v4658 = vpop.permute.xlu0 %4657
  %4661 = vset.pattern.permute.xlu0 0
  %4662 = vperm.xlu0 %4661, %v3970
  %v4663 = vpop.permute.xlu0 %4662
  %4666 = vset.pattern.permute.xlu0 0
  %4667 = vperm.xlu0 %4666, %v3971
  %v4668 = vpop.permute.xlu0 %4667
  %4671 = vset.pattern.permute.xlu0 0
  %4672 = vperm.xlu0 %4671, %v3972
  %v4673 = vpop.permute.xlu0 %4672
  %v4675 = vmul.f32 %v3772, %v4598
  %v4676 = vmul.f32 %v3773, %v4603
  %v4677 = vmul.f32 %v3774, %v4608
  %v4678 = vmul.f32 %v3775, %v4613
  %v4679 = vmul.f32 %v3776, %v4618
  %v4680 = vmul.f32 %v3777, %v4623
  %v4681 = vmul.f32 %v3778, %v4628
  %v4682 = vmul.f32 %v3779, %v4633
  %v4683 = vmul.f32 %v3780, %v4638
  %v4684 = vmul.f32 %v3781, %v4643
  %v4685 = vmul.f32 %v3782, %v4648
  %v4686 = vmul.f32 %v3783, %v4653
  %v4687 = vmul.f32 %v3784, %v4658
  %v4688 = vmul.f32 %v3785, %v4663
  %v4689 = vmul.f32 %v3786, %v4668
  %v4690 = vmul.f32 %v3787, %v4673
  %v4691 = vmul.f32 %v4675, %v4579
  %v4692 = vmul.f32 %v4676, %v4580
  %v4693 = vmul.f32 %v4677, %v4581
  %v4694 = vmul.f32 %v4678, %v4582
  %v4695 = vmul.f32 %v4679, %v4583
  %v4696 = vmul.f32 %v4680, %v4584
  %v4697 = vmul.f32 %v4681, %v4585
  %v4698 = vmul.f32 %v4682, %v4586
  %v4699 = vmul.f32 %v4683, %v4587
  %v4700 = vmul.f32 %v4684, %v4588
  %v4701 = vmul.f32 %v4685, %v4589
  %v4702 = vmul.f32 %v4686, %v4590
  %v4703 = vmul.f32 %v4687, %v4591
  %v4704 = vmul.f32 %v4688, %v4592
  %v4705 = vmul.f32 %v4689, %v4593
  %v4706 = vmul.f32 %v4690, %v4594
  %v4707 = vld [vmem:[%s3 + $0x84] sm:$0xf]
  %v4708 = vld [vmem:[%s3 + $0x88] sm:$0xf]
  %v4709 = vld [vmem:[%s3 + $0x8c] sm:$0xf]
  %v4710 = vld [vmem:[%s3 + $0x90] sm:$0xf]
  %v4711 = vld [vmem:[%s3 + $0x94] sm:$0xf]
  %v4712 = vld [vmem:[%s3 + $0x98] sm:$0xf]
  %v4713 = vld [vmem:[%s3 + $0x9c] sm:$0xf]
  %v4714 = vld [vmem:[%s3 + $0xa0] sm:$0xf]
  %v4715 = vld [vmem:[%s3 + $0xa4] sm:$0xf]
  %v4716 = vld [vmem:[%s3 + $0xa8] sm:$0xf]
  %v4717 = vld [vmem:[%s3 + $0xac] sm:$0xf]
  %v4718 = vld [vmem:[%s3 + $0xb0] sm:$0xf]
  %v4719 = vld [vmem:[%s3 + $0xb4] sm:$0xf]
  %v4720 = vld [vmem:[%s3 + $0xb8] sm:$0xf]
  %v4721 = vld [vmem:[%s3 + $0xbc] sm:$0xf]
  %v4722 = vld [vmem:[%s3 + $0xc0] sm:$0xf]
  %v4723 = vld [vmem:[%s4 + $0x3] sm:$0x1]
  %v4724 = vmul.f32 %v37, %v4579
  %v4725 = vmul.f32 %v38, %v4580
  %v4726 = vmul.f32 %v39, %v4581
  %v4727 = vmul.f32 %v40, %v4582
  %v4728 = vmul.f32 %v41, %v4583
  %v4729 = vmul.f32 %v42, %v4584
  %v4730 = vmul.f32 %v43, %v4585
  %v4731 = vmul.f32 %v44, %v4586
  %v4732 = vmul.f32 %v45, %v4587
  %v4733 = vmul.f32 %v46, %v4588
  %v4734 = vmul.f32 %v47, %v4589
  %v4735 = vmul.f32 %v48, %v4590
  %v4736 = vmul.f32 %v49, %v4591
  %v4737 = vmul.f32 %v50, %v4592
  %v4738 = vmul.f32 %v51, %v4593
  %v4739 = vmul.f32 %v52, %v4594
  %v4740 = vpack.c.bf16 %v4725, %v4724
  %v4741 = vpack.c.bf16 %v4727, %v4726
  %v4742 = vpack.c.bf16 %v4729, %v4728
  %v4743 = vpack.c.bf16 %v4731, %v4730
  %v4744 = vpack.c.bf16 %v4733, %v4732
  %v4745 = vpack.c.bf16 %v4735, %v4734
  %v4746 = vpack.c.bf16 %v4737, %v4736
  %v4747 = vpack.c.bf16 %v4739, %v4738
  %4748 = vmatprep.subr.bf16.mxu0 0
  %4749 = vmatpush1.bf16.msra.mxu0 %v4740
  %4750 = vmatprep.subr.bf16.mxu0 0
  %4751 = vmatpush1.bf16.msra.mxu0 %v4741
  %4752 = vmatprep.subr.bf16.mxu0 0
  %4753 = vmatpush1.bf16.msra.mxu0 %v4742
  %4754 = vmatprep.subr.bf16.mxu0 0
  %4755 = vmatpush1.bf16.msra.mxu0 %v4743
  %4756 = vmatprep.subr.bf16.mxu0 0
  %4757 = vmatpush1.bf16.msra.mxu0 %v4744
  %4758 = vmatprep.subr.bf16.mxu0 0
  %4759 = vmatpush1.bf16.msra.mxu0 %v4745
  %4760 = vmatprep.subr.bf16.mxu0 0
  %4761 = vmatpush1.bf16.msra.mxu0 %v4746
  %4762 = vmatprep.subr.bf16.mxu0 0
  %4763 = vmatpush1.bf16.msra.mxu0 %v4747
  %4764 = vmatprep.subr.bf16.mxu0 0
  %4765 = vmatpush1.bf16.msra.mxu0 0
  %4766 = vmatprep.subr.bf16.mxu0 0
  %4767 = vmatpush1.bf16.msra.mxu0 0
  %4768 = vmatprep.subr.bf16.mxu0 0
  %4769 = vmatpush1.bf16.msra.mxu0 0
  %4770 = vmatprep.subr.bf16.mxu0 0
  %4771 = vmatpush1.bf16.msra.mxu0 0
  %4772 = vmatprep.subr.bf16.mxu0 0
  %4773 = vmatpush1.bf16.msra.mxu0 0
  %4774 = vmatprep.subr.bf16.mxu0 0
  %4775 = vmatpush1.bf16.msra.mxu0 0
  %4776 = vmatprep.subr.bf16.mxu0 0
  %4777 = vmatpush1.bf16.msra.mxu0 0
  %4778 = vmatprep.subr.bf16.mxu0 0
  %4779 = vmatpush1.bf16.msra.mxu0 0
  %4780 = vmatprep.mubr.bf16.mxu0 0
  %4781 = vmatmul.mubr.bf16.gmra.mrb[0].mxu0 %v219
  %v4782 = vpop.f32.mrb[0].mxu0
  %v4783 = vadd.f32 0.0, %v4782
  %v4784 = vpop.f32.mrb[0].mxu0
  %v4785 = vpop.f32.mrb[0].mxu0
  %v4786 = vadd.f32 0.0, %v4785
  %v4787 = vpop.f32.mrb[0].mxu0
  %4788 = vmatprep.mubr.bf16.mxu0 0
  %4789 = vmatmul.mubr.bf16.gmra.mrb[0].mxu0 %v220
  %v4790 = vpop.f32.mrb[0].mxu0
  %v4791 = vadd.f32 0.0, %v4790
  %v4792 = vpop.f32.mrb[0].mxu0
  %v4793 = vpop.f32.mrb[0].mxu0
  %v4794 = vadd.f32 0.0, %v4793
  %v4795 = vpop.f32.mrb[0].mxu0
  %4796 = vmatprep.mubr.bf16.mxu0 0
  %4797 = vmatmul.mubr.bf16.gmra.mrb[0].mxu0 %v221
  %v4798 = vpop.f32.mrb[0].mxu0
  %v4799 = vadd.f32 0.0, %v4798
  %v4800 = vpop.f32.mrb[0].mxu0
  %v4801 = vpop.f32.mrb[0].mxu0
  %v4802 = vadd.f32 0.0, %v4801
  %v4803 = vpop.f32.mrb[0].mxu0
  %4804 = vmatprep.mubr.bf16.mxu0 0
  %4805 = vmatmul.mubr.bf16.gmra.mrb[0].mxu0 %v222
  %v4806 = vpop.f32.mrb[0].mxu0
  %v4807 = vadd.f32 0.0, %v4806
  %v4808 = vpop.f32.mrb[0].mxu0
  %v4809 = vpop.f32.mrb[0].mxu0
  %v4810 = vadd.f32 0.0, %v4809
  %v4811 = vpop.f32.mrb[0].mxu0
  %4812 = vmatprep.mubr.bf16.mxu0 0
  %4813 = vmatmul.mubr.bf16.gmra.mrb[0].mxu0 %v223
  %v4814 = vpop.f32.mrb[0].mxu0
  %v4815 = vadd.f32 0.0, %v4814
  %v4816 = vpop.f32.mrb[0].mxu0
  %v4817 = vpop.f32.mrb[0].mxu0
  %v4818 = vadd.f32 0.0, %v4817
  %v4819 = vpop.f32.mrb[0].mxu0
  %4820 = vmatprep.mubr.bf16.mxu0 0
  %4821 = vmatmul.mubr.bf16.gmra.mrb[0].mxu0 %v224
  %v4822 = vpop.f32.mrb[0].mxu0
  %v4823 = vadd.f32 0.0, %v4822
  %v4824 = vpop.f32.mrb[0].mxu0
  %v4825 = vpop.f32.mrb[0].mxu0
  %v4826 = vadd.f32 0.0, %v4825
  %v4827 = vpop.f32.mrb[0].mxu0
  %4828 = vmatprep.mubr.bf16.mxu0 0
  %4829 = vmatmul.mubr.bf16.gmra.mrb[0].mxu0 %v225
  %v4830 = vpop.f32.mrb[0].mxu0
  %v4831 = vadd.f32 0.0, %v4830
  %v4832 = vpop.f32.mrb[0].mxu0
  %v4833 = vpop.f32.mrb[0].mxu0
  %v4834 = vadd.f32 0.0, %v4833
  %v4835 = vpop.f32.mrb[0].mxu0
  %4836 = vmatprep.mubr.bf16.mxu0 0
  %4837 = vmatmul.mubr.bf16.gmra.mrb[0].mxu0 %v226
  %v4838 = vpop.f32.mrb[0].mxu0
  %v4839 = vadd.f32 0.0, %v4838
  %v4840 = vpop.f32.mrb[0].mxu0
  %v4841 = vpop.f32.mrb[0].mxu0
  %v4842 = vadd.f32 0.0, %v4841
  %v4843 = vpop.f32.mrb[0].mxu0
  %4844 = vdwg.mxu0
  %v4845 = vsel %vm61, %v4783, 0.0
  %4846 = vadd.xlane.f32.xlu0 %v4845
  %v4847 = vpop.xlane.xlu0 %4846
  %v4848 = vsel %vm61, %v4786, 0.0
  %4849 = vadd.xlane.f32.xlu0 %v4848
  %v4850 = vpop.xlane.xlu0 %4849
  %v4851 = vsel %vm61, %v4791, 0.0
  %4852 = vadd.xlane.f32.xlu0 %v4851
  %v4853 = vpop.xlane.xlu0 %4852
  %v4854 = vsel %vm61, %v4794, 0.0
  %4855 = vadd.xlane.f32.xlu0 %v4854
  %v4856 = vpop.xlane.xlu0 %4855
  %v4857 = vsel %vm61, %v4799, 0.0
  %4858 = vadd.xlane.f32.xlu0 %v4857
  %v4859 = vpop.xlane.xlu0 %4858
  %v4860 = vsel %vm61, %v4802, 0.0
  %4861 = vadd.xlane.f32.xlu0 %v4860
  %v4862 = vpop.xlane.xlu0 %4861
  %v4863 = vsel %vm61, %v4807, 0.0
  %4864 = vadd.xlane.f32.xlu0 %v4863
  %v4865 = vpop.xlane.xlu0 %4864
  %v4866 = vsel %vm61, %v4810, 0.0
  %4867 = vadd.xlane.f32.xlu0 %v4866
  %v4868 = vpop.xlane.xlu0 %4867
  %v4869 = vsel %vm61, %v4815, 0.0
  %4870 = vadd.xlane.f32.xlu0 %v4869
  %v4871 = vpop.xlane.xlu0 %4870
  %v4872 = vsel %vm61, %v4818, 0.0
  %4873 = vadd.xlane.f32.xlu0 %v4872
  %v4874 = vpop.xlane.xlu0 %4873
  %v4875 = vsel %vm61, %v4823, 0.0
  %4876 = vadd.xlane.f32.xlu0 %v4875
  %v4877 = vpop.xlane.xlu0 %4876
  %v4878 = vsel %vm61, %v4826, 0.0
  %4879 = vadd.xlane.f32.xlu0 %v4878
  %v4880 = vpop.xlane.xlu0 %4879
  %v4881 = vsel %vm61, %v4831, 0.0
  %4882 = vadd.xlane.f32.xlu0 %v4881
  %v4883 = vpop.xlane.xlu0 %4882
  %v4884 = vsel %vm61, %v4834, 0.0
  %4885 = vadd.xlane.f32.xlu0 %v4884
  %v4886 = vpop.xlane.xlu0 %4885
  %v4887 = vsel %vm61, %v4839, 0.0
  %4888 = vadd.xlane.f32.xlu0 %v4887
  %v4889 = vpop.xlane.xlu0 %4888
  %v4890 = vsel %vm61, %v4842, 0.0
  %4891 = vadd.xlane.f32.xlu0 %v4890
  %v4892 = vpop.xlane.xlu0 %4891
  %v4893 = vadd.f32 %v4847, 1.0
  %v4894 = vadd.f32 %v4850, 1.0
  %v4895 = vadd.f32 %v4853, 1.0
  %v4896 = vadd.f32 %v4856, 1.0
  %v4897 = vadd.f32 %v4859, 1.0
  %v4898 = vadd.f32 %v4862, 1.0
  %v4899 = vadd.f32 %v4865, 1.0
  %v4900 = vadd.f32 %v4868, 1.0
  %v4901 = vadd.f32 %v4871, 1.0
  %v4902 = vadd.f32 %v4874, 1.0
  %v4903 = vadd.f32 %v4877, 1.0
  %v4904 = vadd.f32 %v4880, 1.0
  %v4905 = vadd.f32 %v4883, 1.0
  %v4906 = vadd.f32 %v4886, 1.0
  %v4907 = vadd.f32 %v4889, 1.0
  %v4908 = vadd.f32 %v4892, 1.0
  %v4909 = vrsqrt.pop %v4893
  %v4910 = vrsqrt.pop %v4894
  %v4911 = vrsqrt.pop %v4895
  %v4912 = vrsqrt.pop %v4896
  %v4913 = vrsqrt.pop %v4897
  %v4914 = vrsqrt.pop %v4898
  %v4915 = vrsqrt.pop %v4899
  %v4916 = vrsqrt.pop %v4900
  %v4917 = vrsqrt.pop %v4901
  %v4918 = vrsqrt.pop %v4902
  %v4919 = vrsqrt.pop %v4903
  %v4920 = vrsqrt.pop %v4904
  %v4921 = vrsqrt.pop %v4905
  %v4922 = vrsqrt.pop %v4906
  %v4923 = vrsqrt.pop %v4907
  %v4924 = vrsqrt.pop %v4908
  %v4925 = vmul.f32 %v4909, %v4691
  %v4926 = vmul.f32 %v4910, %v4692
  %v4927 = vmul.f32 %v4911, %v4693
  %v4928 = vmul.f32 %v4912, %v4694
  %v4929 = vmul.f32 %v4913, %v4695
  %v4930 = vmul.f32 %v4914, %v4696
  %v4931 = vmul.f32 %v4915, %v4697
  %v4932 = vmul.f32 %v4916, %v4698
  %v4933 = vmul.f32 %v4917, %v4699
  %v4934 = vmul.f32 %v4918, %v4700
  %v4935 = vmul.f32 %v4919, %v4701
  %v4936 = vmul.f32 %v4920, %v4702
  %v4937 = vmul.f32 %v4921, %v4703
  %v4938 = vmul.f32 %v4922, %v4704
  %v4939 = vmul.f32 %v4923, %v4705
  %v4940 = vmul.f32 %v4924, %v4706
  %v4941 = vpack.c.bf16 %v4926, %v4925
  %v4942 = vpack.c.bf16 %v4928, %v4927
  %v4943 = vpack.c.bf16 %v4930, %v4929
  %v4944 = vpack.c.bf16 %v4932, %v4931
  %v4945 = vpack.c.bf16 %v4934, %v4933
  %v4946 = vpack.c.bf16 %v4936, %v4935
  %v4947 = vpack.c.bf16 %v4938, %v4937
  %v4948 = vpack.c.bf16 %v4940, %v4939
  %4949 = vmatprep.subr.bf16.mxu0 0
  %4950 = vmatpush1.bf16.msra.mxu0 %v4941
  %4951 = vmatprep.subr.bf16.mxu0 0
  %4952 = vmatpush1.bf16.msra.mxu0 %v4942
  %4953 = vmatprep.subr.bf16.mxu0 0
  %4954 = vmatpush1.bf16.msra.mxu0 %v4943
  %4955 = vmatprep.subr.bf16.mxu0 0
  %4956 = vmatpush1.bf16.msra.mxu0 %v4944
  %4957 = vmatprep.subr.bf16.mxu0 0
  %4958 = vmatpush1.bf16.msra.mxu0 %v4945
  %4959 = vmatprep.subr.bf16.mxu0 0
  %4960 = vmatpush1.bf16.msra.mxu0 %v4946
  %4961 = vmatprep.subr.bf16.mxu0 0
  %4962 = vmatpush1.bf16.msra.mxu0 %v4947
  %4963 = vmatprep.subr.bf16.mxu0 0
  %4964 = vmatpush1.bf16.msra.mxu0 %v4948
  %4965 = vmatprep.subr.bf16.mxu0 0
  %4966 = vmatpush1.bf16.msra.mxu0 0
  %4967 = vmatprep.subr.bf16.mxu0 0
  %4968 = vmatpush1.bf16.msra.mxu0 0
  %4969 = vmatprep.subr.bf16.mxu0 0
  %4970 = vmatpush1.bf16.msra.mxu0 0
  %4971 = vmatprep.subr.bf16.mxu0 0
  %4972 = vmatpush1.bf16.msra.mxu0 0
  %4973 = vmatprep.subr.bf16.mxu0 0
  %4974 = vmatpush1.bf16.msra.mxu0 0
  %4975 = vmatprep.subr.bf16.mxu0 0
  %4976 = vmatpush1.bf16.msra.mxu0 0
  %4977 = vmatprep.subr.bf16.mxu0 0
  %4978 = vmatpush1.bf16.msra.mxu0 0
  %4979 = vmatprep.subr.bf16.mxu0 0
  %4980 = vmatpush1.bf16.msra.mxu0 0
  %4981 = vmatprep.mubr.bf16.mxu0 0
  %4982 = vmatmul.mubr.bf16.gmra.mrb[0].mxu0 %v219
  %v4983 = vpop.f32.mrb[0].mxu0
  %v4984 = vadd.f32 0.0, %v4983
  %v4985 = vpop.f32.mrb[0].mxu0
  %v4986 = vpop.f32.mrb[0].mxu0
  %v4987 = vadd.f32 0.0, %v4986
  %v4988 = vpop.f32.mrb[0].mxu0
  %4989 = vmatprep.mubr.bf16.mxu0 0
  %4990 = vmatmul.mubr.bf16.gmra.mrb[0].mxu0 %v220
  %v4991 = vpop.f32.mrb[0].mxu0
  %v4992 = vadd.f32 0.0, %v4991
  %v4993 = vpop.f32.mrb[0].mxu0
  %v4994 = vpop.f32.mrb[0].mxu0
  %v4995 = vadd.f32 0.0, %v4994
  %v4996 = vpop.f32.mrb[0].mxu0
  %4997 = vmatprep.mubr.bf16.mxu0 0
  %4998 = vmatmul.mubr.bf16.gmra.mrb[0].mxu0 %v221
  %v4999 = vpop.f32.mrb[0].mxu0
  %v5000 = vadd.f32 0.0, %v4999
  %v5001 = vpop.f32.mrb[0].mxu0
  %v5002 = vpop.f32.mrb[0].mxu0
  %v5003 = vadd.f32 0.0, %v5002
  %v5004 = vpop.f32.mrb[0].mxu0
  %5005 = vmatprep.mubr.bf16.mxu0 0
  %5006 = vmatmul.mubr.bf16.gmra.mrb[0].mxu0 %v222
  %v5007 = vpop.f32.mrb[0].mxu0
  %v5008 = vadd.f32 0.0, %v5007
  %v5009 = vpop.f32.mrb[0].mxu0
  %v5010 = vpop.f32.mrb[0].mxu0
  %v5011 = vadd.f32 0.0, %v5010
  %v5012 = vpop.f32.mrb[0].mxu0
  %5013 = vmatprep.mubr.bf16.mxu0 0
  %5014 = vmatmul.mubr.bf16.gmra.mrb[0].mxu0 %v223
  %v5015 = vpop.f32.mrb[0].mxu0
  %v5016 = vadd.f32 0.0, %v5015
  %v5017 = vpop.f32.mrb[0].mxu0
  %v5018 = vpop.f32.mrb[0].mxu0
  %v5019 = vadd.f32 0.0, %v5018
  %v5020 = vpop.f32.mrb[0].mxu0
  %5021 = vmatprep.mubr.bf16.mxu0 0
  %5022 = vmatmul.mubr.bf16.gmra.mrb[0].mxu0 %v224
  %v5023 = vpop.f32.mrb[0].mxu0
  %v5024 = vadd.f32 0.0, %v5023
  %v5025 = vpop.f32.mrb[0].mxu0
  %v5026 = vpop.f32.mrb[0].mxu0
  %v5027 = vadd.f32 0.0, %v5026
  %v5028 = vpop.f32.mrb[0].mxu0
  %5029 = vmatprep.mubr.bf16.mxu0 0
  %5030 = vmatmul.mubr.bf16.gmra.mrb[0].mxu0 %v225
  %v5031 = vpop.f32.mrb[0].mxu0
  %v5032 = vadd.f32 0.0, %v5031
  %v5033 = vpop.f32.mrb[0].mxu0
  %v5034 = vpop.f32.mrb[0].mxu0
  %v5035 = vadd.f32 0.0, %v5034
  %v5036 = vpop.f32.mrb[0].mxu0
  %5037 = vmatprep.mubr.bf16.mxu0 0
  %5038 = vmatmul.mubr.bf16.gmra.mrb[0].mxu0 %v226
  %v5039 = vpop.f32.mrb[0].mxu0
  %v5040 = vadd.f32 0.0, %v5039
  %v5041 = vpop.f32.mrb[0].mxu0
  %v5042 = vpop.f32.mrb[0].mxu0
  %v5043 = vadd.f32 0.0, %v5042
  %v5044 = vpop.f32.mrb[0].mxu0
  %5045 = vdwg.mxu0
  %v5046 = vmul.f32 %v4909, %v4984
  %v5047 = vmul.f32 %v4910, %v4987
  %v5048 = vmul.f32 %v4911, %v4992
  %v5049 = vmul.f32 %v4912, %v4995
  %v5050 = vmul.f32 %v4913, %v5000
  %v5051 = vmul.f32 %v4914, %v5003
  %v5052 = vmul.f32 %v4915, %v5008
  %v5053 = vmul.f32 %v4916, %v5011
  %v5054 = vmul.f32 %v4917, %v5016
  %v5055 = vmul.f32 %v4918, %v5019
  %v5056 = vmul.f32 %v4919, %v5024
  %v5057 = vmul.f32 %v4920, %v5027
  %v5058 = vmul.f32 %v4921, %v5032
  %v5059 = vmul.f32 %v4922, %v5035
  %v5060 = vmul.f32 %v4923, %v5040
  %v5061 = vmul.f32 %v4924, %v5043
  %v5062 = vmul.f32 %v4909, %v4909
  %v5063 = vmul.f32 %v4910, %v4910
  %v5064 = vmul.f32 %v4911, %v4911
  %v5065 = vmul.f32 %v4912, %v4912
  %v5066 = vmul.f32 %v4913, %v4913
  %v5067 = vmul.f32 %v4914, %v4914
  %v5068 = vmul.f32 %v4915, %v4915
  %v5069 = vmul.f32 %v4916, %v4916
  %v5070 = vmul.f32 %v4917, %v4917
  %v5071 = vmul.f32 %v4918, %v4918
  %v5072 = vmul.f32 %v4919, %v4919
  %v5073 = vmul.f32 %v4920, %v4920
  %v5074 = vmul.f32 %v4921, %v4921
  %v5075 = vmul.f32 %v4922, %v4922
  %v5076 = vmul.f32 %v4923, %v4923
  %v5077 = vmul.f32 %v4924, %v4924
  %v5078 = vmul.f32 %v5062, %v4691
  %v5079 = vmul.f32 %v5063, %v4692
  %v5080 = vmul.f32 %v5064, %v4693
  %v5081 = vmul.f32 %v5065, %v4694
  %v5082 = vmul.f32 %v5066, %v4695
  %v5083 = vmul.f32 %v5067, %v4696
  %v5084 = vmul.f32 %v5068, %v4697
  %v5085 = vmul.f32 %v5069, %v4698
  %v5086 = vmul.f32 %v5070, %v4699
  %v5087 = vmul.f32 %v5071, %v4700
  %v5088 = vmul.f32 %v5072, %v4701
  %v5089 = vmul.f32 %v5073, %v4702
  %v5090 = vmul.f32 %v5074, %v4703
  %v5091 = vmul.f32 %v5075, %v4704
  %v5092 = vmul.f32 %v5076, %v4705
  %v5093 = vmul.f32 %v5077, %v4706
  %v5094 = vadd.f32 %v5046, %v5078
  %v5095 = vadd.f32 %v5047, %v5079
  %v5096 = vadd.f32 %v5048, %v5080
  %v5097 = vadd.f32 %v5049, %v5081
  %v5098 = vadd.f32 %v5050, %v5082
  %v5099 = vadd.f32 %v5051, %v5083
  %v5100 = vadd.f32 %v5052, %v5084
  %v5101 = vadd.f32 %v5053, %v5085
  %v5102 = vadd.f32 %v5054, %v5086
  %v5103 = vadd.f32 %v5055, %v5087
  %v5104 = vadd.f32 %v5056, %v5088
  %v5105 = vadd.f32 %v5057, %v5089
  %v5106 = vadd.f32 %v5058, %v5090
  %v5107 = vadd.f32 %v5059, %v5091
  %v5108 = vadd.f32 %v5060, %v5092
  %v5109 = vadd.f32 %v5061, %v5093
  %v5110 = vpack.c.bf16 %v5095, %v5094
  %v5111 = vpack.c.bf16 %v5097, %v5096
  %v5112 = vpack.c.bf16 %v5099, %v5098
  %v5113 = vpack.c.bf16 %v5101, %v5100
  %v5114 = vpack.c.bf16 %v5103, %v5102
  %v5115 = vpack.c.bf16 %v5105, %v5104
  %v5116 = vpack.c.bf16 %v5107, %v5106
  %v5117 = vpack.c.bf16 %v5109, %v5108
  %v5118 = vlaneseq
  %v5119 = vshrl.u32 %v5118, 7
  %v5120 = vsub.s32 0, %v5119
  %v5121 = vrot.slane %v4723, %v5120
  %v5138 = vunpack.c.l.b16 %v4707
  %v5139 = vunpack.c.l.b16 %v4708
  %v5140 = vunpack.c.l.b16 %v4709
  %v5141 = vunpack.c.l.b16 %v4710
  %v5142 = vunpack.c.l.b16 %v4711
  %v5143 = vunpack.c.l.b16 %v4712
  %v5144 = vunpack.c.l.b16 %v4713
  %v5145 = vunpack.c.l.b16 %v4714
  %v5146 = vunpack.c.l.b16 %v4715
  %v5147 = vunpack.c.l.b16 %v4716
  %v5148 = vunpack.c.l.b16 %v4717
  %v5149 = vunpack.c.l.b16 %v4718
  %v5150 = vunpack.c.l.b16 %v4719
  %v5151 = vunpack.c.l.b16 %v4720
  %v5152 = vunpack.c.l.b16 %v4721
  %v5153 = vunpack.c.l.b16 %v4722
  %v5154 = vpack.c.b16 %v5139, %v5138
  %v5155 = vpack.c.b16 %v5141, %v5140
  %v5156 = vpack.c.b16 %v5143, %v5142
  %v5157 = vpack.c.b16 %v5145, %v5144
  %v5158 = vpack.c.b16 %v5147, %v5146
  %v5159 = vpack.c.b16 %v5149, %v5148
  %v5160 = vpack.c.b16 %v5151, %v5150
  %v5161 = vpack.c.b16 %v5153, %v5152
  %5170 = vmatprep.subr.bf16.mxu0 0
  %5171 = vmatpush1.bf16.msra.mxu0 %v5154
  %5172 = vmatprep.subr.bf16.mxu0 0
  %5173 = vmatpush1.bf16.msra.mxu0 %v5155
  %5174 = vmatprep.subr.bf16.mxu0 0
  %5175 = vmatpush1.bf16.msra.mxu0 %v5156
  %5176 = vmatprep.subr.bf16.mxu0 0
  %5177 = vmatpush1.bf16.msra.mxu0 %v5157
  %5178 = vmatprep.subr.bf16.mxu0 0
  %5179 = vmatpush1.bf16.msra.mxu0 %v5158
  %5180 = vmatprep.subr.bf16.mxu0 0
  %5181 = vmatpush1.bf16.msra.mxu0 %v5159
  %5182 = vmatprep.subr.bf16.mxu0 0
  %5183 = vmatpush1.bf16.msra.mxu0 %v5160
  %5184 = vmatprep.subr.bf16.mxu0 0
  %5185 = vmatpush1.bf16.msra.mxu0 %v5161
  %5186 = vmatprep.subr.bf16.mxu0 0
  %5187 = vmatpush1.bf16.msra.mxu0 0
  %5188 = vmatprep.subr.bf16.mxu0 0
  %5189 = vmatpush1.bf16.msra.mxu0 0
  %5190 = vmatprep.subr.bf16.mxu0 0
  %5191 = vmatpush1.bf16.msra.mxu0 0
  %5192 = vmatprep.subr.bf16.mxu0 0
  %5193 = vmatpush1.bf16.msra.mxu0 0
  %5194 = vmatprep.subr.bf16.mxu0 0
  %5195 = vmatpush1.bf16.msra.mxu0 0
  %5196 = vmatprep.subr.bf16.mxu0 0
  %5197 = vmatpush1.bf16.msra.mxu0 0
  %5198 = vmatprep.subr.bf16.mxu0 0
  %5199 = vmatpush1.bf16.msra.mxu0 0
  %5200 = vmatprep.subr.bf16.mxu0 0
  %5201 = vmatpush1.bf16.msra.mxu0 0
  %5202 = vmatprep.mubr.bf16.mxu0 0
  %5203 = vmatmul.mubr.bf16.gmra.mrb[0].mxu0 %v5110
  %v5204 = vpop.f32.mrb[0].mxu0
  %v5205 = vadd.f32 %v5121, %v5204
  %v5206 = vpop.f32.mrb[0].mxu0
  %v5207 = vpop.f32.mrb[0].mxu0
  %v5208 = vadd.f32 %v5121, %v5207
  %v5209 = vpop.f32.mrb[0].mxu0
  %5210 = vmatprep.mubr.bf16.mxu0 0
  %5211 = vmatmul.mubr.bf16.gmra.mrb[0].mxu0 %v5111
  %v5212 = vpop.f32.mrb[0].mxu0
  %v5213 = vadd.f32 %v5121, %v5212
  %v5214 = vpop.f32.mrb[0].mxu0
  %v5215 = vpop.f32.mrb[0].mxu0
  %v5216 = vadd.f32 %v5121, %v5215
  %v5217 = vpop.f32.mrb[0].mxu0
  %5218 = vmatprep.mubr.bf16.mxu0 0
  %5219 = vmatmul.mubr.bf16.gmra.mrb[0].mxu0 %v5112
  %v5220 = vpop.f32.mrb[0].mxu0
  %v5221 = vadd.f32 %v5121, %v5220
  %v5222 = vpop.f32.mrb[0].mxu0
  %v5223 = vpop.f32.mrb[0].mxu0
  %v5224 = vadd.f32 %v5121, %v5223
  %v5225 = vpop.f32.mrb[0].mxu0
  %5226 = vmatprep.mubr.bf16.mxu0 0
  %5227 = vmatmul.mubr.bf16.gmra.mrb[0].mxu0 %v5113
  %v5228 = vpop.f32.mrb[0].mxu0
  %v5229 = vadd.f32 %v5121, %v5228
  %v5230 = vpop.f32.mrb[0].mxu0
  %v5231 = vpop.f32.mrb[0].mxu0
  %v5232 = vadd.f32 %v5121, %v5231
  %v5233 = vpop.f32.mrb[0].mxu0
  %5234 = vmatprep.mubr.bf16.mxu0 0
  %5235 = vmatmul.mubr.bf16.gmra.mrb[0].mxu0 %v5114
  %v5236 = vpop.f32.mrb[0].mxu0
  %v5237 = vadd.f32 %v5121, %v5236
  %v5238 = vpop.f32.mrb[0].mxu0
  %v5239 = vpop.f32.mrb[0].mxu0
  %v5240 = vadd.f32 %v5121, %v5239
  %v5241 = vpop.f32.mrb[0].mxu0
  %5242 = vmatprep.mubr.bf16.mxu0 0
  %5243 = vmatmul.mubr.bf16.gmra.mrb[0].mxu0 %v5115
  %v5244 = vpop.f32.mrb[0].mxu0
  %v5245 = vadd.f32 %v5121, %v5244
  %v5246 = vpop.f32.mrb[0].mxu0
  %v5247 = vpop.f32.mrb[0].mxu0
  %v5248 = vadd.f32 %v5121, %v5247
  %v5249 = vpop.f32.mrb[0].mxu0
  %5250 = vmatprep.mubr.bf16.mxu0 0
  %5251 = vmatmul.mubr.bf16.gmra.mrb[0].mxu0 %v5116
  %v5252 = vpop.f32.mrb[0].mxu0
  %v5253 = vadd.f32 %v5121, %v5252
  %v5254 = vpop.f32.mrb[0].mxu0
  %v5255 = vpop.f32.mrb[0].mxu0
  %v5256 = vadd.f32 %v5121, %v5255
  %v5257 = vpop.f32.mrb[0].mxu0
  %5258 = vmatprep.mubr.bf16.mxu0 0
  %5259 = vmatmul.mubr.bf16.gmra.mrb[0].mxu0 %v5117
  %v5260 = vpop.f32.mrb[0].mxu0
  %v5261 = vadd.f32 %v5121, %v5260
  %v5262 = vpop.f32.mrb[0].mxu0
  %v5263 = vpop.f32.mrb[0].mxu0
  %v5264 = vadd.f32 %v5121, %v5263
  %v5265 = vpop.f32.mrb[0].mxu0
  %5266 = vdwg.mxu0
  %v5267 = vmax.f32 %v5205, 0.0
  %v5268 = vmax.f32 %v5208, 0.0
  %v5269 = vmax.f32 %v5213, 0.0
  %v5270 = vmax.f32 %v5216, 0.0
  %v5271 = vmax.f32 %v5221, 0.0
  %v5272 = vmax.f32 %v5224, 0.0
  %v5273 = vmax.f32 %v5229, 0.0
  %v5274 = vmax.f32 %v5232, 0.0
  %v5275 = vmax.f32 %v5237, 0.0
  %v5276 = vmax.f32 %v5240, 0.0
  %v5277 = vmax.f32 %v5245, 0.0
  %v5278 = vmax.f32 %v5248, 0.0
  %v5279 = vmax.f32 %v5253, 0.0
  %v5280 = vmax.f32 %v5256, 0.0
  %v5281 = vmax.f32 %v5261, 0.0
  %v5282 = vmax.f32 %v5264, 0.0
  %v5283 = vmul.f32 %v5267, %v4579
  %v5284 = vmul.f32 %v5268, %v4580
  %v5285 = vmul.f32 %v5269, %v4581
  %v5286 = vmul.f32 %v5270, %v4582
  %v5287 = vmul.f32 %v5271, %v4583
  %v5288 = vmul.f32 %v5272, %v4584
  %v5289 = vmul.f32 %v5273, %v4585
  %v5290 = vmul.f32 %v5274, %v4586
  %v5291 = vmul.f32 %v5275, %v4587
  %v5292 = vmul.f32 %v5276, %v4588
  %v5293 = vmul.f32 %v5277, %v4589
  %v5294 = vmul.f32 %v5278, %v4590
  %v5295 = vmul.f32 %v5279, %v4591
  %v5296 = vmul.f32 %v5280, %v4592
  %v5297 = vmul.f32 %v5281, %v4593
  %v5298 = vmul.f32 %v5282, %v4594
  %5300 = vset.pattern.permute.xlu0 0
  %5301 = vperm.xlu0 %5300, %v4724
  %v5302 = vpop.permute.xlu0 %5301
  %5305 = vset.pattern.permute.xlu0 0
  %5306 = vperm.xlu0 %5305, %v4725
  %v5307 = vpop.permute.xlu0 %5306
  %5310 = vset.pattern.permute.xlu0 0
  %5311 = vperm.xlu0 %5310, %v4726
  %v5312 = vpop.permute.xlu0 %5311
  %5315 = vset.pattern.permute.xlu0 0
  %5316 = vperm.xlu0 %5315, %v4727
  %v5317 = vpop.permute.xlu0 %5316
  %5320 = vset.pattern.permute.xlu0 0
  %5321 = vperm.xlu0 %5320, %v4728
  %v5322 = vpop.permute.xlu0 %5321
  %5325 = vset.pattern.permute.xlu0 0
  %5326 = vperm.xlu0 %5325, %v4729
  %v5327 = vpop.permute.xlu0 %5326
  %5330 = vset.pattern.permute.xlu0 0
  %5331 = vperm.xlu0 %5330, %v4730
  %v5332 = vpop.permute.xlu0 %5331
  %5335 = vset.pattern.permute.xlu0 0
  %5336 = vperm.xlu0 %5335, %v4731
  %v5337 = vpop.permute.xlu0 %5336
  %5340 = vset.pattern.permute.xlu0 0
  %5341 = vperm.xlu0 %5340, %v4732
  %v5342 = vpop.permute.xlu0 %5341
  %5345 = vset.pattern.permute.xlu0 0
  %5346 = vperm.xlu0 %5345, %v4733
  %v5347 = vpop.permute.xlu0 %5346
  %5350 = vset.pattern.permute.xlu0 0
  %5351 = vperm.xlu0 %5350, %v4734
  %v5352 = vpop.permute.xlu0 %5351
  %5355 = vset.pattern.permute.xlu0 0
  %5356 = vperm.xlu0 %5355, %v4735
  %v5357 = vpop.permute.xlu0 %5356
  %5360 = vset.pattern.permute.xlu0 0
  %5361 = vperm.xlu0 %5360, %v4736
  %v5362 = vpop.permute.xlu0 %5361
  %5365 = vset.pattern.permute.xlu0 0
  %5366 = vperm.xlu0 %5365, %v4737
  %v5367 = vpop.permute.xlu0 %5366
  %5370 = vset.pattern.permute.xlu0 0
  %5371 = vperm.xlu0 %5370, %v4738
  %v5372 = vpop.permute.xlu0 %5371
  %5375 = vset.pattern.permute.xlu0 0
  %5376 = vperm.xlu0 %5375, %v4739
  %v5377 = vpop.permute.xlu0 %5376
  %v5379 = vmul.f32 %v5283, %v5302
  %v5380 = vmul.f32 %v5284, %v5307
  %v5381 = vmul.f32 %v5285, %v5312
  %v5382 = vmul.f32 %v5286, %v5317
  %v5383 = vmul.f32 %v5287, %v5322
  %v5384 = vmul.f32 %v5288, %v5327
  %v5385 = vmul.f32 %v5289, %v5332
  %v5386 = vmul.f32 %v5290, %v5337
  %v5387 = vmul.f32 %v5291, %v5342
  %v5388 = vmul.f32 %v5292, %v5347
  %v5389 = vmul.f32 %v5293, %v5352
  %v5390 = vmul.f32 %v5294, %v5357
  %v5391 = vmul.f32 %v5295, %v5362
  %v5392 = vmul.f32 %v5296, %v5367
  %v5393 = vmul.f32 %v5297, %v5372
  %v5394 = vmul.f32 %v5298, %v5377
  %v5395 = vmax.f32 %v5379, %v5383
  %v5396 = vmax.f32 %v5380, %v5384
  %v5397 = vmax.f32 %v5381, %v5385
  %v5398 = vmax.f32 %v5382, %v5386
  %v5399 = vmax.f32 %v5395, %v5387
  %v5400 = vmax.f32 %v5396, %v5388
  %v5401 = vmax.f32 %v5397, %v5389
  %v5402 = vmax.f32 %v5398, %v5390
  %v5403 = vmax.f32 %v5399, %v5391
  %v5404 = vmax.f32 %v5400, %v5392
  %v5405 = vmax.f32 %v5401, %v5393
  %v5406 = vmax.f32 %v5402, %v5394
  %v5407 = vmax.f32 %v5403, %v5404
  %v5408 = vmax.f32 %v5405, %v5406
  %v5409 = vmax.f32 %v5407, %v5408
  %v5410 = vrot.slane %v5409, 4
  %v5411 = vmax.f32 %v5409, %v5410
  %v5412 = vrot.slane %v5411, 2
  %v5413 = vmax.f32 %v5411, %v5412
  %v5414 = vrot.slane %v5413, 1
  %v5415 = vmax.f32 %v5413, %v5414
  %vm5416 = vcmp.eq.s32.totalorder %v111, 0
  %v5417 = vsel %vm5416, 1, 0
  %vm5418 = vcmp.eq.s32.totalorder %v5417, 1
  %v5419 = vsel %vm5418, %v5415, 0.0
  %5420 = vset.pattern.permute.xlu0 1
  %5421 = vperm.xlu0 %5420, %v4724
  %v5422 = vpop.permute.xlu0 %5421
  %5424 = vset.pattern.permute.xlu0 1
  %5425 = vperm.xlu0 %5424, %v4725
  %v5426 = vpop.permute.xlu0 %5425
  %5428 = vset.pattern.permute.xlu0 1
  %5429 = vperm.xlu0 %5428, %v4726
  %v5430 = vpop.permute.xlu0 %5429
  %5432 = vset.pattern.permute.xlu0 1
  %5433 = vperm.xlu0 %5432, %v4727
  %v5434 = vpop.permute.xlu0 %5433
  %5436 = vset.pattern.permute.xlu0 1
  %5437 = vperm.xlu0 %5436, %v4728
  %v5438 = vpop.permute.xlu0 %5437
  %5440 = vset.pattern.permute.xlu0 1
  %5441 = vperm.xlu0 %5440, %v4729
  %v5442 = vpop.permute.xlu0 %5441
  %5444 = vset.pattern.permute.xlu0 1
  %5445 = vperm.xlu0 %5444, %v4730
  %v5446 = vpop.permute.xlu0 %5445
  %5448 = vset.pattern.permute.xlu0 1
  %5449 = vperm.xlu0 %5448, %v4731
  %v5450 = vpop.permute.xlu0 %5449
  %5452 = vset.pattern.permute.xlu0 1
  %5453 = vperm.xlu0 %5452, %v4732
  %v5454 = vpop.permute.xlu0 %5453
  %5456 = vset.pattern.permute.xlu0 1
  %5457 = vperm.xlu0 %5456, %v4733
  %v5458 = vpop.permute.xlu0 %5457
  %5460 = vset.pattern.permute.xlu0 1
  %5461 = vperm.xlu0 %5460, %v4734
  %v5462 = vpop.permute.xlu0 %5461
  %5464 = vset.pattern.permute.xlu0 1
  %5465 = vperm.xlu0 %5464, %v4735
  %v5466 = vpop.permute.xlu0 %5465
  %5468 = vset.pattern.permute.xlu0 1
  %5469 = vperm.xlu0 %5468, %v4736
  %v5470 = vpop.permute.xlu0 %5469
  %5472 = vset.pattern.permute.xlu0 1
  %5473 = vperm.xlu0 %5472, %v4737
  %v5474 = vpop.permute.xlu0 %5473
  %5476 = vset.pattern.permute.xlu0 1
  %5477 = vperm.xlu0 %5476, %v4738
  %v5478 = vpop.permute.xlu0 %5477
  %5480 = vset.pattern.permute.xlu0 1
  %5481 = vperm.xlu0 %5480, %v4739
  %v5482 = vpop.permute.xlu0 %5481
  %v5484 = vmul.f32 %v5283, %v5422
  %v5485 = vmul.f32 %v5284, %v5426
  %v5486 = vmul.f32 %v5285, %v5430
  %v5487 = vmul.f32 %v5286, %v5434
  %v5488 = vmul.f32 %v5287, %v5438
  %v5489 = vmul.f32 %v5288, %v5442
  %v5490 = vmul.f32 %v5289, %v5446
  %v5491 = vmul.f32 %v5290, %v5450
  %v5492 = vmul.f32 %v5291, %v5454
  %v5493 = vmul.f32 %v5292, %v5458
  %v5494 = vmul.f32 %v5293, %v5462
  %v5495 = vmul.f32 %v5294, %v5466
  %v5496 = vmul.f32 %v5295, %v5470
  %v5497 = vmul.f32 %v5296, %v5474
  %v5498 = vmul.f32 %v5297, %v5478
  %v5499 = vmul.f32 %v5298, %v5482
  %v5500 = vmax.f32 %v5484, %v5488
  %v5501 = vmax.f32 %v5485, %v5489
  %v5502 = vmax.f32 %v5486, %v5490
  %v5503 = vmax.f32 %v5487, %v5491
  %v5504 = vmax.f32 %v5500, %v5492
  %v5505 = vmax.f32 %v5501, %v5493
  %v5506 = vmax.f32 %v5502, %v5494
  %v5507 = vmax.f32 %v5503, %v5495
  %v5508 = vmax.f32 %v5504, %v5496
  %v5509 = vmax.f32 %v5505, %v5497
  %v5510 = vmax.f32 %v5506, %v5498
  %v5511 = vmax.f32 %v5507, %v5499
  %v5512 = vmax.f32 %v5508, %v5509
  %v5513 = vmax.f32 %v5510, %v5511
  %v5514 = vmax.f32 %v5512, %v5513
  %v5515 = vrot.slane %v5514, 4
  %v5516 = vmax.f32 %v5514, %v5515
  %v5517 = vrot.slane %v5516, 2
  %v5518 = vmax.f32 %v5516, %v5517
  %v5519 = vrot.slane %v5518, 1
  %v5520 = vmax.f32 %v5518, %v5519
  %vm5521 = vcmp.eq.s32.totalorder %v111, 1
  %v5522 = vsel %vm5521, 1, 0
  %vm5523 = vcmp.eq.s32.totalorder %v5522, 1
  %v5524 = vsel %vm5523, %v5520, %v5419
  %5525 = vset.pattern.permute.xlu0 2
  %5526 = vperm.xlu0 %5525, %v4724
  %v5527 = vpop.permute.xlu0 %5526
  %5529 = vset.pattern.permute.xlu0 2
  %5530 = vperm.xlu0 %5529, %v4725
  %v5531 = vpop.permute.xlu0 %5530
  %5533 = vset.pattern.permute.xlu0 2
  %5534 = vperm.xlu0 %5533, %v4726
  %v5535 = vpop.permute.xlu0 %5534
  %5537 = vset.pattern.permute.xlu0 2
  %5538 = vperm.xlu0 %5537, %v4727
  %v5539 = vpop.permute.xlu0 %5538
  %5541 = vset.pattern.permute.xlu0 2
  %5542 = vperm.xlu0 %5541, %v4728
  %v5543 = vpop.permute.xlu0 %5542
  %5545 = vset.pattern.permute.xlu0 2
  %5546 = vperm.xlu0 %5545, %v4729
  %v5547 = vpop.permute.xlu0 %5546
  %5549 = vset.pattern.permute.xlu0 2
  %5550 = vperm.xlu0 %5549, %v4730
  %v5551 = vpop.permute.xlu0 %5550
  %5553 = vset.pattern.permute.xlu0 2
  %5554 = vperm.xlu0 %5553, %v4731
  %v5555 = vpop.permute.xlu0 %5554
  %5557 = vset.pattern.permute.xlu0 2
  %5558 = vperm.xlu0 %5557, %v4732
  %v5559 = vpop.permute.xlu0 %5558
  %5561 = vset.pattern.permute.xlu0 2
  %5562 = vperm.xlu0 %5561, %v4733
  %v5563 = vpop.permute.xlu0 %5562
  %5565 = vset.pattern.permute.xlu0 2
  %5566 = vperm.xlu0 %5565, %v4734
  %v5567 = vpop.permute.xlu0 %5566
  %5569 = vset.pattern.permute.xlu0 2
  %5570 = vperm.xlu0 %5569, %v4735
  %v5571 = vpop.permute.xlu0 %5570
  %5573 = vset.pattern.permute.xlu0 2
  %5574 = vperm.xlu0 %5573, %v4736
  %v5575 = vpop.permute.xlu0 %5574
  %5577 = vset.pattern.permute.xlu0 2
  %5578 = vperm.xlu0 %5577, %v4737
  %v5579 = vpop.permute.xlu0 %5578
  %5581 = vset.pattern.permute.xlu0 2
  %5582 = vperm.xlu0 %5581, %v4738
  %v5583 = vpop.permute.xlu0 %5582
  %5585 = vset.pattern.permute.xlu0 2
  %5586 = vperm.xlu0 %5585, %v4739
  %v5587 = vpop.permute.xlu0 %5586
  %v5589 = vmul.f32 %v5283, %v5527
  %v5590 = vmul.f32 %v5284, %v5531
  %v5591 = vmul.f32 %v5285, %v5535
  %v5592 = vmul.f32 %v5286, %v5539
  %v5593 = vmul.f32 %v5287, %v5543
  %v5594 = vmul.f32 %v5288, %v5547
  %v5595 = vmul.f32 %v5289, %v5551
  %v5596 = vmul.f32 %v5290, %v5555
  %v5597 = vmul.f32 %v5291, %v5559
  %v5598 = vmul.f32 %v5292, %v5563
  %v5599 = vmul.f32 %v5293, %v5567
  %v5600 = vmul.f32 %v5294, %v5571
  %v5601 = vmul.f32 %v5295, %v5575
  %v5602 = vmul.f32 %v5296, %v5579
  %v5603 = vmul.f32 %v5297, %v5583
  %v5604 = vmul.f32 %v5298, %v5587
  %v5605 = vmax.f32 %v5589, %v5593
  %v5606 = vmax.f32 %v5590, %v5594
  %v5607 = vmax.f32 %v5591, %v5595
  %v5608 = vmax.f32 %v5592, %v5596
  %v5609 = vmax.f32 %v5605, %v5597
  %v5610 = vmax.f32 %v5606, %v5598
  %v5611 = vmax.f32 %v5607, %v5599
  %v5612 = vmax.f32 %v5608, %v5600
  %v5613 = vmax.f32 %v5609, %v5601
  %v5614 = vmax.f32 %v5610, %v5602
  %v5615 = vmax.f32 %v5611, %v5603
  %v5616 = vmax.f32 %v5612, %v5604
  %v5617 = vmax.f32 %v5613, %v5614
  %v5618 = vmax.f32 %v5615, %v5616
  %v5619 = vmax.f32 %v5617, %v5618
  %v5620 = vrot.slane %v5619, 4
  %v5621 = vmax.f32 %v5619, %v5620
  %v5622 = vrot.slane %v5621, 2
  %v5623 = vmax.f32 %v5621, %v5622
  %v5624 = vrot.slane %v5623, 1
  %v5625 = vmax.f32 %v5623, %v5624
  %vm5626 = vcmp.eq.s32.totalorder %v111, 2
  %v5627 = vsel %vm5626, 1, 0
  %vm5628 = vcmp.eq.s32.totalorder %v5627, 1
  %v5629 = vsel %vm5628, %v5625, %v5524
  %5630 = vset.pattern.permute.xlu0 3
  %5631 = vperm.xlu0 %5630, %v4724
  %v5632 = vpop.permute.xlu0 %5631
  %5634 = vset.pattern.permute.xlu0 3
  %5635 = vperm.xlu0 %5634, %v4725
  %v5636 = vpop.permute.xlu0 %5635
  %5638 = vset.pattern.permute.xlu0 3
  %5639 = vperm.xlu0 %5638, %v4726
  %v5640 = vpop.permute.xlu0 %5639
  %5642 = vset.pattern.permute.xlu0 3
  %5643 = vperm.xlu0 %5642, %v4727
  %v5644 = vpop.permute.xlu0 %5643
  %5646 = vset.pattern.permute.xlu0 3
  %5647 = vperm.xlu0 %5646, %v4728
  %v5648 = vpop.permute.xlu0 %5647
  %5650 = vset.pattern.permute.xlu0 3
  %5651 = vperm.xlu0 %5650, %v4729
  %v5652 = vpop.permute.xlu0 %5651
  %5654 = vset.pattern.permute.xlu0 3
  %5655 = vperm.xlu0 %5654, %v4730
  %v5656 = vpop.permute.xlu0 %5655
  %5658 = vset.pattern.permute.xlu0 3
  %5659 = vperm.xlu0 %5658, %v4731
  %v5660 = vpop.permute.xlu0 %5659
  %5662 = vset.pattern.permute.xlu0 3
  %5663 = vperm.xlu0 %5662, %v4732
  %v5664 = vpop.permute.xlu0 %5663
  %5666 = vset.pattern.permute.xlu0 3
  %5667 = vperm.xlu0 %5666, %v4733
  %v5668 = vpop.permute.xlu0 %5667
  %5670 = vset.pattern.permute.xlu0 3
  %5671 = vperm.xlu0 %5670, %v4734
  %v5672 = vpop.permute.xlu0 %5671
  %5674 = vset.pattern.permute.xlu0 3
  %5675 = vperm.xlu0 %5674, %v4735
  %v5676 = vpop.permute.xlu0 %5675
  %5678 = vset.pattern.permute.xlu0 3
  %5679 = vperm.xlu0 %5678, %v4736
  %v5680 = vpop.permute.xlu0 %5679
  %5682 = vset.pattern.permute.xlu0 3
  %5683 = vperm.xlu0 %5682, %v4737
  %v5684 = vpop.permute.xlu0 %5683
  %5686 = vset.pattern.permute.xlu0 3
  %5687 = vperm.xlu0 %5686, %v4738
  %v5688 = vpop.permute.xlu0 %5687
  %5690 = vset.pattern.permute.xlu0 3
  %5691 = vperm.xlu0 %5690, %v4739
  %v5692 = vpop.permute.xlu0 %5691
  %v5694 = vmul.f32 %v5283, %v5632
  %v5695 = vmul.f32 %v5284, %v5636
  %v5696 = vmul.f32 %v5285, %v5640
  %v5697 = vmul.f32 %v5286, %v5644
  %v5698 = vmul.f32 %v5287, %v5648
  %v5699 = vmul.f32 %v5288, %v5652
  %v5700 = vmul.f32 %v5289, %v5656
  %v5701 = vmul.f32 %v5290, %v5660
  %v5702 = vmul.f32 %v5291, %v5664
  %v5703 = vmul.f32 %v5292, %v5668
  %v5704 = vmul.f32 %v5293, %v5672
  %v5705 = vmul.f32 %v5294, %v5676
  %v5706 = vmul.f32 %v5295, %v5680
  %v5707 = vmul.f32 %v5296, %v5684
  %v5708 = vmul.f32 %v5297, %v5688
  %v5709 = vmul.f32 %v5298, %v5692
  %v5710 = vmax.f32 %v5694, %v5698
  %v5711 = vmax.f32 %v5695, %v5699
  %v5712 = vmax.f32 %v5696, %v5700
  %v5713 = vmax.f32 %v5697, %v5701
  %v5714 = vmax.f32 %v5710, %v5702
  %v5715 = vmax.f32 %v5711, %v5703
  %v5716 = vmax.f32 %v5712, %v5704
  %v5717 = vmax.f32 %v5713, %v5705
  %v5718 = vmax.f32 %v5714, %v5706
  %v5719 = vmax.f32 %v5715, %v5707
  %v5720 = vmax.f32 %v5716, %v5708
  %v5721 = vmax.f32 %v5717, %v5709
  %v5722 = vmax.f32 %v5718, %v5719
  %v5723 = vmax.f32 %v5720, %v5721
  %v5724 = vmax.f32 %v5722, %v5723
  %v5725 = vrot.slane %v5724, 4
  %v5726 = vmax.f32 %v5724, %v5725
  %v5727 = vrot.slane %v5726, 2
  %v5728 = vmax.f32 %v5726, %v5727
  %v5729 = vrot.slane %v5728, 1
  %v5730 = vmax.f32 %v5728, %v5729
  %vm5731 = vcmp.eq.s32.totalorder %v111, 3
  %v5732 = vsel %vm5731, 1, 0
  %vm5733 = vcmp.eq.s32.totalorder %v5732, 1
  %v5734 = vsel %vm5733, %v5730, %v5629
  %5735 = vset.pattern.permute.xlu0 4
  %5736 = vperm.xlu0 %5735, %v4724
  %v5737 = vpop.permute.xlu0 %5736
  %5739 = vset.pattern.permute.xlu0 4
  %5740 = vperm.xlu0 %5739, %v4725
  %v5741 = vpop.permute.xlu0 %5740
  %5743 = vset.pattern.permute.xlu0 4
  %5744 = vperm.xlu0 %5743, %v4726
  %v5745 = vpop.permute.xlu0 %5744
  %5747 = vset.pattern.permute.xlu0 4
  %5748 = vperm.xlu0 %5747, %v4727
  %v5749 = vpop.permute.xlu0 %5748
  %5751 = vset.pattern.permute.xlu0 4
  %5752 = vperm.xlu0 %5751, %v4728
  %v5753 = vpop.permute.xlu0 %5752
  %5755 = vset.pattern.permute.xlu0 4
  %5756 = vperm.xlu0 %5755, %v4729
  %v5757 = vpop.permute.xlu0 %5756
  %5759 = vset.pattern.permute.xlu0 4
  %5760 = vperm.xlu0 %5759, %v4730
  %v5761 = vpop.permute.xlu0 %5760
  %5763 = vset.pattern.permute.xlu0 4
  %5764 = vperm.xlu0 %5763, %v4731
  %v5765 = vpop.permute.xlu0 %5764
  %5767 = vset.pattern.permute.xlu0 4
  %5768 = vperm.xlu0 %5767, %v4732
  %v5769 = vpop.permute.xlu0 %5768
  %5771 = vset.pattern.permute.xlu0 4
  %5772 = vperm.xlu0 %5771, %v4733
  %v5773 = vpop.permute.xlu0 %5772
  %5775 = vset.pattern.permute.xlu0 4
  %5776 = vperm.xlu0 %5775, %v4734
  %v5777 = vpop.permute.xlu0 %5776
  %5779 = vset.pattern.permute.xlu0 4
  %5780 = vperm.xlu0 %5779, %v4735
  %v5781 = vpop.permute.xlu0 %5780
  %5783 = vset.pattern.permute.xlu0 4
  %5784 = vperm.xlu0 %5783, %v4736
  %v5785 = vpop.permute.xlu0 %5784
  %5787 = vset.pattern.permute.xlu0 4
  %5788 = vperm.xlu0 %5787, %v4737
  %v5789 = vpop.permute.xlu0 %5788
  %5791 = vset.pattern.permute.xlu0 4
  %5792 = vperm.xlu0 %5791, %v4738
  %v5793 = vpop.permute.xlu0 %5792
  %5795 = vset.pattern.permute.xlu0 4
  %5796 = vperm.xlu0 %5795, %v4739
  %v5797 = vpop.permute.xlu0 %5796
  %v5799 = vmul.f32 %v5283, %v5737
  %v5800 = vmul.f32 %v5284, %v5741
  %v5801 = vmul.f32 %v5285, %v5745
  %v5802 = vmul.f32 %v5286, %v5749
  %v5803 = vmul.f32 %v5287, %v5753
  %v5804 = vmul.f32 %v5288, %v5757
  %v5805 = vmul.f32 %v5289, %v5761
  %v5806 = vmul.f32 %v5290, %v5765
  %v5807 = vmul.f32 %v5291, %v5769
  %v5808 = vmul.f32 %v5292, %v5773
  %v5809 = vmul.f32 %v5293, %v5777
  %v5810 = vmul.f32 %v5294, %v5781
  %v5811 = vmul.f32 %v5295, %v5785
  %v5812 = vmul.f32 %v5296, %v5789
  %v5813 = vmul.f32 %v5297, %v5793
  %v5814 = vmul.f32 %v5298, %v5797
  %v5815 = vmax.f32 %v5799, %v5803
  %v5816 = vmax.f32 %v5800, %v5804
  %v5817 = vmax.f32 %v5801, %v5805
  %v5818 = vmax.f32 %v5802, %v5806
  %v5819 = vmax.f32 %v5815, %v5807
  %v5820 = vmax.f32 %v5816, %v5808
  %v5821 = vmax.f32 %v5817, %v5809
  %v5822 = vmax.f32 %v5818, %v5810
  %v5823 = vmax.f32 %v5819, %v5811
  %v5824 = vmax.f32 %v5820, %v5812
  %v5825 = vmax.f32 %v5821, %v5813
  %v5826 = vmax.f32 %v5822, %v5814
  %v5827 = vmax.f32 %v5823, %v5824
  %v5828 = vmax.f32 %v5825, %v5826
  %v5829 = vmax.f32 %v5827, %v5828
  %v5830 = vrot.slane %v5829, 4
  %v5831 = vmax.f32 %v5829, %v5830
  %v5832 = vrot.slane %v5831, 2
  %v5833 = vmax.f32 %v5831, %v5832
  %v5834 = vrot.slane %v5833, 1
  %v5835 = vmax.f32 %v5833, %v5834
  %vm5836 = vcmp.eq.s32.totalorder %v111, 4
  %v5837 = vsel %vm5836, 1, 0
  %vm5838 = vcmp.eq.s32.totalorder %v5837, 1
  %v5839 = vsel %vm5838, %v5835, %v5734
  %5840 = vset.pattern.permute.xlu0 5
  %5841 = vperm.xlu0 %5840, %v4724
  %v5842 = vpop.permute.xlu0 %5841
  %5844 = vset.pattern.permute.xlu0 5
  %5845 = vperm.xlu0 %5844, %v4725
  %v5846 = vpop.permute.xlu0 %5845
  %5848 = vset.pattern.permute.xlu0 5
  %5849 = vperm.xlu0 %5848, %v4726
  %v5850 = vpop.permute.xlu0 %5849
  %5852 = vset.pattern.permute.xlu0 5
  %5853 = vperm.xlu0 %5852, %v4727
  %v5854 = vpop.permute.xlu0 %5853
  %5856 = vset.pattern.permute.xlu0 5
  %5857 = vperm.xlu0 %5856, %v4728
  %v5858 = vpop.permute.xlu0 %5857
  %5860 = vset.pattern.permute.xlu0 5
  %5861 = vperm.xlu0 %5860, %v4729
  %v5862 = vpop.permute.xlu0 %5861
  %5864 = vset.pattern.permute.xlu0 5
  %5865 = vperm.xlu0 %5864, %v4730
  %v5866 = vpop.permute.xlu0 %5865
  %5868 = vset.pattern.permute.xlu0 5
  %5869 = vperm.xlu0 %5868, %v4731
  %v5870 = vpop.permute.xlu0 %5869
  %5872 = vset.pattern.permute.xlu0 5
  %5873 = vperm.xlu0 %5872, %v4732
  %v5874 = vpop.permute.xlu0 %5873
  %5876 = vset.pattern.permute.xlu0 5
  %5877 = vperm.xlu0 %5876, %v4733
  %v5878 = vpop.permute.xlu0 %5877
  %5880 = vset.pattern.permute.xlu0 5
  %5881 = vperm.xlu0 %5880, %v4734
  %v5882 = vpop.permute.xlu0 %5881
  %5884 = vset.pattern.permute.xlu0 5
  %5885 = vperm.xlu0 %5884, %v4735
  %v5886 = vpop.permute.xlu0 %5885
  %5888 = vset.pattern.permute.xlu0 5
  %5889 = vperm.xlu0 %5888, %v4736
  %v5890 = vpop.permute.xlu0 %5889
  %5892 = vset.pattern.permute.xlu0 5
  %5893 = vperm.xlu0 %5892, %v4737
  %v5894 = vpop.permute.xlu0 %5893
  %5896 = vset.pattern.permute.xlu0 5
  %5897 = vperm.xlu0 %5896, %v4738
  %v5898 = vpop.permute.xlu0 %5897
  %5900 = vset.pattern.permute.xlu0 5
  %5901 = vperm.xlu0 %5900, %v4739
  %v5902 = vpop.permute.xlu0 %5901
  %v5904 = vmul.f32 %v5283, %v5842
  %v5905 = vmul.f32 %v5284, %v5846
  %v5906 = vmul.f32 %v5285, %v5850
  %v5907 = vmul.f32 %v5286, %v5854
  %v5908 = vmul.f32 %v5287, %v5858
  %v5909 = vmul.f32 %v5288, %v5862
  %v5910 = vmul.f32 %v5289, %v5866
  %v5911 = vmul.f32 %v5290, %v5870
  %v5912 = vmul.f32 %v5291, %v5874
  %v5913 = vmul.f32 %v5292, %v5878
  %v5914 = vmul.f32 %v5293, %v5882
  %v5915 = vmul.f32 %v5294, %v5886
  %v5916 = vmul.f32 %v5295, %v5890
  %v5917 = vmul.f32 %v5296, %v5894
  %v5918 = vmul.f32 %v5297, %v5898
  %v5919 = vmul.f32 %v5298, %v5902
  %v5920 = vmax.f32 %v5904, %v5908
  %v5921 = vmax.f32 %v5905, %v5909
  %v5922 = vmax.f32 %v5906, %v5910
  %v5923 = vmax.f32 %v5907, %v5911
  %v5924 = vmax.f32 %v5920, %v5912
  %v5925 = vmax.f32 %v5921, %v5913
  %v5926 = vmax.f32 %v5922, %v5914
  %v5927 = vmax.f32 %v5923, %v5915
  %v5928 = vmax.f32 %v5924, %v5916
  %v5929 = vmax.f32 %v5925, %v5917
  %v5930 = vmax.f32 %v5926, %v5918
  %v5931 = vmax.f32 %v5927, %v5919
  %v5932 = vmax.f32 %v5928, %v5929
  %v5933 = vmax.f32 %v5930, %v5931
  %v5934 = vmax.f32 %v5932, %v5933
  %v5935 = vrot.slane %v5934, 4
  %v5936 = vmax.f32 %v5934, %v5935
  %v5937 = vrot.slane %v5936, 2
  %v5938 = vmax.f32 %v5936, %v5937
  %v5939 = vrot.slane %v5938, 1
  %v5940 = vmax.f32 %v5938, %v5939
  %vm5941 = vcmp.eq.s32.totalorder %v111, 5
  %v5942 = vsel %vm5941, 1, 0
  %vm5943 = vcmp.eq.s32.totalorder %v5942, 1
  %v5944 = vsel %vm5943, %v5940, %v5839
  %5945 = vset.pattern.permute.xlu0 6
  %5946 = vperm.xlu0 %5945, %v4724
  %v5947 = vpop.permute.xlu0 %5946
  %5949 = vset.pattern.permute.xlu0 6
  %5950 = vperm.xlu0 %5949, %v4725
  %v5951 = vpop.permute.xlu0 %5950
  %5953 = vset.pattern.permute.xlu0 6
  %5954 = vperm.xlu0 %5953, %v4726
  %v5955 = vpop.permute.xlu0 %5954
  %5957 = vset.pattern.permute.xlu0 6
  %5958 = vperm.xlu0 %5957, %v4727
  %v5959 = vpop.permute.xlu0 %5958
  %5961 = vset.pattern.permute.xlu0 6
  %5962 = vperm.xlu0 %5961, %v4728
  %v5963 = vpop.permute.xlu0 %5962
  %5965 = vset.pattern.permute.xlu0 6
  %5966 = vperm.xlu0 %5965, %v4729
  %v5967 = vpop.permute.xlu0 %5966
  %5969 = vset.pattern.permute.xlu0 6
  %5970 = vperm.xlu0 %5969, %v4730
  %v5971 = vpop.permute.xlu0 %5970
  %5973 = vset.pattern.permute.xlu0 6
  %5974 = vperm.xlu0 %5973, %v4731
  %v5975 = vpop.permute.xlu0 %5974
  %5977 = vset.pattern.permute.xlu0 6
  %5978 = vperm.xlu0 %5977, %v4732
  %v5979 = vpop.permute.xlu0 %5978
  %5981 = vset.pattern.permute.xlu0 6
  %5982 = vperm.xlu0 %5981, %v4733
  %v5983 = vpop.permute.xlu0 %5982
  %5985 = vset.pattern.permute.xlu0 6
  %5986 = vperm.xlu0 %5985, %v4734
  %v5987 = vpop.permute.xlu0 %5986
  %5989 = vset.pattern.permute.xlu0 6
  %5990 = vperm.xlu0 %5989, %v4735
  %v5991 = vpop.permute.xlu0 %5990
  %5993 = vset.pattern.permute.xlu0 6
  %5994 = vperm.xlu0 %5993, %v4736
  %v5995 = vpop.permute.xlu0 %5994
  %5997 = vset.pattern.permute.xlu0 6
  %5998 = vperm.xlu0 %5997, %v4737
  %v5999 = vpop.permute.xlu0 %5998
  %6001 = vset.pattern.permute.xlu0 6
  %6002 = vperm.xlu0 %6001, %v4738
  %v6003 = vpop.permute.xlu0 %6002
  %6005 = vset.pattern.permute.xlu0 6
  %6006 = vperm.xlu0 %6005, %v4739
  %v6007 = vpop.permute.xlu0 %6006
  %v6009 = vmul.f32 %v5283, %v5947
  %v6010 = vmul.f32 %v5284, %v5951
  %v6011 = vmul.f32 %v5285, %v5955
  %v6012 = vmul.f32 %v5286, %v5959
  %v6013 = vmul.f32 %v5287, %v5963
  %v6014 = vmul.f32 %v5288, %v5967
  %v6015 = vmul.f32 %v5289, %v5971
  %v6016 = vmul.f32 %v5290, %v5975
  %v6017 = vmul.f32 %v5291, %v5979
  %v6018 = vmul.f32 %v5292, %v5983
  %v6019 = vmul.f32 %v5293, %v5987
  %v6020 = vmul.f32 %v5294, %v5991
  %v6021 = vmul.f32 %v5295, %v5995
  %v6022 = vmul.f32 %v5296, %v5999
  %v6023 = vmul.f32 %v5297, %v6003
  %v6024 = vmul.f32 %v5298, %v6007
  %v6025 = vmax.f32 %v6009, %v6013
  %v6026 = vmax.f32 %v6010, %v6014
  %v6027 = vmax.f32 %v6011, %v6015
  %v6028 = vmax.f32 %v6012, %v6016
  %v6029 = vmax.f32 %v6025, %v6017
  %v6030 = vmax.f32 %v6026, %v6018
  %v6031 = vmax.f32 %v6027, %v6019
  %v6032 = vmax.f32 %v6028, %v6020
  %v6033 = vmax.f32 %v6029, %v6021
  %v6034 = vmax.f32 %v6030, %v6022
  %v6035 = vmax.f32 %v6031, %v6023
  %v6036 = vmax.f32 %v6032, %v6024
  %v6037 = vmax.f32 %v6033, %v6034
  %v6038 = vmax.f32 %v6035, %v6036
  %v6039 = vmax.f32 %v6037, %v6038
  %v6040 = vrot.slane %v6039, 4
  %v6041 = vmax.f32 %v6039, %v6040
  %v6042 = vrot.slane %v6041, 2
  %v6043 = vmax.f32 %v6041, %v6042
  %v6044 = vrot.slane %v6043, 1
  %v6045 = vmax.f32 %v6043, %v6044
  %vm6046 = vcmp.eq.s32.totalorder %v111, 6
  %v6047 = vsel %vm6046, 1, 0
  %vm6048 = vcmp.eq.s32.totalorder %v6047, 1
  %v6049 = vsel %vm6048, %v6045, %v5944
  %6050 = vset.pattern.permute.xlu0 7
  %6051 = vperm.xlu0 %6050, %v4724
  %v6052 = vpop.permute.xlu0 %6051
  %6054 = vset.pattern.permute.xlu0 7
  %6055 = vperm.xlu0 %6054, %v4725
  %v6056 = vpop.permute.xlu0 %6055
  %6058 = vset.pattern.permute.xlu0 7
  %6059 = vperm.xlu0 %6058, %v4726
  %v6060 = vpop.permute.xlu0 %6059
  %6062 = vset.pattern.permute.xlu0 7
  %6063 = vperm.xlu0 %6062, %v4727
  %v6064 = vpop.permute.xlu0 %6063
  %6066 = vset.pattern.permute.xlu0 7
  %6067 = vperm.xlu0 %6066, %v4728
  %v6068 = vpop.permute.xlu0 %6067
  %6070 = vset.pattern.permute.xlu0 7
  %6071 = vperm.xlu0 %6070, %v4729
  %v6072 = vpop.permute.xlu0 %6071
  %6074 = vset.pattern.permute.xlu0 7
  %6075 = vperm.xlu0 %6074, %v4730
  %v6076 = vpop.permute.xlu0 %6075
  %6078 = vset.pattern.permute.xlu0 7
  %6079 = vperm.xlu0 %6078, %v4731
  %v6080 = vpop.permute.xlu0 %6079
  %6082 = vset.pattern.permute.xlu0 7
  %6083 = vperm.xlu0 %6082, %v4732
  %v6084 = vpop.permute.xlu0 %6083
  %6086 = vset.pattern.permute.xlu0 7
  %6087 = vperm.xlu0 %6086, %v4733
  %v6088 = vpop.permute.xlu0 %6087
  %6090 = vset.pattern.permute.xlu0 7
  %6091 = vperm.xlu0 %6090, %v4734
  %v6092 = vpop.permute.xlu0 %6091
  %6094 = vset.pattern.permute.xlu0 7
  %6095 = vperm.xlu0 %6094, %v4735
  %v6096 = vpop.permute.xlu0 %6095
  %6098 = vset.pattern.permute.xlu0 7
  %6099 = vperm.xlu0 %6098, %v4736
  %v6100 = vpop.permute.xlu0 %6099
  %6102 = vset.pattern.permute.xlu0 7
  %6103 = vperm.xlu0 %6102, %v4737
  %v6104 = vpop.permute.xlu0 %6103
  %6106 = vset.pattern.permute.xlu0 7
  %6107 = vperm.xlu0 %6106, %v4738
  %v6108 = vpop.permute.xlu0 %6107
  %6110 = vset.pattern.permute.xlu0 7
  %6111 = vperm.xlu0 %6110, %v4739
  %v6112 = vpop.permute.xlu0 %6111
  %v6114 = vmul.f32 %v5283, %v6052
  %v6115 = vmul.f32 %v5284, %v6056
  %v6116 = vmul.f32 %v5285, %v6060
  %v6117 = vmul.f32 %v5286, %v6064
  %v6118 = vmul.f32 %v5287, %v6068
  %v6119 = vmul.f32 %v5288, %v6072
  %v6120 = vmul.f32 %v5289, %v6076
  %v6121 = vmul.f32 %v5290, %v6080
  %v6122 = vmul.f32 %v5291, %v6084
  %v6123 = vmul.f32 %v5292, %v6088
  %v6124 = vmul.f32 %v5293, %v6092
  %v6125 = vmul.f32 %v5294, %v6096
  %v6126 = vmul.f32 %v5295, %v6100
  %v6127 = vmul.f32 %v5296, %v6104
  %v6128 = vmul.f32 %v5297, %v6108
  %v6129 = vmul.f32 %v5298, %v6112
  %v6130 = vmax.f32 %v6114, %v6118
  %v6131 = vmax.f32 %v6115, %v6119
  %v6132 = vmax.f32 %v6116, %v6120
  %v6133 = vmax.f32 %v6117, %v6121
  %v6134 = vmax.f32 %v6130, %v6122
  %v6135 = vmax.f32 %v6131, %v6123
  %v6136 = vmax.f32 %v6132, %v6124
  %v6137 = vmax.f32 %v6133, %v6125
  %v6138 = vmax.f32 %v6134, %v6126
  %v6139 = vmax.f32 %v6135, %v6127
  %v6140 = vmax.f32 %v6136, %v6128
  %v6141 = vmax.f32 %v6137, %v6129
  %v6142 = vmax.f32 %v6138, %v6139
  %v6143 = vmax.f32 %v6140, %v6141
  %v6144 = vmax.f32 %v6142, %v6143
  %v6145 = vrot.slane %v6144, 4
  %v6146 = vmax.f32 %v6144, %v6145
  %v6147 = vrot.slane %v6146, 2
  %v6148 = vmax.f32 %v6146, %v6147
  %v6149 = vrot.slane %v6148, 1
  %v6150 = vmax.f32 %v6148, %v6149
  %vm6151 = vcmp.eq.s32.totalorder %v111, 7
  %v6152 = vsel %vm6151, 1, 0
  %vm6153 = vcmp.eq.s32.totalorder %v6152, 1
  %v6154 = vsel %vm6153, %v6150, %v6049
  %v6155 = vld [vmem:[%s3 + $0x184] sm:$0xf]
  %v6156 = vld [vmem:[%s3 + $0x188] sm:$0xf]
  %v6157 = vld [vmem:[%s3 + $0x18c] sm:$0xf]
  %v6158 = vld [vmem:[%s3 + $0x190] sm:$0xf]
  %v6159 = vld [vmem:[%s3 + $0x194] sm:$0xf]
  %v6160 = vld [vmem:[%s3 + $0x198] sm:$0xf]
  %v6161 = vld [vmem:[%s3 + $0x19c] sm:$0xf]
  %v6162 = vld [vmem:[%s3 + $0x1a0] sm:$0xf]
  %v6163 = vld [vmem:[%s3 + $0x1a4] sm:$0xf]
  %v6164 = vld [vmem:[%s3 + $0x1a8] sm:$0xf]
  %v6165 = vld [vmem:[%s3 + $0x1ac] sm:$0xf]
  %v6166 = vld [vmem:[%s3 + $0x1b0] sm:$0xf]
  %v6167 = vld [vmem:[%s3 + $0x1b4] sm:$0xf]
  %v6168 = vld [vmem:[%s3 + $0x1b8] sm:$0xf]
  %v6169 = vld [vmem:[%s3 + $0x1bc] sm:$0xf]
  %v6170 = vld [vmem:[%s3 + $0x1c0] sm:$0xf]
  %v6171 = vld [vmem:[%s4 + $0x4] sm:$0x1]
  %v6172 = vpack.c.bf16 %v6154, %v6154
  %v6173 = vlaneseq
  %v6174 = vshrl.u32 %v6173, 7
  %v6175 = vsub.s32 0, %v6174
  %v6176 = vrot.slane %v6171, %v6175
  %v6193 = vunpack.c.l.b16 %v6155
  %v6194 = vunpack.c.l.b16 %v6156
  %v6195 = vunpack.c.l.b16 %v6157
  %v6196 = vunpack.c.l.b16 %v6158
  %v6197 = vunpack.c.l.b16 %v6159
  %v6198 = vunpack.c.l.b16 %v6160
  %v6199 = vunpack.c.l.b16 %v6161
  %v6200 = vunpack.c.l.b16 %v6162
  %v6201 = vunpack.c.l.b16 %v6163
  %v6202 = vunpack.c.l.b16 %v6164
  %v6203 = vunpack.c.l.b16 %v6165
  %v6204 = vunpack.c.l.b16 %v6166
  %v6205 = vunpack.c.l.b16 %v6167
  %v6206 = vunpack.c.l.b16 %v6168
  %v6207 = vunpack.c.l.b16 %v6169
  %v6208 = vunpack.c.l.b16 %v6170
  %v6209 = vpack.c.b16 %v6194, %v6193
  %v6210 = vpack.c.b16 %v6196, %v6195
  %v6211 = vpack.c.b16 %v6198, %v6197
  %v6212 = vpack.c.b16 %v6200, %v6199
  %v6213 = vpack.c.b16 %v6202, %v6201
  %v6214 = vpack.c.b16 %v6204, %v6203
  %v6215 = vpack.c.b16 %v6206, %v6205
  %v6216 = vpack.c.b16 %v6208, %v6207
  %6225 = vmatprep.subr.bf16.mxu0 0
  %6226 = vmatpush1.bf16.msra.mxu0 %v6209
  %6227 = vmatprep.subr.bf16.mxu0 0
  %6228 = vmatpush1.bf16.msra.mxu0 %v6210
  %6229 = vmatprep.subr.bf16.mxu0 0
  %6230 = vmatpush1.bf16.msra.mxu0 %v6211
  %6231 = vmatprep.subr.bf16.mxu0 0
  %6232 = vmatpush1.bf16.msra.mxu0 %v6212
  %6233 = vmatprep.subr.bf16.mxu0 0
  %6234 = vmatpush1.bf16.msra.mxu0 %v6213
  %6235 = vmatprep.subr.bf16.mxu0 0
  %6236 = vmatpush1.bf16.msra.mxu0 %v6214
  %6237 = vmatprep.subr.bf16.mxu0 0
  %6238 = vmatpush1.bf16.msra.mxu0 %v6215
  %6239 = vmatprep.subr.bf16.mxu0 0
  %6240 = vmatpush1.bf16.msra.mxu0 %v6216
  %6241 = vmatprep.subr.bf16.mxu0 0
  %6242 = vmatpush1.bf16.msra.mxu0 0
  %6243 = vmatprep.subr.bf16.mxu0 0
  %6244 = vmatpush1.bf16.msra.mxu0 0
  %6245 = vmatprep.subr.bf16.mxu0 0
  %6246 = vmatpush1.bf16.msra.mxu0 0
  %6247 = vmatprep.subr.bf16.mxu0 0
  %6248 = vmatpush1.bf16.msra.mxu0 0
  %6249 = vmatprep.subr.bf16.mxu0 0
  %6250 = vmatpush1.bf16.msra.mxu0 0
  %6251 = vmatprep.subr.bf16.mxu0 0
  %6252 = vmatpush1.bf16.msra.mxu0 0
  %6253 = vmatprep.subr.bf16.mxu0 0
  %6254 = vmatpush1.bf16.msra.mxu0 0
  %6255 = vmatprep.subr.bf16.mxu0 0
  %6256 = vmatpush1.bf16.msra.mxu0 0
  %6257 = vmatprep.mubr.bf16.mxu0 0
  %6258 = vmatmul.mubr.bf16.gmra.mrb[0].mxu0 %v6172
  %v6259 = vpop.f32.mrb[0].mxu0
  %v6260 = vadd.f32 %v6176, %v6259
  %v6261 = vpop.f32.mrb[0].mxu0
  %v6262 = vpop.f32.mrb[0].mxu0
  %v6263 = vpop.f32.mrb[0].mxu0
  %6264 = vdwg.mxu0
  %v6265 = vmax.f32 %v6260, 0.0
  %v6266 = vld [vmem:[%s3 + $0x1c4] sm:$0xf]
  %v6267 = vld [vmem:[%s3 + $0x1c8] sm:$0xf]
  %v6268 = vld [vmem:[%s3 + $0x1cc] sm:$0xf]
  %v6269 = vld [vmem:[%s3 + $0x1d0] sm:$0xf]
  %v6270 = vld [vmem:[%s3 + $0x1d4] sm:$0xf]
  %v6271 = vld [vmem:[%s3 + $0x1d8] sm:$0xf]
  %v6272 = vld [vmem:[%s3 + $0x1dc] sm:$0xf]
  %v6273 = vld [vmem:[%s3 + $0x1e0] sm:$0xf]
  %v6274 = vld [vmem:[%s3 + $0x1e4] sm:$0xf]
  %v6275 = vld [vmem:[%s3 + $0x1e8] sm:$0xf]
  %v6276 = vld [vmem:[%s3 + $0x1ec] sm:$0xf]
  %v6277 = vld [vmem:[%s3 + $0x1f0] sm:$0xf]
  %v6278 = vld [vmem:[%s3 + $0x1f4] sm:$0xf]
  %v6279 = vld [vmem:[%s3 + $0x1f8] sm:$0xf]
  %v6280 = vld [vmem:[%s3 + $0x1fc] sm:$0xf]
  %v6281 = vld [vmem:[%s3 + $0x200] sm:$0xf]
  %v6282 = vld [vmem:[%s4 + $0x5] sm:$0x1]
  %v6283 = vpack.c.bf16 %v6265, %v6265
  %v6284 = vlaneseq
  %v6285 = vshrl.u32 %v6284, 7
  %v6286 = vsub.s32 0, %v6285
  %v6287 = vrot.slane %v6282, %v6286
  %v6304 = vunpack.c.l.b16 %v6266
  %v6305 = vunpack.c.l.b16 %v6267
  %v6306 = vunpack.c.l.b16 %v6268
  %v6307 = vunpack.c.l.b16 %v6269
  %v6308 = vunpack.c.l.b16 %v6270
  %v6309 = vunpack.c.l.b16 %v6271
  %v6310 = vunpack.c.l.b16 %v6272
  %v6311 = vunpack.c.l.b16 %v6273
  %v6312 = vunpack.c.l.b16 %v6274
  %v6313 = vunpack.c.l.b16 %v6275
  %v6314 = vunpack.c.l.b16 %v6276
  %v6315 = vunpack.c.l.b16 %v6277
  %v6316 = vunpack.c.l.b16 %v6278
  %v6317 = vunpack.c.l.b16 %v6279
  %v6318 = vunpack.c.l.b16 %v6280
  %v6319 = vunpack.c.l.b16 %v6281
  %v6320 = vpack.c.b16 %v6305, %v6304
  %v6321 = vpack.c.b16 %v6307, %v6306
  %v6322 = vpack.c.b16 %v6309, %v6308
  %v6323 = vpack.c.b16 %v6311, %v6310
  %v6324 = vpack.c.b16 %v6313, %v6312
  %v6325 = vpack.c.b16 %v6315, %v6314
  %v6326 = vpack.c.b16 %v6317, %v6316
  %v6327 = vpack.c.b16 %v6319, %v6318
  %6336 = vmatprep.subr.bf16.mxu0 0
  %6337 = vmatpush1.bf16.msra.mxu0 %v6320
  %6338 = vmatprep.subr.bf16.mxu0 0
  %6339 = vmatpush1.bf16.msra.mxu0 %v6321
  %6340 = vmatprep.subr.bf16.mxu0 0
  %6341 = vmatpush1.bf16.msra.mxu0 %v6322
  %6342 = vmatprep.subr.bf16.mxu0 0
  %6343 = vmatpush1.bf16.msra.mxu0 %v6323
  %6344 = vmatprep.subr.bf16.mxu0 0
  %6345 = vmatpush1.bf16.msra.mxu0 %v6324
  %6346 = vmatprep.subr.bf16.mxu0 0
  %6347 = vmatpush1.bf16.msra.mxu0 %v6325
  %6348 = vmatprep.subr.bf16.mxu0 0
  %6349 = vmatpush1.bf16.msra.mxu0 %v6326
  %6350 = vmatprep.subr.bf16.mxu0 0
  %6351 = vmatpush1.bf16.msra.mxu0 %v6327
  %6352 = vmatprep.subr.bf16.mxu0 0
  %6353 = vmatpush1.bf16.msra.mxu0 0
  %6354 = vmatprep.subr.bf16.mxu0 0
  %6355 = vmatpush1.bf16.msra.mxu0 0
  %6356 = vmatprep.subr.bf16.mxu0 0
  %6357 = vmatpush1.bf16.msra.mxu0 0
  %6358 = vmatprep.subr.bf16.mxu0 0
  %6359 = vmatpush1.bf16.msra.mxu0 0
  %6360 = vmatprep.subr.bf16.mxu0 0
  %6361 = vmatpush1.bf16.msra.mxu0 0
  %6362 = vmatprep.subr.bf16.mxu0 0
  %6363 = vmatpush1.bf16.msra.mxu0 0
  %6364 = vmatprep.subr.bf16.mxu0 0
  %6365 = vmatpush1.bf16.msra.mxu0 0
  %6366 = vmatprep.subr.bf16.mxu0 0
  %6367 = vmatpush1.bf16.msra.mxu0 0
  %6368 = vmatprep.mubr.bf16.mxu0 0
  %6369 = vmatmul.mubr.bf16.gmra.mrb[0].mxu0 %v6283
  %v6370 = vpop.f32.mrb[0].mxu0
  %v6371 = vadd.f32 %v6287, %v6370
  %v6372 = vpop.f32.mrb[0].mxu0
  %v6373 = vpop.f32.mrb[0].mxu0
  %v6374 = vpop.f32.mrb[0].mxu0
  %6375 = vdwg.mxu0
  %v6376 = vmax.f32 %v6371, 0.0
  %v6377 = vld [vmem:[%s3 + $0x204] sm:$0xf]
  %v6378 = vld [vmem:[%s3 + $0x208] sm:$0xf]
  %v6379 = vld [vmem:[%s3 + $0x20c] sm:$0xf]
  %v6380 = vld [vmem:[%s3 + $0x210] sm:$0xf]
  %v6381 = vld [vmem:[%s3 + $0x214] sm:$0xf]
  %v6382 = vld [vmem:[%s3 + $0x218] sm:$0xf]
  %v6383 = vld [vmem:[%s3 + $0x21c] sm:$0xf]
  %v6384 = vld [vmem:[%s3 + $0x220] sm:$0xf]
  %v6385 = vld [vmem:[%s3 + $0x224] sm:$0xf]
  %v6386 = vld [vmem:[%s3 + $0x228] sm:$0xf]
  %v6387 = vld [vmem:[%s3 + $0x22c] sm:$0xf]
  %v6388 = vld [vmem:[%s3 + $0x230] sm:$0xf]
  %v6389 = vld [vmem:[%s3 + $0x234] sm:$0xf]
  %v6390 = vld [vmem:[%s3 + $0x238] sm:$0xf]
  %v6391 = vld [vmem:[%s3 + $0x23c] sm:$0xf]
  %v6392 = vld [vmem:[%s3 + $0x240] sm:$0xf]
  %v6393 = vld [vmem:[%s4 + $0x6] sm:$0x1]
  %v6394 = vpack.c.bf16 %v6376, %v6376
  %v6395 = vlaneseq
  %v6396 = vshrl.u32 %v6395, 7
  %v6397 = vsub.s32 0, %v6396
  %v6398 = vrot.slane %v6393, %v6397
  %v6415 = vunpack.c.l.b16 %v6377
  %v6416 = vunpack.c.l.b16 %v6378
  %v6417 = vunpack.c.l.b16 %v6379
  %v6418 = vunpack.c.l.b16 %v6380
  %v6419 = vunpack.c.l.b16 %v6381
  %v6420 = vunpack.c.l.b16 %v6382
  %v6421 = vunpack.c.l.b16 %v6383
  %v6422 = vunpack.c.l.b16 %v6384
  %v6423 = vunpack.c.l.b16 %v6385
  %v6424 = vunpack.c.l.b16 %v6386
  %v6425 = vunpack.c.l.b16 %v6387
  %v6426 = vunpack.c.l.b16 %v6388
  %v6427 = vunpack.c.l.b16 %v6389
  %v6428 = vunpack.c.l.b16 %v6390
  %v6429 = vunpack.c.l.b16 %v6391
  %v6430 = vunpack.c.l.b16 %v6392
  %v6431 = vpack.c.b16 %v6416, %v6415
  %v6432 = vpack.c.b16 %v6418, %v6417
  %v6433 = vpack.c.b16 %v6420, %v6419
  %v6434 = vpack.c.b16 %v6422, %v6421
  %v6435 = vpack.c.b16 %v6424, %v6423
  %v6436 = vpack.c.b16 %v6426, %v6425
  %v6437 = vpack.c.b16 %v6428, %v6427
  %v6438 = vpack.c.b16 %v6430, %v6429
  %6447 = vmatprep.subr.bf16.mxu0 0
  %6448 = vmatpush1.bf16.msra.mxu0 %v6431
  %6449 = vmatprep.subr.bf16.mxu0 0
  %6450 = vmatpush1.bf16.msra.mxu0 %v6432
  %6451 = vmatprep.subr.bf16.mxu0 0
  %6452 = vmatpush1.bf16.msra.mxu0 %v6433
  %6453 = vmatprep.subr.bf16.mxu0 0
  %6454 = vmatpush1.bf16.msra.mxu0 %v6434
  %6455 = vmatprep.subr.bf16.mxu0 0
  %6456 = vmatpush1.bf16.msra.mxu0 %v6435
  %6457 = vmatprep.subr.bf16.mxu0 0
  %6458 = vmatpush1.bf16.msra.mxu0 %v6436
  %6459 = vmatprep.subr.bf16.mxu0 0
  %6460 = vmatpush1.bf16.msra.mxu0 %v6437
  %6461 = vmatprep.subr.bf16.mxu0 0
  %6462 = vmatpush1.bf16.msra.mxu0 %v6438
  %6463 = vmatprep.subr.bf16.mxu0 0
  %6464 = vmatpush1.bf16.msra.mxu0 0
  %6465 = vmatprep.subr.bf16.mxu0 0
  %6466 = vmatpush1.bf16.msra.mxu0 0
  %6467 = vmatprep.subr.bf16.mxu0 0
  %6468 = vmatpush1.bf16.msra.mxu0 0
  %6469 = vmatprep.subr.bf16.mxu0 0
  %6470 = vmatpush1.bf16.msra.mxu0 0
  %6471 = vmatprep.subr.bf16.mxu0 0
  %6472 = vmatpush1.bf16.msra.mxu0 0
  %6473 = vmatprep.subr.bf16.mxu0 0
  %6474 = vmatpush1.bf16.msra.mxu0 0
  %6475 = vmatprep.subr.bf16.mxu0 0
  %6476 = vmatpush1.bf16.msra.mxu0 0
  %6477 = vmatprep.subr.bf16.mxu0 0
  %6478 = vmatpush1.bf16.msra.mxu0 0
  %6479 = vmatprep.mubr.bf16.mxu0 0
  %6480 = vmatmul.mubr.bf16.gmra.mrb[0].mxu0 %v6394
  %v6481 = vpop.f32.mrb[0].mxu0
  %v6482 = vadd.f32 %v6398, %v6481
  %v6483 = vpop.f32.mrb[0].mxu0
  %v6484 = vpop.f32.mrb[0].mxu0
  %v6485 = vpop.f32.mrb[0].mxu0
  %6486 = vdwg.mxu0
  %v6487 = vmax.f32 %v6482, 0.0
  %v6488 = vld [vmem:[%s3 + $0x244] sm:$0xf]
  %v6489 = vld [vmem:[%s3 + $0x248] sm:$0xf]
  %v6490 = vld [vmem:[%s3 + $0x24c] sm:$0xf]
  %v6491 = vld [vmem:[%s3 + $0x250] sm:$0xf]
  %v6492 = vld [vmem:[%s3 + $0x254] sm:$0xf]
  %v6493 = vld [vmem:[%s3 + $0x258] sm:$0xf]
  %v6494 = vld [vmem:[%s3 + $0x25c] sm:$0xf]
  %v6495 = vld [vmem:[%s3 + $0x260] sm:$0xf]
  %v6496 = vld [vmem:[%s3 + $0x264] sm:$0xf]
  %v6497 = vld [vmem:[%s3 + $0x268] sm:$0xf]
  %v6498 = vld [vmem:[%s3 + $0x26c] sm:$0xf]
  %v6499 = vld [vmem:[%s3 + $0x270] sm:$0xf]
  %v6500 = vld [vmem:[%s3 + $0x274] sm:$0xf]
  %v6501 = vld [vmem:[%s3 + $0x278] sm:$0xf]
  %v6502 = vld [vmem:[%s3 + $0x27c] sm:$0xf]
  %v6503 = vld [vmem:[%s3 + $0x280] sm:$0xf]
  %v6504 = vld [vmem:[%s4 + $0x7] sm:$0x1]
  %v6505 = vpack.c.bf16 %v6487, %v6487
  %v6506 = vlaneseq
  %v6507 = vshrl.u32 %v6506, 7
  %v6508 = vsub.s32 0, %v6507
  %v6509 = vrot.slane %v6504, %v6508
  %v6526 = vunpack.c.l.b16 %v6488
  %v6527 = vunpack.c.l.b16 %v6489
  %v6528 = vunpack.c.l.b16 %v6490
  %v6529 = vunpack.c.l.b16 %v6491
  %v6530 = vunpack.c.l.b16 %v6492
  %v6531 = vunpack.c.l.b16 %v6493
  %v6532 = vunpack.c.l.b16 %v6494
  %v6533 = vunpack.c.l.b16 %v6495
  %v6534 = vunpack.c.l.b16 %v6496
  %v6535 = vunpack.c.l.b16 %v6497
  %v6536 = vunpack.c.l.b16 %v6498
  %v6537 = vunpack.c.l.b16 %v6499
  %v6538 = vunpack.c.l.b16 %v6500
  %v6539 = vunpack.c.l.b16 %v6501
  %v6540 = vunpack.c.l.b16 %v6502
  %v6541 = vunpack.c.l.b16 %v6503
  %v6542 = vpack.c.b16 %v6527, %v6526
  %v6543 = vpack.c.b16 %v6529, %v6528
  %v6544 = vpack.c.b16 %v6531, %v6530
  %v6545 = vpack.c.b16 %v6533, %v6532
  %v6546 = vpack.c.b16 %v6535, %v6534
  %v6547 = vpack.c.b16 %v6537, %v6536
  %v6548 = vpack.c.b16 %v6539, %v6538
  %v6549 = vpack.c.b16 %v6541, %v6540
  %6558 = vmatprep.subr.bf16.mxu0 0
  %6559 = vmatpush1.bf16.msra.mxu0 %v6542
  %6560 = vmatprep.subr.bf16.mxu0 0
  %6561 = vmatpush1.bf16.msra.mxu0 %v6543
  %6562 = vmatprep.subr.bf16.mxu0 0
  %6563 = vmatpush1.bf16.msra.mxu0 %v6544
  %6564 = vmatprep.subr.bf16.mxu0 0
  %6565 = vmatpush1.bf16.msra.mxu0 %v6545
  %6566 = vmatprep.subr.bf16.mxu0 0
  %6567 = vmatpush1.bf16.msra.mxu0 %v6546
  %6568 = vmatprep.subr.bf16.mxu0 0
  %6569 = vmatpush1.bf16.msra.mxu0 %v6547
  %6570 = vmatprep.subr.bf16.mxu0 0
  %6571 = vmatpush1.bf16.msra.mxu0 %v6548
  %6572 = vmatprep.subr.bf16.mxu0 0
  %6573 = vmatpush1.bf16.msra.mxu0 %v6549
  %6574 = vmatprep.subr.bf16.mxu0 0
  %6575 = vmatpush1.bf16.msra.mxu0 0
  %6576 = vmatprep.subr.bf16.mxu0 0
  %6577 = vmatpush1.bf16.msra.mxu0 0
  %6578 = vmatprep.subr.bf16.mxu0 0
  %6579 = vmatpush1.bf16.msra.mxu0 0
  %6580 = vmatprep.subr.bf16.mxu0 0
  %6581 = vmatpush1.bf16.msra.mxu0 0
  %6582 = vmatprep.subr.bf16.mxu0 0
  %6583 = vmatpush1.bf16.msra.mxu0 0
  %6584 = vmatprep.subr.bf16.mxu0 0
  %6585 = vmatpush1.bf16.msra.mxu0 0
  %6586 = vmatprep.subr.bf16.mxu0 0
  %6587 = vmatpush1.bf16.msra.mxu0 0
  %6588 = vmatprep.subr.bf16.mxu0 0
  %6589 = vmatpush1.bf16.msra.mxu0 0
  %6590 = vmatprep.mubr.bf16.mxu0 0
  %6591 = vmatmul.mubr.bf16.gmra.mrb[0].mxu0 %v6505
  %v6592 = vpop.f32.mrb[0].mxu0
  %v6593 = vadd.f32 %v6509, %v6592
  %v6594 = vpop.f32.mrb[0].mxu0
  %v6595 = vpop.f32.mrb[0].mxu0
  %v6596 = vpop.f32.mrb[0].mxu0
  %6597 = vdwg.mxu0
  %v6598 = vmax.f32 %v6593, 0.0
  %v6599 = vpack.c.bf16 %v6598, %v6598
  %v6600 = vld [vmem:[%s3 + $0x284] sm:$0xf]
  %v6601 = vld [vmem:[%s3 + $0x288] sm:$0xf]
  %v6602 = vld [vmem:[%s3 + $0x28c] sm:$0xf]
  %v6603 = vld [vmem:[%s3 + $0x290] sm:$0xf]
  %v6604 = vld [vmem:[%s3 + $0x294] sm:$0xf]
  %v6605 = vld [vmem:[%s3 + $0x298] sm:$0xf]
  %v6606 = vld [vmem:[%s3 + $0x29c] sm:$0xf]
  %v6607 = vld [vmem:[%s3 + $0x2a0] sm:$0xf]
  %v6608 = vld [vmem:[%s3 + $0x2a4] sm:$0xf]
  %v6609 = vld [vmem:[%s3 + $0x2a8] sm:$0xf]
  %v6610 = vld [vmem:[%s3 + $0x2ac] sm:$0xf]
  %v6611 = vld [vmem:[%s3 + $0x2b0] sm:$0xf]
  %v6612 = vld [vmem:[%s3 + $0x2b4] sm:$0xf]
  %v6613 = vld [vmem:[%s3 + $0x2b8] sm:$0xf]
  %v6614 = vld [vmem:[%s3 + $0x2bc] sm:$0xf]
  %v6615 = vld [vmem:[%s3 + $0x2c0] sm:$0xf]
  %v6616 = vld [vmem:[%s4 + $0x8] sm:$0x1]
  %v6617 = vlaneseq
  %v6618 = vshrl.u32 %v6617, 7
  %v6619 = vsub.s32 0, %v6618
  %v6620 = vrot.slane %v6616, %v6619
  %v6637 = vunpack.c.l.b16 %v6600
  %v6638 = vunpack.c.l.b16 %v6601
  %v6639 = vunpack.c.l.b16 %v6602
  %v6640 = vunpack.c.l.b16 %v6603
  %v6641 = vunpack.c.l.b16 %v6604
  %v6642 = vunpack.c.l.b16 %v6605
  %v6643 = vunpack.c.l.b16 %v6606
  %v6644 = vunpack.c.l.b16 %v6607
  %v6645 = vunpack.c.l.b16 %v6608
  %v6646 = vunpack.c.l.b16 %v6609
  %v6647 = vunpack.c.l.b16 %v6610
  %v6648 = vunpack.c.l.b16 %v6611
  %v6649 = vunpack.c.l.b16 %v6612
  %v6650 = vunpack.c.l.b16 %v6613
  %v6651 = vunpack.c.l.b16 %v6614
  %v6652 = vunpack.c.l.b16 %v6615
  %v6653 = vpack.c.b16 %v6638, %v6637
  %v6654 = vpack.c.b16 %v6640, %v6639
  %v6655 = vpack.c.b16 %v6642, %v6641
  %v6656 = vpack.c.b16 %v6644, %v6643
  %v6657 = vpack.c.b16 %v6646, %v6645
  %v6658 = vpack.c.b16 %v6648, %v6647
  %v6659 = vpack.c.b16 %v6650, %v6649
  %v6660 = vpack.c.b16 %v6652, %v6651
  %6669 = vmatprep.subr.bf16.mxu0 0
  %6670 = vmatpush1.bf16.msra.mxu0 %v6653
  %6671 = vmatprep.subr.bf16.mxu0 0
  %6672 = vmatpush1.bf16.msra.mxu0 %v6654
  %6673 = vmatprep.subr.bf16.mxu0 0
  %6674 = vmatpush1.bf16.msra.mxu0 %v6655
  %6675 = vmatprep.subr.bf16.mxu0 0
  %6676 = vmatpush1.bf16.msra.mxu0 %v6656
  %6677 = vmatprep.subr.bf16.mxu0 0
  %6678 = vmatpush1.bf16.msra.mxu0 %v6657
  %6679 = vmatprep.subr.bf16.mxu0 0
  %6680 = vmatpush1.bf16.msra.mxu0 %v6658
  %6681 = vmatprep.subr.bf16.mxu0 0
  %6682 = vmatpush1.bf16.msra.mxu0 %v6659
  %6683 = vmatprep.subr.bf16.mxu0 0
  %6684 = vmatpush1.bf16.msra.mxu0 %v6660
  %6685 = vmatprep.subr.bf16.mxu0 0
  %6686 = vmatpush1.bf16.msra.mxu0 0
  %6687 = vmatprep.subr.bf16.mxu0 0
  %6688 = vmatpush1.bf16.msra.mxu0 0
  %6689 = vmatprep.subr.bf16.mxu0 0
  %6690 = vmatpush1.bf16.msra.mxu0 0
  %6691 = vmatprep.subr.bf16.mxu0 0
  %6692 = vmatpush1.bf16.msra.mxu0 0
  %6693 = vmatprep.subr.bf16.mxu0 0
  %6694 = vmatpush1.bf16.msra.mxu0 0
  %6695 = vmatprep.subr.bf16.mxu0 0
  %6696 = vmatpush1.bf16.msra.mxu0 0
  %6697 = vmatprep.subr.bf16.mxu0 0
  %6698 = vmatpush1.bf16.msra.mxu0 0
  %6699 = vmatprep.subr.bf16.mxu0 0
  %6700 = vmatpush1.bf16.msra.mxu0 0
  %6701 = vmatprep.mubr.bf16.mxu0 0
  %6702 = vmatmul.mubr.bf16.gmra.mrb[0].mxu0 %v6599
  %v6703 = vpop.f32.mrb[0].mxu0
  %v6704 = vadd.f32 %v6620, %v6703
  %v6705 = vpop.f32.mrb[0].mxu0
  %v6706 = vpop.f32.mrb[0].mxu0
  %v6707 = vpop.f32.mrb[0].mxu0
  %6708 = vdwg.mxu0
  %6709 = vst [vmem:[%s5] sm:$0xff] %v6704
  // Predicated region
  $region22: #{net_forward.1} parent=0 // pred_check
    _
  $region23: #{net_forward.1} parent=0 // pred_check_branch
    %6711 = sbr.rel (0) target = $region25
  $region24: #{net_forward.1} parent=0 // pred_region
    _
  $region25: #{net_forward.1} parent=0 // pred_fallthru
    _
  // Predicated region
  $region26: #{net_forward.1} parent=0 // pred_check
    _
  $region27: #{net_forward.1} parent=0 // pred_check_branch
    %6713 = sbr.rel (0) target = $region29
  $region28: #{net_forward.1} parent=0 // pred_region
    _
  $region29: #{net_forward.1} parent=0 // pred_fallthru
    _

</llo_original>
